<compile_context>
chip_gen: v7x
topology: tpu7x:2x2x1
jax: 0.10.0
libtpu: 0.0.40
codegen_flags: <defaults>
</compile_context>

<pallas_src>
import numpy as np
import jax
import jax.numpy as jnp
from jax.experimental import pallas as pl
from jax.experimental.pallas import tpu as pltpu

PRELU_SLOPE = 0.25  # nn.PReLU() default init, shared across all CABs.


# ----------------------------------------------------------------------------
# Fused CAB-chain kernel (1 or 2 CABs per grid step, one batch sample per step)
# ----------------------------------------------------------------------------
def _make_cab_chain_kernel(H, WC, ncab):
    def kernel(x_ref, b1_ref, b2_ref, kd_ref, wu_ref, out_ref, pad_ref):
        # x_ref   : (H, W*C)             row-flat NHWC input
        # b1/b2   : (ncab, 3, W*C, W*C)  banded 3x3 conv matrices (dy-major)
        # kd_ref  : (ncab, W*C, C//r)    GAP + first CA 1x1 folded (1/(H*W) incl.)
        # wu_ref  : (ncab, C//r, W*C)    second CA 1x1 tiled over W (lane-aligned)
        # out_ref : (H, W*C)
        # pad_ref : VMEM (H+2, W*C)      zero-bordered scratch for the dy shifts
        zero_row = jnp.zeros((1, WC), jnp.float32)
        pad_ref[0:1, :] = zero_row          # only the 2 border rows are zeroed;
        pad_ref[H + 1:H + 2, :] = zero_row  # the interior is always overwritten

        cur = x_ref[...]
        for i in range(ncab):               # static -> fully unrolled
            # ---- conv1 (3x3, pad=1, bias=False) + PReLU : 3 big matmuls ----
            pad_ref[1:H + 1, :] = cur
            h = jnp.dot(pad_ref[0:H, :], b1_ref[i, 0],
                        preferred_element_type=jnp.float32)
            h = h + jnp.dot(pad_ref[1:H + 1, :], b1_ref[i, 1],
                            preferred_element_type=jnp.float32)
            h = h + jnp.dot(pad_ref[2:H + 2, :], b1_ref[i, 2],
                            preferred_element_type=jnp.float32)
            h = jnp.where(h > 0, h, PRELU_SLOPE * h)

            # ---- conv2 (3x3, pad=1, bias=False) ----
            pad_ref[1:H + 1, :] = h
            r = jnp.dot(pad_ref[0:H, :], b2_ref[i, 0],
                        preferred_element_type=jnp.float32)
            r = r + jnp.dot(pad_ref[1:H + 1, :], b2_ref[i, 1],
                            preferred_element_type=jnp.float32)
            r = r + jnp.dot(pad_ref[2:H + 2, :], b2_ref[i, 2],
                            preferred_element_type=jnp.float32)

            # ---- channel attention + residual ----
            g = jnp.sum(r, axis=0, keepdims=True)                       # (1, W*C)
            z = jnp.maximum(
                jnp.dot(g, kd_ref[i], preferred_element_type=jnp.float32), 0.0)
            s = jax.nn.sigmoid(
                jnp.dot(z, wu_ref[i], preferred_element_type=jnp.float32))
            cur = r * s + cur
        out_ref[...] = cur

    return kernel


def _shift_matrix(W, dx):
    """(W, W) structural matrix: S[w + dx - 1, w] = 1 (zero-padded conv tap)."""
    S = np.zeros((W, W), np.float32)
    idx = np.arange(W)
    src = idx + dx - 1
    ok = (src >= 0) & (src < W)
    S[src[ok], idx[ok]] = 1.0
    return S


def _banded_conv_mats(w, W):
    """w: (3, 3, Cin, Cout) [dy, dx, ci, co] -> (3, W*Cin, W*Cout)."""
    mats = []
    for dy in range(3):
        m = 0.0
        for dx in range(3):
            m = m + jnp.kron(jnp.asarray(_shift_matrix(W, dx)), w[dy, dx])
        mats.append(m)
    return jnp.stack(mats)


def _cab_stack_params(cabs, W, HW):
    b1 = jnp.stack([_banded_conv_mats(p["w1"], W) for p in cabs])
    b2 = jnp.stack([_banded_conv_mats(p["w2"], W) for p in cabs])
    kd = jnp.stack([jnp.kron(jnp.ones((W, 1), jnp.float32), p["wd"]) / HW
                    for p in cabs])
    wu = jnp.stack([jnp.tile(p["wu"], (1, W)) for p in cabs])
    return b1, b2, kd, wu


def cab_chain_apply(x, cabs):
    """Apply len(cabs) CABs back-to-back in one fused kernel.

    x: (B, H, W, C) float32 NHWC -> (B, H, W, C).
    """
    B, H, W, C = x.shape
    WC = W * C
    ncab = len(cabs)
    Cr = cabs[0]["wd"].shape[1]
    b1, b2, kd, wu = _cab_stack_params(cabs, W, H * W)
    xf = x.reshape(B, H, WC)        # free reshape: NHWC is already row-flat

    gs = pltpu.PrefetchScalarGridSpec(
        num_scalar_prefetch=0,
        grid=(B,),
        in_specs=[
            pl.BlockSpec((None, H, WC), lambda b: (b, 0, 0)),
            pl.BlockSpec((ncab, 3, WC, WC), lambda b: (0, 0, 0, 0)),
            pl.BlockSpec((ncab, 3, WC, WC), lambda b: (0, 0, 0, 0)),
            pl.BlockSpec((ncab, WC, Cr), lambda b: (0, 0, 0)),
            pl.BlockSpec((ncab, Cr, WC), lambda b: (0, 0, 0)),
        ],
        out_specs=pl.BlockSpec((None, H, WC), lambda b: (b, 0, 0)),
        scratch_shapes=[pltpu.VMEM((H + 2, WC), jnp.float32)],
    )
    out = pl.pallas_call(
        _make_cab_chain_kernel(H, WC, ncab),
        out_shape=jax.ShapeDtypeStruct((B, H, WC), jnp.float32),
        grid_spec=gs,
        compiler_params=pltpu.CompilerParams(
            dimension_semantics=("parallel",)),   # samples independent (v7x 2xTC)
    )(xf, b1, b2, kd, wu)
    return out.reshape(B, H, W, C)


# ----------------------------------------------------------------------------
# SkipUpSample kernel: bilinear 2x up + 1x1 conv + skip add  ==  two matmuls
# ----------------------------------------------------------------------------
def _skipup_kernel(x_ref, y_ref, r_ref, m_ref, out_ref):
    # x_ref : (H, W*Cin)   y_ref/out_ref : (2H, 2W*Cout)
    # r_ref : (2H, H) row interpolation ; m_ref : (W*Cin, 2W*Cout) col-interp
    #                                       with the 1x1 conv folded in.
    u = jnp.dot(r_ref[...], x_ref[...], preferred_element_type=jnp.float32)
    out_ref[...] = (jnp.dot(u, m_ref[...], preferred_element_type=jnp.float32)
                    + y_ref[...])


def _bilinear_1d(n):
    """PyTorch Upsample(scale_factor=2, bilinear, align_corners=False) taps."""
    out = np.arange(2 * n)
    src = (out + 0.5) * 0.5 - 0.5
    src = np.maximum(src, 0.0)                    # PyTorch clamps negative source
    i0 = np.minimum(np.floor(src), n - 1).astype(np.int32)
    i1 = np.minimum(i0 + 1, n - 1).astype(np.int32)
    w1 = (src - i0).astype(np.float32)
    w0 = (1.0 - w1).astype(np.float32)
    return i0, i1, w0, w1


def skipup_apply(x, y, wc):
    """x: (B, H, W, Cin), y: (B, 2H, 2W, Cout), wc: (Cin, Cout) 1x1 conv."""
    B, H, W, Cin = x.shape
    Cout = wc.shape[1]
    H2, W2 = 2 * H, 2 * W

    i0, i1, w0, w1 = _bilinear_1d(H)
    R = np.zeros((H2, H), np.float32)             # row-interp matrix
    np.add.at(R, (np.arange(H2), i0), w0)
    np.add.at(R, (np.arange(H2), i1), w1)

    j0, j1, v0, v1 = _bilinear_1d(W)
    Mw = np.zeros((W, W2), np.float32)            # col-interp matrix
    np.add.at(Mw, (j0, np.arange(W2)), v0)
    np.add.at(Mw, (j1, np.arange(W2)), v1)
    M = jnp.kron(jnp.asarray(Mw), wc)             # fold 1x1 conv: (W*Cin, 2W*Cout)

    xf = x.reshape(B, H, W * Cin)
    yf = y.reshape(B, H2, W2 * Cout)

    gs = pltpu.PrefetchScalarGridSpec(
        num_scalar_prefetch=0,
        grid=(B,),
        in_specs=[
            pl.BlockSpec((None, H, W * Cin), lambda b: (b, 0, 0)),
            pl.BlockSpec((None, H2, W2 * Cout), lambda b: (b, 0, 0)),
            pl.BlockSpec((H2, H), lambda b: (0, 0)),
            pl.BlockSpec((W * Cin, W2 * Cout), lambda b: (0, 0)),
        ],
        out_specs=pl.BlockSpec((None, H2, W2 * Cout), lambda b: (b, 0, 0)),
    )
    out = pl.pallas_call(
        _skipup_kernel,
        out_shape=jax.ShapeDtypeStruct((B, H2, W2 * Cout), jnp.float32),
        grid_spec=gs,
        compiler_params=pltpu.CompilerParams(
            dimension_semantics=("parallel",)),
        input_output_aliases={1: 0},              # write in place over the skip y
    )(xf, yf, jnp.asarray(R), M)
    return out.reshape(B, H2, W2, Cout)


# ----------------------------------------------------------------------------
# Parameter init (deterministic, synthetic) and Decoder forward
# ----------------------------------------------------------------------------
def init_cab_params(key, c, reduction):
    k1, k2, k3, k4 = jax.random.split(key, 4)
    cr = c // reduction
    s = 0.1
    return {"w1": s * jax.random.normal(k1, (3, 3, c, c), jnp.float32),
            "w2": s * jax.random.normal(k2, (3, 3, c, c), jnp.float32),
            "wd": s * jax.random.normal(k3, (c, cr), jnp.float32),
            "wu": s * jax.random.normal(k4, (cr, c), jnp.float32)}


def init_decoder_params(key, n_feat, scale_unetfeats, reduction):
    c1 = n_feat
    c2 = n_feat + scale_unetfeats
    c3 = n_feat + 2 * scale_unetfeats
    ks = jax.random.split(key, 10)
    return {
        "dec1": [init_cab_params(ks[0], c1, reduction),
                 init_cab_params(ks[1], c1, reduction)],
        "dec2": [init_cab_params(ks[2], c2, reduction),
                 init_cab_params(ks[3], c2, reduction)],
        "dec3": [init_cab_params(ks[4], c3, reduction),
                 init_cab_params(ks[5], c3, reduction)],
        "skip_attn1": init_cab_params(ks[6], c1, reduction),
        "skip_attn2": init_cab_params(ks[7], c2, reduction),
        "up21": 0.1 * jax.random.normal(ks[8], (c2, c1), jnp.float32),  # 1x1 c2->c1
        "up32": 0.1 * jax.random.normal(ks[9], (c3, c2), jnp.float32),  # 1x1 c3->c2
    }


def decoder_forward(params, enc1, enc2, enc3):
    # enc*: NCHW (PyTorch convention) -> NHWC for the kernels.
    e1 = jnp.transpose(enc1, (0, 2, 3, 1))
    e2 = jnp.transpose(enc2, (0, 2, 3, 1))
    e3 = jnp.transpose(enc3, (0, 2, 3, 1))

    dec3 = cab_chain_apply(e3, params["dec3"])            # 2 CABs, one kernel
    skip2 = cab_chain_apply(e2, [params["skip_attn2"]])   # 1 CAB
    x = skipup_apply(dec3, skip2, params["up32"])
    dec2 = cab_chain_apply(x, params["dec2"])
    skip1 = cab_chain_apply(e1, [params["skip_attn1"]])
    x = skipup_apply(dec2, skip1, params["up21"])
    dec1 = cab_chain_apply(x, params["dec1"])

    to_nchw = lambda t: jnp.transpose(t, (0, 3, 1, 2))
    return [to_nchw(dec1), to_nchw(dec2), to_nchw(dec3)]


if __name__ == "__main__":
    n_feat, scale_unetfeats, reduction = 8, 4, 4
    B, H, W = 2, 16, 16

    key = jax.random.PRNGKey(0)
    kp, k1, k2, k3 = jax.random.split(key, 4)
    params = init_decoder_params(kp, n_feat, scale_unetfeats, reduction)

    enc1 = jax.random.normal(k1, (B, n_feat, H, W), jnp.float32)
    enc2 = jax.random.normal(k2, (B, n_feat + scale_unetfeats, H // 2, W // 2),
                             jnp.float32)
    enc3 = jax.random.normal(k3, (B, n_feat + 2 * scale_unetfeats, H // 4, W // 4),
                             jnp.float32)

    fwd = jax.jit(decoder_forward)
    dec1, dec2, dec3 = fwd(params, enc1, enc2, enc3)
    jax.block_until_ready((dec1, dec2, dec3))

    assert dec1.shape == (B, n_feat, H, W)
    assert dec2.shape == (B, n_feat + scale_unetfeats, H // 2, W // 2)
    assert dec3.shape == (B, n_feat + 2 * scale_unetfeats, H // 4, W // 4)
    assert all(bool(jnp.isfinite(d).all()) for d in (dec1, dec2, dec3))
    print("KERNEL_OK")
</pallas_src>

<mosaic_0001>
module attributes {stable_mosaic.version = 11 : i64} {
  func.func @kernel(%arg0: i32, %arg1: memref<1x4x64xf32, #tpu.memory_space<vmem>>, %arg2: memref<2x3x64x64xf32, #tpu.memory_space<vmem>>, %arg3: memref<2x3x64x64xf32, #tpu.memory_space<vmem>>, %arg4: memref<2x64x4xf32, #tpu.memory_space<vmem>>, %arg5: memref<2x4x64xf32, #tpu.memory_space<vmem>>, %arg6: memref<1x4x64xf32, #tpu.memory_space<vmem>>, %arg7: memref<6x64xf32, #tpu.memory_space<vmem>>) attributes {dimension_semantics = [#tpu.dimension_semantics<parallel>], iteration_bounds = array<i64: 2>, scalar_prefetch = 0 : i64, scratch_operands = 1 : i64, tpu.core_type = #tpu.core_type<tc>, window_params = [{transform_indices = @transform_0, window_bounds = array<i64: 1, 4, 64>}, {pipeline_mode = #tpu.pipeline_mode<synchronous>, transform_indices = @transform_1, window_bounds = array<i64: 2, 3, 64, 64>}, {pipeline_mode = #tpu.pipeline_mode<synchronous>, transform_indices = @transform_2, window_bounds = array<i64: 2, 3, 64, 64>}, {pipeline_mode = #tpu.pipeline_mode<synchronous>, transform_indices = @transform_3, window_bounds = array<i64: 2, 64, 4>}, {pipeline_mode = #tpu.pipeline_mode<synchronous>, transform_indices = @transform_4, window_bounds = array<i64: 2, 4, 64>}, {transform_indices = @transform_5, window_bounds = array<i64: 1, 4, 64>}]} {
    %cst = arith.constant 0.000000e+00 : f32
    %0 = vector.broadcast %cst : f32 to vector<1x64xf32>
    %c0 = arith.constant 0 : index
    %c0_0 = arith.constant 0 : index
    %1 = vector.load %arg7[%c0, %c0_0] : memref<6x64xf32, #tpu.memory_space<vmem>>, vector<1x64xf32>
    tpu.vector_store %arg7[%c0, %c0_0], %0 {strides = array<i32>} : memref<6x64xf32, #tpu.memory_space<vmem>>, vector<1x64xf32>,
    %c5 = arith.constant 5 : index
    %c0_1 = arith.constant 0 : index
    %2 = vector.load %arg7[%c5, %c0_1] : memref<6x64xf32, #tpu.memory_space<vmem>>, vector<1x64xf32>
    tpu.vector_store %arg7[%c5, %c0_1], %0 {strides = array<i32>} : memref<6x64xf32, #tpu.memory_space<vmem>>, vector<1x64xf32>,
    %c0_2 = arith.constant 0 : index
    %c0_3 = arith.constant 0 : index
    %c0_4 = arith.constant 0 : index
    %3 = vector.load %arg1[%c0_2, %c0_3, %c0_4] : memref<1x4x64xf32, #tpu.memory_space<vmem>>, vector<1x4x64xf32>
    %4 = vector.shape_cast %3 : vector<1x4x64xf32> to vector<4x64xf32>
    %c1 = arith.constant 1 : index
    %c0_5 = arith.constant 0 : index
    %5 = vector.load %arg7[%c1, %c0_5] : memref<6x64xf32, #tpu.memory_space<vmem>>, vector<4x64xf32>
    tpu.vector_store %arg7[%c1, %c0_5], %4 {strides = array<i32>} : memref<6x64xf32, #tpu.memory_space<vmem>>, vector<4x64xf32>,
    %c0_6 = arith.constant 0 : index
    %c0_7 = arith.constant 0 : index
    %6 = vector.load %arg7[%c0_6, %c0_7] : memref<6x64xf32, #tpu.memory_space<vmem>>, vector<4x64xf32>
    %c0_8 = arith.constant 0 : index
    %c0_9 = arith.constant 0 : index
    %c0_10 = arith.constant 0 : index
    %c0_11 = arith.constant 0 : index
    %7 = vector.load %arg2[%c0_8, %c0_9, %c0_10, %c0_11] : memref<2x3x64x64xf32, #tpu.memory_space<vmem>>, vector<1x1x64x64xf32>
    %8 = vector.shape_cast %7 : vector<1x1x64x64xf32> to vector<64x64xf32>
    %cst_12 = arith.constant dense<0.000000e+00> : vector<4x64xf32>
    %9 = tpu.matmul %6, %8, %cst_12 {dimension_numbers = #tpu.dot_dimension_numbers<[1], [0], [0], [1], [0, 0, 1, 1], [], []>} : vector<4x64xf32>, vector<64x64xf32>, vector<4x64xf32> -> vector<4x64xf32>
    %c1_13 = arith.constant 1 : index
    %c0_14 = arith.constant 0 : index
    %10 = vector.load %arg7[%c1_13, %c0_14] : memref<6x64xf32, #tpu.memory_space<vmem>>, vector<4x64xf32>
    %c0_15 = arith.constant 0 : index
    %c1_16 = arith.constant 1 : index
    %c0_17 = arith.constant 0 : index
    %c0_18 = arith.constant 0 : index
    %11 = vector.load %arg2[%c0_15, %c1_16, %c0_17, %c0_18] : memref<2x3x64x64xf32, #tpu.memory_space<vmem>>, vector<1x1x64x64xf32>
    %12 = vector.shape_cast %11 : vector<1x1x64x64xf32> to vector<64x64xf32>
    %cst_19 = arith.constant dense<0.000000e+00> : vector<4x64xf32>
    %13 = tpu.matmul %10, %12, %cst_19 {dimension_numbers = #tpu.dot_dimension_numbers<[1], [0], [0], [1], [0, 0, 1, 1], [], []>} : vector<4x64xf32>, vector<64x64xf32>, vector<4x64xf32> -> vector<4x64xf32>
    %14 = arith.addf %9, %13 : vector<4x64xf32>
    %c2 = arith.constant 2 : index
    %c0_20 = arith.constant 0 : index
    %15 = vector.load %arg7[%c2, %c0_20] : memref<6x64xf32, #tpu.memory_space<vmem>>, vector<4x64xf32>
    %c0_21 = arith.constant 0 : index
    %c2_22 = arith.constant 2 : index
    %c0_23 = arith.constant 0 : index
    %c0_24 = arith.constant 0 : index
    %16 = vector.load %arg2[%c0_21, %c2_22, %c0_23, %c0_24] : memref<2x3x64x64xf32, #tpu.memory_space<vmem>>, vector<1x1x64x64xf32>
    %17 = vector.shape_cast %16 : vector<1x1x64x64xf32> to vector<64x64xf32>
    %cst_25 = arith.constant dense<0.000000e+00> : vector<4x64xf32>
    %18 = tpu.matmul %15, %17, %cst_25 {dimension_numbers = #tpu.dot_dimension_numbers<[1], [0], [0], [1], [0, 0, 1, 1], [], []>} : vector<4x64xf32>, vector<64x64xf32>, vector<4x64xf32> -> vector<4x64xf32>
    %19 = arith.addf %14, %18 : vector<4x64xf32>
    %cst_26 = arith.constant 0.000000e+00 : f32
    %20 = vector.broadcast %cst_26 : f32 to vector<4x64xf32>
    %21 = arith.cmpf ogt, %19, %20 : vector<4x64xf32>
    %cst_27 = arith.constant 2.500000e-01 : f32
    %22 = vector.broadcast %cst_27 : f32 to vector<4x64xf32>
    %23 = arith.mulf %22, %19 : vector<4x64xf32>
    %24 = arith.select %21, %19, %23 : vector<4x64xi1>, vector<4x64xf32>
    %c1_28 = arith.constant 1 : index
    %c0_29 = arith.constant 0 : index
    %25 = vector.load %arg7[%c1_28, %c0_29] : memref<6x64xf32, #tpu.memory_space<vmem>>, vector<4x64xf32>
    tpu.vector_store %arg7[%c1_28, %c0_29], %24 {strides = array<i32>} : memref<6x64xf32, #tpu.memory_space<vmem>>, vector<4x64xf32>,
    %c0_30 = arith.constant 0 : index
    %c0_31 = arith.constant 0 : index
    %26 = vector.load %arg7[%c0_30, %c0_31] : memref<6x64xf32, #tpu.memory_space<vmem>>, vector<4x64xf32>
    %c0_32 = arith.constant 0 : index
    %c0_33 = arith.constant 0 : index
    %c0_34 = arith.constant 0 : index
    %c0_35 = arith.constant 0 : index
    %27 = vector.load %arg3[%c0_32, %c0_33, %c0_34, %c0_35] : memref<2x3x64x64xf32, #tpu.memory_space<vmem>>, vector<1x1x64x64xf32>
    %28 = vector.shape_cast %27 : vector<1x1x64x64xf32> to vector<64x64xf32>
    %cst_36 = arith.constant dense<0.000000e+00> : vector<4x64xf32>
    %29 = tpu.matmul %26, %28, %cst_36 {dimension_numbers = #tpu.dot_dimension_numbers<[1], [0], [0], [1], [0, 0, 1, 1], [], []>} : vector<4x64xf32>, vector<64x64xf32>, vector<4x64xf32> -> vector<4x64xf32>
    %c1_37 = arith.constant 1 : index
    %c0_38 = arith.constant 0 : index
    %30 = vector.load %arg7[%c1_37, %c0_38] : memref<6x64xf32, #tpu.memory_space<vmem>>, vector<4x64xf32>
    %c0_39 = arith.constant 0 : index
    %c1_40 = arith.constant 1 : index
    %c0_41 = arith.constant 0 : index
    %c0_42 = arith.constant 0 : index
    %31 = vector.load %arg3[%c0_39, %c1_40, %c0_41, %c0_42] : memref<2x3x64x64xf32, #tpu.memory_space<vmem>>, vector<1x1x64x64xf32>
    %32 = vector.shape_cast %31 : vector<1x1x64x64xf32> to vector<64x64xf32>
    %cst_43 = arith.constant dense<0.000000e+00> : vector<4x64xf32>
    %33 = tpu.matmul %30, %32, %cst_43 {dimension_numbers = #tpu.dot_dimension_numbers<[1], [0], [0], [1], [0, 0, 1, 1], [], []>} : vector<4x64xf32>, vector<64x64xf32>, vector<4x64xf32> -> vector<4x64xf32>
    %34 = arith.addf %29, %33 : vector<4x64xf32>
    %c2_44 = arith.constant 2 : index
    %c0_45 = arith.constant 0 : index
    %35 = vector.load %arg7[%c2_44, %c0_45] : memref<6x64xf32, #tpu.memory_space<vmem>>, vector<4x64xf32>
    %c0_46 = arith.constant 0 : index
    %c2_47 = arith.constant 2 : index
    %c0_48 = arith.constant 0 : index
    %c0_49 = arith.constant 0 : index
    %36 = vector.load %arg3[%c0_46, %c2_47, %c0_48, %c0_49] : memref<2x3x64x64xf32, #tpu.memory_space<vmem>>, vector<1x1x64x64xf32>
    %37 = vector.shape_cast %36 : vector<1x1x64x64xf32> to vector<64x64xf32>
    %cst_50 = arith.constant dense<0.000000e+00> : vector<4x64xf32>
    %38 = tpu.matmul %35, %37, %cst_50 {dimension_numbers = #tpu.dot_dimension_numbers<[1], [0], [0], [1], [0, 0, 1, 1], [], []>} : vector<4x64xf32>, vector<64x64xf32>, vector<4x64xf32> -> vector<4x64xf32>
    %39 = arith.addf %34, %38 : vector<4x64xf32>
    %cst_51 = arith.constant dense<0.000000e+00> : vector<64xf32>
    %40 = vector.multi_reduction <add>, %39, %cst_51 [0] : vector<4x64xf32> to vector<64xf32>
    %41 = vector.shape_cast %40 : vector<64xf32> to vector<1x64xf32>
    %c0_52 = arith.constant 0 : index
    %c0_53 = arith.constant 0 : index
    %c0_54 = arith.constant 0 : index
    %42 = vector.load %arg4[%c0_52, %c0_53, %c0_54] : memref<2x64x4xf32, #tpu.memory_space<vmem>>, vector<1x64x4xf32>
    %43 = vector.shape_cast %42 : vector<1x64x4xf32> to vector<64x4xf32>
    %cst_55 = arith.constant dense<0.000000e+00> : vector<1x4xf32>
    %44 = tpu.matmul %41, %43, %cst_55 {dimension_numbers = #tpu.dot_dimension_numbers<[1], [0], [0], [1], [0, 0, 1, 1], [], []>} : vector<1x64xf32>, vector<64x4xf32>, vector<1x4xf32> -> vector<1x4xf32>
    %cst_56 = arith.constant 0.000000e+00 : f32
    %45 = vector.broadcast %cst_56 : f32 to vector<1x4xf32>
    %46 = arith.maximumf %44, %45 : vector<1x4xf32>
    %c0_57 = arith.constant 0 : index
    %c0_58 = arith.constant 0 : index
    %c0_59 = arith.constant 0 : index
    %47 = vector.load %arg5[%c0_57, %c0_58, %c0_59] : memref<2x4x64xf32, #tpu.memory_space<vmem>>, vector<1x4x64xf32>
    %48 = vector.shape_cast %47 : vector<1x4x64xf32> to vector<4x64xf32>
    %cst_60 = arith.constant dense<0.000000e+00> : vector<1x64xf32>
    %49 = tpu.matmul %46, %48, %cst_60 {dimension_numbers = #tpu.dot_dimension_numbers<[1], [0], [0], [1], [0, 0, 1, 1], [], []>} : vector<1x4xf32>, vector<4x64xf32>, vector<1x64xf32> -> vector<1x64xf32>
    %50 = arith.negf %49 : vector<1x64xf32>
    %51 = math.exp %50 : vector<1x64xf32>
    %cst_61 = arith.constant 1.000000e+00 : f32
    %52 = vector.broadcast %cst_61 : f32 to vector<1x64xf32>
    %53 = arith.addf %52, %51 : vector<1x64xf32>
    %54 = arith.divf %52, %53 : vector<1x64xf32>
    %55 = vector.broadcast %54 : vector<1x64xf32> to vector<4x64xf32>
    %56 = arith.mulf %39, %55 : vector<4x64xf32>
    %57 = arith.addf %56, %4 : vector<4x64xf32>
    %c1_62 = arith.constant 1 : index
    %c0_63 = arith.constant 0 : index
    %58 = vector.load %arg7[%c1_62, %c0_63] : memref<6x64xf32, #tpu.memory_space<vmem>>, vector<4x64xf32>
    tpu.vector_store %arg7[%c1_62, %c0_63], %57 {strides = array<i32>} : memref<6x64xf32, #tpu.memory_space<vmem>>, vector<4x64xf32>,
    %c0_64 = arith.constant 0 : index
    %c0_65 = arith.constant 0 : index
    %59 = vector.load %arg7[%c0_64, %c0_65] : memref<6x64xf32, #tpu.memory_space<vmem>>, vector<4x64xf32>
    %c1_66 = arith.constant 1 : index
    %c0_67 = arith.constant 0 : index
    %c0_68 = arith.constant 0 : index
    %c0_69 = arith.constant 0 : index
    %60 = vector.load %arg2[%c1_66, %c0_67, %c0_68, %c0_69] : memref<2x3x64x64xf32, #tpu.memory_space<vmem>>, vector<1x1x64x64xf32>
    %61 = vector.shape_cast %60 : vector<1x1x64x64xf32> to vector<64x64xf32>
    %cst_70 = arith.constant dense<0.000000e+00> : vector<4x64xf32>
    %62 = tpu.matmul %59, %61, %cst_70 {dimension_numbers = #tpu.dot_dimension_numbers<[1], [0], [0], [1], [0, 0, 1, 1], [], []>} : vector<4x64xf32>, vector<64x64xf32>, vector<4x64xf32> -> vector<4x64xf32>
    %c1_71 = arith.constant 1 : index
    %c0_72 = arith.constant 0 : index
    %63 = vector.load %arg7[%c1_71, %c0_72] : memref<6x64xf32, #tpu.memory_space<vmem>>, vector<4x64xf32>
    %c1_73 = arith.constant 1 : index
    %c1_74 = arith.constant 1 : index
    %c0_75 = arith.constant 0 : index
    %c0_76 = arith.constant 0 : index
    %64 = vector.load %arg2[%c1_73, %c1_74, %c0_75, %c0_76] : memref<2x3x64x64xf32, #tpu.memory_space<vmem>>, vector<1x1x64x64xf32>
    %65 = vector.shape_cast %64 : vector<1x1x64x64xf32> to vector<64x64xf32>
    %cst_77 = arith.constant dense<0.000000e+00> : vector<4x64xf32>
    %66 = tpu.matmul %63, %65, %cst_77 {dimension_numbers = #tpu.dot_dimension_numbers<[1], [0], [0], [1], [0, 0, 1, 1], [], []>} : vector<4x64xf32>, vector<64x64xf32>, vector<4x64xf32> -> vector<4x64xf32>
    %67 = arith.addf %62, %66 : vector<4x64xf32>
    %c2_78 = arith.constant 2 : index
    %c0_79 = arith.constant 0 : index
    %68 = vector.load %arg7[%c2_78, %c0_79] : memref<6x64xf32, #tpu.memory_space<vmem>>, vector<4x64xf32>
    %c1_80 = arith.constant 1 : index
    %c2_81 = arith.constant 2 : index
    %c0_82 = arith.constant 0 : index
    %c0_83 = arith.constant 0 : index
    %69 = vector.load %arg2[%c1_80, %c2_81, %c0_82, %c0_83] : memref<2x3x64x64xf32, #tpu.memory_space<vmem>>, vector<1x1x64x64xf32>
    %70 = vector.shape_cast %69 : vector<1x1x64x64xf32> to vector<64x64xf32>
    %cst_84 = arith.constant dense<0.000000e+00> : vector<4x64xf32>
    %71 = tpu.matmul %68, %70, %cst_84 {dimension_numbers = #tpu.dot_dimension_numbers<[1], [0], [0], [1], [0, 0, 1, 1], [], []>} : vector<4x64xf32>, vector<64x64xf32>, vector<4x64xf32> -> vector<4x64xf32>
    %72 = arith.addf %67, %71 : vector<4x64xf32>
    %cst_85 = arith.constant 0.000000e+00 : f32
    %73 = vector.broadcast %cst_85 : f32 to vector<4x64xf32>
    %74 = arith.cmpf ogt, %72, %73 : vector<4x64xf32>
    %cst_86 = arith.constant 2.500000e-01 : f32
    %75 = vector.broadcast %cst_86 : f32 to vector<4x64xf32>
    %76 = arith.mulf %75, %72 : vector<4x64xf32>
    %77 = arith.select %74, %72, %76 : vector<4x64xi1>, vector<4x64xf32>
    %c1_87 = arith.constant 1 : index
    %c0_88 = arith.constant 0 : index
    %78 = vector.load %arg7[%c1_87, %c0_88] : memref<6x64xf32, #tpu.memory_space<vmem>>, vector<4x64xf32>
    tpu.vector_store %arg7[%c1_87, %c0_88], %77 {strides = array<i32>} : memref<6x64xf32, #tpu.memory_space<vmem>>, vector<4x64xf32>,
    %c0_89 = arith.constant 0 : index
    %c0_90 = arith.constant 0 : index
    %79 = vector.load %arg7[%c0_89, %c0_90] : memref<6x64xf32, #tpu.memory_space<vmem>>, vector<4x64xf32>
    %c1_91 = arith.constant 1 : index
    %c0_92 = arith.constant 0 : index
    %c0_93 = arith.constant 0 : index
    %c0_94 = arith.constant 0 : index
    %80 = vector.load %arg3[%c1_91, %c0_92, %c0_93, %c0_94] : memref<2x3x64x64xf32, #tpu.memory_space<vmem>>, vector<1x1x64x64xf32>
    %81 = vector.shape_cast %80 : vector<1x1x64x64xf32> to vector<64x64xf32>
    %cst_95 = arith.constant dense<0.000000e+00> : vector<4x64xf32>
    %82 = tpu.matmul %79, %81, %cst_95 {dimension_numbers = #tpu.dot_dimension_numbers<[1], [0], [0], [1], [0, 0, 1, 1], [], []>} : vector<4x64xf32>, vector<64x64xf32>, vector<4x64xf32> -> vector<4x64xf32>
    %c1_96 = arith.constant 1 : index
    %c0_97 = arith.constant 0 : index
    %83 = vector.load %arg7[%c1_96, %c0_97] : memref<6x64xf32, #tpu.memory_space<vmem>>, vector<4x64xf32>
    %c1_98 = arith.constant 1 : index
    %c1_99 = arith.constant 1 : index
    %c0_100 = arith.constant 0 : index
    %c0_101 = arith.constant 0 : index
    %84 = vector.load %arg3[%c1_98, %c1_99, %c0_100, %c0_101] : memref<2x3x64x64xf32, #tpu.memory_space<vmem>>, vector<1x1x64x64xf32>
    %85 = vector.shape_cast %84 : vector<1x1x64x64xf32> to vector<64x64xf32>
    %cst_102 = arith.constant dense<0.000000e+00> : vector<4x64xf32>
    %86 = tpu.matmul %83, %85, %cst_102 {dimension_numbers = #tpu.dot_dimension_numbers<[1], [0], [0], [1], [0, 0, 1, 1], [], []>} : vector<4x64xf32>, vector<64x64xf32>, vector<4x64xf32> -> vector<4x64xf32>
    %87 = arith.addf %82, %86 : vector<4x64xf32>
    %c2_103 = arith.constant 2 : index
    %c0_104 = arith.constant 0 : index
    %88 = vector.load %arg7[%c2_103, %c0_104] : memref<6x64xf32, #tpu.memory_space<vmem>>, vector<4x64xf32>
    %c1_105 = arith.constant 1 : index
    %c2_106 = arith.constant 2 : index
    %c0_107 = arith.constant 0 : index
    %c0_108 = arith.constant 0 : index
    %89 = vector.load %arg3[%c1_105, %c2_106, %c0_107, %c0_108] : memref<2x3x64x64xf32, #tpu.memory_space<vmem>>, vector<1x1x64x64xf32>
    %90 = vector.shape_cast %89 : vector<1x1x64x64xf32> to vector<64x64xf32>
    %cst_109 = arith.constant dense<0.000000e+00> : vector<4x64xf32>
    %91 = tpu.matmul %88, %90, %cst_109 {dimension_numbers = #tpu.dot_dimension_numbers<[1], [0], [0], [1], [0, 0, 1, 1], [], []>} : vector<4x64xf32>, vector<64x64xf32>, vector<4x64xf32> -> vector<4x64xf32>
    %92 = arith.addf %87, %91 : vector<4x64xf32>
    %cst_110 = arith.constant dense<0.000000e+00> : vector<64xf32>
    %93 = vector.multi_reduction <add>, %92, %cst_110 [0] : vector<4x64xf32> to vector<64xf32>
    %94 = vector.shape_cast %93 : vector<64xf32> to vector<1x64xf32>
    %c1_111 = arith.constant 1 : index
    %c0_112 = arith.constant 0 : index
    %c0_113 = arith.constant 0 : index
    %95 = vector.load %arg4[%c1_111, %c0_112, %c0_113] : memref<2x64x4xf32, #tpu.memory_space<vmem>>, vector<1x64x4xf32>
    %96 = vector.shape_cast %95 : vector<1x64x4xf32> to vector<64x4xf32>
    %cst_114 = arith.constant dense<0.000000e+00> : vector<1x4xf32>
    %97 = tpu.matmul %94, %96, %cst_114 {dimension_numbers = #tpu.dot_dimension_numbers<[1], [0], [0], [1], [0, 0, 1, 1], [], []>} : vector<1x64xf32>, vector<64x4xf32>, vector<1x4xf32> -> vector<1x4xf32>
    %cst_115 = arith.constant 0.000000e+00 : f32
    %98 = vector.broadcast %cst_115 : f32 to vector<1x4xf32>
    %99 = arith.maximumf %97, %98 : vector<1x4xf32>
    %c1_116 = arith.constant 1 : index
    %c0_117 = arith.constant 0 : index
    %c0_118 = arith.constant 0 : index
    %100 = vector.load %arg5[%c1_116, %c0_117, %c0_118] : memref<2x4x64xf32, #tpu.memory_space<vmem>>, vector<1x4x64xf32>
    %101 = vector.shape_cast %100 : vector<1x4x64xf32> to vector<4x64xf32>
    %cst_119 = arith.constant dense<0.000000e+00> : vector<1x64xf32>
    %102 = tpu.matmul %99, %101, %cst_119 {dimension_numbers = #tpu.dot_dimension_numbers<[1], [0], [0], [1], [0, 0, 1, 1], [], []>} : vector<1x4xf32>, vector<4x64xf32>, vector<1x64xf32> -> vector<1x64xf32>
    %103 = arith.negf %102 : vector<1x64xf32>
    %104 = math.exp %103 : vector<1x64xf32>
    %cst_120 = arith.constant 1.000000e+00 : f32
    %105 = vector.broadcast %cst_120 : f32 to vector<1x64xf32>
    %106 = arith.addf %105, %104 : vector<1x64xf32>
    %107 = arith.divf %105, %106 : vector<1x64xf32>
    %108 = vector.broadcast %107 : vector<1x64xf32> to vector<4x64xf32>
    %109 = arith.mulf %92, %108 : vector<4x64xf32>
    %110 = arith.addf %109, %57 : vector<4x64xf32>
    %c0_121 = arith.constant 0 : index
    %c0_122 = arith.constant 0 : index
    %c0_123 = arith.constant 0 : index
    %111 = vector.load %arg6[%c0_121, %c0_122, %c0_123] : memref<1x4x64xf32, #tpu.memory_space<vmem>>, vector<1x4x64xf32>
    %112 = vector.shape_cast %111 : vector<1x4x64xf32> to vector<4x64xf32>
    %113 = vector.shape_cast %110 : vector<4x64xf32> to vector<1x4x64xf32>
    tpu.vector_store %arg6[%c0_121, %c0_122, %c0_123], %113 {strides = array<i32>} : memref<1x4x64xf32, #tpu.memory_space<vmem>>, vector<1x4x64xf32>,
    return
  }
  func.func @transform_0(%arg0: i32) -> (i32, i32, i32) {
    %c0_i32 = arith.constant 0 : i32
    %c0_i32_0 = arith.constant 0 : i32
    %c0_i32_1 = arith.constant 0 : i32
    return %arg0, %c0_i32, %c0_i32_0 : i32, i32, i32
  }
  func.func @transform_1(%arg0: i32) -> (i32, i32, i32, i32) {
    %c0_i32 = arith.constant 0 : i32
    %c0_i32_0 = arith.constant 0 : i32
    %c0_i32_1 = arith.constant 0 : i32
    %c0_i32_2 = arith.constant 0 : i32
    %c0_i32_3 = arith.constant 0 : i32
    return %c0_i32, %c0_i32_0, %c0_i32_1, %c0_i32_2 : i32, i32, i32, i32
  }
  func.func @transform_2(%arg0: i32) -> (i32, i32, i32, i32) {
    %c0_i32 = arith.constant 0 : i32
    %c0_i32_0 = arith.constant 0 : i32
    %c0_i32_1 = arith.constant 0 : i32
    %c0_i32_2 = arith.constant 0 : i32
    %c0_i32_3 = arith.constant 0 : i32
    return %c0_i32, %c0_i32_0, %c0_i32_1, %c0_i32_2 : i32, i32, i32, i32
  }
  func.func @transform_3(%arg0: i32) -> (i32, i32, i32) {
    %c0_i32 = arith.constant 0 : i32
    %c0_i32_0 = arith.constant 0 : i32
    %c0_i32_1 = arith.constant 0 : i32
    %c0_i32_2 = arith.constant 0 : i32
    return %c0_i32, %c0_i32_0, %c0_i32_1 : i32, i32, i32
  }
  func.func @transform_4(%arg0: i32) -> (i32, i32, i32) {
    %c0_i32 = arith.constant 0 : i32
    %c0_i32_0 = arith.constant 0 : i32
    %c0_i32_1 = arith.constant 0 : i32
    %c0_i32_2 = arith.constant 0 : i32
    return %c0_i32, %c0_i32_0, %c0_i32_1 : i32, i32, i32
  }
  func.func @transform_5(%arg0: i32) -> (i32, i32, i32) {
    %c0_i32 = arith.constant 0 : i32
    %c0_i32_0 = arith.constant 0 : i32
    %c0_i32_1 = arith.constant 0 : i32
    return %arg0, %c0_i32, %c0_i32_0 : i32, i32, i32
  }
}

module attributes {stable_mosaic.version = 11 : i64} {
  func.func @kernel(%arg0: i32, %arg1: memref<1x8x96xf32, #tpu.memory_space<vmem>>, %arg2: memref<1x3x96x96xf32, #tpu.memory_space<vmem>>, %arg3: memref<1x3x96x96xf32, #tpu.memory_space<vmem>>, %arg4: memref<1x96x3xf32, #tpu.memory_space<vmem>>, %arg5: memref<1x3x96xf32, #tpu.memory_space<vmem>>, %arg6: memref<1x8x96xf32, #tpu.memory_space<vmem>>, %arg7: memref<10x96xf32, #tpu.memory_space<vmem>>) attributes {dimension_semantics = [#tpu.dimension_semantics<parallel>], iteration_bounds = array<i64: 2>, scalar_prefetch = 0 : i64, scratch_operands = 1 : i64, tpu.core_type = #tpu.core_type<tc>, window_params = [{transform_indices = @transform_0, window_bounds = array<i64: 1, 8, 96>}, {pipeline_mode = #tpu.pipeline_mode<synchronous>, transform_indices = @transform_1, window_bounds = array<i64: 1, 3, 96, 96>}, {pipeline_mode = #tpu.pipeline_mode<synchronous>, transform_indices = @transform_2, window_bounds = array<i64: 1, 3, 96, 96>}, {pipeline_mode = #tpu.pipeline_mode<synchronous>, transform_indices = @transform_3, window_bounds = array<i64: 1, 96, 3>}, {pipeline_mode = #tpu.pipeline_mode<synchronous>, transform_indices = @transform_4, window_bounds = array<i64: 1, 3, 96>}, {transform_indices = @transform_5, window_bounds = array<i64: 1, 8, 96>}]} {
    %cst = arith.constant 0.000000e+00 : f32
    %0 = vector.broadcast %cst : f32 to vector<1x96xf32>
    %c0 = arith.constant 0 : index
    %c0_0 = arith.constant 0 : index
    %1 = vector.load %arg7[%c0, %c0_0] : memref<10x96xf32, #tpu.memory_space<vmem>>, vector<1x96xf32>
    tpu.vector_store %arg7[%c0, %c0_0], %0 {strides = array<i32>} : memref<10x96xf32, #tpu.memory_space<vmem>>, vector<1x96xf32>,
    %c9 = arith.constant 9 : index
    %c0_1 = arith.constant 0 : index
    %2 = vector.load %arg7[%c9, %c0_1] : memref<10x96xf32, #tpu.memory_space<vmem>>, vector<1x96xf32>
    tpu.vector_store %arg7[%c9, %c0_1], %0 {strides = array<i32>} : memref<10x96xf32, #tpu.memory_space<vmem>>, vector<1x96xf32>,
    %c0_2 = arith.constant 0 : index
    %c0_3 = arith.constant 0 : index
    %c0_4 = arith.constant 0 : index
    %3 = vector.load %arg1[%c0_2, %c0_3, %c0_4] : memref<1x8x96xf32, #tpu.memory_space<vmem>>, vector<1x8x96xf32>
    %4 = vector.shape_cast %3 : vector<1x8x96xf32> to vector<8x96xf32>
    %c1 = arith.constant 1 : index
    %c0_5 = arith.constant 0 : index
    %5 = vector.load %arg7[%c1, %c0_5] : memref<10x96xf32, #tpu.memory_space<vmem>>, vector<8x96xf32>
    tpu.vector_store %arg7[%c1, %c0_5], %4 {strides = array<i32>} : memref<10x96xf32, #tpu.memory_space<vmem>>, vector<8x96xf32>,
    %c0_6 = arith.constant 0 : index
    %c0_7 = arith.constant 0 : index
    %6 = vector.load %arg7[%c0_6, %c0_7] : memref<10x96xf32, #tpu.memory_space<vmem>>, vector<8x96xf32>
    %c0_8 = arith.constant 0 : index
    %c0_9 = arith.constant 0 : index
    %c0_10 = arith.constant 0 : index
    %c0_11 = arith.constant 0 : index
    %7 = vector.load %arg2[%c0_8, %c0_9, %c0_10, %c0_11] : memref<1x3x96x96xf32, #tpu.memory_space<vmem>>, vector<1x1x96x96xf32>
    %8 = vector.shape_cast %7 : vector<1x1x96x96xf32> to vector<96x96xf32>
    %cst_12 = arith.constant dense<0.000000e+00> : vector<8x96xf32>
    %9 = tpu.matmul %6, %8, %cst_12 {dimension_numbers = #tpu.dot_dimension_numbers<[1], [0], [0], [1], [0, 0, 1, 1], [], []>} : vector<8x96xf32>, vector<96x96xf32>, vector<8x96xf32> -> vector<8x96xf32>
    %c1_13 = arith.constant 1 : index
    %c0_14 = arith.constant 0 : index
    %10 = vector.load %arg7[%c1_13, %c0_14] : memref<10x96xf32, #tpu.memory_space<vmem>>, vector<8x96xf32>
    %c0_15 = arith.constant 0 : index
    %c1_16 = arith.constant 1 : index
    %c0_17 = arith.constant 0 : index
    %c0_18 = arith.constant 0 : index
    %11 = vector.load %arg2[%c0_15, %c1_16, %c0_17, %c0_18] : memref<1x3x96x96xf32, #tpu.memory_space<vmem>>, vector<1x1x96x96xf32>
    %12 = vector.shape_cast %11 : vector<1x1x96x96xf32> to vector<96x96xf32>
    %cst_19 = arith.constant dense<0.000000e+00> : vector<8x96xf32>
    %13 = tpu.matmul %10, %12, %cst_19 {dimension_numbers = #tpu.dot_dimension_numbers<[1], [0], [0], [1], [0, 0, 1, 1], [], []>} : vector<8x96xf32>, vector<96x96xf32>, vector<8x96xf32> -> vector<8x96xf32>
    %14 = arith.addf %9, %13 : vector<8x96xf32>
    %c2 = arith.constant 2 : index
    %c0_20 = arith.constant 0 : index
    %15 = vector.load %arg7[%c2, %c0_20] : memref<10x96xf32, #tpu.memory_space<vmem>>, vector<8x96xf32>
    %c0_21 = arith.constant 0 : index
    %c2_22 = arith.constant 2 : index
    %c0_23 = arith.constant 0 : index
    %c0_24 = arith.constant 0 : index
    %16 = vector.load %arg2[%c0_21, %c2_22, %c0_23, %c0_24] : memref<1x3x96x96xf32, #tpu.memory_space<vmem>>, vector<1x1x96x96xf32>
    %17 = vector.shape_cast %16 : vector<1x1x96x96xf32> to vector<96x96xf32>
    %cst_25 = arith.constant dense<0.000000e+00> : vector<8x96xf32>
    %18 = tpu.matmul %15, %17, %cst_25 {dimension_numbers = #tpu.dot_dimension_numbers<[1], [0], [0], [1], [0, 0, 1, 1], [], []>} : vector<8x96xf32>, vector<96x96xf32>, vector<8x96xf32> -> vector<8x96xf32>
    %19 = arith.addf %14, %18 : vector<8x96xf32>
    %cst_26 = arith.constant 0.000000e+00 : f32
    %20 = vector.broadcast %cst_26 : f32 to vector<8x96xf32>
    %21 = arith.cmpf ogt, %19, %20 : vector<8x96xf32>
    %cst_27 = arith.constant 2.500000e-01 : f32
    %22 = vector.broadcast %cst_27 : f32 to vector<8x96xf32>
    %23 = arith.mulf %22, %19 : vector<8x96xf32>
    %24 = arith.select %21, %19, %23 : vector<8x96xi1>, vector<8x96xf32>
    %c1_28 = arith.constant 1 : index
    %c0_29 = arith.constant 0 : index
    %25 = vector.load %arg7[%c1_28, %c0_29] : memref<10x96xf32, #tpu.memory_space<vmem>>, vector<8x96xf32>
    tpu.vector_store %arg7[%c1_28, %c0_29], %24 {strides = array<i32>} : memref<10x96xf32, #tpu.memory_space<vmem>>, vector<8x96xf32>,
    %c0_30 = arith.constant 0 : index
    %c0_31 = arith.constant 0 : index
    %26 = vector.load %arg7[%c0_30, %c0_31] : memref<10x96xf32, #tpu.memory_space<vmem>>, vector<8x96xf32>
    %c0_32 = arith.constant 0 : index
    %c0_33 = arith.constant 0 : index
    %c0_34 = arith.constant 0 : index
    %c0_35 = arith.constant 0 : index
    %27 = vector.load %arg3[%c0_32, %c0_33, %c0_34, %c0_35] : memref<1x3x96x96xf32, #tpu.memory_space<vmem>>, vector<1x1x96x96xf32>
    %28 = vector.shape_cast %27 : vector<1x1x96x96xf32> to vector<96x96xf32>
    %cst_36 = arith.constant dense<0.000000e+00> : vector<8x96xf32>
    %29 = tpu.matmul %26, %28, %cst_36 {dimension_numbers = #tpu.dot_dimension_numbers<[1], [0], [0], [1], [0, 0, 1, 1], [], []>} : vector<8x96xf32>, vector<96x96xf32>, vector<8x96xf32> -> vector<8x96xf32>
    %c1_37 = arith.constant 1 : index
    %c0_38 = arith.constant 0 : index
    %30 = vector.load %arg7[%c1_37, %c0_38] : memref<10x96xf32, #tpu.memory_space<vmem>>, vector<8x96xf32>
    %c0_39 = arith.constant 0 : index
    %c1_40 = arith.constant 1 : index
    %c0_41 = arith.constant 0 : index
    %c0_42 = arith.constant 0 : index
    %31 = vector.load %arg3[%c0_39, %c1_40, %c0_41, %c0_42] : memref<1x3x96x96xf32, #tpu.memory_space<vmem>>, vector<1x1x96x96xf32>
    %32 = vector.shape_cast %31 : vector<1x1x96x96xf32> to vector<96x96xf32>
    %cst_43 = arith.constant dense<0.000000e+00> : vector<8x96xf32>
    %33 = tpu.matmul %30, %32, %cst_43 {dimension_numbers = #tpu.dot_dimension_numbers<[1], [0], [0], [1], [0, 0, 1, 1], [], []>} : vector<8x96xf32>, vector<96x96xf32>, vector<8x96xf32> -> vector<8x96xf32>
    %34 = arith.addf %29, %33 : vector<8x96xf32>
    %c2_44 = arith.constant 2 : index
    %c0_45 = arith.constant 0 : index
    %35 = vector.load %arg7[%c2_44, %c0_45] : memref<10x96xf32, #tpu.memory_space<vmem>>, vector<8x96xf32>
    %c0_46 = arith.constant 0 : index
    %c2_47 = arith.constant 2 : index
    %c0_48 = arith.constant 0 : index
    %c0_49 = arith.constant 0 : index
    %36 = vector.load %arg3[%c0_46, %c2_47, %c0_48, %c0_49] : memref<1x3x96x96xf32, #tpu.memory_space<vmem>>, vector<1x1x96x96xf32>
    %37 = vector.shape_cast %36 : vector<1x1x96x96xf32> to vector<96x96xf32>
    %cst_50 = arith.constant dense<0.000000e+00> : vector<8x96xf32>
    %38 = tpu.matmul %35, %37, %cst_50 {dimension_numbers = #tpu.dot_dimension_numbers<[1], [0], [0], [1], [0, 0, 1, 1], [], []>} : vector<8x96xf32>, vector<96x96xf32>, vector<8x96xf32> -> vector<8x96xf32>
    %39 = arith.addf %34, %38 : vector<8x96xf32>
    %cst_51 = arith.constant dense<0.000000e+00> : vector<96xf32>
    %40 = vector.multi_reduction <add>, %39, %cst_51 [0] : vector<8x96xf32> to vector<96xf32>
    %41 = vector.shape_cast %40 : vector<96xf32> to vector<1x96xf32>
    %c0_52 = arith.constant 0 : index
    %c0_53 = arith.constant 0 : index
    %c0_54 = arith.constant 0 : index
    %42 = vector.load %arg4[%c0_52, %c0_53, %c0_54] : memref<1x96x3xf32, #tpu.memory_space<vmem>>, vector<1x96x3xf32>
    %43 = vector.shape_cast %42 : vector<1x96x3xf32> to vector<96x3xf32>
    %cst_55 = arith.constant dense<0.000000e+00> : vector<1x3xf32>
    %44 = tpu.matmul %41, %43, %cst_55 {dimension_numbers = #tpu.dot_dimension_numbers<[1], [0], [0], [1], [0, 0, 1, 1], [], []>} : vector<1x96xf32>, vector<96x3xf32>, vector<1x3xf32> -> vector<1x3xf32>
    %cst_56 = arith.constant 0.000000e+00 : f32
    %45 = vector.broadcast %cst_56 : f32 to vector<1x3xf32>
    %46 = arith.maximumf %44, %45 : vector<1x3xf32>
    %c0_57 = arith.constant 0 : index
    %c0_58 = arith.constant 0 : index
    %c0_59 = arith.constant 0 : index
    %47 = vector.load %arg5[%c0_57, %c0_58, %c0_59] : memref<1x3x96xf32, #tpu.memory_space<vmem>>, vector<1x3x96xf32>
    %48 = vector.shape_cast %47 : vector<1x3x96xf32> to vector<3x96xf32>
    %cst_60 = arith.constant dense<0.000000e+00> : vector<1x96xf32>
    %49 = tpu.matmul %46, %48, %cst_60 {dimension_numbers = #tpu.dot_dimension_numbers<[1], [0], [0], [1], [0, 0, 1, 1], [], []>} : vector<1x3xf32>, vector<3x96xf32>, vector<1x96xf32> -> vector<1x96xf32>
    %50 = arith.negf %49 : vector<1x96xf32>
    %51 = math.exp %50 : vector<1x96xf32>
    %cst_61 = arith.constant 1.000000e+00 : f32
    %52 = vector.broadcast %cst_61 : f32 to vector<1x96xf32>
    %53 = arith.addf %52, %51 : vector<1x96xf32>
    %54 = arith.divf %52, %53 : vector<1x96xf32>
    %55 = vector.broadcast %54 : vector<1x96xf32> to vector<8x96xf32>
    %56 = arith.mulf %39, %55 : vector<8x96xf32>
    %57 = arith.addf %56, %4 : vector<8x96xf32>
    %c0_62 = arith.constant 0 : index
    %c0_63 = arith.constant 0 : index
    %c0_64 = arith.constant 0 : index
    %58 = vector.load %arg6[%c0_62, %c0_63, %c0_64] : memref<1x8x96xf32, #tpu.memory_space<vmem>>, vector<1x8x96xf32>
    %59 = vector.shape_cast %58 : vector<1x8x96xf32> to vector<8x96xf32>
    %60 = vector.shape_cast %57 : vector<8x96xf32> to vector<1x8x96xf32>
    tpu.vector_store %arg6[%c0_62, %c0_63, %c0_64], %60 {strides = array<i32>} : memref<1x8x96xf32, #tpu.memory_space<vmem>>, vector<1x8x96xf32>,
    return
  }
  func.func @transform_0(%arg0: i32) -> (i32, i32, i32) {
    %c0_i32 = arith.constant 0 : i32
    %c0_i32_0 = arith.constant 0 : i32
    %c0_i32_1 = arith.constant 0 : i32
    return %arg0, %c0_i32, %c0_i32_0 : i32, i32, i32
  }
  func.func @transform_1(%arg0: i32) -> (i32, i32, i32, i32) {
    %c0_i32 = arith.constant 0 : i32
    %c0_i32_0 = arith.constant 0 : i32
    %c0_i32_1 = arith.constant 0 : i32
    %c0_i32_2 = arith.constant 0 : i32
    %c0_i32_3 = arith.constant 0 : i32
    return %c0_i32, %c0_i32_0, %c0_i32_1, %c0_i32_2 : i32, i32, i32, i32
  }
  func.func @transform_2(%arg0: i32) -> (i32, i32, i32, i32) {
    %c0_i32 = arith.constant 0 : i32
    %c0_i32_0 = arith.constant 0 : i32
    %c0_i32_1 = arith.constant 0 : i32
    %c0_i32_2 = arith.constant 0 : i32
    %c0_i32_3 = arith.constant 0 : i32
    return %c0_i32, %c0_i32_0, %c0_i32_1, %c0_i32_2 : i32, i32, i32, i32
  }
  func.func @transform_3(%arg0: i32) -> (i32, i32, i32) {
    %c0_i32 = arith.constant 0 : i32
    %c0_i32_0 = arith.constant 0 : i32
    %c0_i32_1 = arith.constant 0 : i32
    %c0_i32_2 = arith.constant 0 : i32
    return %c0_i32, %c0_i32_0, %c0_i32_1 : i32, i32, i32
  }
  func.func @transform_4(%arg0: i32) -> (i32, i32, i32) {
    %c0_i32 = arith.constant 0 : i32
    %c0_i32_0 = arith.constant 0 : i32
    %c0_i32_1 = arith.constant 0 : i32
    %c0_i32_2 = arith.constant 0 : i32
    return %c0_i32, %c0_i32_0, %c0_i32_1 : i32, i32, i32
  }
  func.func @transform_5(%arg0: i32) -> (i32, i32, i32) {
    %c0_i32 = arith.constant 0 : i32
    %c0_i32_0 = arith.constant 0 : i32
    %c0_i32_1 = arith.constant 0 : i32
    return %arg0, %c0_i32, %c0_i32_0 : i32, i32, i32
  }
}

module attributes {stable_mosaic.version = 11 : i64} {
  func.func @_skipup_kernel(%arg0: i32, %arg1: memref<1x4x64xf32, #tpu.memory_space<vmem>>, %arg2: memref<1x8x96xf32, #tpu.memory_space<vmem>>, %arg3: memref<8x4xf32, #tpu.memory_space<vmem>>, %arg4: memref<64x96xf32, #tpu.memory_space<vmem>>, %arg5: memref<1x8x96xf32, #tpu.memory_space<vmem>>) attributes {dimension_semantics = [#tpu.dimension_semantics<parallel>], iteration_bounds = array<i64: 2>, scalar_prefetch = 0 : i64, scratch_operands = 0 : i64, tpu.core_type = #tpu.core_type<tc>, window_params = [{transform_indices = @transform_0, window_bounds = array<i64: 1, 4, 64>}, {transform_indices = @transform_1, window_bounds = array<i64: 1, 8, 96>}, {pipeline_mode = #tpu.pipeline_mode<synchronous>, transform_indices = @transform_2, window_bounds = array<i64: 8, 4>}, {pipeline_mode = #tpu.pipeline_mode<synchronous>, transform_indices = @transform_3, window_bounds = array<i64: 64, 96>}, {transform_indices = @transform_4, window_bounds = array<i64: 1, 8, 96>}]} {
    %c0 = arith.constant 0 : index
    %c0_0 = arith.constant 0 : index
    %0 = vector.load %arg3[%c0, %c0_0] : memref<8x4xf32, #tpu.memory_space<vmem>>, vector<8x4xf32>
    %c0_1 = arith.constant 0 : index
    %c0_2 = arith.constant 0 : index
    %c0_3 = arith.constant 0 : index
    %1 = vector.load %arg1[%c0_1, %c0_2, %c0_3] : memref<1x4x64xf32, #tpu.memory_space<vmem>>, vector<1x4x64xf32>
    %2 = vector.shape_cast %1 : vector<1x4x64xf32> to vector<4x64xf32>
    %cst = arith.constant dense<0.000000e+00> : vector<8x64xf32>
    %3 = tpu.matmul %0, %2, %cst {dimension_numbers = #tpu.dot_dimension_numbers<[1], [0], [0], [1], [0, 0, 1, 1], [], []>} : vector<8x4xf32>, vector<4x64xf32>, vector<8x64xf32> -> vector<8x64xf32>
    %c0_4 = arith.constant 0 : index
    %c0_5 = arith.constant 0 : index
    %4 = vector.load %arg4[%c0_4, %c0_5] : memref<64x96xf32, #tpu.memory_space<vmem>>, vector<64x96xf32>
    %cst_6 = arith.constant dense<0.000000e+00> : vector<8x96xf32>
    %5 = tpu.matmul %3, %4, %cst_6 {dimension_numbers = #tpu.dot_dimension_numbers<[1], [0], [0], [1], [0, 0, 1, 1], [], []>} : vector<8x64xf32>, vector<64x96xf32>, vector<8x96xf32> -> vector<8x96xf32>
    %c0_7 = arith.constant 0 : index
    %c0_8 = arith.constant 0 : index
    %c0_9 = arith.constant 0 : index
    %6 = vector.load %arg2[%c0_7, %c0_8, %c0_9] : memref<1x8x96xf32, #tpu.memory_space<vmem>>, vector<1x8x96xf32>
    %7 = vector.shape_cast %6 : vector<1x8x96xf32> to vector<8x96xf32>
    %8 = arith.addf %5, %7 : vector<8x96xf32>
    %c0_10 = arith.constant 0 : index
    %c0_11 = arith.constant 0 : index
    %c0_12 = arith.constant 0 : index
    %9 = vector.load %arg5[%c0_10, %c0_11, %c0_12] : memref<1x8x96xf32, #tpu.memory_space<vmem>>, vector<1x8x96xf32>
    %10 = vector.shape_cast %9 : vector<1x8x96xf32> to vector<8x96xf32>
    %11 = vector.shape_cast %8 : vector<8x96xf32> to vector<1x8x96xf32>
    tpu.vector_store %arg5[%c0_10, %c0_11, %c0_12], %11 {strides = array<i32>} : memref<1x8x96xf32, #tpu.memory_space<vmem>>, vector<1x8x96xf32>,
    return
  }
  func.func @transform_0(%arg0: i32) -> (i32, i32, i32) {
    %c0_i32 = arith.constant 0 : i32
    %c0_i32_0 = arith.constant 0 : i32
    %c0_i32_1 = arith.constant 0 : i32
    return %arg0, %c0_i32, %c0_i32_0 : i32, i32, i32
  }
  func.func @transform_1(%arg0: i32) -> (i32, i32, i32) {
    %c0_i32 = arith.constant 0 : i32
    %c0_i32_0 = arith.constant 0 : i32
    %c0_i32_1 = arith.constant 0 : i32
    return %arg0, %c0_i32, %c0_i32_0 : i32, i32, i32
  }
  func.func @transform_2(%arg0: i32) -> (i32, i32) {
    %c0_i32 = arith.constant 0 : i32
    %c0_i32_0 = arith.constant 0 : i32
    %c0_i32_1 = arith.constant 0 : i32
    return %c0_i32, %c0_i32_0 : i32, i32
  }
  func.func @transform_3(%arg0: i32) -> (i32, i32) {
    %c0_i32 = arith.constant 0 : i32
    %c0_i32_0 = arith.constant 0 : i32
    %c0_i32_1 = arith.constant 0 : i32
    return %c0_i32, %c0_i32_0 : i32, i32
  }
  func.func @transform_4(%arg0: i32) -> (i32, i32, i32) {
    %c0_i32 = arith.constant 0 : i32
    %c0_i32_0 = arith.constant 0 : i32
    %c0_i32_1 = arith.constant 0 : i32
    return %arg0, %c0_i32, %c0_i32_0 : i32, i32, i32
  }
}

module attributes {stable_mosaic.version = 11 : i64} {
  func.func @kernel(%arg0: i32, %arg1: memref<1x8x96xf32, #tpu.memory_space<vmem>>, %arg2: memref<2x3x96x96xf32, #tpu.memory_space<vmem>>, %arg3: memref<2x3x96x96xf32, #tpu.memory_space<vmem>>, %arg4: memref<2x96x3xf32, #tpu.memory_space<vmem>>, %arg5: memref<2x3x96xf32, #tpu.memory_space<vmem>>, %arg6: memref<1x8x96xf32, #tpu.memory_space<vmem>>, %arg7: memref<10x96xf32, #tpu.memory_space<vmem>>) attributes {dimension_semantics = [#tpu.dimension_semantics<parallel>], iteration_bounds = array<i64: 2>, scalar_prefetch = 0 : i64, scratch_operands = 1 : i64, tpu.core_type = #tpu.core_type<tc>, window_params = [{transform_indices = @transform_0, window_bounds = array<i64: 1, 8, 96>}, {pipeline_mode = #tpu.pipeline_mode<synchronous>, transform_indices = @transform_1, window_bounds = array<i64: 2, 3, 96, 96>}, {pipeline_mode = #tpu.pipeline_mode<synchronous>, transform_indices = @transform_2, window_bounds = array<i64: 2, 3, 96, 96>}, {pipeline_mode = #tpu.pipeline_mode<synchronous>, transform_indices = @transform_3, window_bounds = array<i64: 2, 96, 3>}, {pipeline_mode = #tpu.pipeline_mode<synchronous>, transform_indices = @transform_4, window_bounds = array<i64: 2, 3, 96>}, {transform_indices = @transform_5, window_bounds = array<i64: 1, 8, 96>}]} {
    %cst = arith.constant 0.000000e+00 : f32
    %0 = vector.broadcast %cst : f32 to vector<1x96xf32>
    %c0 = arith.constant 0 : index
    %c0_0 = arith.constant 0 : index
    %1 = vector.load %arg7[%c0, %c0_0] : memref<10x96xf32, #tpu.memory_space<vmem>>, vector<1x96xf32>
    tpu.vector_store %arg7[%c0, %c0_0], %0 {strides = array<i32>} : memref<10x96xf32, #tpu.memory_space<vmem>>, vector<1x96xf32>,
    %c9 = arith.constant 9 : index
    %c0_1 = arith.constant 0 : index
    %2 = vector.load %arg7[%c9, %c0_1] : memref<10x96xf32, #tpu.memory_space<vmem>>, vector<1x96xf32>
    tpu.vector_store %arg7[%c9, %c0_1], %0 {strides = array<i32>} : memref<10x96xf32, #tpu.memory_space<vmem>>, vector<1x96xf32>,
    %c0_2 = arith.constant 0 : index
    %c0_3 = arith.constant 0 : index
    %c0_4 = arith.constant 0 : index
    %3 = vector.load %arg1[%c0_2, %c0_3, %c0_4] : memref<1x8x96xf32, #tpu.memory_space<vmem>>, vector<1x8x96xf32>
    %4 = vector.shape_cast %3 : vector<1x8x96xf32> to vector<8x96xf32>
    %c1 = arith.constant 1 : index
    %c0_5 = arith.constant 0 : index
    %5 = vector.load %arg7[%c1, %c0_5] : memref<10x96xf32, #tpu.memory_space<vmem>>, vector<8x96xf32>
    tpu.vector_store %arg7[%c1, %c0_5], %4 {strides = array<i32>} : memref<10x96xf32, #tpu.memory_space<vmem>>, vector<8x96xf32>,
    %c0_6 = arith.constant 0 : index
    %c0_7 = arith.constant 0 : index
    %6 = vector.load %arg7[%c0_6, %c0_7] : memref<10x96xf32, #tpu.memory_space<vmem>>, vector<8x96xf32>
    %c0_8 = arith.constant 0 : index
    %c0_9 = arith.constant 0 : index
    %c0_10 = arith.constant 0 : index
    %c0_11 = arith.constant 0 : index
    %7 = vector.load %arg2[%c0_8, %c0_9, %c0_10, %c0_11] : memref<2x3x96x96xf32, #tpu.memory_space<vmem>>, vector<1x1x96x96xf32>
    %8 = vector.shape_cast %7 : vector<1x1x96x96xf32> to vector<96x96xf32>
    %cst_12 = arith.constant dense<0.000000e+00> : vector<8x96xf32>
    %9 = tpu.matmul %6, %8, %cst_12 {dimension_numbers = #tpu.dot_dimension_numbers<[1], [0], [0], [1], [0, 0, 1, 1], [], []>} : vector<8x96xf32>, vector<96x96xf32>, vector<8x96xf32> -> vector<8x96xf32>
    %c1_13 = arith.constant 1 : index
    %c0_14 = arith.constant 0 : index
    %10 = vector.load %arg7[%c1_13, %c0_14] : memref<10x96xf32, #tpu.memory_space<vmem>>, vector<8x96xf32>
    %c0_15 = arith.constant 0 : index
    %c1_16 = arith.constant 1 : index
    %c0_17 = arith.constant 0 : index
    %c0_18 = arith.constant 0 : index
    %11 = vector.load %arg2[%c0_15, %c1_16, %c0_17, %c0_18] : memref<2x3x96x96xf32, #tpu.memory_space<vmem>>, vector<1x1x96x96xf32>
    %12 = vector.shape_cast %11 : vector<1x1x96x96xf32> to vector<96x96xf32>
    %cst_19 = arith.constant dense<0.000000e+00> : vector<8x96xf32>
    %13 = tpu.matmul %10, %12, %cst_19 {dimension_numbers = #tpu.dot_dimension_numbers<[1], [0], [0], [1], [0, 0, 1, 1], [], []>} : vector<8x96xf32>, vector<96x96xf32>, vector<8x96xf32> -> vector<8x96xf32>
    %14 = arith.addf %9, %13 : vector<8x96xf32>
    %c2 = arith.constant 2 : index
    %c0_20 = arith.constant 0 : index
    %15 = vector.load %arg7[%c2, %c0_20] : memref<10x96xf32, #tpu.memory_space<vmem>>, vector<8x96xf32>
    %c0_21 = arith.constant 0 : index
    %c2_22 = arith.constant 2 : index
    %c0_23 = arith.constant 0 : index
    %c0_24 = arith.constant 0 : index
    %16 = vector.load %arg2[%c0_21, %c2_22, %c0_23, %c0_24] : memref<2x3x96x96xf32, #tpu.memory_space<vmem>>, vector<1x1x96x96xf32>
    %17 = vector.shape_cast %16 : vector<1x1x96x96xf32> to vector<96x96xf32>
    %cst_25 = arith.constant dense<0.000000e+00> : vector<8x96xf32>
    %18 = tpu.matmul %15, %17, %cst_25 {dimension_numbers = #tpu.dot_dimension_numbers<[1], [0], [0], [1], [0, 0, 1, 1], [], []>} : vector<8x96xf32>, vector<96x96xf32>, vector<8x96xf32> -> vector<8x96xf32>
    %19 = arith.addf %14, %18 : vector<8x96xf32>
    %cst_26 = arith.constant 0.000000e+00 : f32
    %20 = vector.broadcast %cst_26 : f32 to vector<8x96xf32>
    %21 = arith.cmpf ogt, %19, %20 : vector<8x96xf32>
    %cst_27 = arith.constant 2.500000e-01 : f32
    %22 = vector.broadcast %cst_27 : f32 to vector<8x96xf32>
    %23 = arith.mulf %22, %19 : vector<8x96xf32>
    %24 = arith.select %21, %19, %23 : vector<8x96xi1>, vector<8x96xf32>
    %c1_28 = arith.constant 1 : index
    %c0_29 = arith.constant 0 : index
    %25 = vector.load %arg7[%c1_28, %c0_29] : memref<10x96xf32, #tpu.memory_space<vmem>>, vector<8x96xf32>
    tpu.vector_store %arg7[%c1_28, %c0_29], %24 {strides = array<i32>} : memref<10x96xf32, #tpu.memory_space<vmem>>, vector<8x96xf32>,
    %c0_30 = arith.constant 0 : index
    %c0_31 = arith.constant 0 : index
    %26 = vector.load %arg7[%c0_30, %c0_31] : memref<10x96xf32, #tpu.memory_space<vmem>>, vector<8x96xf32>
    %c0_32 = arith.constant 0 : index
    %c0_33 = arith.constant 0 : index
    %c0_34 = arith.constant 0 : index
    %c0_35 = arith.constant 0 : index
    %27 = vector.load %arg3[%c0_32, %c0_33, %c0_34, %c0_35] : memref<2x3x96x96xf32, #tpu.memory_space<vmem>>, vector<1x1x96x96xf32>
    %28 = vector.shape_cast %27 : vector<1x1x96x96xf32> to vector<96x96xf32>
    %cst_36 = arith.constant dense<0.000000e+00> : vector<8x96xf32>
    %29 = tpu.matmul %26, %28, %cst_36 {dimension_numbers = #tpu.dot_dimension_numbers<[1], [0], [0], [1], [0, 0, 1, 1], [], []>} : vector<8x96xf32>, vector<96x96xf32>, vector<8x96xf32> -> vector<8x96xf32>
    %c1_37 = arith.constant 1 : index
    %c0_38 = arith.constant 0 : index
    %30 = vector.load %arg7[%c1_37, %c0_38] : memref<10x96xf32, #tpu.memory_space<vmem>>, vector<8x96xf32>
    %c0_39 = arith.constant 0 : index
    %c1_40 = arith.constant 1 : index
    %c0_41 = arith.constant 0 : index
    %c0_42 = arith.constant 0 : index
    %31 = vector.load %arg3[%c0_39, %c1_40, %c0_41, %c0_42] : memref<2x3x96x96xf32, #tpu.memory_space<vmem>>, vector<1x1x96x96xf32>
    %32 = vector.shape_cast %31 : vector<1x1x96x96xf32> to vector<96x96xf32>
    %cst_43 = arith.constant dense<0.000000e+00> : vector<8x96xf32>
    %33 = tpu.matmul %30, %32, %cst_43 {dimension_numbers = #tpu.dot_dimension_numbers<[1], [0], [0], [1], [0, 0, 1, 1], [], []>} : vector<8x96xf32>, vector<96x96xf32>, vector<8x96xf32> -> vector<8x96xf32>
    %34 = arith.addf %29, %33 : vector<8x96xf32>
    %c2_44 = arith.constant 2 : index
    %c0_45 = arith.constant 0 : index
    %35 = vector.load %arg7[%c2_44, %c0_45] : memref<10x96xf32, #tpu.memory_space<vmem>>, vector<8x96xf32>
    %c0_46 = arith.constant 0 : index
    %c2_47 = arith.constant 2 : index
    %c0_48 = arith.constant 0 : index
    %c0_49 = arith.constant 0 : index
    %36 = vector.load %arg3[%c0_46, %c2_47, %c0_48, %c0_49] : memref<2x3x96x96xf32, #tpu.memory_space<vmem>>, vector<1x1x96x96xf32>
    %37 = vector.shape_cast %36 : vector<1x1x96x96xf32> to vector<96x96xf32>
    %cst_50 = arith.constant dense<0.000000e+00> : vector<8x96xf32>
    %38 = tpu.matmul %35, %37, %cst_50 {dimension_numbers = #tpu.dot_dimension_numbers<[1], [0], [0], [1], [0, 0, 1, 1], [], []>} : vector<8x96xf32>, vector<96x96xf32>, vector<8x96xf32> -> vector<8x96xf32>
    %39 = arith.addf %34, %38 : vector<8x96xf32>
    %cst_51 = arith.constant dense<0.000000e+00> : vector<96xf32>
    %40 = vector.multi_reduction <add>, %39, %cst_51 [0] : vector<8x96xf32> to vector<96xf32>
    %41 = vector.shape_cast %40 : vector<96xf32> to vector<1x96xf32>
    %c0_52 = arith.constant 0 : index
    %c0_53 = arith.constant 0 : index
    %c0_54 = arith.constant 0 : index
    %42 = vector.load %arg4[%c0_52, %c0_53, %c0_54] : memref<2x96x3xf32, #tpu.memory_space<vmem>>, vector<1x96x3xf32>
    %43 = vector.shape_cast %42 : vector<1x96x3xf32> to vector<96x3xf32>
    %cst_55 = arith.constant dense<0.000000e+00> : vector<1x3xf32>
    %44 = tpu.matmul %41, %43, %cst_55 {dimension_numbers = #tpu.dot_dimension_numbers<[1], [0], [0], [1], [0, 0, 1, 1], [], []>} : vector<1x96xf32>, vector<96x3xf32>, vector<1x3xf32> -> vector<1x3xf32>
    %cst_56 = arith.constant 0.000000e+00 : f32
    %45 = vector.broadcast %cst_56 : f32 to vector<1x3xf32>
    %46 = arith.maximumf %44, %45 : vector<1x3xf32>
    %c0_57 = arith.constant 0 : index
    %c0_58 = arith.constant 0 : index
    %c0_59 = arith.constant 0 : index
    %47 = vector.load %arg5[%c0_57, %c0_58, %c0_59] : memref<2x3x96xf32, #tpu.memory_space<vmem>>, vector<1x3x96xf32>
    %48 = vector.shape_cast %47 : vector<1x3x96xf32> to vector<3x96xf32>
    %cst_60 = arith.constant dense<0.000000e+00> : vector<1x96xf32>
    %49 = tpu.matmul %46, %48, %cst_60 {dimension_numbers = #tpu.dot_dimension_numbers<[1], [0], [0], [1], [0, 0, 1, 1], [], []>} : vector<1x3xf32>, vector<3x96xf32>, vector<1x96xf32> -> vector<1x96xf32>
    %50 = arith.negf %49 : vector<1x96xf32>
    %51 = math.exp %50 : vector<1x96xf32>
    %cst_61 = arith.constant 1.000000e+00 : f32
    %52 = vector.broadcast %cst_61 : f32 to vector<1x96xf32>
    %53 = arith.addf %52, %51 : vector<1x96xf32>
    %54 = arith.divf %52, %53 : vector<1x96xf32>
    %55 = vector.broadcast %54 : vector<1x96xf32> to vector<8x96xf32>
    %56 = arith.mulf %39, %55 : vector<8x96xf32>
    %57 = arith.addf %56, %4 : vector<8x96xf32>
    %c1_62 = arith.constant 1 : index
    %c0_63 = arith.constant 0 : index
    %58 = vector.load %arg7[%c1_62, %c0_63] : memref<10x96xf32, #tpu.memory_space<vmem>>, vector<8x96xf32>
    tpu.vector_store %arg7[%c1_62, %c0_63], %57 {strides = array<i32>} : memref<10x96xf32, #tpu.memory_space<vmem>>, vector<8x96xf32>,
    %c0_64 = arith.constant 0 : index
    %c0_65 = arith.constant 0 : index
    %59 = vector.load %arg7[%c0_64, %c0_65] : memref<10x96xf32, #tpu.memory_space<vmem>>, vector<8x96xf32>
    %c1_66 = arith.constant 1 : index
    %c0_67 = arith.constant 0 : index
    %c0_68 = arith.constant 0 : index
    %c0_69 = arith.constant 0 : index
    %60 = vector.load %arg2[%c1_66, %c0_67, %c0_68, %c0_69] : memref<2x3x96x96xf32, #tpu.memory_space<vmem>>, vector<1x1x96x96xf32>
    %61 = vector.shape_cast %60 : vector<1x1x96x96xf32> to vector<96x96xf32>
    %cst_70 = arith.constant dense<0.000000e+00> : vector<8x96xf32>
    %62 = tpu.matmul %59, %61, %cst_70 {dimension_numbers = #tpu.dot_dimension_numbers<[1], [0], [0], [1], [0, 0, 1, 1], [], []>} : vector<8x96xf32>, vector<96x96xf32>, vector<8x96xf32> -> vector<8x96xf32>
    %c1_71 = arith.constant 1 : index
    %c0_72 = arith.constant 0 : index
    %63 = vector.load %arg7[%c1_71, %c0_72] : memref<10x96xf32, #tpu.memory_space<vmem>>, vector<8x96xf32>
    %c1_73 = arith.constant 1 : index
    %c1_74 = arith.constant 1 : index
    %c0_75 = arith.constant 0 : index
    %c0_76 = arith.constant 0 : index
    %64 = vector.load %arg2[%c1_73, %c1_74, %c0_75, %c0_76] : memref<2x3x96x96xf32, #tpu.memory_space<vmem>>, vector<1x1x96x96xf32>
    %65 = vector.shape_cast %64 : vector<1x1x96x96xf32> to vector<96x96xf32>
    %cst_77 = arith.constant dense<0.000000e+00> : vector<8x96xf32>
    %66 = tpu.matmul %63, %65, %cst_77 {dimension_numbers = #tpu.dot_dimension_numbers<[1], [0], [0], [1], [0, 0, 1, 1], [], []>} : vector<8x96xf32>, vector<96x96xf32>, vector<8x96xf32> -> vector<8x96xf32>
    %67 = arith.addf %62, %66 : vector<8x96xf32>
    %c2_78 = arith.constant 2 : index
    %c0_79 = arith.constant 0 : index
    %68 = vector.load %arg7[%c2_78, %c0_79] : memref<10x96xf32, #tpu.memory_space<vmem>>, vector<8x96xf32>
    %c1_80 = arith.constant 1 : index
    %c2_81 = arith.constant 2 : index
    %c0_82 = arith.constant 0 : index
    %c0_83 = arith.constant 0 : index
    %69 = vector.load %arg2[%c1_80, %c2_81, %c0_82, %c0_83] : memref<2x3x96x96xf32, #tpu.memory_space<vmem>>, vector<1x1x96x96xf32>
    %70 = vector.shape_cast %69 : vector<1x1x96x96xf32> to vector<96x96xf32>
    %cst_84 = arith.constant dense<0.000000e+00> : vector<8x96xf32>
    %71 = tpu.matmul %68, %70, %cst_84 {dimension_numbers = #tpu.dot_dimension_numbers<[1], [0], [0], [1], [0, 0, 1, 1], [], []>} : vector<8x96xf32>, vector<96x96xf32>, vector<8x96xf32> -> vector<8x96xf32>
    %72 = arith.addf %67, %71 : vector<8x96xf32>
    %cst_85 = arith.constant 0.000000e+00 : f32
    %73 = vector.broadcast %cst_85 : f32 to vector<8x96xf32>
    %74 = arith.cmpf ogt, %72, %73 : vector<8x96xf32>
    %cst_86 = arith.constant 2.500000e-01 : f32
    %75 = vector.broadcast %cst_86 : f32 to vector<8x96xf32>
    %76 = arith.mulf %75, %72 : vector<8x96xf32>
    %77 = arith.select %74, %72, %76 : vector<8x96xi1>, vector<8x96xf32>
    %c1_87 = arith.constant 1 : index
    %c0_88 = arith.constant 0 : index
    %78 = vector.load %arg7[%c1_87, %c0_88] : memref<10x96xf32, #tpu.memory_space<vmem>>, vector<8x96xf32>
    tpu.vector_store %arg7[%c1_87, %c0_88], %77 {strides = array<i32>} : memref<10x96xf32, #tpu.memory_space<vmem>>, vector<8x96xf32>,
    %c0_89 = arith.constant 0 : index
    %c0_90 = arith.constant 0 : index
    %79 = vector.load %arg7[%c0_89, %c0_90] : memref<10x96xf32, #tpu.memory_space<vmem>>, vector<8x96xf32>
    %c1_91 = arith.constant 1 : index
    %c0_92 = arith.constant 0 : index
    %c0_93 = arith.constant 0 : index
    %c0_94 = arith.constant 0 : index
    %80 = vector.load %arg3[%c1_91, %c0_92, %c0_93, %c0_94] : memref<2x3x96x96xf32, #tpu.memory_space<vmem>>, vector<1x1x96x96xf32>
    %81 = vector.shape_cast %80 : vector<1x1x96x96xf32> to vector<96x96xf32>
    %cst_95 = arith.constant dense<0.000000e+00> : vector<8x96xf32>
    %82 = tpu.matmul %79, %81, %cst_95 {dimension_numbers = #tpu.dot_dimension_numbers<[1], [0], [0], [1], [0, 0, 1, 1], [], []>} : vector<8x96xf32>, vector<96x96xf32>, vector<8x96xf32> -> vector<8x96xf32>
    %c1_96 = arith.constant 1 : index
    %c0_97 = arith.constant 0 : index
    %83 = vector.load %arg7[%c1_96, %c0_97] : memref<10x96xf32, #tpu.memory_space<vmem>>, vector<8x96xf32>
    %c1_98 = arith.constant 1 : index
    %c1_99 = arith.constant 1 : index
    %c0_100 = arith.constant 0 : index
    %c0_101 = arith.constant 0 : index
    %84 = vector.load %arg3[%c1_98, %c1_99, %c0_100, %c0_101] : memref<2x3x96x96xf32, #tpu.memory_space<vmem>>, vector<1x1x96x96xf32>
    %85 = vector.shape_cast %84 : vector<1x1x96x96xf32> to vector<96x96xf32>
    %cst_102 = arith.constant dense<0.000000e+00> : vector<8x96xf32>
    %86 = tpu.matmul %83, %85, %cst_102 {dimension_numbers = #tpu.dot_dimension_numbers<[1], [0], [0], [1], [0, 0, 1, 1], [], []>} : vector<8x96xf32>, vector<96x96xf32>, vector<8x96xf32> -> vector<8x96xf32>
    %87 = arith.addf %82, %86 : vector<8x96xf32>
    %c2_103 = arith.constant 2 : index
    %c0_104 = arith.constant 0 : index
    %88 = vector.load %arg7[%c2_103, %c0_104] : memref<10x96xf32, #tpu.memory_space<vmem>>, vector<8x96xf32>
    %c1_105 = arith.constant 1 : index
    %c2_106 = arith.constant 2 : index
    %c0_107 = arith.constant 0 : index
    %c0_108 = arith.constant 0 : index
    %89 = vector.load %arg3[%c1_105, %c2_106, %c0_107, %c0_108] : memref<2x3x96x96xf32, #tpu.memory_space<vmem>>, vector<1x1x96x96xf32>
    %90 = vector.shape_cast %89 : vector<1x1x96x96xf32> to vector<96x96xf32>
    %cst_109 = arith.constant dense<0.000000e+00> : vector<8x96xf32>
    %91 = tpu.matmul %88, %90, %cst_109 {dimension_numbers = #tpu.dot_dimension_numbers<[1], [0], [0], [1], [0, 0, 1, 1], [], []>} : vector<8x96xf32>, vector<96x96xf32>, vector<8x96xf32> -> vector<8x96xf32>
    %92 = arith.addf %87, %91 : vector<8x96xf32>
    %cst_110 = arith.constant dense<0.000000e+00> : vector<96xf32>
    %93 = vector.multi_reduction <add>, %92, %cst_110 [0] : vector<8x96xf32> to vector<96xf32>
    %94 = vector.shape_cast %93 : vector<96xf32> to vector<1x96xf32>
    %c1_111 = arith.constant 1 : index
    %c0_112 = arith.constant 0 : index
    %c0_113 = arith.constant 0 : index
    %95 = vector.load %arg4[%c1_111, %c0_112, %c0_113] : memref<2x96x3xf32, #tpu.memory_space<vmem>>, vector<1x96x3xf32>
    %96 = vector.shape_cast %95 : vector<1x96x3xf32> to vector<96x3xf32>
    %cst_114 = arith.constant dense<0.000000e+00> : vector<1x3xf32>
    %97 = tpu.matmul %94, %96, %cst_114 {dimension_numbers = #tpu.dot_dimension_numbers<[1], [0], [0], [1], [0, 0, 1, 1], [], []>} : vector<1x96xf32>, vector<96x3xf32>, vector<1x3xf32> -> vector<1x3xf32>
    %cst_115 = arith.constant 0.000000e+00 : f32
    %98 = vector.broadcast %cst_115 : f32 to vector<1x3xf32>
    %99 = arith.maximumf %97, %98 : vector<1x3xf32>
    %c1_116 = arith.constant 1 : index
    %c0_117 = arith.constant 0 : index
    %c0_118 = arith.constant 0 : index
    %100 = vector.load %arg5[%c1_116, %c0_117, %c0_118] : memref<2x3x96xf32, #tpu.memory_space<vmem>>, vector<1x3x96xf32>
    %101 = vector.shape_cast %100 : vector<1x3x96xf32> to vector<3x96xf32>
    %cst_119 = arith.constant dense<0.000000e+00> : vector<1x96xf32>
    %102 = tpu.matmul %99, %101, %cst_119 {dimension_numbers = #tpu.dot_dimension_numbers<[1], [0], [0], [1], [0, 0, 1, 1], [], []>} : vector<1x3xf32>, vector<3x96xf32>, vector<1x96xf32> -> vector<1x96xf32>
    %103 = arith.negf %102 : vector<1x96xf32>
    %104 = math.exp %103 : vector<1x96xf32>
    %cst_120 = arith.constant 1.000000e+00 : f32
    %105 = vector.broadcast %cst_120 : f32 to vector<1x96xf32>
    %106 = arith.addf %105, %104 : vector<1x96xf32>
    %107 = arith.divf %105, %106 : vector<1x96xf32>
    %108 = vector.broadcast %107 : vector<1x96xf32> to vector<8x96xf32>
    %109 = arith.mulf %92, %108 : vector<8x96xf32>
    %110 = arith.addf %109, %57 : vector<8x96xf32>
    %c0_121 = arith.constant 0 : index
    %c0_122 = arith.constant 0 : index
    %c0_123 = arith.constant 0 : index
    %111 = vector.load %arg6[%c0_121, %c0_122, %c0_123] : memref<1x8x96xf32, #tpu.memory_space<vmem>>, vector<1x8x96xf32>
    %112 = vector.shape_cast %111 : vector<1x8x96xf32> to vector<8x96xf32>
    %113 = vector.shape_cast %110 : vector<8x96xf32> to vector<1x8x96xf32>
    tpu.vector_store %arg6[%c0_121, %c0_122, %c0_123], %113 {strides = array<i32>} : memref<1x8x96xf32, #tpu.memory_space<vmem>>, vector<1x8x96xf32>,
    return
  }
  func.func @transform_0(%arg0: i32) -> (i32, i32, i32) {
    %c0_i32 = arith.constant 0 : i32
    %c0_i32_0 = arith.constant 0 : i32
    %c0_i32_1 = arith.constant 0 : i32
    return %arg0, %c0_i32, %c0_i32_0 : i32, i32, i32
  }
  func.func @transform_1(%arg0: i32) -> (i32, i32, i32, i32) {
    %c0_i32 = arith.constant 0 : i32
    %c0_i32_0 = arith.constant 0 : i32
    %c0_i32_1 = arith.constant 0 : i32
    %c0_i32_2 = arith.constant 0 : i32
    %c0_i32_3 = arith.constant 0 : i32
    return %c0_i32, %c0_i32_0, %c0_i32_1, %c0_i32_2 : i32, i32, i32, i32
  }
  func.func @transform_2(%arg0: i32) -> (i32, i32, i32, i32) {
    %c0_i32 = arith.constant 0 : i32
    %c0_i32_0 = arith.constant 0 : i32
    %c0_i32_1 = arith.constant 0 : i32
    %c0_i32_2 = arith.constant 0 : i32
    %c0_i32_3 = arith.constant 0 : i32
    return %c0_i32, %c0_i32_0, %c0_i32_1, %c0_i32_2 : i32, i32, i32, i32
  }
  func.func @transform_3(%arg0: i32) -> (i32, i32, i32) {
    %c0_i32 = arith.constant 0 : i32
    %c0_i32_0 = arith.constant 0 : i32
    %c0_i32_1 = arith.constant 0 : i32
    %c0_i32_2 = arith.constant 0 : i32
    return %c0_i32, %c0_i32_0, %c0_i32_1 : i32, i32, i32
  }
  func.func @transform_4(%arg0: i32) -> (i32, i32, i32) {
    %c0_i32 = arith.constant 0 : i32
    %c0_i32_0 = arith.constant 0 : i32
    %c0_i32_1 = arith.constant 0 : i32
    %c0_i32_2 = arith.constant 0 : i32
    return %c0_i32, %c0_i32_0, %c0_i32_1 : i32, i32, i32
  }
  func.func @transform_5(%arg0: i32) -> (i32, i32, i32) {
    %c0_i32 = arith.constant 0 : i32
    %c0_i32_0 = arith.constant 0 : i32
    %c0_i32_1 = arith.constant 0 : i32
    return %arg0, %c0_i32, %c0_i32_0 : i32, i32, i32
  }
}

module attributes {stable_mosaic.version = 11 : i64} {
  func.func @kernel(%arg0: i32, %arg1: memref<1x16x128xf32, #tpu.memory_space<vmem>>, %arg2: memref<1x3x128x128xf32, #tpu.memory_space<vmem>>, %arg3: memref<1x3x128x128xf32, #tpu.memory_space<vmem>>, %arg4: memref<1x128x2xf32, #tpu.memory_space<vmem>>, %arg5: memref<1x2x128xf32, #tpu.memory_space<vmem>>, %arg6: memref<1x16x128xf32, #tpu.memory_space<vmem>>, %arg7: memref<18x128xf32, #tpu.memory_space<vmem>>) attributes {dimension_semantics = [#tpu.dimension_semantics<parallel>], iteration_bounds = array<i64: 2>, scalar_prefetch = 0 : i64, scratch_operands = 1 : i64, tpu.core_type = #tpu.core_type<tc>, window_params = [{transform_indices = @transform_0, window_bounds = array<i64: 1, 16, 128>}, {pipeline_mode = #tpu.pipeline_mode<synchronous>, transform_indices = @transform_1, window_bounds = array<i64: 1, 3, 128, 128>}, {pipeline_mode = #tpu.pipeline_mode<synchronous>, transform_indices = @transform_2, window_bounds = array<i64: 1, 3, 128, 128>}, {pipeline_mode = #tpu.pipeline_mode<synchronous>, transform_indices = @transform_3, window_bounds = array<i64: 1, 128, 2>}, {pipeline_mode = #tpu.pipeline_mode<synchronous>, transform_indices = @transform_4, window_bounds = array<i64: 1, 2, 128>}, {transform_indices = @transform_5, window_bounds = array<i64: 1, 16, 128>}]} {
    %cst = arith.constant 0.000000e+00 : f32
    %0 = vector.broadcast %cst : f32 to vector<1x128xf32>
    %c0 = arith.constant 0 : index
    %c0_0 = arith.constant 0 : index
    %1 = vector.load %arg7[%c0, %c0_0] : memref<18x128xf32, #tpu.memory_space<vmem>>, vector<1x128xf32>
    tpu.vector_store %arg7[%c0, %c0_0], %0 {strides = array<i32>} : memref<18x128xf32, #tpu.memory_space<vmem>>, vector<1x128xf32>,
    %c17 = arith.constant 17 : index
    %c0_1 = arith.constant 0 : index
    %2 = vector.load %arg7[%c17, %c0_1] : memref<18x128xf32, #tpu.memory_space<vmem>>, vector<1x128xf32>
    tpu.vector_store %arg7[%c17, %c0_1], %0 {strides = array<i32>} : memref<18x128xf32, #tpu.memory_space<vmem>>, vector<1x128xf32>,
    %c0_2 = arith.constant 0 : index
    %c0_3 = arith.constant 0 : index
    %c0_4 = arith.constant 0 : index
    %3 = vector.load %arg1[%c0_2, %c0_3, %c0_4] : memref<1x16x128xf32, #tpu.memory_space<vmem>>, vector<1x16x128xf32>
    %4 = vector.shape_cast %3 : vector<1x16x128xf32> to vector<16x128xf32>
    %c1 = arith.constant 1 : index
    %c0_5 = arith.constant 0 : index
    %5 = vector.load %arg7[%c1, %c0_5] : memref<18x128xf32, #tpu.memory_space<vmem>>, vector<16x128xf32>
    tpu.vector_store %arg7[%c1, %c0_5], %4 {strides = array<i32>} : memref<18x128xf32, #tpu.memory_space<vmem>>, vector<16x128xf32>,
    %c0_6 = arith.constant 0 : index
    %c0_7 = arith.constant 0 : index
    %6 = vector.load %arg7[%c0_6, %c0_7] : memref<18x128xf32, #tpu.memory_space<vmem>>, vector<16x128xf32>
    %c0_8 = arith.constant 0 : index
    %c0_9 = arith.constant 0 : index
    %c0_10 = arith.constant 0 : index
    %c0_11 = arith.constant 0 : index
    %7 = vector.load %arg2[%c0_8, %c0_9, %c0_10, %c0_11] : memref<1x3x128x128xf32, #tpu.memory_space<vmem>>, vector<1x1x128x128xf32>
    %8 = vector.shape_cast %7 : vector<1x1x128x128xf32> to vector<128x128xf32>
    %cst_12 = arith.constant dense<0.000000e+00> : vector<16x128xf32>
    %9 = tpu.matmul %6, %8, %cst_12 {dimension_numbers = #tpu.dot_dimension_numbers<[1], [0], [0], [1], [0, 0, 1, 1], [], []>} : vector<16x128xf32>, vector<128x128xf32>, vector<16x128xf32> -> vector<16x128xf32>
    %c1_13 = arith.constant 1 : index
    %c0_14 = arith.constant 0 : index
    %10 = vector.load %arg7[%c1_13, %c0_14] : memref<18x128xf32, #tpu.memory_space<vmem>>, vector<16x128xf32>
    %c0_15 = arith.constant 0 : index
    %c1_16 = arith.constant 1 : index
    %c0_17 = arith.constant 0 : index
    %c0_18 = arith.constant 0 : index
    %11 = vector.load %arg2[%c0_15, %c1_16, %c0_17, %c0_18] : memref<1x3x128x128xf32, #tpu.memory_space<vmem>>, vector<1x1x128x128xf32>
    %12 = vector.shape_cast %11 : vector<1x1x128x128xf32> to vector<128x128xf32>
    %cst_19 = arith.constant dense<0.000000e+00> : vector<16x128xf32>
    %13 = tpu.matmul %10, %12, %cst_19 {dimension_numbers = #tpu.dot_dimension_numbers<[1], [0], [0], [1], [0, 0, 1, 1], [], []>} : vector<16x128xf32>, vector<128x128xf32>, vector<16x128xf32> -> vector<16x128xf32>
    %14 = arith.addf %9, %13 : vector<16x128xf32>
    %c2 = arith.constant 2 : index
    %c0_20 = arith.constant 0 : index
    %15 = vector.load %arg7[%c2, %c0_20] : memref<18x128xf32, #tpu.memory_space<vmem>>, vector<16x128xf32>
    %c0_21 = arith.constant 0 : index
    %c2_22 = arith.constant 2 : index
    %c0_23 = arith.constant 0 : index
    %c0_24 = arith.constant 0 : index
    %16 = vector.load %arg2[%c0_21, %c2_22, %c0_23, %c0_24] : memref<1x3x128x128xf32, #tpu.memory_space<vmem>>, vector<1x1x128x128xf32>
    %17 = vector.shape_cast %16 : vector<1x1x128x128xf32> to vector<128x128xf32>
    %cst_25 = arith.constant dense<0.000000e+00> : vector<16x128xf32>
    %18 = tpu.matmul %15, %17, %cst_25 {dimension_numbers = #tpu.dot_dimension_numbers<[1], [0], [0], [1], [0, 0, 1, 1], [], []>} : vector<16x128xf32>, vector<128x128xf32>, vector<16x128xf32> -> vector<16x128xf32>
    %19 = arith.addf %14, %18 : vector<16x128xf32>
    %cst_26 = arith.constant 0.000000e+00 : f32
    %20 = vector.broadcast %cst_26 : f32 to vector<16x128xf32>
    %21 = arith.cmpf ogt, %19, %20 : vector<16x128xf32>
    %cst_27 = arith.constant 2.500000e-01 : f32
    %22 = vector.broadcast %cst_27 : f32 to vector<16x128xf32>
    %23 = arith.mulf %22, %19 : vector<16x128xf32>
    %24 = arith.select %21, %19, %23 : vector<16x128xi1>, vector<16x128xf32>
    %c1_28 = arith.constant 1 : index
    %c0_29 = arith.constant 0 : index
    %25 = vector.load %arg7[%c1_28, %c0_29] : memref<18x128xf32, #tpu.memory_space<vmem>>, vector<16x128xf32>
    tpu.vector_store %arg7[%c1_28, %c0_29], %24 {strides = array<i32>} : memref<18x128xf32, #tpu.memory_space<vmem>>, vector<16x128xf32>,
    %c0_30 = arith.constant 0 : index
    %c0_31 = arith.constant 0 : index
    %26 = vector.load %arg7[%c0_30, %c0_31] : memref<18x128xf32, #tpu.memory_space<vmem>>, vector<16x128xf32>
    %c0_32 = arith.constant 0 : index
    %c0_33 = arith.constant 0 : index
    %c0_34 = arith.constant 0 : index
    %c0_35 = arith.constant 0 : index
    %27 = vector.load %arg3[%c0_32, %c0_33, %c0_34, %c0_35] : memref<1x3x128x128xf32, #tpu.memory_space<vmem>>, vector<1x1x128x128xf32>
    %28 = vector.shape_cast %27 : vector<1x1x128x128xf32> to vector<128x128xf32>
    %cst_36 = arith.constant dense<0.000000e+00> : vector<16x128xf32>
    %29 = tpu.matmul %26, %28, %cst_36 {dimension_numbers = #tpu.dot_dimension_numbers<[1], [0], [0], [1], [0, 0, 1, 1], [], []>} : vector<16x128xf32>, vector<128x128xf32>, vector<16x128xf32> -> vector<16x128xf32>
    %c1_37 = arith.constant 1 : index
    %c0_38 = arith.constant 0 : index
    %30 = vector.load %arg7[%c1_37, %c0_38] : memref<18x128xf32, #tpu.memory_space<vmem>>, vector<16x128xf32>
    %c0_39 = arith.constant 0 : index
    %c1_40 = arith.constant 1 : index
    %c0_41 = arith.constant 0 : index
    %c0_42 = arith.constant 0 : index
    %31 = vector.load %arg3[%c0_39, %c1_40, %c0_41, %c0_42] : memref<1x3x128x128xf32, #tpu.memory_space<vmem>>, vector<1x1x128x128xf32>
    %32 = vector.shape_cast %31 : vector<1x1x128x128xf32> to vector<128x128xf32>
    %cst_43 = arith.constant dense<0.000000e+00> : vector<16x128xf32>
    %33 = tpu.matmul %30, %32, %cst_43 {dimension_numbers = #tpu.dot_dimension_numbers<[1], [0], [0], [1], [0, 0, 1, 1], [], []>} : vector<16x128xf32>, vector<128x128xf32>, vector<16x128xf32> -> vector<16x128xf32>
    %34 = arith.addf %29, %33 : vector<16x128xf32>
    %c2_44 = arith.constant 2 : index
    %c0_45 = arith.constant 0 : index
    %35 = vector.load %arg7[%c2_44, %c0_45] : memref<18x128xf32, #tpu.memory_space<vmem>>, vector<16x128xf32>
    %c0_46 = arith.constant 0 : index
    %c2_47 = arith.constant 2 : index
    %c0_48 = arith.constant 0 : index
    %c0_49 = arith.constant 0 : index
    %36 = vector.load %arg3[%c0_46, %c2_47, %c0_48, %c0_49] : memref<1x3x128x128xf32, #tpu.memory_space<vmem>>, vector<1x1x128x128xf32>
    %37 = vector.shape_cast %36 : vector<1x1x128x128xf32> to vector<128x128xf32>
    %cst_50 = arith.constant dense<0.000000e+00> : vector<16x128xf32>
    %38 = tpu.matmul %35, %37, %cst_50 {dimension_numbers = #tpu.dot_dimension_numbers<[1], [0], [0], [1], [0, 0, 1, 1], [], []>} : vector<16x128xf32>, vector<128x128xf32>, vector<16x128xf32> -> vector<16x128xf32>
    %39 = arith.addf %34, %38 : vector<16x128xf32>
    %cst_51 = arith.constant dense<0.000000e+00> : vector<128xf32>
    %40 = vector.multi_reduction <add>, %39, %cst_51 [0] : vector<16x128xf32> to vector<128xf32>
    %41 = vector.shape_cast %40 : vector<128xf32> to vector<1x128xf32>
    %c0_52 = arith.constant 0 : index
    %c0_53 = arith.constant 0 : index
    %c0_54 = arith.constant 0 : index
    %42 = vector.load %arg4[%c0_52, %c0_53, %c0_54] : memref<1x128x2xf32, #tpu.memory_space<vmem>>, vector<1x128x2xf32>
    %43 = vector.shape_cast %42 : vector<1x128x2xf32> to vector<128x2xf32>
    %cst_55 = arith.constant dense<0.000000e+00> : vector<1x2xf32>
    %44 = tpu.matmul %41, %43, %cst_55 {dimension_numbers = #tpu.dot_dimension_numbers<[1], [0], [0], [1], [0, 0, 1, 1], [], []>} : vector<1x128xf32>, vector<128x2xf32>, vector<1x2xf32> -> vector<1x2xf32>
    %cst_56 = arith.constant 0.000000e+00 : f32
    %45 = vector.broadcast %cst_56 : f32 to vector<1x2xf32>
    %46 = arith.maximumf %44, %45 : vector<1x2xf32>
    %c0_57 = arith.constant 0 : index
    %c0_58 = arith.constant 0 : index
    %c0_59 = arith.constant 0 : index
    %47 = vector.load %arg5[%c0_57, %c0_58, %c0_59] : memref<1x2x128xf32, #tpu.memory_space<vmem>>, vector<1x2x128xf32>
    %48 = vector.shape_cast %47 : vector<1x2x128xf32> to vector<2x128xf32>
    %cst_60 = arith.constant dense<0.000000e+00> : vector<1x128xf32>
    %49 = tpu.matmul %46, %48, %cst_60 {dimension_numbers = #tpu.dot_dimension_numbers<[1], [0], [0], [1], [0, 0, 1, 1], [], []>} : vector<1x2xf32>, vector<2x128xf32>, vector<1x128xf32> -> vector<1x128xf32>
    %50 = arith.negf %49 : vector<1x128xf32>
    %51 = math.exp %50 : vector<1x128xf32>
    %cst_61 = arith.constant 1.000000e+00 : f32
    %52 = vector.broadcast %cst_61 : f32 to vector<1x128xf32>
    %53 = arith.addf %52, %51 : vector<1x128xf32>
    %54 = arith.divf %52, %53 : vector<1x128xf32>
    %55 = vector.broadcast %54 : vector<1x128xf32> to vector<16x128xf32>
    %56 = arith.mulf %39, %55 : vector<16x128xf32>
    %57 = arith.addf %56, %4 : vector<16x128xf32>
    %c0_62 = arith.constant 0 : index
    %c0_63 = arith.constant 0 : index
    %c0_64 = arith.constant 0 : index
    %58 = vector.load %arg6[%c0_62, %c0_63, %c0_64] : memref<1x16x128xf32, #tpu.memory_space<vmem>>, vector<1x16x128xf32>
    %59 = vector.shape_cast %58 : vector<1x16x128xf32> to vector<16x128xf32>
    %60 = vector.shape_cast %57 : vector<16x128xf32> to vector<1x16x128xf32>
    tpu.vector_store %arg6[%c0_62, %c0_63, %c0_64], %60 {strides = array<i32>} : memref<1x16x128xf32, #tpu.memory_space<vmem>>, vector<1x16x128xf32>,
    return
  }
  func.func @transform_0(%arg0: i32) -> (i32, i32, i32) {
    %c0_i32 = arith.constant 0 : i32
    %c0_i32_0 = arith.constant 0 : i32
    %c0_i32_1 = arith.constant 0 : i32
    return %arg0, %c0_i32, %c0_i32_0 : i32, i32, i32
  }
  func.func @transform_1(%arg0: i32) -> (i32, i32, i32, i32) {
    %c0_i32 = arith.constant 0 : i32
    %c0_i32_0 = arith.constant 0 : i32
    %c0_i32_1 = arith.constant 0 : i32
    %c0_i32_2 = arith.constant 0 : i32
    %c0_i32_3 = arith.constant 0 : i32
    return %c0_i32, %c0_i32_0, %c0_i32_1, %c0_i32_2 : i32, i32, i32, i32
  }
  func.func @transform_2(%arg0: i32) -> (i32, i32, i32, i32) {
    %c0_i32 = arith.constant 0 : i32
    %c0_i32_0 = arith.constant 0 : i32
    %c0_i32_1 = arith.constant 0 : i32
    %c0_i32_2 = arith.constant 0 : i32
    %c0_i32_3 = arith.constant 0 : i32
    return %c0_i32, %c0_i32_0, %c0_i32_1, %c0_i32_2 : i32, i32, i32, i32
  }
  func.func @transform_3(%arg0: i32) -> (i32, i32, i32) {
    %c0_i32 = arith.constant 0 : i32
    %c0_i32_0 = arith.constant 0 : i32
    %c0_i32_1 = arith.constant 0 : i32
    %c0_i32_2 = arith.constant 0 : i32
    return %c0_i32, %c0_i32_0, %c0_i32_1 : i32, i32, i32
  }
  func.func @transform_4(%arg0: i32) -> (i32, i32, i32) {
    %c0_i32 = arith.constant 0 : i32
    %c0_i32_0 = arith.constant 0 : i32
    %c0_i32_1 = arith.constant 0 : i32
    %c0_i32_2 = arith.constant 0 : i32
    return %c0_i32, %c0_i32_0, %c0_i32_1 : i32, i32, i32
  }
  func.func @transform_5(%arg0: i32) -> (i32, i32, i32) {
    %c0_i32 = arith.constant 0 : i32
    %c0_i32_0 = arith.constant 0 : i32
    %c0_i32_1 = arith.constant 0 : i32
    return %arg0, %c0_i32, %c0_i32_0 : i32, i32, i32
  }
}

module attributes {stable_mosaic.version = 11 : i64} {
  func.func @_skipup_kernel(%arg0: i32, %arg1: memref<1x8x96xf32, #tpu.memory_space<vmem>>, %arg2: memref<1x16x128xf32, #tpu.memory_space<vmem>>, %arg3: memref<16x8xf32, #tpu.memory_space<vmem>>, %arg4: memref<96x128xf32, #tpu.memory_space<vmem>>, %arg5: memref<1x16x128xf32, #tpu.memory_space<vmem>>) attributes {dimension_semantics = [#tpu.dimension_semantics<parallel>], iteration_bounds = array<i64: 2>, scalar_prefetch = 0 : i64, scratch_operands = 0 : i64, tpu.core_type = #tpu.core_type<tc>, window_params = [{transform_indices = @transform_0, window_bounds = array<i64: 1, 8, 96>}, {transform_indices = @transform_1, window_bounds = array<i64: 1, 16, 128>}, {pipeline_mode = #tpu.pipeline_mode<synchronous>, transform_indices = @transform_2, window_bounds = array<i64: 16, 8>}, {pipeline_mode = #tpu.pipeline_mode<synchronous>, transform_indices = @transform_3, window_bounds = array<i64: 96, 128>}, {transform_indices = @transform_4, window_bounds = array<i64: 1, 16, 128>}]} {
    %c0 = arith.constant 0 : index
    %c0_0 = arith.constant 0 : index
    %0 = vector.load %arg3[%c0, %c0_0] : memref<16x8xf32, #tpu.memory_space<vmem>>, vector<16x8xf32>
    %c0_1 = arith.constant 0 : index
    %c0_2 = arith.constant 0 : index
    %c0_3 = arith.constant 0 : index
    %1 = vector.load %arg1[%c0_1, %c0_2, %c0_3] : memref<1x8x96xf32, #tpu.memory_space<vmem>>, vector<1x8x96xf32>
    %2 = vector.shape_cast %1 : vector<1x8x96xf32> to vector<8x96xf32>
    %cst = arith.constant dense<0.000000e+00> : vector<16x96xf32>
    %3 = tpu.matmul %0, %2, %cst {dimension_numbers = #tpu.dot_dimension_numbers<[1], [0], [0], [1], [0, 0, 1, 1], [], []>} : vector<16x8xf32>, vector<8x96xf32>, vector<16x96xf32> -> vector<16x96xf32>
    %c0_4 = arith.constant 0 : index
    %c0_5 = arith.constant 0 : index
    %4 = vector.load %arg4[%c0_4, %c0_5] : memref<96x128xf32, #tpu.memory_space<vmem>>, vector<96x128xf32>
    %cst_6 = arith.constant dense<0.000000e+00> : vector<16x128xf32>
    %5 = tpu.matmul %3, %4, %cst_6 {dimension_numbers = #tpu.dot_dimension_numbers<[1], [0], [0], [1], [0, 0, 1, 1], [], []>} : vector<16x96xf32>, vector<96x128xf32>, vector<16x128xf32> -> vector<16x128xf32>
    %c0_7 = arith.constant 0 : index
    %c0_8 = arith.constant 0 : index
    %c0_9 = arith.constant 0 : index
    %6 = vector.load %arg2[%c0_7, %c0_8, %c0_9] : memref<1x16x128xf32, #tpu.memory_space<vmem>>, vector<1x16x128xf32>
    %7 = vector.shape_cast %6 : vector<1x16x128xf32> to vector<16x128xf32>
    %8 = arith.addf %5, %7 : vector<16x128xf32>
    %c0_10 = arith.constant 0 : index
    %c0_11 = arith.constant 0 : index
    %c0_12 = arith.constant 0 : index
    %9 = vector.load %arg5[%c0_10, %c0_11, %c0_12] : memref<1x16x128xf32, #tpu.memory_space<vmem>>, vector<1x16x128xf32>
    %10 = vector.shape_cast %9 : vector<1x16x128xf32> to vector<16x128xf32>
    %11 = vector.shape_cast %8 : vector<16x128xf32> to vector<1x16x128xf32>
    tpu.vector_store %arg5[%c0_10, %c0_11, %c0_12], %11 {strides = array<i32>} : memref<1x16x128xf32, #tpu.memory_space<vmem>>, vector<1x16x128xf32>,
    return
  }
  func.func @transform_0(%arg0: i32) -> (i32, i32, i32) {
    %c0_i32 = arith.constant 0 : i32
    %c0_i32_0 = arith.constant 0 : i32
    %c0_i32_1 = arith.constant 0 : i32
    return %arg0, %c0_i32, %c0_i32_0 : i32, i32, i32
  }
  func.func @transform_1(%arg0: i32) -> (i32, i32, i32) {
    %c0_i32 = arith.constant 0 : i32
    %c0_i32_0 = arith.constant 0 : i32
    %c0_i32_1 = arith.constant 0 : i32
    return %arg0, %c0_i32, %c0_i32_0 : i32, i32, i32
  }
  func.func @transform_2(%arg0: i32) -> (i32, i32) {
    %c0_i32 = arith.constant 0 : i32
    %c0_i32_0 = arith.constant 0 : i32
    %c0_i32_1 = arith.constant 0 : i32
    return %c0_i32, %c0_i32_0 : i32, i32
  }
  func.func @transform_3(%arg0: i32) -> (i32, i32) {
    %c0_i32 = arith.constant 0 : i32
    %c0_i32_0 = arith.constant 0 : i32
    %c0_i32_1 = arith.constant 0 : i32
    return %c0_i32, %c0_i32_0 : i32, i32
  }
  func.func @transform_4(%arg0: i32) -> (i32, i32, i32) {
    %c0_i32 = arith.constant 0 : i32
    %c0_i32_0 = arith.constant 0 : i32
    %c0_i32_1 = arith.constant 0 : i32
    return %arg0, %c0_i32, %c0_i32_0 : i32, i32, i32
  }
}

module attributes {stable_mosaic.version = 11 : i64} {
  func.func @kernel(%arg0: i32, %arg1: memref<1x16x128xf32, #tpu.memory_space<vmem>>, %arg2: memref<2x3x128x128xf32, #tpu.memory_space<vmem>>, %arg3: memref<2x3x128x128xf32, #tpu.memory_space<vmem>>, %arg4: memref<2x128x2xf32, #tpu.memory_space<vmem>>, %arg5: memref<2x2x128xf32, #tpu.memory_space<vmem>>, %arg6: memref<1x16x128xf32, #tpu.memory_space<vmem>>, %arg7: memref<18x128xf32, #tpu.memory_space<vmem>>) attributes {dimension_semantics = [#tpu.dimension_semantics<parallel>], iteration_bounds = array<i64: 2>, scalar_prefetch = 0 : i64, scratch_operands = 1 : i64, tpu.core_type = #tpu.core_type<tc>, window_params = [{transform_indices = @transform_0, window_bounds = array<i64: 1, 16, 128>}, {pipeline_mode = #tpu.pipeline_mode<synchronous>, transform_indices = @transform_1, window_bounds = array<i64: 2, 3, 128, 128>}, {pipeline_mode = #tpu.pipeline_mode<synchronous>, transform_indices = @transform_2, window_bounds = array<i64: 2, 3, 128, 128>}, {pipeline_mode = #tpu.pipeline_mode<synchronous>, transform_indices = @transform_3, window_bounds = array<i64: 2, 128, 2>}, {pipeline_mode = #tpu.pipeline_mode<synchronous>, transform_indices = @transform_4, window_bounds = array<i64: 2, 2, 128>}, {transform_indices = @transform_5, window_bounds = array<i64: 1, 16, 128>}]} {
    %cst = arith.constant 0.000000e+00 : f32
    %0 = vector.broadcast %cst : f32 to vector<1x128xf32>
    %c0 = arith.constant 0 : index
    %c0_0 = arith.constant 0 : index
    %1 = vector.load %arg7[%c0, %c0_0] : memref<18x128xf32, #tpu.memory_space<vmem>>, vector<1x128xf32>
    tpu.vector_store %arg7[%c0, %c0_0], %0 {strides = array<i32>} : memref<18x128xf32, #tpu.memory_space<vmem>>, vector<1x128xf32>,
    %c17 = arith.constant 17 : index
    %c0_1 = arith.constant 0 : index
    %2 = vector.load %arg7[%c17, %c0_1] : memref<18x128xf32, #tpu.memory_space<vmem>>, vector<1x128xf32>
    tpu.vector_store %arg7[%c17, %c0_1], %0 {strides = array<i32>} : memref<18x128xf32, #tpu.memory_space<vmem>>, vector<1x128xf32>,
    %c0_2 = arith.constant 0 : index
    %c0_3 = arith.constant 0 : index
    %c0_4 = arith.constant 0 : index
    %3 = vector.load %arg1[%c0_2, %c0_3, %c0_4] : memref<1x16x128xf32, #tpu.memory_space<vmem>>, vector<1x16x128xf32>
    %4 = vector.shape_cast %3 : vector<1x16x128xf32> to vector<16x128xf32>
    %c1 = arith.constant 1 : index
    %c0_5 = arith.constant 0 : index
    %5 = vector.load %arg7[%c1, %c0_5] : memref<18x128xf32, #tpu.memory_space<vmem>>, vector<16x128xf32>
    tpu.vector_store %arg7[%c1, %c0_5], %4 {strides = array<i32>} : memref<18x128xf32, #tpu.memory_space<vmem>>, vector<16x128xf32>,
    %c0_6 = arith.constant 0 : index
    %c0_7 = arith.constant 0 : index
    %6 = vector.load %arg7[%c0_6, %c0_7] : memref<18x128xf32, #tpu.memory_space<vmem>>, vector<16x128xf32>
    %c0_8 = arith.constant 0 : index
    %c0_9 = arith.constant 0 : index
    %c0_10 = arith.constant 0 : index
    %c0_11 = arith.constant 0 : index
    %7 = vector.load %arg2[%c0_8, %c0_9, %c0_10, %c0_11] : memref<2x3x128x128xf32, #tpu.memory_space<vmem>>, vector<1x1x128x128xf32>
    %8 = vector.shape_cast %7 : vector<1x1x128x128xf32> to vector<128x128xf32>
    %cst_12 = arith.constant dense<0.000000e+00> : vector<16x128xf32>
    %9 = tpu.matmul %6, %8, %cst_12 {dimension_numbers = #tpu.dot_dimension_numbers<[1], [0], [0], [1], [0, 0, 1, 1], [], []>} : vector<16x128xf32>, vector<128x128xf32>, vector<16x128xf32> -> vector<16x128xf32>
    %c1_13 = arith.constant 1 : index
    %c0_14 = arith.constant 0 : index
    %10 = vector.load %arg7[%c1_13, %c0_14] : memref<18x128xf32, #tpu.memory_space<vmem>>, vector<16x128xf32>
    %c0_15 = arith.constant 0 : index
    %c1_16 = arith.constant 1 : index
    %c0_17 = arith.constant 0 : index
    %c0_18 = arith.constant 0 : index
    %11 = vector.load %arg2[%c0_15, %c1_16, %c0_17, %c0_18] : memref<2x3x128x128xf32, #tpu.memory_space<vmem>>, vector<1x1x128x128xf32>
    %12 = vector.shape_cast %11 : vector<1x1x128x128xf32> to vector<128x128xf32>
    %cst_19 = arith.constant dense<0.000000e+00> : vector<16x128xf32>
    %13 = tpu.matmul %10, %12, %cst_19 {dimension_numbers = #tpu.dot_dimension_numbers<[1], [0], [0], [1], [0, 0, 1, 1], [], []>} : vector<16x128xf32>, vector<128x128xf32>, vector<16x128xf32> -> vector<16x128xf32>
    %14 = arith.addf %9, %13 : vector<16x128xf32>
    %c2 = arith.constant 2 : index
    %c0_20 = arith.constant 0 : index
    %15 = vector.load %arg7[%c2, %c0_20] : memref<18x128xf32, #tpu.memory_space<vmem>>, vector<16x128xf32>
    %c0_21 = arith.constant 0 : index
    %c2_22 = arith.constant 2 : index
    %c0_23 = arith.constant 0 : index
    %c0_24 = arith.constant 0 : index
    %16 = vector.load %arg2[%c0_21, %c2_22, %c0_23, %c0_24] : memref<2x3x128x128xf32, #tpu.memory_space<vmem>>, vector<1x1x128x128xf32>
    %17 = vector.shape_cast %16 : vector<1x1x128x128xf32> to vector<128x128xf32>
    %cst_25 = arith.constant dense<0.000000e+00> : vector<16x128xf32>
    %18 = tpu.matmul %15, %17, %cst_25 {dimension_numbers = #tpu.dot_dimension_numbers<[1], [0], [0], [1], [0, 0, 1, 1], [], []>} : vector<16x128xf32>, vector<128x128xf32>, vector<16x128xf32> -> vector<16x128xf32>
    %19 = arith.addf %14, %18 : vector<16x128xf32>
    %cst_26 = arith.constant 0.000000e+00 : f32
    %20 = vector.broadcast %cst_26 : f32 to vector<16x128xf32>
    %21 = arith.cmpf ogt, %19, %20 : vector<16x128xf32>
    %cst_27 = arith.constant 2.500000e-01 : f32
    %22 = vector.broadcast %cst_27 : f32 to vector<16x128xf32>
    %23 = arith.mulf %22, %19 : vector<16x128xf32>
    %24 = arith.select %21, %19, %23 : vector<16x128xi1>, vector<16x128xf32>
    %c1_28 = arith.constant 1 : index
    %c0_29 = arith.constant 0 : index
    %25 = vector.load %arg7[%c1_28, %c0_29] : memref<18x128xf32, #tpu.memory_space<vmem>>, vector<16x128xf32>
    tpu.vector_store %arg7[%c1_28, %c0_29], %24 {strides = array<i32>} : memref<18x128xf32, #tpu.memory_space<vmem>>, vector<16x128xf32>,
    %c0_30 = arith.constant 0 : index
    %c0_31 = arith.constant 0 : index
    %26 = vector.load %arg7[%c0_30, %c0_31] : memref<18x128xf32, #tpu.memory_space<vmem>>, vector<16x128xf32>
    %c0_32 = arith.constant 0 : index
    %c0_33 = arith.constant 0 : index
    %c0_34 = arith.constant 0 : index
    %c0_35 = arith.constant 0 : index
    %27 = vector.load %arg3[%c0_32, %c0_33, %c0_34, %c0_35] : memref<2x3x128x128xf32, #tpu.memory_space<vmem>>, vector<1x1x128x128xf32>
    %28 = vector.shape_cast %27 : vector<1x1x128x128xf32> to vector<128x128xf32>
    %cst_36 = arith.constant dense<0.000000e+00> : vector<16x128xf32>
    %29 = tpu.matmul %26, %28, %cst_36 {dimension_numbers = #tpu.dot_dimension_numbers<[1], [0], [0], [1], [0, 0, 1, 1], [], []>} : vector<16x128xf32>, vector<128x128xf32>, vector<16x128xf32> -> vector<16x128xf32>
    %c1_37 = arith.constant 1 : index
    %c0_38 = arith.constant 0 : index
    %30 = vector.load %arg7[%c1_37, %c0_38] : memref<18x128xf32, #tpu.memory_space<vmem>>, vector<16x128xf32>
    %c0_39 = arith.constant 0 : index
    %c1_40 = arith.constant 1 : index
    %c0_41 = arith.constant 0 : index
    %c0_42 = arith.constant 0 : index
    %31 = vector.load %arg3[%c0_39, %c1_40, %c0_41, %c0_42] : memref<2x3x128x128xf32, #tpu.memory_space<vmem>>, vector<1x1x128x128xf32>
    %32 = vector.shape_cast %31 : vector<1x1x128x128xf32> to vector<128x128xf32>
    %cst_43 = arith.constant dense<0.000000e+00> : vector<16x128xf32>
    %33 = tpu.matmul %30, %32, %cst_43 {dimension_numbers = #tpu.dot_dimension_numbers<[1], [0], [0], [1], [0, 0, 1, 1], [], []>} : vector<16x128xf32>, vector<128x128xf32>, vector<16x128xf32> -> vector<16x128xf32>
    %34 = arith.addf %29, %33 : vector<16x128xf32>
    %c2_44 = arith.constant 2 : index
    %c0_45 = arith.constant 0 : index
    %35 = vector.load %arg7[%c2_44, %c0_45] : memref<18x128xf32, #tpu.memory_space<vmem>>, vector<16x128xf32>
    %c0_46 = arith.constant 0 : index
    %c2_47 = arith.constant 2 : index
    %c0_48 = arith.constant 0 : index
    %c0_49 = arith.constant 0 : index
    %36 = vector.load %arg3[%c0_46, %c2_47, %c0_48, %c0_49] : memref<2x3x128x128xf32, #tpu.memory_space<vmem>>, vector<1x1x128x128xf32>
    %37 = vector.shape_cast %36 : vector<1x1x128x128xf32> to vector<128x128xf32>
    %cst_50 = arith.constant dense<0.000000e+00> : vector<16x128xf32>
    %38 = tpu.matmul %35, %37, %cst_50 {dimension_numbers = #tpu.dot_dimension_numbers<[1], [0], [0], [1], [0, 0, 1, 1], [], []>} : vector<16x128xf32>, vector<128x128xf32>, vector<16x128xf32> -> vector<16x128xf32>
    %39 = arith.addf %34, %38 : vector<16x128xf32>
    %cst_51 = arith.constant dense<0.000000e+00> : vector<128xf32>
    %40 = vector.multi_reduction <add>, %39, %cst_51 [0] : vector<16x128xf32> to vector<128xf32>
    %41 = vector.shape_cast %40 : vector<128xf32> to vector<1x128xf32>
    %c0_52 = arith.constant 0 : index
    %c0_53 = arith.constant 0 : index
    %c0_54 = arith.constant 0 : index
    %42 = vector.load %arg4[%c0_52, %c0_53, %c0_54] : memref<2x128x2xf32, #tpu.memory_space<vmem>>, vector<1x128x2xf32>
    %43 = vector.shape_cast %42 : vector<1x128x2xf32> to vector<128x2xf32>
    %cst_55 = arith.constant dense<0.000000e+00> : vector<1x2xf32>
    %44 = tpu.matmul %41, %43, %cst_55 {dimension_numbers = #tpu.dot_dimension_numbers<[1], [0], [0], [1], [0, 0, 1, 1], [], []>} : vector<1x128xf32>, vector<128x2xf32>, vector<1x2xf32> -> vector<1x2xf32>
    %cst_56 = arith.constant 0.000000e+00 : f32
    %45 = vector.broadcast %cst_56 : f32 to vector<1x2xf32>
    %46 = arith.maximumf %44, %45 : vector<1x2xf32>
    %c0_57 = arith.constant 0 : index
    %c0_58 = arith.constant 0 : index
    %c0_59 = arith.constant 0 : index
    %47 = vector.load %arg5[%c0_57, %c0_58, %c0_59] : memref<2x2x128xf32, #tpu.memory_space<vmem>>, vector<1x2x128xf32>
    %48 = vector.shape_cast %47 : vector<1x2x128xf32> to vector<2x128xf32>
    %cst_60 = arith.constant dense<0.000000e+00> : vector<1x128xf32>
    %49 = tpu.matmul %46, %48, %cst_60 {dimension_numbers = #tpu.dot_dimension_numbers<[1], [0], [0], [1], [0, 0, 1, 1], [], []>} : vector<1x2xf32>, vector<2x128xf32>, vector<1x128xf32> -> vector<1x128xf32>
    %50 = arith.negf %49 : vector<1x128xf32>
    %51 = math.exp %50 : vector<1x128xf32>
    %cst_61 = arith.constant 1.000000e+00 : f32
    %52 = vector.broadcast %cst_61 : f32 to vector<1x128xf32>
    %53 = arith.addf %52, %51 : vector<1x128xf32>
    %54 = arith.divf %52, %53 : vector<1x128xf32>
    %55 = vector.broadcast %54 : vector<1x128xf32> to vector<16x128xf32>
    %56 = arith.mulf %39, %55 : vector<16x128xf32>
    %57 = arith.addf %56, %4 : vector<16x128xf32>
    %c1_62 = arith.constant 1 : index
    %c0_63 = arith.constant 0 : index
    %58 = vector.load %arg7[%c1_62, %c0_63] : memref<18x128xf32, #tpu.memory_space<vmem>>, vector<16x128xf32>
    tpu.vector_store %arg7[%c1_62, %c0_63], %57 {strides = array<i32>} : memref<18x128xf32, #tpu.memory_space<vmem>>, vector<16x128xf32>,
    %c0_64 = arith.constant 0 : index
    %c0_65 = arith.constant 0 : index
    %59 = vector.load %arg7[%c0_64, %c0_65] : memref<18x128xf32, #tpu.memory_space<vmem>>, vector<16x128xf32>
    %c1_66 = arith.constant 1 : index
    %c0_67 = arith.constant 0 : index
    %c0_68 = arith.constant 0 : index
    %c0_69 = arith.constant 0 : index
    %60 = vector.load %arg2[%c1_66, %c0_67, %c0_68, %c0_69] : memref<2x3x128x128xf32, #tpu.memory_space<vmem>>, vector<1x1x128x128xf32>
    %61 = vector.shape_cast %60 : vector<1x1x128x128xf32> to vector<128x128xf32>
    %cst_70 = arith.constant dense<0.000000e+00> : vector<16x128xf32>
    %62 = tpu.matmul %59, %61, %cst_70 {dimension_numbers = #tpu.dot_dimension_numbers<[1], [0], [0], [1], [0, 0, 1, 1], [], []>} : vector<16x128xf32>, vector<128x128xf32>, vector<16x128xf32> -> vector<16x128xf32>
    %c1_71 = arith.constant 1 : index
    %c0_72 = arith.constant 0 : index
    %63 = vector.load %arg7[%c1_71, %c0_72] : memref<18x128xf32, #tpu.memory_space<vmem>>, vector<16x128xf32>
    %c1_73 = arith.constant 1 : index
    %c1_74 = arith.constant 1 : index
    %c0_75 = arith.constant 0 : index
    %c0_76 = arith.constant 0 : index
    %64 = vector.load %arg2[%c1_73, %c1_74, %c0_75, %c0_76] : memref<2x3x128x128xf32, #tpu.memory_space<vmem>>, vector<1x1x128x128xf32>
    %65 = vector.shape_cast %64 : vector<1x1x128x128xf32> to vector<128x128xf32>
    %cst_77 = arith.constant dense<0.000000e+00> : vector<16x128xf32>
    %66 = tpu.matmul %63, %65, %cst_77 {dimension_numbers = #tpu.dot_dimension_numbers<[1], [0], [0], [1], [0, 0, 1, 1], [], []>} : vector<16x128xf32>, vector<128x128xf32>, vector<16x128xf32> -> vector<16x128xf32>
    %67 = arith.addf %62, %66 : vector<16x128xf32>
    %c2_78 = arith.constant 2 : index
    %c0_79 = arith.constant 0 : index
    %68 = vector.load %arg7[%c2_78, %c0_79] : memref<18x128xf32, #tpu.memory_space<vmem>>, vector<16x128xf32>
    %c1_80 = arith.constant 1 : index
    %c2_81 = arith.constant 2 : index
    %c0_82 = arith.constant 0 : index
    %c0_83 = arith.constant 0 : index
    %69 = vector.load %arg2[%c1_80, %c2_81, %c0_82, %c0_83] : memref<2x3x128x128xf32, #tpu.memory_space<vmem>>, vector<1x1x128x128xf32>
    %70 = vector.shape_cast %69 : vector<1x1x128x128xf32> to vector<128x128xf32>
    %cst_84 = arith.constant dense<0.000000e+00> : vector<16x128xf32>
    %71 = tpu.matmul %68, %70, %cst_84 {dimension_numbers = #tpu.dot_dimension_numbers<[1], [0], [0], [1], [0, 0, 1, 1], [], []>} : vector<16x128xf32>, vector<128x128xf32>, vector<16x128xf32> -> vector<16x128xf32>
    %72 = arith.addf %67, %71 : vector<16x128xf32>
    %cst_85 = arith.constant 0.000000e+00 : f32
    %73 = vector.broadcast %cst_85 : f32 to vector<16x128xf32>
    %74 = arith.cmpf ogt, %72, %73 : vector<16x128xf32>
    %cst_86 = arith.constant 2.500000e-01 : f32
    %75 = vector.broadcast %cst_86 : f32 to vector<16x128xf32>
    %76 = arith.mulf %75, %72 : vector<16x128xf32>
    %77 = arith.select %74, %72, %76 : vector<16x128xi1>, vector<16x128xf32>
    %c1_87 = arith.constant 1 : index
    %c0_88 = arith.constant 0 : index
    %78 = vector.load %arg7[%c1_87, %c0_88] : memref<18x128xf32, #tpu.memory_space<vmem>>, vector<16x128xf32>
    tpu.vector_store %arg7[%c1_87, %c0_88], %77 {strides = array<i32>} : memref<18x128xf32, #tpu.memory_space<vmem>>, vector<16x128xf32>,
    %c0_89 = arith.constant 0 : index
    %c0_90 = arith.constant 0 : index
    %79 = vector.load %arg7[%c0_89, %c0_90] : memref<18x128xf32, #tpu.memory_space<vmem>>, vector<16x128xf32>
    %c1_91 = arith.constant 1 : index
    %c0_92 = arith.constant 0 : index
    %c0_93 = arith.constant 0 : index
    %c0_94 = arith.constant 0 : index
    %80 = vector.load %arg3[%c1_91, %c0_92, %c0_93, %c0_94] : memref<2x3x128x128xf32, #tpu.memory_space<vmem>>, vector<1x1x128x128xf32>
    %81 = vector.shape_cast %80 : vector<1x1x128x128xf32> to vector<128x128xf32>
    %cst_95 = arith.constant dense<0.000000e+00> : vector<16x128xf32>
    %82 = tpu.matmul %79, %81, %cst_95 {dimension_numbers = #tpu.dot_dimension_numbers<[1], [0], [0], [1], [0, 0, 1, 1], [], []>} : vector<16x128xf32>, vector<128x128xf32>, vector<16x128xf32> -> vector<16x128xf32>
    %c1_96 = arith.constant 1 : index
    %c0_97 = arith.constant 0 : index
    %83 = vector.load %arg7[%c1_96, %c0_97] : memref<18x128xf32, #tpu.memory_space<vmem>>, vector<16x128xf32>
    %c1_98 = arith.constant 1 : index
    %c1_99 = arith.constant 1 : index
    %c0_100 = arith.constant 0 : index
    %c0_101 = arith.constant 0 : index
    %84 = vector.load %arg3[%c1_98, %c1_99, %c0_100, %c0_101] : memref<2x3x128x128xf32, #tpu.memory_space<vmem>>, vector<1x1x128x128xf32>
    %85 = vector.shape_cast %84 : vector<1x1x128x128xf32> to vector<128x128xf32>
    %cst_102 = arith.constant dense<0.000000e+00> : vector<16x128xf32>
    %86 = tpu.matmul %83, %85, %cst_102 {dimension_numbers = #tpu.dot_dimension_numbers<[1], [0], [0], [1], [0, 0, 1, 1], [], []>} : vector<16x128xf32>, vector<128x128xf32>, vector<16x128xf32> -> vector<16x128xf32>
    %87 = arith.addf %82, %86 : vector<16x128xf32>
    %c2_103 = arith.constant 2 : index
    %c0_104 = arith.constant 0 : index
    %88 = vector.load %arg7[%c2_103, %c0_104] : memref<18x128xf32, #tpu.memory_space<vmem>>, vector<16x128xf32>
    %c1_105 = arith.constant 1 : index
    %c2_106 = arith.constant 2 : index
    %c0_107 = arith.constant 0 : index
    %c0_108 = arith.constant 0 : index
    %89 = vector.load %arg3[%c1_105, %c2_106, %c0_107, %c0_108] : memref<2x3x128x128xf32, #tpu.memory_space<vmem>>, vector<1x1x128x128xf32>
    %90 = vector.shape_cast %89 : vector<1x1x128x128xf32> to vector<128x128xf32>
    %cst_109 = arith.constant dense<0.000000e+00> : vector<16x128xf32>
    %91 = tpu.matmul %88, %90, %cst_109 {dimension_numbers = #tpu.dot_dimension_numbers<[1], [0], [0], [1], [0, 0, 1, 1], [], []>} : vector<16x128xf32>, vector<128x128xf32>, vector<16x128xf32> -> vector<16x128xf32>
    %92 = arith.addf %87, %91 : vector<16x128xf32>
    %cst_110 = arith.constant dense<0.000000e+00> : vector<128xf32>
    %93 = vector.multi_reduction <add>, %92, %cst_110 [0] : vector<16x128xf32> to vector<128xf32>
    %94 = vector.shape_cast %93 : vector<128xf32> to vector<1x128xf32>
    %c1_111 = arith.constant 1 : index
    %c0_112 = arith.constant 0 : index
    %c0_113 = arith.constant 0 : index
    %95 = vector.load %arg4[%c1_111, %c0_112, %c0_113] : memref<2x128x2xf32, #tpu.memory_space<vmem>>, vector<1x128x2xf32>
    %96 = vector.shape_cast %95 : vector<1x128x2xf32> to vector<128x2xf32>
    %cst_114 = arith.constant dense<0.000000e+00> : vector<1x2xf32>
    %97 = tpu.matmul %94, %96, %cst_114 {dimension_numbers = #tpu.dot_dimension_numbers<[1], [0], [0], [1], [0, 0, 1, 1], [], []>} : vector<1x128xf32>, vector<128x2xf32>, vector<1x2xf32> -> vector<1x2xf32>
    %cst_115 = arith.constant 0.000000e+00 : f32
    %98 = vector.broadcast %cst_115 : f32 to vector<1x2xf32>
    %99 = arith.maximumf %97, %98 : vector<1x2xf32>
    %c1_116 = arith.constant 1 : index
    %c0_117 = arith.constant 0 : index
    %c0_118 = arith.constant 0 : index
    %100 = vector.load %arg5[%c1_116, %c0_117, %c0_118] : memref<2x2x128xf32, #tpu.memory_space<vmem>>, vector<1x2x128xf32>
    %101 = vector.shape_cast %100 : vector<1x2x128xf32> to vector<2x128xf32>
    %cst_119 = arith.constant dense<0.000000e+00> : vector<1x128xf32>
    %102 = tpu.matmul %99, %101, %cst_119 {dimension_numbers = #tpu.dot_dimension_numbers<[1], [0], [0], [1], [0, 0, 1, 1], [], []>} : vector<1x2xf32>, vector<2x128xf32>, vector<1x128xf32> -> vector<1x128xf32>
    %103 = arith.negf %102 : vector<1x128xf32>
    %104 = math.exp %103 : vector<1x128xf32>
    %cst_120 = arith.constant 1.000000e+00 : f32
    %105 = vector.broadcast %cst_120 : f32 to vector<1x128xf32>
    %106 = arith.addf %105, %104 : vector<1x128xf32>
    %107 = arith.divf %105, %106 : vector<1x128xf32>
    %108 = vector.broadcast %107 : vector<1x128xf32> to vector<16x128xf32>
    %109 = arith.mulf %92, %108 : vector<16x128xf32>
    %110 = arith.addf %109, %57 : vector<16x128xf32>
    %c0_121 = arith.constant 0 : index
    %c0_122 = arith.constant 0 : index
    %c0_123 = arith.constant 0 : index
    %111 = vector.load %arg6[%c0_121, %c0_122, %c0_123] : memref<1x16x128xf32, #tpu.memory_space<vmem>>, vector<1x16x128xf32>
    %112 = vector.shape_cast %111 : vector<1x16x128xf32> to vector<16x128xf32>
    %113 = vector.shape_cast %110 : vector<16x128xf32> to vector<1x16x128xf32>
    tpu.vector_store %arg6[%c0_121, %c0_122, %c0_123], %113 {strides = array<i32>} : memref<1x16x128xf32, #tpu.memory_space<vmem>>, vector<1x16x128xf32>,
    return
  }
  func.func @transform_0(%arg0: i32) -> (i32, i32, i32) {
    %c0_i32 = arith.constant 0 : i32
    %c0_i32_0 = arith.constant 0 : i32
    %c0_i32_1 = arith.constant 0 : i32
    return %arg0, %c0_i32, %c0_i32_0 : i32, i32, i32
  }
  func.func @transform_1(%arg0: i32) -> (i32, i32, i32, i32) {
    %c0_i32 = arith.constant 0 : i32
    %c0_i32_0 = arith.constant 0 : i32
    %c0_i32_1 = arith.constant 0 : i32
    %c0_i32_2 = arith.constant 0 : i32
    %c0_i32_3 = arith.constant 0 : i32
    return %c0_i32, %c0_i32_0, %c0_i32_1, %c0_i32_2 : i32, i32, i32, i32
  }
  func.func @transform_2(%arg0: i32) -> (i32, i32, i32, i32) {
    %c0_i32 = arith.constant 0 : i32
    %c0_i32_0 = arith.constant 0 : i32
    %c0_i32_1 = arith.constant 0 : i32
    %c0_i32_2 = arith.constant 0 : i32
    %c0_i32_3 = arith.constant 0 : i32
    return %c0_i32, %c0_i32_0, %c0_i32_1, %c0_i32_2 : i32, i32, i32, i32
  }
  func.func @transform_3(%arg0: i32) -> (i32, i32, i32) {
    %c0_i32 = arith.constant 0 : i32
    %c0_i32_0 = arith.constant 0 : i32
    %c0_i32_1 = arith.constant 0 : i32
    %c0_i32_2 = arith.constant 0 : i32
    return %c0_i32, %c0_i32_0, %c0_i32_1 : i32, i32, i32
  }
  func.func @transform_4(%arg0: i32) -> (i32, i32, i32) {
    %c0_i32 = arith.constant 0 : i32
    %c0_i32_0 = arith.constant 0 : i32
    %c0_i32_1 = arith.constant 0 : i32
    %c0_i32_2 = arith.constant 0 : i32
    return %c0_i32, %c0_i32_0, %c0_i32_1 : i32, i32, i32
  }
  func.func @transform_5(%arg0: i32) -> (i32, i32, i32) {
    %c0_i32 = arith.constant 0 : i32
    %c0_i32_0 = arith.constant 0 : i32
    %c0_i32_1 = arith.constant 0 : i32
    return %arg0, %c0_i32, %c0_i32_0 : i32, i32, i32
  }
}

</mosaic_0001>

<llo_original>
// kernel: decoder_forward.7
$region0: #{decoder_forward.7}
  #allocation0 [shape = 'u32[]', space=smem, size = 0x4, offset = 0x4, fixed_abs, tag = 'smem constant byte address 0x4 - core index']
  #allocation1 [shape = 'u32[144,128]{1,0:T(1,128)}', space=vmem, size = 0x12000, scoped, tag = 'internal scratch']
  #allocation2 [shape = 'f32[6,64]{1,0:T(8,128)}', space=vmem, size = 0x1000, scoped, tag = 'scratch operand']
  %s0 = inlined_call_operand.vmem [shape: f32[2,4,64], index: 0, kind: input, shape index: {}]
  %s1 = inlined_call_operand.vmem [shape: f32[2,3,64,64], index: 1, kind: input, shape index: {}]
  %s2 = inlined_call_operand.vmem [shape: f32[2,3,64,64], index: 2, kind: input, shape index: {}]
  %s3 = inlined_call_operand.vmem [shape: f32[2,64,4], index: 3, kind: input, shape index: {}]
  %s4 = inlined_call_operand.vmem [shape: f32[2,4,64], index: 4, kind: input, shape index: {}]
  %s5 = inlined_call_operand.vmem [shape: f32[2,4,64], index: 5, kind: output, shape index: {}]
  %s6 = sld [smem:[#allocation0]]
  $region53: #{decoder_forward.7} parent=0
    _
  %s8 = ssub.s32 1, %s6
  %s9 = scalar_select 0, %s8, %s6
  loop: start=0, step=1, limit=4
  $region2: #{decoder_forward.7} parent=0 // loop_pre_header
    _
  $region3: #{decoder_forward.7} parent=0 // loop_header
    %s11 = sphi 0, %s15
    %p12 = scmp.ge.s32.totalorder %s11, 4
    %s21 = sphi 0, %s23
    %s24 = sphi 0, %s21
    %s25 = sphi 0, %s24
    %s41 = sphi 0, %s25
    %s45 = sphi 0, %s45
    %s47 = sphi 0, %s45
    %s48 = sphi 0, %s47
    %s62 = sphi 0, %s48
    %s66 = sphi 0, %s66
    %s68 = sphi 0, %s66
    %s69 = sphi 0, %s68
    %s83 = sphi 0, %s69
    %s87 = sphi 0, %s87
    %s89 = sphi 0, %s87
    %s90 = sphi 0, %s89
    %s104 = sphi 0, %s90
    %s108 = sphi 0, %s108
    %s110 = sphi 0, %s108
    %s111 = sphi 0, %s110
    %s125 = sphi 0, %s111
    %s131 = sphi 0, %s133
    %s134 = sphi 0, %s131
    %s135 = sphi 0, %s134
    %s151 = sphi 0, %s135
  $region4: #{decoder_forward.7} parent=0 // loop_header_branch
    %14 = sbr.rel (%p12) target = $region8
  $region5: #{decoder_forward.7} parent=0 // loop_body
    %s16 = ssub.s32 %s11, 1
    %s17 = ssub.s32 %s11, 2
    %s18 = sadd.s32 %s11, 1
    %s19 = ssub.s32 %s11, %s18
    %p20 = scmp.eq.s32.totalorder %s19, 0
    %s22 = sadd.s32 %s21, 1
    %s23 = scalar_select %p20, %s21, %s22
    %p26 = pneg %p20
    %p27 = scmp.eq.s32.totalorder %s11, 1
    %p28 = por %p26, %p27
    %p29 = scmp.ne.s32.totalorder %s21, %s24
    %p30 = scmp.eq.s32.totalorder %s11, 0
    %p31 = por %p29, %p30
    %p32 = scmp.ne.s32.totalorder %s21, %s24
    %p33 = scmp.eq.s32.totalorder %s16, 1
    %p34 = por %p32, %p33
    %p35 = scmp.ne.s32.totalorder %s24, %s25
    %p36 = scmp.eq.s32.totalorder %s16, 0
    %p37 = por %p35, %p36
    %p38 = scmp.ne.s32.totalorder %s24, %s25
    %p39 = scmp.eq.s32.totalorder %s17, 1
    %p40 = por %p38, %p39
    %p42 = scmp.ne.s32.totalorder %s25, %s41
    %p43 = scmp.eq.s32.totalorder %s17, 0
    %p44 = por %p42, %p43
    %s46 = sadd.s32 %s45, 1
    %p49 = scmp.eq.s32.totalorder %s11, 1
    %p50 = scmp.ne.s32.totalorder %s45, %s47
    %p51 = scmp.eq.s32.totalorder %s11, 0
    %p52 = por %p50, %p51
    %p53 = scmp.ne.s32.totalorder %s45, %s47
    %p54 = scmp.eq.s32.totalorder %s16, 1
    %p55 = por %p53, %p54
    %p56 = scmp.ne.s32.totalorder %s47, %s48
    %p57 = scmp.eq.s32.totalorder %s16, 0
    %p58 = por %p56, %p57
    %p59 = scmp.ne.s32.totalorder %s47, %s48
    %p60 = scmp.eq.s32.totalorder %s17, 1
    %p61 = por %p59, %p60
    %p63 = scmp.ne.s32.totalorder %s48, %s62
    %p64 = scmp.eq.s32.totalorder %s17, 0
    %p65 = por %p63, %p64
    %s67 = sadd.s32 %s66, 1
    %p70 = scmp.eq.s32.totalorder %s11, 1
    %p71 = scmp.ne.s32.totalorder %s66, %s68
    %p72 = scmp.eq.s32.totalorder %s11, 0
    %p73 = por %p71, %p72
    %p74 = scmp.ne.s32.totalorder %s66, %s68
    %p75 = scmp.eq.s32.totalorder %s16, 1
    %p76 = por %p74, %p75
    %p77 = scmp.ne.s32.totalorder %s68, %s69
    %p78 = scmp.eq.s32.totalorder %s16, 0
    %p79 = por %p77, %p78
    %p80 = scmp.ne.s32.totalorder %s68, %s69
    %p81 = scmp.eq.s32.totalorder %s17, 1
    %p82 = por %p80, %p81
    %p84 = scmp.ne.s32.totalorder %s69, %s83
    %p85 = scmp.eq.s32.totalorder %s17, 0
    %p86 = por %p84, %p85
    %s88 = sadd.s32 %s87, 1
    %p91 = scmp.eq.s32.totalorder %s11, 1
    %p92 = scmp.ne.s32.totalorder %s87, %s89
    %p93 = scmp.eq.s32.totalorder %s11, 0
    %p94 = por %p92, %p93
    %p95 = scmp.ne.s32.totalorder %s87, %s89
    %p96 = scmp.eq.s32.totalorder %s16, 1
    %p97 = por %p95, %p96
    %p98 = scmp.ne.s32.totalorder %s89, %s90
    %p99 = scmp.eq.s32.totalorder %s16, 0
    %p100 = por %p98, %p99
    %p101 = scmp.ne.s32.totalorder %s89, %s90
    %p102 = scmp.eq.s32.totalorder %s17, 1
    %p103 = por %p101, %p102
    %p105 = scmp.ne.s32.totalorder %s90, %s104
    %p106 = scmp.eq.s32.totalorder %s17, 0
    %p107 = por %p105, %p106
    %s109 = sadd.s32 %s108, 1
    %p112 = scmp.eq.s32.totalorder %s11, 1
    %p113 = scmp.ne.s32.totalorder %s108, %s110
    %p114 = scmp.eq.s32.totalorder %s11, 0
    %p115 = por %p113, %p114
    %p116 = scmp.ne.s32.totalorder %s108, %s110
    %p117 = scmp.eq.s32.totalorder %s16, 1
    %p118 = por %p116, %p117
    %p119 = scmp.ne.s32.totalorder %s110, %s111
    %p120 = scmp.eq.s32.totalorder %s16, 0
    %p121 = por %p119, %p120
    %p122 = scmp.ne.s32.totalorder %s110, %s111
    %p123 = scmp.eq.s32.totalorder %s17, 1
    %p124 = por %p122, %p123
    %p126 = scmp.ne.s32.totalorder %s111, %s125
    %p127 = scmp.eq.s32.totalorder %s17, 0
    %p128 = por %p126, %p127
    %s129 = ssub.s32 %s11, %s18
    %p130 = scmp.eq.s32.totalorder %s129, 0
    %s132 = sadd.s32 %s131, 1
    %s133 = scalar_select %p130, %s131, %s132
    %p136 = pneg %p130
    %p137 = scmp.eq.s32.totalorder %s11, 1
    %p138 = por %p136, %p137
    %p139 = scmp.ne.s32.totalorder %s131, %s134
    %p140 = scmp.eq.s32.totalorder %s11, 0
    %p141 = por %p139, %p140
    %p142 = scmp.ne.s32.totalorder %s131, %s134
    %p143 = scmp.eq.s32.totalorder %s16, 1
    %p144 = por %p142, %p143
    %p145 = scmp.ne.s32.totalorder %s134, %s135
    %p146 = scmp.eq.s32.totalorder %s16, 0
    %p147 = por %p145, %p146
    %p148 = scmp.ne.s32.totalorder %s134, %s135
    %p149 = scmp.eq.s32.totalorder %s17, 1
    %p150 = por %p148, %p149
    %p152 = scmp.ne.s32.totalorder %s135, %s151
    %p153 = scmp.eq.s32.totalorder %s17, 0
    %p154 = por %p152, %p153
    %p155 = scmp.le.s32.totalorder 1, %s11
    %p156 = scmp.lt.s32.totalorder %s11, 3
    %p157 = pnand %p155, %p156
    %p158 = pneg %p157
    // Predicated region
    $region9: #{decoder_forward.7} parent=5 // pred_check
      _
    $region10: #{decoder_forward.7} parent=5 // pred_check_branch
      %160 = sbr.rel (%p157) target = $region12
    $region11: #{decoder_forward.7} parent=5 // pred_region
      %s161 = ssub.s32 %s11, 1
      // Predicated region
      $region13: #{decoder_forward.7} parent=11 // pred_check
        %p162 = pneg %p58
      $region14: #{decoder_forward.7} parent=11 // pred_check_branch
        %164 = sbr.rel (%p162) target = $region16
      $region15: #{decoder_forward.7} parent=11 // pred_region
        _
      $region16: #{decoder_forward.7} parent=11 // pred_fallthru
        _
      // Predicated region
      $region17: #{decoder_forward.7} parent=11 // pred_check
        %p165 = pneg %p79
      $region18: #{decoder_forward.7} parent=11 // pred_check_branch
        %167 = sbr.rel (%p165) target = $region20
      $region19: #{decoder_forward.7} parent=11 // pred_region
        _
      $region20: #{decoder_forward.7} parent=11 // pred_fallthru
        _
      // Predicated region
      $region21: #{decoder_forward.7} parent=11 // pred_check
        %p168 = pneg %p100
      $region22: #{decoder_forward.7} parent=11 // pred_check_branch
        %170 = sbr.rel (%p168) target = $region24
      $region23: #{decoder_forward.7} parent=11 // pred_region
        _
      $region24: #{decoder_forward.7} parent=11 // pred_fallthru
        _
      // Predicated region
      $region25: #{decoder_forward.7} parent=11 // pred_check
        %p171 = pneg %p121
      $region26: #{decoder_forward.7} parent=11 // pred_check_branch
        %173 = sbr.rel (%p171) target = $region28
      $region27: #{decoder_forward.7} parent=11 // pred_region
        _
      $region28: #{decoder_forward.7} parent=11 // pred_fallthru
        _
    $region12: #{decoder_forward.7} parent=5 // pred_fallthru
      _
    %p174 = scmp.lt.s32.totalorder %s11, 2
    // Predicated region
    $region29: #{decoder_forward.7} parent=5 // pred_check
      %p175 = pneg %p174
    $region30: #{decoder_forward.7} parent=5 // pred_check_branch
      %177 = sbr.rel (%p175) target = $region32
    $region31: #{decoder_forward.7} parent=5 // pred_region
      // Predicated region
      $region33: #{decoder_forward.7} parent=31 // pred_check
        %p178 = pneg %p31
      $region34: #{decoder_forward.7} parent=31 // pred_check_branch
        %180 = sbr.rel (%p178) target = $region36
      $region35: #{decoder_forward.7} parent=31 // pred_region
        %p181 = scmp.lt.s32.totalorder %s11, 1
        %s182 = scalar_select %p181, %s11, 1
        %s183 = smul.addr %s182, 4
        %s184 = scalar_lea.vmem %s0, %s183
      $region36: #{decoder_forward.7} parent=31 // pred_fallthru
        _
    $region32: #{decoder_forward.7} parent=5 // pred_fallthru
      _
    %p185 = scmp.le.s32.totalorder 1, %s11
    %p186 = scmp.lt.s32.totalorder %s11, 3
    %p187 = pnand %p185, %p186
    %p188 = pneg %p187
    // Predicated region
    $region37: #{decoder_forward.7} parent=5 // pred_check
      _
    $region38: #{decoder_forward.7} parent=5 // pred_check_branch
      %190 = sbr.rel (%p187) target = $region40
    $region39: #{decoder_forward.7} parent=5 // pred_region
      %s191 = ssub.s32 %s11, 1
      %p192 = scmp.lt.s32.totalorder %s16, 1
      %s193 = scalar_select %p192, %s16, 1
      %s194 = smul.addr %s193, 4
      %s195 = scalar_lea.vmem %s0, %s194
      %p196 = pneg %p37
      %p197 = pneg %p34
      %p198 = pneg %p58
      %p199 = pneg %p55
      %p200 = pneg %p79
      %p201 = pneg %p76
      %p202 = pneg %p100
      %p203 = pneg %p97
      %p204 = pneg %p121
      %p205 = pneg %p118
      %p206 = pneg %p147
      %p207 = pneg %p144
      %p208 = scmp.lt.s32.totalorder %s16, 1
      %s209 = scalar_select %p208, %s16, 1
      %s210 = smul.addr %s209, 4
      %s211 = scalar_lea.vmem %s5, %s210
      %p212 = scmp.lt.s32.totalorder %s16, 1
      %s213 = scalar_select %p212, %s16, 1
      %s214 = smul.addr %s213, 4
      %s215 = scalar_lea.vmem %s0, %s214
      %p216 = scmp.lt.s32.totalorder %s16, 1
      %s217 = scalar_select %p216, %s16, 1
      %s218 = smul.addr %s217, 4
      %s219 = scalar_lea.vmem %s5, %s218
      %vm220 = vcmask 516096
      %221 = vst.msk [vmem:[#allocation2] sm:$0x1] %vm220, 0.0
      %222 = vst.msk [vmem:[#allocation2 + $0x5] sm:$0x1] %vm220, 0.0
      %v223 = vld [vmem:[%s215] sm:$0xf]
      %vm224 = vcmask 519168
      %225 = vst.msk [vmem:[#allocation2 + $0x1] sm:$0xf] %vm224, %v223
      %v226 = vld [vmem:[#allocation2] sm:$0xf]
      %v227 = vld [vmem:[%s1] sm:$0xff]
      %v228 = vld [vmem:[%s1 + $0x8] sm:$0xff]
      %v229 = vld [vmem:[%s1 + $0x10] sm:$0xff]
      %v230 = vld [vmem:[%s1 + $0x18] sm:$0xff]
      %v231 = vld [vmem:[%s1 + $0x20] sm:$0xff]
      %v232 = vld [vmem:[%s1 + $0x28] sm:$0xff]
      %v233 = vld [vmem:[%s1 + $0x30] sm:$0xff]
      %v234 = vld [vmem:[%s1 + $0x38] sm:$0xff]
      %v235 = vld [vmem:[#allocation2 + $0x1] sm:$0xf]
      %s236 = scalar_lea.vmem %s1, 64
      %v237 = vld [vmem:[%s236] sm:$0xff]
      %v238 = vld [vmem:[%s236 + $0x8] sm:$0xff]
      %v239 = vld [vmem:[%s236 + $0x10] sm:$0xff]
      %v240 = vld [vmem:[%s236 + $0x18] sm:$0xff]
      %v241 = vld [vmem:[%s236 + $0x20] sm:$0xff]
      %v242 = vld [vmem:[%s236 + $0x28] sm:$0xff]
      %v243 = vld [vmem:[%s236 + $0x30] sm:$0xff]
      %v244 = vld [vmem:[%s236 + $0x38] sm:$0xff]
      %vm245 = vcmask 523264
      %v247 = vsel %vm245, %v235, 0
      %249 = vmatprep.subr.mxu0 0.0
      %250 = vmatpush1.msra.mxu0 %v237
      %251 = vmatprep.subr.mxu0 0.0
      %252 = vmatpush1.msra.mxu0 %v238
      %253 = vmatprep.subr.mxu0 0.0
      %254 = vmatpush1.msra.mxu0 %v239
      %255 = vmatprep.subr.mxu0 0.0
      %256 = vmatpush1.msra.mxu0 %v240
      %257 = vmatprep.subr.mxu0 0.0
      %258 = vmatpush1.msra.mxu0 %v241
      %259 = vmatprep.subr.mxu0 0.0
      %260 = vmatpush1.msra.mxu0 %v242
      %261 = vmatprep.subr.mxu0 0.0
      %262 = vmatpush1.msra.mxu0 %v243
      %263 = vmatprep.subr.mxu0 0.0
      %264 = vmatpush1.msra.mxu0 %v244
      %265 = vmatprep.subr.mxu0 0.0
      %266 = vmatpush1.msra.mxu0 0.0
      %267 = vmatprep.subr.mxu0 0.0
      %268 = vmatpush1.msra.mxu0 0.0
      %269 = vmatprep.subr.mxu0 0.0
      %270 = vmatpush1.msra.mxu0 0.0
      %271 = vmatprep.subr.mxu0 0.0
      %272 = vmatpush1.msra.mxu0 0.0
      %273 = vmatprep.subr.mxu0 0.0
      %274 = vmatpush1.msra.mxu0 0.0
      %275 = vmatprep.subr.mxu0 0.0
      %276 = vmatpush1.msra.mxu0 0.0
      %277 = vmatprep.subr.mxu0 0.0
      %278 = vmatpush1.msra.mxu0 0.0
      %279 = vmatprep.subr.mxu0 0.0
      %280 = vmatpush1.msra.mxu0 0.0
      %281 = vmatprep.subr.mxu0 0.0
      %282 = vmatpush1.msra.mxu0 0.0
      %283 = vmatprep.subr.mxu0 0.0
      %284 = vmatpush1.msra.mxu0 0.0
      %285 = vmatprep.subr.mxu0 0.0
      %286 = vmatpush1.msra.mxu0 0.0
      %287 = vmatprep.subr.mxu0 0.0
      %288 = vmatpush1.msra.mxu0 0.0
      %289 = vmatprep.subr.mxu0 0.0
      %290 = vmatpush1.msra.mxu0 0.0
      %291 = vmatprep.subr.mxu0 0.0
      %292 = vmatpush1.msra.mxu0 0.0
      %293 = vmatprep.subr.mxu0 0.0
      %294 = vmatpush1.msra.mxu0 0.0
      %295 = vmatprep.subr.mxu0 0.0
      %296 = vmatpush1.msra.mxu0 0.0
      %297 = vmatprep.subr.mxu0 0.0
      %298 = vmatpush1.msra.mxu0 0.0
      %299 = vmatprep.subr.mxu0 0.0
      %300 = vmatpush1.msra.mxu0 0.0
      %301 = vmatprep.subr.mxu0 0.0
      %302 = vmatpush1.msra.mxu0 0.0
      %303 = vmatprep.subr.mxu0 0.0
      %304 = vmatpush1.msra.mxu0 0.0
      %305 = vmatprep.subr.mxu0 0.0
      %306 = vmatpush1.msra.mxu0 0.0
      %307 = vmatprep.subr.mxu0 0.0
      %308 = vmatpush1.msra.mxu0 0.0
      %309 = vmatprep.subr.mxu0 0.0
      %310 = vmatpush1.msra.mxu0 0.0
      %311 = vmatprep.subr.mxu0 0.0
      %312 = vmatpush1.msra.mxu0 0.0
      %313 = vmatprep.mubr.f32.mxu0 0.0
      %314 = vmatmul.mubr.f32.gmra.mrb[0].mxu0 %v247
      %v315 = vpop.f32.mrb[0].mxu0
      %v316 = vadd.f32 0.0, %v315
      %v317 = vpop.f32.mrb[0].mxu0
      %318 = vdwg.mxu0
      %v320 = vsel %vm245, %v226, 0
      %322 = vmatprep.subr.mxu0 0.0
      %323 = vmatpush1.msra.mxu0 %v227
      %324 = vmatprep.subr.mxu0 0.0
      %325 = vmatpush1.msra.mxu0 %v228
      %326 = vmatprep.subr.mxu0 0.0
      %327 = vmatpush1.msra.mxu0 %v229
      %328 = vmatprep.subr.mxu0 0.0
      %329 = vmatpush1.msra.mxu0 %v230
      %330 = vmatprep.subr.mxu0 0.0
      %331 = vmatpush1.msra.mxu0 %v231
      %332 = vmatprep.subr.mxu0 0.0
      %333 = vmatpush1.msra.mxu0 %v232
      %334 = vmatprep.subr.mxu0 0.0
      %335 = vmatpush1.msra.mxu0 %v233
      %336 = vmatprep.subr.mxu0 0.0
      %337 = vmatpush1.msra.mxu0 %v234
      %338 = vmatprep.subr.mxu0 0.0
      %339 = vmatpush1.msra.mxu0 0.0
      %340 = vmatprep.subr.mxu0 0.0
      %341 = vmatpush1.msra.mxu0 0.0
      %342 = vmatprep.subr.mxu0 0.0
      %343 = vmatpush1.msra.mxu0 0.0
      %344 = vmatprep.subr.mxu0 0.0
      %345 = vmatpush1.msra.mxu0 0.0
      %346 = vmatprep.subr.mxu0 0.0
      %347 = vmatpush1.msra.mxu0 0.0
      %348 = vmatprep.subr.mxu0 0.0
      %349 = vmatpush1.msra.mxu0 0.0
      %350 = vmatprep.subr.mxu0 0.0
      %351 = vmatpush1.msra.mxu0 0.0
      %352 = vmatprep.subr.mxu0 0.0
      %353 = vmatpush1.msra.mxu0 0.0
      %354 = vmatprep.subr.mxu0 0.0
      %355 = vmatpush1.msra.mxu0 0.0
      %356 = vmatprep.subr.mxu0 0.0
      %357 = vmatpush1.msra.mxu0 0.0
      %358 = vmatprep.subr.mxu0 0.0
      %359 = vmatpush1.msra.mxu0 0.0
      %360 = vmatprep.subr.mxu0 0.0
      %361 = vmatpush1.msra.mxu0 0.0
      %362 = vmatprep.subr.mxu0 0.0
      %363 = vmatpush1.msra.mxu0 0.0
      %364 = vmatprep.subr.mxu0 0.0
      %365 = vmatpush1.msra.mxu0 0.0
      %366 = vmatprep.subr.mxu0 0.0
      %367 = vmatpush1.msra.mxu0 0.0
      %368 = vmatprep.subr.mxu0 0.0
      %369 = vmatpush1.msra.mxu0 0.0
      %370 = vmatprep.subr.mxu0 0.0
      %371 = vmatpush1.msra.mxu0 0.0
      %372 = vmatprep.subr.mxu0 0.0
      %373 = vmatpush1.msra.mxu0 0.0
      %374 = vmatprep.subr.mxu0 0.0
      %375 = vmatpush1.msra.mxu0 0.0
      %376 = vmatprep.subr.mxu0 0.0
      %377 = vmatpush1.msra.mxu0 0.0
      %378 = vmatprep.subr.mxu0 0.0
      %379 = vmatpush1.msra.mxu0 0.0
      %380 = vmatprep.subr.mxu0 0.0
      %381 = vmatpush1.msra.mxu0 0.0
      %382 = vmatprep.subr.mxu0 0.0
      %383 = vmatpush1.msra.mxu0 0.0
      %384 = vmatprep.subr.mxu0 0.0
      %385 = vmatpush1.msra.mxu0 0.0
      %386 = vmatprep.mubr.f32.mxu0 0.0
      %387 = vmatmul.mubr.f32.gmra.mrb[0].mxu0 %v320
      %v388 = vpop.f32.mrb[0].mxu0
      %v389 = vadd.f32 %v316, %v388
      %v390 = vpop.f32.mrb[0].mxu0
      %391 = vdwg.mxu0
      %v392 = vld [vmem:[#allocation2 + $0x2] sm:$0xf]
      %s393 = scalar_lea.vmem %s1, 128
      %v394 = vld [vmem:[%s393] sm:$0xff]
      %v395 = vld [vmem:[%s393 + $0x8] sm:$0xff]
      %v396 = vld [vmem:[%s393 + $0x10] sm:$0xff]
      %v397 = vld [vmem:[%s393 + $0x18] sm:$0xff]
      %v398 = vld [vmem:[%s393 + $0x20] sm:$0xff]
      %v399 = vld [vmem:[%s393 + $0x28] sm:$0xff]
      %v400 = vld [vmem:[%s393 + $0x30] sm:$0xff]
      %v401 = vld [vmem:[%s393 + $0x38] sm:$0xff]
      %v403 = vsel %vm245, %v392, 0
      %405 = vmatprep.subr.mxu0 0.0
      %406 = vmatpush1.msra.mxu0 %v394
      %407 = vmatprep.subr.mxu0 0.0
      %408 = vmatpush1.msra.mxu0 %v395
      %409 = vmatprep.subr.mxu0 0.0
      %410 = vmatpush1.msra.mxu0 %v396
      %411 = vmatprep.subr.mxu0 0.0
      %412 = vmatpush1.msra.mxu0 %v397
      %413 = vmatprep.subr.mxu0 0.0
      %414 = vmatpush1.msra.mxu0 %v398
      %415 = vmatprep.subr.mxu0 0.0
      %416 = vmatpush1.msra.mxu0 %v399
      %417 = vmatprep.subr.mxu0 0.0
      %418 = vmatpush1.msra.mxu0 %v400
      %419 = vmatprep.subr.mxu0 0.0
      %420 = vmatpush1.msra.mxu0 %v401
      %421 = vmatprep.subr.mxu0 0.0
      %422 = vmatpush1.msra.mxu0 0.0
      %423 = vmatprep.subr.mxu0 0.0
      %424 = vmatpush1.msra.mxu0 0.0
      %425 = vmatprep.subr.mxu0 0.0
      %426 = vmatpush1.msra.mxu0 0.0
      %427 = vmatprep.subr.mxu0 0.0
      %428 = vmatpush1.msra.mxu0 0.0
      %429 = vmatprep.subr.mxu0 0.0
      %430 = vmatpush1.msra.mxu0 0.0
      %431 = vmatprep.subr.mxu0 0.0
      %432 = vmatpush1.msra.mxu0 0.0
      %433 = vmatprep.subr.mxu0 0.0
      %434 = vmatpush1.msra.mxu0 0.0
      %435 = vmatprep.subr.mxu0 0.0
      %436 = vmatpush1.msra.mxu0 0.0
      %437 = vmatprep.subr.mxu0 0.0
      %438 = vmatpush1.msra.mxu0 0.0
      %439 = vmatprep.subr.mxu0 0.0
      %440 = vmatpush1.msra.mxu0 0.0
      %441 = vmatprep.subr.mxu0 0.0
      %442 = vmatpush1.msra.mxu0 0.0
      %443 = vmatprep.subr.mxu0 0.0
      %444 = vmatpush1.msra.mxu0 0.0
      %445 = vmatprep.subr.mxu0 0.0
      %446 = vmatpush1.msra.mxu0 0.0
      %447 = vmatprep.subr.mxu0 0.0
      %448 = vmatpush1.msra.mxu0 0.0
      %449 = vmatprep.subr.mxu0 0.0
      %450 = vmatpush1.msra.mxu0 0.0
      %451 = vmatprep.subr.mxu0 0.0
      %452 = vmatpush1.msra.mxu0 0.0
      %453 = vmatprep.subr.mxu0 0.0
      %454 = vmatpush1.msra.mxu0 0.0
      %455 = vmatprep.subr.mxu0 0.0
      %456 = vmatpush1.msra.mxu0 0.0
      %457 = vmatprep.subr.mxu0 0.0
      %458 = vmatpush1.msra.mxu0 0.0
      %459 = vmatprep.subr.mxu0 0.0
      %460 = vmatpush1.msra.mxu0 0.0
      %461 = vmatprep.subr.mxu0 0.0
      %462 = vmatpush1.msra.mxu0 0.0
      %463 = vmatprep.subr.mxu0 0.0
      %464 = vmatpush1.msra.mxu0 0.0
      %465 = vmatprep.subr.mxu0 0.0
      %466 = vmatpush1.msra.mxu0 0.0
      %467 = vmatprep.subr.mxu0 0.0
      %468 = vmatpush1.msra.mxu0 0.0
      %469 = vmatprep.mubr.f32.mxu0 0.0
      %470 = vmatmul.mubr.f32.gmra.mrb[0].mxu0 %v403
      %v471 = vpop.f32.mrb[0].mxu0
      %v472 = vadd.f32 0.0, %v471
      %v473 = vpop.f32.mrb[0].mxu0
      %474 = vdwg.mxu0
      %v475 = vadd.f32 %v389, %v472
      %vm476 = vcmp.gt.f32.partialorder %v475, 0.0
      %v477 = vmul.f32 %v475, 0.25
      %v478 = vsel %vm476, %v475, %v477
      %479 = vst.msk [vmem:[#allocation2 + $0x1] sm:$0xf] %vm224, %v478
      %v480 = vld [vmem:[#allocation2] sm:$0xf]
      %v481 = vld [vmem:[%s2] sm:$0xff]
      %v482 = vld [vmem:[%s2 + $0x8] sm:$0xff]
      %v483 = vld [vmem:[%s2 + $0x10] sm:$0xff]
      %v484 = vld [vmem:[%s2 + $0x18] sm:$0xff]
      %v485 = vld [vmem:[%s2 + $0x20] sm:$0xff]
      %v486 = vld [vmem:[%s2 + $0x28] sm:$0xff]
      %v487 = vld [vmem:[%s2 + $0x30] sm:$0xff]
      %v488 = vld [vmem:[%s2 + $0x38] sm:$0xff]
      %v489 = vld [vmem:[#allocation2 + $0x1] sm:$0xf]
      %s490 = scalar_lea.vmem %s2, 64
      %v491 = vld [vmem:[%s490] sm:$0xff]
      %v492 = vld [vmem:[%s490 + $0x8] sm:$0xff]
      %v493 = vld [vmem:[%s490 + $0x10] sm:$0xff]
      %v494 = vld [vmem:[%s490 + $0x18] sm:$0xff]
      %v495 = vld [vmem:[%s490 + $0x20] sm:$0xff]
      %v496 = vld [vmem:[%s490 + $0x28] sm:$0xff]
      %v497 = vld [vmem:[%s490 + $0x30] sm:$0xff]
      %v498 = vld [vmem:[%s490 + $0x38] sm:$0xff]
      %v500 = vsel %vm245, %v489, 0
      %502 = vmatprep.subr.mxu0 0.0
      %503 = vmatpush1.msra.mxu0 %v491
      %504 = vmatprep.subr.mxu0 0.0
      %505 = vmatpush1.msra.mxu0 %v492
      %506 = vmatprep.subr.mxu0 0.0
      %507 = vmatpush1.msra.mxu0 %v493
      %508 = vmatprep.subr.mxu0 0.0
      %509 = vmatpush1.msra.mxu0 %v494
      %510 = vmatprep.subr.mxu0 0.0
      %511 = vmatpush1.msra.mxu0 %v495
      %512 = vmatprep.subr.mxu0 0.0
      %513 = vmatpush1.msra.mxu0 %v496
      %514 = vmatprep.subr.mxu0 0.0
      %515 = vmatpush1.msra.mxu0 %v497
      %516 = vmatprep.subr.mxu0 0.0
      %517 = vmatpush1.msra.mxu0 %v498
      %518 = vmatprep.subr.mxu0 0.0
      %519 = vmatpush1.msra.mxu0 0.0
      %520 = vmatprep.subr.mxu0 0.0
      %521 = vmatpush1.msra.mxu0 0.0
      %522 = vmatprep.subr.mxu0 0.0
      %523 = vmatpush1.msra.mxu0 0.0
      %524 = vmatprep.subr.mxu0 0.0
      %525 = vmatpush1.msra.mxu0 0.0
      %526 = vmatprep.subr.mxu0 0.0
      %527 = vmatpush1.msra.mxu0 0.0
      %528 = vmatprep.subr.mxu0 0.0
      %529 = vmatpush1.msra.mxu0 0.0
      %530 = vmatprep.subr.mxu0 0.0
      %531 = vmatpush1.msra.mxu0 0.0
      %532 = vmatprep.subr.mxu0 0.0
      %533 = vmatpush1.msra.mxu0 0.0
      %534 = vmatprep.subr.mxu0 0.0
      %535 = vmatpush1.msra.mxu0 0.0
      %536 = vmatprep.subr.mxu0 0.0
      %537 = vmatpush1.msra.mxu0 0.0
      %538 = vmatprep.subr.mxu0 0.0
      %539 = vmatpush1.msra.mxu0 0.0
      %540 = vmatprep.subr.mxu0 0.0
      %541 = vmatpush1.msra.mxu0 0.0
      %542 = vmatprep.subr.mxu0 0.0
      %543 = vmatpush1.msra.mxu0 0.0
      %544 = vmatprep.subr.mxu0 0.0
      %545 = vmatpush1.msra.mxu0 0.0
      %546 = vmatprep.subr.mxu0 0.0
      %547 = vmatpush1.msra.mxu0 0.0
      %548 = vmatprep.subr.mxu0 0.0
      %549 = vmatpush1.msra.mxu0 0.0
      %550 = vmatprep.subr.mxu0 0.0
      %551 = vmatpush1.msra.mxu0 0.0
      %552 = vmatprep.subr.mxu0 0.0
      %553 = vmatpush1.msra.mxu0 0.0
      %554 = vmatprep.subr.mxu0 0.0
      %555 = vmatpush1.msra.mxu0 0.0
      %556 = vmatprep.subr.mxu0 0.0
      %557 = vmatpush1.msra.mxu0 0.0
      %558 = vmatprep.subr.mxu0 0.0
      %559 = vmatpush1.msra.mxu0 0.0
      %560 = vmatprep.subr.mxu0 0.0
      %561 = vmatpush1.msra.mxu0 0.0
      %562 = vmatprep.subr.mxu0 0.0
      %563 = vmatpush1.msra.mxu0 0.0
      %564 = vmatprep.subr.mxu0 0.0
      %565 = vmatpush1.msra.mxu0 0.0
      %566 = vmatprep.mubr.f32.mxu0 0.0
      %567 = vmatmul.mubr.f32.gmra.mrb[0].mxu0 %v500
      %v568 = vpop.f32.mrb[0].mxu0
      %v569 = vadd.f32 0.0, %v568
      %v570 = vpop.f32.mrb[0].mxu0
      %571 = vdwg.mxu0
      %v573 = vsel %vm245, %v480, 0
      %575 = vmatprep.subr.mxu0 0.0
      %576 = vmatpush1.msra.mxu0 %v481
      %577 = vmatprep.subr.mxu0 0.0
      %578 = vmatpush1.msra.mxu0 %v482
      %579 = vmatprep.subr.mxu0 0.0
      %580 = vmatpush1.msra.mxu0 %v483
      %581 = vmatprep.subr.mxu0 0.0
      %582 = vmatpush1.msra.mxu0 %v484
      %583 = vmatprep.subr.mxu0 0.0
      %584 = vmatpush1.msra.mxu0 %v485
      %585 = vmatprep.subr.mxu0 0.0
      %586 = vmatpush1.msra.mxu0 %v486
      %587 = vmatprep.subr.mxu0 0.0
      %588 = vmatpush1.msra.mxu0 %v487
      %589 = vmatprep.subr.mxu0 0.0
      %590 = vmatpush1.msra.mxu0 %v488
      %591 = vmatprep.subr.mxu0 0.0
      %592 = vmatpush1.msra.mxu0 0.0
      %593 = vmatprep.subr.mxu0 0.0
      %594 = vmatpush1.msra.mxu0 0.0
      %595 = vmatprep.subr.mxu0 0.0
      %596 = vmatpush1.msra.mxu0 0.0
      %597 = vmatprep.subr.mxu0 0.0
      %598 = vmatpush1.msra.mxu0 0.0
      %599 = vmatprep.subr.mxu0 0.0
      %600 = vmatpush1.msra.mxu0 0.0
      %601 = vmatprep.subr.mxu0 0.0
      %602 = vmatpush1.msra.mxu0 0.0
      %603 = vmatprep.subr.mxu0 0.0
      %604 = vmatpush1.msra.mxu0 0.0
      %605 = vmatprep.subr.mxu0 0.0
      %606 = vmatpush1.msra.mxu0 0.0
      %607 = vmatprep.subr.mxu0 0.0
      %608 = vmatpush1.msra.mxu0 0.0
      %609 = vmatprep.subr.mxu0 0.0
      %610 = vmatpush1.msra.mxu0 0.0
      %611 = vmatprep.subr.mxu0 0.0
      %612 = vmatpush1.msra.mxu0 0.0
      %613 = vmatprep.subr.mxu0 0.0
      %614 = vmatpush1.msra.mxu0 0.0
      %615 = vmatprep.subr.mxu0 0.0
      %616 = vmatpush1.msra.mxu0 0.0
      %617 = vmatprep.subr.mxu0 0.0
      %618 = vmatpush1.msra.mxu0 0.0
      %619 = vmatprep.subr.mxu0 0.0
      %620 = vmatpush1.msra.mxu0 0.0
      %621 = vmatprep.subr.mxu0 0.0
      %622 = vmatpush1.msra.mxu0 0.0
      %623 = vmatprep.subr.mxu0 0.0
      %624 = vmatpush1.msra.mxu0 0.0
      %625 = vmatprep.subr.mxu0 0.0
      %626 = vmatpush1.msra.mxu0 0.0
      %627 = vmatprep.subr.mxu0 0.0
      %628 = vmatpush1.msra.mxu0 0.0
      %629 = vmatprep.subr.mxu0 0.0
      %630 = vmatpush1.msra.mxu0 0.0
      %631 = vmatprep.subr.mxu0 0.0
      %632 = vmatpush1.msra.mxu0 0.0
      %633 = vmatprep.subr.mxu0 0.0
      %634 = vmatpush1.msra.mxu0 0.0
      %635 = vmatprep.subr.mxu0 0.0
      %636 = vmatpush1.msra.mxu0 0.0
      %637 = vmatprep.subr.mxu0 0.0
      %638 = vmatpush1.msra.mxu0 0.0
      %639 = vmatprep.mubr.f32.mxu0 0.0
      %640 = vmatmul.mubr.f32.gmra.mrb[0].mxu0 %v573
      %v641 = vpop.f32.mrb[0].mxu0
      %v642 = vadd.f32 %v569, %v641
      %v643 = vpop.f32.mrb[0].mxu0
      %644 = vdwg.mxu0
      %v645 = vld [vmem:[#allocation2 + $0x2] sm:$0xf]
      %s646 = scalar_lea.vmem %s2, 128
      %v647 = vld [vmem:[%s646] sm:$0xff]
      %v648 = vld [vmem:[%s646 + $0x8] sm:$0xff]
      %v649 = vld [vmem:[%s646 + $0x10] sm:$0xff]
      %v650 = vld [vmem:[%s646 + $0x18] sm:$0xff]
      %v651 = vld [vmem:[%s646 + $0x20] sm:$0xff]
      %v652 = vld [vmem:[%s646 + $0x28] sm:$0xff]
      %v653 = vld [vmem:[%s646 + $0x30] sm:$0xff]
      %v654 = vld [vmem:[%s646 + $0x38] sm:$0xff]
      %v656 = vsel %vm245, %v645, 0
      %658 = vmatprep.subr.mxu0 0.0
      %659 = vmatpush1.msra.mxu0 %v647
      %660 = vmatprep.subr.mxu0 0.0
      %661 = vmatpush1.msra.mxu0 %v648
      %662 = vmatprep.subr.mxu0 0.0
      %663 = vmatpush1.msra.mxu0 %v649
      %664 = vmatprep.subr.mxu0 0.0
      %665 = vmatpush1.msra.mxu0 %v650
      %666 = vmatprep.subr.mxu0 0.0
      %667 = vmatpush1.msra.mxu0 %v651
      %668 = vmatprep.subr.mxu0 0.0
      %669 = vmatpush1.msra.mxu0 %v652
      %670 = vmatprep.subr.mxu0 0.0
      %671 = vmatpush1.msra.mxu0 %v653
      %672 = vmatprep.subr.mxu0 0.0
      %673 = vmatpush1.msra.mxu0 %v654
      %674 = vmatprep.subr.mxu0 0.0
      %675 = vmatpush1.msra.mxu0 0.0
      %676 = vmatprep.subr.mxu0 0.0
      %677 = vmatpush1.msra.mxu0 0.0
      %678 = vmatprep.subr.mxu0 0.0
      %679 = vmatpush1.msra.mxu0 0.0
      %680 = vmatprep.subr.mxu0 0.0
      %681 = vmatpush1.msra.mxu0 0.0
      %682 = vmatprep.subr.mxu0 0.0
      %683 = vmatpush1.msra.mxu0 0.0
      %684 = vmatprep.subr.mxu0 0.0
      %685 = vmatpush1.msra.mxu0 0.0
      %686 = vmatprep.subr.mxu0 0.0
      %687 = vmatpush1.msra.mxu0 0.0
      %688 = vmatprep.subr.mxu0 0.0
      %689 = vmatpush1.msra.mxu0 0.0
      %690 = vmatprep.subr.mxu0 0.0
      %691 = vmatpush1.msra.mxu0 0.0
      %692 = vmatprep.subr.mxu0 0.0
      %693 = vmatpush1.msra.mxu0 0.0
      %694 = vmatprep.subr.mxu0 0.0
      %695 = vmatpush1.msra.mxu0 0.0
      %696 = vmatprep.subr.mxu0 0.0
      %697 = vmatpush1.msra.mxu0 0.0
      %698 = vmatprep.subr.mxu0 0.0
      %699 = vmatpush1.msra.mxu0 0.0
      %700 = vmatprep.subr.mxu0 0.0
      %701 = vmatpush1.msra.mxu0 0.0
      %702 = vmatprep.subr.mxu0 0.0
      %703 = vmatpush1.msra.mxu0 0.0
      %704 = vmatprep.subr.mxu0 0.0
      %705 = vmatpush1.msra.mxu0 0.0
      %706 = vmatprep.subr.mxu0 0.0
      %707 = vmatpush1.msra.mxu0 0.0
      %708 = vmatprep.subr.mxu0 0.0
      %709 = vmatpush1.msra.mxu0 0.0
      %710 = vmatprep.subr.mxu0 0.0
      %711 = vmatpush1.msra.mxu0 0.0
      %712 = vmatprep.subr.mxu0 0.0
      %713 = vmatpush1.msra.mxu0 0.0
      %714 = vmatprep.subr.mxu0 0.0
      %715 = vmatpush1.msra.mxu0 0.0
      %716 = vmatprep.subr.mxu0 0.0
      %717 = vmatpush1.msra.mxu0 0.0
      %718 = vmatprep.subr.mxu0 0.0
      %719 = vmatpush1.msra.mxu0 0.0
      %720 = vmatprep.subr.mxu0 0.0
      %721 = vmatpush1.msra.mxu0 0.0
      %722 = vmatprep.mubr.f32.mxu0 0.0
      %723 = vmatmul.mubr.f32.gmra.mrb[0].mxu0 %v656
      %v724 = vpop.f32.mrb[0].mxu0
      %v725 = vadd.f32 0.0, %v724
      %v726 = vpop.f32.mrb[0].mxu0
      %727 = vdwg.mxu0
      %v728 = vadd.f32 %v642, %v725
      %v729 = vsel %vm224, %v728, 0.0
      %v730 = vrot.slane %v729, 4
      %v731 = vadd.f32 %v729, %v730
      %v732 = vrot.slane %v731, 2
      %v733 = vadd.f32 %v731, %v732
      %v734 = vrot.slane %v733, 1
      %v735 = vadd.f32 %v733, %v734
      %v736 = vld [vmem:[%s3] sm:$0xff]
      %v737 = vld [vmem:[%s3 + $0x8] sm:$0xff]
      %v738 = vld [vmem:[%s3 + $0x10] sm:$0xff]
      %v739 = vld [vmem:[%s3 + $0x18] sm:$0xff]
      %v740 = vld [vmem:[%s3 + $0x20] sm:$0xff]
      %v741 = vld [vmem:[%s3 + $0x28] sm:$0xff]
      %v742 = vld [vmem:[%s3 + $0x30] sm:$0xff]
      %v743 = vld [vmem:[%s3 + $0x38] sm:$0xff]
      %v745 = vsel %vm245, %v735, 0
      %747 = vmatprep.subr.mxu0 0.0
      %748 = vmatpush1.msra.mxu0 %v736
      %749 = vmatprep.subr.mxu0 0.0
      %750 = vmatpush1.msra.mxu0 %v737
      %751 = vmatprep.subr.mxu0 0.0
      %752 = vmatpush1.msra.mxu0 %v738
      %753 = vmatprep.subr.mxu0 0.0
      %754 = vmatpush1.msra.mxu0 %v739
      %755 = vmatprep.subr.mxu0 0.0
      %756 = vmatpush1.msra.mxu0 %v740
      %757 = vmatprep.subr.mxu0 0.0
      %758 = vmatpush1.msra.mxu0 %v741
      %759 = vmatprep.subr.mxu0 0.0
      %760 = vmatpush1.msra.mxu0 %v742
      %761 = vmatprep.subr.mxu0 0.0
      %762 = vmatpush1.msra.mxu0 %v743
      %763 = vmatprep.subr.mxu0 0.0
      %764 = vmatpush1.msra.mxu0 0.0
      %765 = vmatprep.subr.mxu0 0.0
      %766 = vmatpush1.msra.mxu0 0.0
      %767 = vmatprep.subr.mxu0 0.0
      %768 = vmatpush1.msra.mxu0 0.0
      %769 = vmatprep.subr.mxu0 0.0
      %770 = vmatpush1.msra.mxu0 0.0
      %771 = vmatprep.subr.mxu0 0.0
      %772 = vmatpush1.msra.mxu0 0.0
      %773 = vmatprep.subr.mxu0 0.0
      %774 = vmatpush1.msra.mxu0 0.0
      %775 = vmatprep.subr.mxu0 0.0
      %776 = vmatpush1.msra.mxu0 0.0
      %777 = vmatprep.subr.mxu0 0.0
      %778 = vmatpush1.msra.mxu0 0.0
      %779 = vmatprep.subr.mxu0 0.0
      %780 = vmatpush1.msra.mxu0 0.0
      %781 = vmatprep.subr.mxu0 0.0
      %782 = vmatpush1.msra.mxu0 0.0
      %783 = vmatprep.subr.mxu0 0.0
      %784 = vmatpush1.msra.mxu0 0.0
      %785 = vmatprep.subr.mxu0 0.0
      %786 = vmatpush1.msra.mxu0 0.0
      %787 = vmatprep.subr.mxu0 0.0
      %788 = vmatpush1.msra.mxu0 0.0
      %789 = vmatprep.subr.mxu0 0.0
      %790 = vmatpush1.msra.mxu0 0.0
      %791 = vmatprep.subr.mxu0 0.0
      %792 = vmatpush1.msra.mxu0 0.0
      %793 = vmatprep.subr.mxu0 0.0
      %794 = vmatpush1.msra.mxu0 0.0
      %795 = vmatprep.subr.mxu0 0.0
      %796 = vmatpush1.msra.mxu0 0.0
      %797 = vmatprep.subr.mxu0 0.0
      %798 = vmatpush1.msra.mxu0 0.0
      %799 = vmatprep.subr.mxu0 0.0
      %800 = vmatpush1.msra.mxu0 0.0
      %801 = vmatprep.subr.mxu0 0.0
      %802 = vmatpush1.msra.mxu0 0.0
      %803 = vmatprep.subr.mxu0 0.0
      %804 = vmatpush1.msra.mxu0 0.0
      %805 = vmatprep.subr.mxu0 0.0
      %806 = vmatpush1.msra.mxu0 0.0
      %807 = vmatprep.subr.mxu0 0.0
      %808 = vmatpush1.msra.mxu0 0.0
      %809 = vmatprep.subr.mxu0 0.0
      %810 = vmatpush1.msra.mxu0 0.0
      %811 = vmatprep.mubr.f32.mxu0 0.0
      %812 = vmatmul.mubr.f32.gmra.mrb[0].mxu0 %v745
      %v813 = vpop.f32.mrb[0].mxu0
      %v814 = vadd.f32 0.0, %v813
      %v815 = vpop.f32.mrb[0].mxu0
      %816 = vdwg.mxu0
      %v817 = vmax.f32 %v814, 0.0
      %v818 = vld [vmem:[%s4] sm:$0xf]
      %vm819 = vcmask 31744
      %v821 = vsel %vm819, %v817, 0
      %vm823 = vcmask 1043456
      %v825 = vsel %vm823, %v818, 0
      %827 = vmatprep.subr.mxu0 0.0
      %828 = vmatpush1.msra.mxu0 %v825
      %829 = vmatprep.subr.mxu0 0.0
      %830 = vmatpush1.msra.mxu0 0.0
      %831 = vmatprep.subr.mxu0 0.0
      %832 = vmatpush1.msra.mxu0 0.0
      %833 = vmatprep.subr.mxu0 0.0
      %834 = vmatpush1.msra.mxu0 0.0
      %835 = vmatprep.subr.mxu0 0.0
      %836 = vmatpush1.msra.mxu0 0.0
      %837 = vmatprep.subr.mxu0 0.0
      %838 = vmatpush1.msra.mxu0 0.0
      %839 = vmatprep.subr.mxu0 0.0
      %840 = vmatpush1.msra.mxu0 0.0
      %841 = vmatprep.subr.mxu0 0.0
      %842 = vmatpush1.msra.mxu0 0.0
      %843 = vmatprep.subr.mxu0 0.0
      %844 = vmatpush1.msra.mxu0 0.0
      %845 = vmatprep.subr.mxu0 0.0
      %846 = vmatpush1.msra.mxu0 0.0
      %847 = vmatprep.subr.mxu0 0.0
      %848 = vmatpush1.msra.mxu0 0.0
      %849 = vmatprep.subr.mxu0 0.0
      %850 = vmatpush1.msra.mxu0 0.0
      %851 = vmatprep.subr.mxu0 0.0
      %852 = vmatpush1.msra.mxu0 0.0
      %853 = vmatprep.subr.mxu0 0.0
      %854 = vmatpush1.msra.mxu0 0.0
      %855 = vmatprep.subr.mxu0 0.0
      %856 = vmatpush1.msra.mxu0 0.0
      %857 = vmatprep.subr.mxu0 0.0
      %858 = vmatpush1.msra.mxu0 0.0
      %859 = vmatprep.subr.mxu0 0.0
      %860 = vmatpush1.msra.mxu0 0.0
      %861 = vmatprep.subr.mxu0 0.0
      %862 = vmatpush1.msra.mxu0 0.0
      %863 = vmatprep.subr.mxu0 0.0
      %864 = vmatpush1.msra.mxu0 0.0
      %865 = vmatprep.subr.mxu0 0.0
      %866 = vmatpush1.msra.mxu0 0.0
      %867 = vmatprep.subr.mxu0 0.0
      %868 = vmatpush1.msra.mxu0 0.0
      %869 = vmatprep.subr.mxu0 0.0
      %870 = vmatpush1.msra.mxu0 0.0
      %871 = vmatprep.subr.mxu0 0.0
      %872 = vmatpush1.msra.mxu0 0.0
      %873 = vmatprep.subr.mxu0 0.0
      %874 = vmatpush1.msra.mxu0 0.0
      %875 = vmatprep.subr.mxu0 0.0
      %876 = vmatpush1.msra.mxu0 0.0
      %877 = vmatprep.subr.mxu0 0.0
      %878 = vmatpush1.msra.mxu0 0.0
      %879 = vmatprep.subr.mxu0 0.0
      %880 = vmatpush1.msra.mxu0 0.0
      %881 = vmatprep.subr.mxu0 0.0
      %882 = vmatpush1.msra.mxu0 0.0
      %883 = vmatprep.subr.mxu0 0.0
      %884 = vmatpush1.msra.mxu0 0.0
      %885 = vmatprep.subr.mxu0 0.0
      %886 = vmatpush1.msra.mxu0 0.0
      %887 = vmatprep.subr.mxu0 0.0
      %888 = vmatpush1.msra.mxu0 0.0
      %889 = vmatprep.subr.mxu0 0.0
      %890 = vmatpush1.msra.mxu0 0.0
      %891 = vmatprep.mubr.f32.mxu0 0.0
      %892 = vmatmul.mubr.f32.gmra.mrb[0].mxu0 %v821
      %v893 = vpop.f32.mrb[0].mxu0
      %v894 = vadd.f32 0.0, %v893
      %v895 = vpop.f32.mrb[0].mxu0
      %896 = vdwg.mxu0
      %v897 = vxor.u32 %v894, 2147483648
      %v898 = vmul.f32 %v897, 1.442695
      %v899 = vpow.pop %v898
      %v900 = vadd.f32 %v899, 1.0
      %v901 = vrcp.pop %v900
      %v902 = vmul.f32 1.0, %v901
      %v903 = vlaneseq
      %v904 = vshrl.u32 %v903, 7
      %v905 = vsub.s32 0, %v904
      %v906 = vrot.slane %v902, %v905
      %v907 = vmul.f32 %v728, %v906
      %v908 = vadd.f32 %v907, %v223
      %909 = vst.msk [vmem:[#allocation2 + $0x1] sm:$0xf] %vm224, %v908
      %v910 = vld [vmem:[#allocation2] sm:$0xf]
      %s911 = scalar_lea.vmem %s1, 192
      %v912 = vld [vmem:[%s911] sm:$0xff]
      %v913 = vld [vmem:[%s911 + $0x8] sm:$0xff]
      %v914 = vld [vmem:[%s911 + $0x10] sm:$0xff]
      %v915 = vld [vmem:[%s911 + $0x18] sm:$0xff]
      %v916 = vld [vmem:[%s911 + $0x20] sm:$0xff]
      %v917 = vld [vmem:[%s911 + $0x28] sm:$0xff]
      %v918 = vld [vmem:[%s911 + $0x30] sm:$0xff]
      %v919 = vld [vmem:[%s911 + $0x38] sm:$0xff]
      %v920 = vld [vmem:[#allocation2 + $0x1] sm:$0xf]
      %s921 = scalar_lea.vmem %s1, 256
      %v922 = vld [vmem:[%s921] sm:$0xff]
      %v923 = vld [vmem:[%s921 + $0x8] sm:$0xff]
      %v924 = vld [vmem:[%s921 + $0x10] sm:$0xff]
      %v925 = vld [vmem:[%s921 + $0x18] sm:$0xff]
      %v926 = vld [vmem:[%s921 + $0x20] sm:$0xff]
      %v927 = vld [vmem:[%s921 + $0x28] sm:$0xff]
      %v928 = vld [vmem:[%s921 + $0x30] sm:$0xff]
      %v929 = vld [vmem:[%s921 + $0x38] sm:$0xff]
      %v931 = vsel %vm245, %v920, 0
      %933 = vmatprep.subr.mxu0 0.0
      %934 = vmatpush1.msra.mxu0 %v922
      %935 = vmatprep.subr.mxu0 0.0
      %936 = vmatpush1.msra.mxu0 %v923
      %937 = vmatprep.subr.mxu0 0.0
      %938 = vmatpush1.msra.mxu0 %v924
      %939 = vmatprep.subr.mxu0 0.0
      %940 = vmatpush1.msra.mxu0 %v925
      %941 = vmatprep.subr.mxu0 0.0
      %942 = vmatpush1.msra.mxu0 %v926
      %943 = vmatprep.subr.mxu0 0.0
      %944 = vmatpush1.msra.mxu0 %v927
      %945 = vmatprep.subr.mxu0 0.0
      %946 = vmatpush1.msra.mxu0 %v928
      %947 = vmatprep.subr.mxu0 0.0
      %948 = vmatpush1.msra.mxu0 %v929
      %949 = vmatprep.subr.mxu0 0.0
      %950 = vmatpush1.msra.mxu0 0.0
      %951 = vmatprep.subr.mxu0 0.0
      %952 = vmatpush1.msra.mxu0 0.0
      %953 = vmatprep.subr.mxu0 0.0
      %954 = vmatpush1.msra.mxu0 0.0
      %955 = vmatprep.subr.mxu0 0.0
      %956 = vmatpush1.msra.mxu0 0.0
      %957 = vmatprep.subr.mxu0 0.0
      %958 = vmatpush1.msra.mxu0 0.0
      %959 = vmatprep.subr.mxu0 0.0
      %960 = vmatpush1.msra.mxu0 0.0
      %961 = vmatprep.subr.mxu0 0.0
      %962 = vmatpush1.msra.mxu0 0.0
      %963 = vmatprep.subr.mxu0 0.0
      %964 = vmatpush1.msra.mxu0 0.0
      %965 = vmatprep.subr.mxu0 0.0
      %966 = vmatpush1.msra.mxu0 0.0
      %967 = vmatprep.subr.mxu0 0.0
      %968 = vmatpush1.msra.mxu0 0.0
      %969 = vmatprep.subr.mxu0 0.0
      %970 = vmatpush1.msra.mxu0 0.0
      %971 = vmatprep.subr.mxu0 0.0
      %972 = vmatpush1.msra.mxu0 0.0
      %973 = vmatprep.subr.mxu0 0.0
      %974 = vmatpush1.msra.mxu0 0.0
      %975 = vmatprep.subr.mxu0 0.0
      %976 = vmatpush1.msra.mxu0 0.0
      %977 = vmatprep.subr.mxu0 0.0
      %978 = vmatpush1.msra.mxu0 0.0
      %979 = vmatprep.subr.mxu0 0.0
      %980 = vmatpush1.msra.mxu0 0.0
      %981 = vmatprep.subr.mxu0 0.0
      %982 = vmatpush1.msra.mxu0 0.0
      %983 = vmatprep.subr.mxu0 0.0
      %984 = vmatpush1.msra.mxu0 0.0
      %985 = vmatprep.subr.mxu0 0.0
      %986 = vmatpush1.msra.mxu0 0.0
      %987 = vmatprep.subr.mxu0 0.0
      %988 = vmatpush1.msra.mxu0 0.0
      %989 = vmatprep.subr.mxu0 0.0
      %990 = vmatpush1.msra.mxu0 0.0
      %991 = vmatprep.subr.mxu0 0.0
      %992 = vmatpush1.msra.mxu0 0.0
      %993 = vmatprep.subr.mxu0 0.0
      %994 = vmatpush1.msra.mxu0 0.0
      %995 = vmatprep.subr.mxu0 0.0
      %996 = vmatpush1.msra.mxu0 0.0
      %997 = vmatprep.mubr.f32.mxu0 0.0
      %998 = vmatmul.mubr.f32.gmra.mrb[0].mxu0 %v931
      %v999 = vpop.f32.mrb[0].mxu0
      %v1000 = vadd.f32 0.0, %v999
      %v1001 = vpop.f32.mrb[0].mxu0
      %1002 = vdwg.mxu0
      %v1004 = vsel %vm245, %v910, 0
      %1006 = vmatprep.subr.mxu0 0.0
      %1007 = vmatpush1.msra.mxu0 %v912
      %1008 = vmatprep.subr.mxu0 0.0
      %1009 = vmatpush1.msra.mxu0 %v913
      %1010 = vmatprep.subr.mxu0 0.0
      %1011 = vmatpush1.msra.mxu0 %v914
      %1012 = vmatprep.subr.mxu0 0.0
      %1013 = vmatpush1.msra.mxu0 %v915
      %1014 = vmatprep.subr.mxu0 0.0
      %1015 = vmatpush1.msra.mxu0 %v916
      %1016 = vmatprep.subr.mxu0 0.0
      %1017 = vmatpush1.msra.mxu0 %v917
      %1018 = vmatprep.subr.mxu0 0.0
      %1019 = vmatpush1.msra.mxu0 %v918
      %1020 = vmatprep.subr.mxu0 0.0
      %1021 = vmatpush1.msra.mxu0 %v919
      %1022 = vmatprep.subr.mxu0 0.0
      %1023 = vmatpush1.msra.mxu0 0.0
      %1024 = vmatprep.subr.mxu0 0.0
      %1025 = vmatpush1.msra.mxu0 0.0
      %1026 = vmatprep.subr.mxu0 0.0
      %1027 = vmatpush1.msra.mxu0 0.0
      %1028 = vmatprep.subr.mxu0 0.0
      %1029 = vmatpush1.msra.mxu0 0.0
      %1030 = vmatprep.subr.mxu0 0.0
      %1031 = vmatpush1.msra.mxu0 0.0
      %1032 = vmatprep.subr.mxu0 0.0
      %1033 = vmatpush1.msra.mxu0 0.0
      %1034 = vmatprep.subr.mxu0 0.0
      %1035 = vmatpush1.msra.mxu0 0.0
      %1036 = vmatprep.subr.mxu0 0.0
      %1037 = vmatpush1.msra.mxu0 0.0
      %1038 = vmatprep.subr.mxu0 0.0
      %1039 = vmatpush1.msra.mxu0 0.0
      %1040 = vmatprep.subr.mxu0 0.0
      %1041 = vmatpush1.msra.mxu0 0.0
      %1042 = vmatprep.subr.mxu0 0.0
      %1043 = vmatpush1.msra.mxu0 0.0
      %1044 = vmatprep.subr.mxu0 0.0
      %1045 = vmatpush1.msra.mxu0 0.0
      %1046 = vmatprep.subr.mxu0 0.0
      %1047 = vmatpush1.msra.mxu0 0.0
      %1048 = vmatprep.subr.mxu0 0.0
      %1049 = vmatpush1.msra.mxu0 0.0
      %1050 = vmatprep.subr.mxu0 0.0
      %1051 = vmatpush1.msra.mxu0 0.0
      %1052 = vmatprep.subr.mxu0 0.0
      %1053 = vmatpush1.msra.mxu0 0.0
      %1054 = vmatprep.subr.mxu0 0.0
      %1055 = vmatpush1.msra.mxu0 0.0
      %1056 = vmatprep.subr.mxu0 0.0
      %1057 = vmatpush1.msra.mxu0 0.0
      %1058 = vmatprep.subr.mxu0 0.0
      %1059 = vmatpush1.msra.mxu0 0.0
      %1060 = vmatprep.subr.mxu0 0.0
      %1061 = vmatpush1.msra.mxu0 0.0
      %1062 = vmatprep.subr.mxu0 0.0
      %1063 = vmatpush1.msra.mxu0 0.0
      %1064 = vmatprep.subr.mxu0 0.0
      %1065 = vmatpush1.msra.mxu0 0.0
      %1066 = vmatprep.subr.mxu0 0.0
      %1067 = vmatpush1.msra.mxu0 0.0
      %1068 = vmatprep.subr.mxu0 0.0
      %1069 = vmatpush1.msra.mxu0 0.0
      %1070 = vmatprep.mubr.f32.mxu0 0.0
      %1071 = vmatmul.mubr.f32.gmra.mrb[0].mxu0 %v1004
      %v1072 = vpop.f32.mrb[0].mxu0
      %v1073 = vadd.f32 %v1000, %v1072
      %v1074 = vpop.f32.mrb[0].mxu0
      %1075 = vdwg.mxu0
      %v1076 = vld [vmem:[#allocation2 + $0x2] sm:$0xf]
      %s1077 = scalar_lea.vmem %s1, 320
      %v1078 = vld [vmem:[%s1077] sm:$0xff]
      %v1079 = vld [vmem:[%s1077 + $0x8] sm:$0xff]
      %v1080 = vld [vmem:[%s1077 + $0x10] sm:$0xff]
      %v1081 = vld [vmem:[%s1077 + $0x18] sm:$0xff]
      %v1082 = vld [vmem:[%s1077 + $0x20] sm:$0xff]
      %v1083 = vld [vmem:[%s1077 + $0x28] sm:$0xff]
      %v1084 = vld [vmem:[%s1077 + $0x30] sm:$0xff]
      %v1085 = vld [vmem:[%s1077 + $0x38] sm:$0xff]
      %v1087 = vsel %vm245, %v1076, 0
      %1089 = vmatprep.subr.mxu0 0.0
      %1090 = vmatpush1.msra.mxu0 %v1078
      %1091 = vmatprep.subr.mxu0 0.0
      %1092 = vmatpush1.msra.mxu0 %v1079
      %1093 = vmatprep.subr.mxu0 0.0
      %1094 = vmatpush1.msra.mxu0 %v1080
      %1095 = vmatprep.subr.mxu0 0.0
      %1096 = vmatpush1.msra.mxu0 %v1081
      %1097 = vmatprep.subr.mxu0 0.0
      %1098 = vmatpush1.msra.mxu0 %v1082
      %1099 = vmatprep.subr.mxu0 0.0
      %1100 = vmatpush1.msra.mxu0 %v1083
      %1101 = vmatprep.subr.mxu0 0.0
      %1102 = vmatpush1.msra.mxu0 %v1084
      %1103 = vmatprep.subr.mxu0 0.0
      %1104 = vmatpush1.msra.mxu0 %v1085
      %1105 = vmatprep.subr.mxu0 0.0
      %1106 = vmatpush1.msra.mxu0 0.0
      %1107 = vmatprep.subr.mxu0 0.0
      %1108 = vmatpush1.msra.mxu0 0.0
      %1109 = vmatprep.subr.mxu0 0.0
      %1110 = vmatpush1.msra.mxu0 0.0
      %1111 = vmatprep.subr.mxu0 0.0
      %1112 = vmatpush1.msra.mxu0 0.0
      %1113 = vmatprep.subr.mxu0 0.0
      %1114 = vmatpush1.msra.mxu0 0.0
      %1115 = vmatprep.subr.mxu0 0.0
      %1116 = vmatpush1.msra.mxu0 0.0
      %1117 = vmatprep.subr.mxu0 0.0
      %1118 = vmatpush1.msra.mxu0 0.0
      %1119 = vmatprep.subr.mxu0 0.0
      %1120 = vmatpush1.msra.mxu0 0.0
      %1121 = vmatprep.subr.mxu0 0.0
      %1122 = vmatpush1.msra.mxu0 0.0
      %1123 = vmatprep.subr.mxu0 0.0
      %1124 = vmatpush1.msra.mxu0 0.0
      %1125 = vmatprep.subr.mxu0 0.0
      %1126 = vmatpush1.msra.mxu0 0.0
      %1127 = vmatprep.subr.mxu0 0.0
      %1128 = vmatpush1.msra.mxu0 0.0
      %1129 = vmatprep.subr.mxu0 0.0
      %1130 = vmatpush1.msra.mxu0 0.0
      %1131 = vmatprep.subr.mxu0 0.0
      %1132 = vmatpush1.msra.mxu0 0.0
      %1133 = vmatprep.subr.mxu0 0.0
      %1134 = vmatpush1.msra.mxu0 0.0
      %1135 = vmatprep.subr.mxu0 0.0
      %1136 = vmatpush1.msra.mxu0 0.0
      %1137 = vmatprep.subr.mxu0 0.0
      %1138 = vmatpush1.msra.mxu0 0.0
      %1139 = vmatprep.subr.mxu0 0.0
      %1140 = vmatpush1.msra.mxu0 0.0
      %1141 = vmatprep.subr.mxu0 0.0
      %1142 = vmatpush1.msra.mxu0 0.0
      %1143 = vmatprep.subr.mxu0 0.0
      %1144 = vmatpush1.msra.mxu0 0.0
      %1145 = vmatprep.subr.mxu0 0.0
      %1146 = vmatpush1.msra.mxu0 0.0
      %1147 = vmatprep.subr.mxu0 0.0
      %1148 = vmatpush1.msra.mxu0 0.0
      %1149 = vmatprep.subr.mxu0 0.0
      %1150 = vmatpush1.msra.mxu0 0.0
      %1151 = vmatprep.subr.mxu0 0.0
      %1152 = vmatpush1.msra.mxu0 0.0
      %1153 = vmatprep.mubr.f32.mxu0 0.0
      %1154 = vmatmul.mubr.f32.gmra.mrb[0].mxu0 %v1087
      %v1155 = vpop.f32.mrb[0].mxu0
      %v1156 = vadd.f32 0.0, %v1155
      %v1157 = vpop.f32.mrb[0].mxu0
      %1158 = vdwg.mxu0
      %v1159 = vadd.f32 %v1073, %v1156
      %vm1160 = vcmp.gt.f32.partialorder %v1159, 0.0
      %v1161 = vmul.f32 %v1159, 0.25
      %v1162 = vsel %vm1160, %v1159, %v1161
      %1163 = vst.msk [vmem:[#allocation2 + $0x1] sm:$0xf] %vm224, %v1162
      %v1164 = vld [vmem:[#allocation2] sm:$0xf]
      %s1165 = scalar_lea.vmem %s2, 192
      %v1166 = vld [vmem:[%s1165] sm:$0xff]
      %v1167 = vld [vmem:[%s1165 + $0x8] sm:$0xff]
      %v1168 = vld [vmem:[%s1165 + $0x10] sm:$0xff]
      %v1169 = vld [vmem:[%s1165 + $0x18] sm:$0xff]
      %v1170 = vld [vmem:[%s1165 + $0x20] sm:$0xff]
      %v1171 = vld [vmem:[%s1165 + $0x28] sm:$0xff]
      %v1172 = vld [vmem:[%s1165 + $0x30] sm:$0xff]
      %v1173 = vld [vmem:[%s1165 + $0x38] sm:$0xff]
      %v1174 = vld [vmem:[#allocation2 + $0x1] sm:$0xf]
      %s1175 = scalar_lea.vmem %s2, 256
      %v1176 = vld [vmem:[%s1175] sm:$0xff]
      %v1177 = vld [vmem:[%s1175 + $0x8] sm:$0xff]
      %v1178 = vld [vmem:[%s1175 + $0x10] sm:$0xff]
      %v1179 = vld [vmem:[%s1175 + $0x18] sm:$0xff]
      %v1180 = vld [vmem:[%s1175 + $0x20] sm:$0xff]
      %v1181 = vld [vmem:[%s1175 + $0x28] sm:$0xff]
      %v1182 = vld [vmem:[%s1175 + $0x30] sm:$0xff]
      %v1183 = vld [vmem:[%s1175 + $0x38] sm:$0xff]
      %v1185 = vsel %vm245, %v1174, 0
      %1187 = vmatprep.subr.mxu0 0.0
      %1188 = vmatpush1.msra.mxu0 %v1176
      %1189 = vmatprep.subr.mxu0 0.0
      %1190 = vmatpush1.msra.mxu0 %v1177
      %1191 = vmatprep.subr.mxu0 0.0
      %1192 = vmatpush1.msra.mxu0 %v1178
      %1193 = vmatprep.subr.mxu0 0.0
      %1194 = vmatpush1.msra.mxu0 %v1179
      %1195 = vmatprep.subr.mxu0 0.0
      %1196 = vmatpush1.msra.mxu0 %v1180
      %1197 = vmatprep.subr.mxu0 0.0
      %1198 = vmatpush1.msra.mxu0 %v1181
      %1199 = vmatprep.subr.mxu0 0.0
      %1200 = vmatpush1.msra.mxu0 %v1182
      %1201 = vmatprep.subr.mxu0 0.0
      %1202 = vmatpush1.msra.mxu0 %v1183
      %1203 = vmatprep.subr.mxu0 0.0
      %1204 = vmatpush1.msra.mxu0 0.0
      %1205 = vmatprep.subr.mxu0 0.0
      %1206 = vmatpush1.msra.mxu0 0.0
      %1207 = vmatprep.subr.mxu0 0.0
      %1208 = vmatpush1.msra.mxu0 0.0
      %1209 = vmatprep.subr.mxu0 0.0
      %1210 = vmatpush1.msra.mxu0 0.0
      %1211 = vmatprep.subr.mxu0 0.0
      %1212 = vmatpush1.msra.mxu0 0.0
      %1213 = vmatprep.subr.mxu0 0.0
      %1214 = vmatpush1.msra.mxu0 0.0
      %1215 = vmatprep.subr.mxu0 0.0
      %1216 = vmatpush1.msra.mxu0 0.0
      %1217 = vmatprep.subr.mxu0 0.0
      %1218 = vmatpush1.msra.mxu0 0.0
      %1219 = vmatprep.subr.mxu0 0.0
      %1220 = vmatpush1.msra.mxu0 0.0
      %1221 = vmatprep.subr.mxu0 0.0
      %1222 = vmatpush1.msra.mxu0 0.0
      %1223 = vmatprep.subr.mxu0 0.0
      %1224 = vmatpush1.msra.mxu0 0.0
      %1225 = vmatprep.subr.mxu0 0.0
      %1226 = vmatpush1.msra.mxu0 0.0
      %1227 = vmatprep.subr.mxu0 0.0
      %1228 = vmatpush1.msra.mxu0 0.0
      %1229 = vmatprep.subr.mxu0 0.0
      %1230 = vmatpush1.msra.mxu0 0.0
      %1231 = vmatprep.subr.mxu0 0.0
      %1232 = vmatpush1.msra.mxu0 0.0
      %1233 = vmatprep.subr.mxu0 0.0
      %1234 = vmatpush1.msra.mxu0 0.0
      %1235 = vmatprep.subr.mxu0 0.0
      %1236 = vmatpush1.msra.mxu0 0.0
      %1237 = vmatprep.subr.mxu0 0.0
      %1238 = vmatpush1.msra.mxu0 0.0
      %1239 = vmatprep.subr.mxu0 0.0
      %1240 = vmatpush1.msra.mxu0 0.0
      %1241 = vmatprep.subr.mxu0 0.0
      %1242 = vmatpush1.msra.mxu0 0.0
      %1243 = vmatprep.subr.mxu0 0.0
      %1244 = vmatpush1.msra.mxu0 0.0
      %1245 = vmatprep.subr.mxu0 0.0
      %1246 = vmatpush1.msra.mxu0 0.0
      %1247 = vmatprep.subr.mxu0 0.0
      %1248 = vmatpush1.msra.mxu0 0.0
      %1249 = vmatprep.subr.mxu0 0.0
      %1250 = vmatpush1.msra.mxu0 0.0
      %1251 = vmatprep.mubr.f32.mxu0 0.0
      %1252 = vmatmul.mubr.f32.gmra.mrb[0].mxu0 %v1185
      %v1253 = vpop.f32.mrb[0].mxu0
      %v1254 = vadd.f32 0.0, %v1253
      %v1255 = vpop.f32.mrb[0].mxu0
      %1256 = vdwg.mxu0
      %v1258 = vsel %vm245, %v1164, 0
      %1260 = vmatprep.subr.mxu0 0.0
      %1261 = vmatpush1.msra.mxu0 %v1166
      %1262 = vmatprep.subr.mxu0 0.0
      %1263 = vmatpush1.msra.mxu0 %v1167
      %1264 = vmatprep.subr.mxu0 0.0
      %1265 = vmatpush1.msra.mxu0 %v1168
      %1266 = vmatprep.subr.mxu0 0.0
      %1267 = vmatpush1.msra.mxu0 %v1169
      %1268 = vmatprep.subr.mxu0 0.0
      %1269 = vmatpush1.msra.mxu0 %v1170
      %1270 = vmatprep.subr.mxu0 0.0
      %1271 = vmatpush1.msra.mxu0 %v1171
      %1272 = vmatprep.subr.mxu0 0.0
      %1273 = vmatpush1.msra.mxu0 %v1172
      %1274 = vmatprep.subr.mxu0 0.0
      %1275 = vmatpush1.msra.mxu0 %v1173
      %1276 = vmatprep.subr.mxu0 0.0
      %1277 = vmatpush1.msra.mxu0 0.0
      %1278 = vmatprep.subr.mxu0 0.0
      %1279 = vmatpush1.msra.mxu0 0.0
      %1280 = vmatprep.subr.mxu0 0.0
      %1281 = vmatpush1.msra.mxu0 0.0
      %1282 = vmatprep.subr.mxu0 0.0
      %1283 = vmatpush1.msra.mxu0 0.0
      %1284 = vmatprep.subr.mxu0 0.0
      %1285 = vmatpush1.msra.mxu0 0.0
      %1286 = vmatprep.subr.mxu0 0.0
      %1287 = vmatpush1.msra.mxu0 0.0
      %1288 = vmatprep.subr.mxu0 0.0
      %1289 = vmatpush1.msra.mxu0 0.0
      %1290 = vmatprep.subr.mxu0 0.0
      %1291 = vmatpush1.msra.mxu0 0.0
      %1292 = vmatprep.subr.mxu0 0.0
      %1293 = vmatpush1.msra.mxu0 0.0
      %1294 = vmatprep.subr.mxu0 0.0
      %1295 = vmatpush1.msra.mxu0 0.0
      %1296 = vmatprep.subr.mxu0 0.0
      %1297 = vmatpush1.msra.mxu0 0.0
      %1298 = vmatprep.subr.mxu0 0.0
      %1299 = vmatpush1.msra.mxu0 0.0
      %1300 = vmatprep.subr.mxu0 0.0
      %1301 = vmatpush1.msra.mxu0 0.0
      %1302 = vmatprep.subr.mxu0 0.0
      %1303 = vmatpush1.msra.mxu0 0.0
      %1304 = vmatprep.subr.mxu0 0.0
      %1305 = vmatpush1.msra.mxu0 0.0
      %1306 = vmatprep.subr.mxu0 0.0
      %1307 = vmatpush1.msra.mxu0 0.0
      %1308 = vmatprep.subr.mxu0 0.0
      %1309 = vmatpush1.msra.mxu0 0.0
      %1310 = vmatprep.subr.mxu0 0.0
      %1311 = vmatpush1.msra.mxu0 0.0
      %1312 = vmatprep.subr.mxu0 0.0
      %1313 = vmatpush1.msra.mxu0 0.0
      %1314 = vmatprep.subr.mxu0 0.0
      %1315 = vmatpush1.msra.mxu0 0.0
      %1316 = vmatprep.subr.mxu0 0.0
      %1317 = vmatpush1.msra.mxu0 0.0
      %1318 = vmatprep.subr.mxu0 0.0
      %1319 = vmatpush1.msra.mxu0 0.0
      %1320 = vmatprep.subr.mxu0 0.0
      %1321 = vmatpush1.msra.mxu0 0.0
      %1322 = vmatprep.subr.mxu0 0.0
      %1323 = vmatpush1.msra.mxu0 0.0
      %1324 = vmatprep.mubr.f32.mxu0 0.0
      %1325 = vmatmul.mubr.f32.gmra.mrb[0].mxu0 %v1258
      %v1326 = vpop.f32.mrb[0].mxu0
      %v1327 = vadd.f32 %v1254, %v1326
      %v1328 = vpop.f32.mrb[0].mxu0
      %1329 = vdwg.mxu0
      %v1330 = vld [vmem:[#allocation2 + $0x2] sm:$0xf]
      %s1331 = scalar_lea.vmem %s2, 320
      %v1332 = vld [vmem:[%s1331] sm:$0xff]
      %v1333 = vld [vmem:[%s1331 + $0x8] sm:$0xff]
      %v1334 = vld [vmem:[%s1331 + $0x10] sm:$0xff]
      %v1335 = vld [vmem:[%s1331 + $0x18] sm:$0xff]
      %v1336 = vld [vmem:[%s1331 + $0x20] sm:$0xff]
      %v1337 = vld [vmem:[%s1331 + $0x28] sm:$0xff]
      %v1338 = vld [vmem:[%s1331 + $0x30] sm:$0xff]
      %v1339 = vld [vmem:[%s1331 + $0x38] sm:$0xff]
      %v1341 = vsel %vm245, %v1330, 0
      %1343 = vmatprep.subr.mxu0 0.0
      %1344 = vmatpush1.msra.mxu0 %v1332
      %1345 = vmatprep.subr.mxu0 0.0
      %1346 = vmatpush1.msra.mxu0 %v1333
      %1347 = vmatprep.subr.mxu0 0.0
      %1348 = vmatpush1.msra.mxu0 %v1334
      %1349 = vmatprep.subr.mxu0 0.0
      %1350 = vmatpush1.msra.mxu0 %v1335
      %1351 = vmatprep.subr.mxu0 0.0
      %1352 = vmatpush1.msra.mxu0 %v1336
      %1353 = vmatprep.subr.mxu0 0.0
      %1354 = vmatpush1.msra.mxu0 %v1337
      %1355 = vmatprep.subr.mxu0 0.0
      %1356 = vmatpush1.msra.mxu0 %v1338
      %1357 = vmatprep.subr.mxu0 0.0
      %1358 = vmatpush1.msra.mxu0 %v1339
      %1359 = vmatprep.subr.mxu0 0.0
      %1360 = vmatpush1.msra.mxu0 0.0
      %1361 = vmatprep.subr.mxu0 0.0
      %1362 = vmatpush1.msra.mxu0 0.0
      %1363 = vmatprep.subr.mxu0 0.0
      %1364 = vmatpush1.msra.mxu0 0.0
      %1365 = vmatprep.subr.mxu0 0.0
      %1366 = vmatpush1.msra.mxu0 0.0
      %1367 = vmatprep.subr.mxu0 0.0
      %1368 = vmatpush1.msra.mxu0 0.0
      %1369 = vmatprep.subr.mxu0 0.0
      %1370 = vmatpush1.msra.mxu0 0.0
      %1371 = vmatprep.subr.mxu0 0.0
      %1372 = vmatpush1.msra.mxu0 0.0
      %1373 = vmatprep.subr.mxu0 0.0
      %1374 = vmatpush1.msra.mxu0 0.0
      %1375 = vmatprep.subr.mxu0 0.0
      %1376 = vmatpush1.msra.mxu0 0.0
      %1377 = vmatprep.subr.mxu0 0.0
      %1378 = vmatpush1.msra.mxu0 0.0
      %1379 = vmatprep.subr.mxu0 0.0
      %1380 = vmatpush1.msra.mxu0 0.0
      %1381 = vmatprep.subr.mxu0 0.0
      %1382 = vmatpush1.msra.mxu0 0.0
      %1383 = vmatprep.subr.mxu0 0.0
      %1384 = vmatpush1.msra.mxu0 0.0
      %1385 = vmatprep.subr.mxu0 0.0
      %1386 = vmatpush1.msra.mxu0 0.0
      %1387 = vmatprep.subr.mxu0 0.0
      %1388 = vmatpush1.msra.mxu0 0.0
      %1389 = vmatprep.subr.mxu0 0.0
      %1390 = vmatpush1.msra.mxu0 0.0
      %1391 = vmatprep.subr.mxu0 0.0
      %1392 = vmatpush1.msra.mxu0 0.0
      %1393 = vmatprep.subr.mxu0 0.0
      %1394 = vmatpush1.msra.mxu0 0.0
      %1395 = vmatprep.subr.mxu0 0.0
      %1396 = vmatpush1.msra.mxu0 0.0
      %1397 = vmatprep.subr.mxu0 0.0
      %1398 = vmatpush1.msra.mxu0 0.0
      %1399 = vmatprep.subr.mxu0 0.0
      %1400 = vmatpush1.msra.mxu0 0.0
      %1401 = vmatprep.subr.mxu0 0.0
      %1402 = vmatpush1.msra.mxu0 0.0
      %1403 = vmatprep.subr.mxu0 0.0
      %1404 = vmatpush1.msra.mxu0 0.0
      %1405 = vmatprep.subr.mxu0 0.0
      %1406 = vmatpush1.msra.mxu0 0.0
      %1407 = vmatprep.mubr.f32.mxu0 0.0
      %1408 = vmatmul.mubr.f32.gmra.mrb[0].mxu0 %v1341
      %v1409 = vpop.f32.mrb[0].mxu0
      %v1410 = vadd.f32 0.0, %v1409
      %v1411 = vpop.f32.mrb[0].mxu0
      %1412 = vdwg.mxu0
      %v1413 = vadd.f32 %v1327, %v1410
      %v1414 = vsel %vm224, %v1413, 0.0
      %v1415 = vrot.slane %v1414, 4
      %v1416 = vadd.f32 %v1414, %v1415
      %v1417 = vrot.slane %v1416, 2
      %v1418 = vadd.f32 %v1416, %v1417
      %v1419 = vrot.slane %v1418, 1
      %v1420 = vadd.f32 %v1418, %v1419
      %s1421 = scalar_lea.vmem %s3, 64
      %v1422 = vld [vmem:[%s1421] sm:$0xff]
      %v1423 = vld [vmem:[%s1421 + $0x8] sm:$0xff]
      %v1424 = vld [vmem:[%s1421 + $0x10] sm:$0xff]
      %v1425 = vld [vmem:[%s1421 + $0x18] sm:$0xff]
      %v1426 = vld [vmem:[%s1421 + $0x20] sm:$0xff]
      %v1427 = vld [vmem:[%s1421 + $0x28] sm:$0xff]
      %v1428 = vld [vmem:[%s1421 + $0x30] sm:$0xff]
      %v1429 = vld [vmem:[%s1421 + $0x38] sm:$0xff]
      %v1431 = vsel %vm245, %v1420, 0
      %1433 = vmatprep.subr.mxu0 0.0
      %1434 = vmatpush1.msra.mxu0 %v1422
      %1435 = vmatprep.subr.mxu0 0.0
      %1436 = vmatpush1.msra.mxu0 %v1423
      %1437 = vmatprep.subr.mxu0 0.0
      %1438 = vmatpush1.msra.mxu0 %v1424
      %1439 = vmatprep.subr.mxu0 0.0
      %1440 = vmatpush1.msra.mxu0 %v1425
      %1441 = vmatprep.subr.mxu0 0.0
      %1442 = vmatpush1.msra.mxu0 %v1426
      %1443 = vmatprep.subr.mxu0 0.0
      %1444 = vmatpush1.msra.mxu0 %v1427
      %1445 = vmatprep.subr.mxu0 0.0
      %1446 = vmatpush1.msra.mxu0 %v1428
      %1447 = vmatprep.subr.mxu0 0.0
      %1448 = vmatpush1.msra.mxu0 %v1429
      %1449 = vmatprep.subr.mxu0 0.0
      %1450 = vmatpush1.msra.mxu0 0.0
      %1451 = vmatprep.subr.mxu0 0.0
      %1452 = vmatpush1.msra.mxu0 0.0
      %1453 = vmatprep.subr.mxu0 0.0
      %1454 = vmatpush1.msra.mxu0 0.0
      %1455 = vmatprep.subr.mxu0 0.0
      %1456 = vmatpush1.msra.mxu0 0.0
      %1457 = vmatprep.subr.mxu0 0.0
      %1458 = vmatpush1.msra.mxu0 0.0
      %1459 = vmatprep.subr.mxu0 0.0
      %1460 = vmatpush1.msra.mxu0 0.0
      %1461 = vmatprep.subr.mxu0 0.0
      %1462 = vmatpush1.msra.mxu0 0.0
      %1463 = vmatprep.subr.mxu0 0.0
      %1464 = vmatpush1.msra.mxu0 0.0
      %1465 = vmatprep.subr.mxu0 0.0
      %1466 = vmatpush1.msra.mxu0 0.0
      %1467 = vmatprep.subr.mxu0 0.0
      %1468 = vmatpush1.msra.mxu0 0.0
      %1469 = vmatprep.subr.mxu0 0.0
      %1470 = vmatpush1.msra.mxu0 0.0
      %1471 = vmatprep.subr.mxu0 0.0
      %1472 = vmatpush1.msra.mxu0 0.0
      %1473 = vmatprep.subr.mxu0 0.0
      %1474 = vmatpush1.msra.mxu0 0.0
      %1475 = vmatprep.subr.mxu0 0.0
      %1476 = vmatpush1.msra.mxu0 0.0
      %1477 = vmatprep.subr.mxu0 0.0
      %1478 = vmatpush1.msra.mxu0 0.0
      %1479 = vmatprep.subr.mxu0 0.0
      %1480 = vmatpush1.msra.mxu0 0.0
      %1481 = vmatprep.subr.mxu0 0.0
      %1482 = vmatpush1.msra.mxu0 0.0
      %1483 = vmatprep.subr.mxu0 0.0
      %1484 = vmatpush1.msra.mxu0 0.0
      %1485 = vmatprep.subr.mxu0 0.0
      %1486 = vmatpush1.msra.mxu0 0.0
      %1487 = vmatprep.subr.mxu0 0.0
      %1488 = vmatpush1.msra.mxu0 0.0
      %1489 = vmatprep.subr.mxu0 0.0
      %1490 = vmatpush1.msra.mxu0 0.0
      %1491 = vmatprep.subr.mxu0 0.0
      %1492 = vmatpush1.msra.mxu0 0.0
      %1493 = vmatprep.subr.mxu0 0.0
      %1494 = vmatpush1.msra.mxu0 0.0
      %1495 = vmatprep.subr.mxu0 0.0
      %1496 = vmatpush1.msra.mxu0 0.0
      %1497 = vmatprep.mubr.f32.mxu0 0.0
      %1498 = vmatmul.mubr.f32.gmra.mrb[0].mxu0 %v1431
      %v1499 = vpop.f32.mrb[0].mxu0
      %v1500 = vadd.f32 0.0, %v1499
      %v1501 = vpop.f32.mrb[0].mxu0
      %1502 = vdwg.mxu0
      %v1503 = vmax.f32 %v1500, 0.0
      %s1504 = scalar_lea.vmem %s4, 4
      %v1505 = vld [vmem:[%s1504] sm:$0xf]
      %v1507 = vsel %vm819, %v1503, 0
      %v1510 = vsel %vm823, %v1505, 0
      %1512 = vmatprep.subr.mxu0 0.0
      %1513 = vmatpush1.msra.mxu0 %v1510
      %1514 = vmatprep.subr.mxu0 0.0
      %1515 = vmatpush1.msra.mxu0 0.0
      %1516 = vmatprep.subr.mxu0 0.0
      %1517 = vmatpush1.msra.mxu0 0.0
      %1518 = vmatprep.subr.mxu0 0.0
      %1519 = vmatpush1.msra.mxu0 0.0
      %1520 = vmatprep.subr.mxu0 0.0
      %1521 = vmatpush1.msra.mxu0 0.0
      %1522 = vmatprep.subr.mxu0 0.0
      %1523 = vmatpush1.msra.mxu0 0.0
      %1524 = vmatprep.subr.mxu0 0.0
      %1525 = vmatpush1.msra.mxu0 0.0
      %1526 = vmatprep.subr.mxu0 0.0
      %1527 = vmatpush1.msra.mxu0 0.0
      %1528 = vmatprep.subr.mxu0 0.0
      %1529 = vmatpush1.msra.mxu0 0.0
      %1530 = vmatprep.subr.mxu0 0.0
      %1531 = vmatpush1.msra.mxu0 0.0
      %1532 = vmatprep.subr.mxu0 0.0
      %1533 = vmatpush1.msra.mxu0 0.0
      %1534 = vmatprep.subr.mxu0 0.0
      %1535 = vmatpush1.msra.mxu0 0.0
      %1536 = vmatprep.subr.mxu0 0.0
      %1537 = vmatpush1.msra.mxu0 0.0
      %1538 = vmatprep.subr.mxu0 0.0
      %1539 = vmatpush1.msra.mxu0 0.0
      %1540 = vmatprep.subr.mxu0 0.0
      %1541 = vmatpush1.msra.mxu0 0.0
      %1542 = vmatprep.subr.mxu0 0.0
      %1543 = vmatpush1.msra.mxu0 0.0
      %1544 = vmatprep.subr.mxu0 0.0
      %1545 = vmatpush1.msra.mxu0 0.0
      %1546 = vmatprep.subr.mxu0 0.0
      %1547 = vmatpush1.msra.mxu0 0.0
      %1548 = vmatprep.subr.mxu0 0.0
      %1549 = vmatpush1.msra.mxu0 0.0
      %1550 = vmatprep.subr.mxu0 0.0
      %1551 = vmatpush1.msra.mxu0 0.0
      %1552 = vmatprep.subr.mxu0 0.0
      %1553 = vmatpush1.msra.mxu0 0.0
      %1554 = vmatprep.subr.mxu0 0.0
      %1555 = vmatpush1.msra.mxu0 0.0
      %1556 = vmatprep.subr.mxu0 0.0
      %1557 = vmatpush1.msra.mxu0 0.0
      %1558 = vmatprep.subr.mxu0 0.0
      %1559 = vmatpush1.msra.mxu0 0.0
      %1560 = vmatprep.subr.mxu0 0.0
      %1561 = vmatpush1.msra.mxu0 0.0
      %1562 = vmatprep.subr.mxu0 0.0
      %1563 = vmatpush1.msra.mxu0 0.0
      %1564 = vmatprep.subr.mxu0 0.0
      %1565 = vmatpush1.msra.mxu0 0.0
      %1566 = vmatprep.subr.mxu0 0.0
      %1567 = vmatpush1.msra.mxu0 0.0
      %1568 = vmatprep.subr.mxu0 0.0
      %1569 = vmatpush1.msra.mxu0 0.0
      %1570 = vmatprep.subr.mxu0 0.0
      %1571 = vmatpush1.msra.mxu0 0.0
      %1572 = vmatprep.subr.mxu0 0.0
      %1573 = vmatpush1.msra.mxu0 0.0
      %1574 = vmatprep.subr.mxu0 0.0
      %1575 = vmatpush1.msra.mxu0 0.0
      %1576 = vmatprep.mubr.f32.mxu0 0.0
      %1577 = vmatmul.mubr.f32.gmra.mrb[0].mxu0 %v1507
      %v1578 = vpop.f32.mrb[0].mxu0
      %v1579 = vadd.f32 0.0, %v1578
      %v1580 = vpop.f32.mrb[0].mxu0
      %1581 = vdwg.mxu0
      %v1582 = vxor.u32 %v1579, 2147483648
      %v1583 = vmul.f32 %v1582, 1.442695
      %v1584 = vpow.pop %v1583
      %v1585 = vadd.f32 %v1584, 1.0
      %v1586 = vrcp.pop %v1585
      %v1587 = vmul.f32 1.0, %v1586
      %v1588 = vlaneseq
      %v1589 = vshrl.u32 %v1588, 7
      %v1590 = vsub.s32 0, %v1589
      %v1591 = vrot.slane %v1587, %v1590
      %v1592 = vmul.f32 %v1413, %v1591
      %v1593 = vadd.f32 %v1592, %v908
      %1594 = vst.msk [vmem:[%s219] sm:$0xf] %vm224, %v1593
      %p1595 = scmp.lt.s32.totalorder %s16, 1
      %s1596 = scalar_select %p1595, %s16, 1
      %s1597 = smul.addr %s1596, 4
      %s1598 = scalar_lea.vmem %s5, %s1597
      // Predicated region
      $region41: #{decoder_forward.7} parent=39 // pred_check
        %p1599 = pneg %p144
      $region42: #{decoder_forward.7} parent=39 // pred_check_branch
        %1601 = sbr.rel (%p1599) target = $region44
      $region43: #{decoder_forward.7} parent=39 // pred_region
        _
      $region44: #{decoder_forward.7} parent=39 // pred_fallthru
        _
    $region40: #{decoder_forward.7} parent=5 // pred_fallthru
      _
    %p1602 = scmp.le.s32.totalorder 2, %s11
    // Predicated region
    $region45: #{decoder_forward.7} parent=5 // pred_check
      %p1603 = pneg %p1602
    $region46: #{decoder_forward.7} parent=5 // pred_check_branch
      %1605 = sbr.rel (%p1603) target = $region48
    $region47: #{decoder_forward.7} parent=5 // pred_region
      %s1606 = ssub.s32 %s11, 2
      // Predicated region
      $region49: #{decoder_forward.7} parent=47 // pred_check
        %p1607 = pneg %p150
      $region50: #{decoder_forward.7} parent=47 // pred_check_branch
        %1609 = sbr.rel (%p1607) target = $region52
      $region51: #{decoder_forward.7} parent=47 // pred_region
        %p1610 = scmp.lt.s32.totalorder %s17, 1
        %s1611 = scalar_select %p1610, %s17, 1
        %s1612 = smul.addr %s1611, 4
        %s1613 = scalar_lea.vmem %s5, %s1612
      $region52: #{decoder_forward.7} parent=47 // pred_fallthru
        _
    $region48: #{decoder_forward.7} parent=5 // pred_fallthru
      _
  $region6: #{decoder_forward.7} parent=0 // loop_footer
    %s15 = sadd.s32 1, %s11
  $region7: #{decoder_forward.7} parent=0 // loop_footer_branch
    %10 = sbr.rel target = $region3
  $region8: #{decoder_forward.7} parent=0 // loop_exit
    _

// kernel: decoder_forward.9
$region0: #{decoder_forward.9}
  #allocation0 [shape = 'u32[]', space=smem, size = 0x4, offset = 0x4, fixed_abs, tag = 'smem constant byte address 0x4 - core index']
  #allocation1 [shape = 'u32[144,128]{1,0:T(1,128)}', space=vmem, size = 0x12000, scoped, tag = 'internal scratch']
  %s0 = inlined_call_operand.vmem [shape: f32[2,4,64], index: 0, kind: input, shape index: {}]
  %s1 = inlined_call_operand.vmem [shape: f32[2,8,96], index: 1, kind: input, shape index: {}, may-alias: {1,4}]
  %s2 = inlined_call_operand.vmem [shape: f32[8,4], index: 2, kind: input, shape index: {}]
  %s3 = inlined_call_operand.vmem [shape: f32[64,96], index: 3, kind: input, shape index: {}]
  %s4 = inlined_call_operand.vmem [shape: f32[2,8,96], index: 4, kind: output, shape index: {}, may-alias: {1,4}]
  %s5 = sld [smem:[#allocation0]]
  $region49: #{decoder_forward.9} parent=0
    _
  %s7 = ssub.s32 1, %s5
  %s8 = scalar_select 0, %s7, %s5
  loop: start=0, step=1, limit=4
  $region2: #{decoder_forward.9} parent=0 // loop_pre_header
    _
  $region3: #{decoder_forward.9} parent=0 // loop_header
    %s10 = sphi 0, %s14
    %p11 = scmp.ge.s32.totalorder %s10, 4
    %s20 = sphi 0, %s22
    %s23 = sphi 0, %s20
    %s24 = sphi 0, %s23
    %s40 = sphi 0, %s24
    %s46 = sphi 0, %s48
    %s49 = sphi 0, %s46
    %s50 = sphi 0, %s49
    %s66 = sphi 0, %s50
    %s70 = sphi 0, %s70
    %s72 = sphi 0, %s70
    %s73 = sphi 0, %s72
    %s87 = sphi 0, %s73
    %s91 = sphi 0, %s91
    %s93 = sphi 0, %s91
    %s94 = sphi 0, %s93
    %s108 = sphi 0, %s94
    %s114 = sphi 0, %s116
    %s117 = sphi 0, %s114
    %s118 = sphi 0, %s117
    %s134 = sphi 0, %s118
  $region4: #{decoder_forward.9} parent=0 // loop_header_branch
    %13 = sbr.rel (%p11) target = $region8
  $region5: #{decoder_forward.9} parent=0 // loop_body
    %s15 = ssub.s32 %s10, 1
    %s16 = ssub.s32 %s10, 2
    %s17 = sadd.s32 %s10, 1
    %s18 = ssub.s32 %s10, %s17
    %p19 = scmp.eq.s32.totalorder %s18, 0
    %s21 = sadd.s32 %s20, 1
    %s22 = scalar_select %p19, %s20, %s21
    %p25 = pneg %p19
    %p26 = scmp.eq.s32.totalorder %s10, 1
    %p27 = por %p25, %p26
    %p28 = scmp.ne.s32.totalorder %s20, %s23
    %p29 = scmp.eq.s32.totalorder %s10, 0
    %p30 = por %p28, %p29
    %p31 = scmp.ne.s32.totalorder %s20, %s23
    %p32 = scmp.eq.s32.totalorder %s15, 1
    %p33 = por %p31, %p32
    %p34 = scmp.ne.s32.totalorder %s23, %s24
    %p35 = scmp.eq.s32.totalorder %s15, 0
    %p36 = por %p34, %p35
    %p37 = scmp.ne.s32.totalorder %s23, %s24
    %p38 = scmp.eq.s32.totalorder %s16, 1
    %p39 = por %p37, %p38
    %p41 = scmp.ne.s32.totalorder %s24, %s40
    %p42 = scmp.eq.s32.totalorder %s16, 0
    %p43 = por %p41, %p42
    %s44 = ssub.s32 %s10, %s17
    %p45 = scmp.eq.s32.totalorder %s44, 0
    %s47 = sadd.s32 %s46, 1
    %s48 = scalar_select %p45, %s46, %s47
    %p51 = pneg %p45
    %p52 = scmp.eq.s32.totalorder %s10, 1
    %p53 = por %p51, %p52
    %p54 = scmp.ne.s32.totalorder %s46, %s49
    %p55 = scmp.eq.s32.totalorder %s10, 0
    %p56 = por %p54, %p55
    %p57 = scmp.ne.s32.totalorder %s46, %s49
    %p58 = scmp.eq.s32.totalorder %s15, 1
    %p59 = por %p57, %p58
    %p60 = scmp.ne.s32.totalorder %s49, %s50
    %p61 = scmp.eq.s32.totalorder %s15, 0
    %p62 = por %p60, %p61
    %p63 = scmp.ne.s32.totalorder %s49, %s50
    %p64 = scmp.eq.s32.totalorder %s16, 1
    %p65 = por %p63, %p64
    %p67 = scmp.ne.s32.totalorder %s50, %s66
    %p68 = scmp.eq.s32.totalorder %s16, 0
    %p69 = por %p67, %p68
    %s71 = sadd.s32 %s70, 1
    %p74 = scmp.eq.s32.totalorder %s10, 1
    %p75 = scmp.ne.s32.totalorder %s70, %s72
    %p76 = scmp.eq.s32.totalorder %s10, 0
    %p77 = por %p75, %p76
    %p78 = scmp.ne.s32.totalorder %s70, %s72
    %p79 = scmp.eq.s32.totalorder %s15, 1
    %p80 = por %p78, %p79
    %p81 = scmp.ne.s32.totalorder %s72, %s73
    %p82 = scmp.eq.s32.totalorder %s15, 0
    %p83 = por %p81, %p82
    %p84 = scmp.ne.s32.totalorder %s72, %s73
    %p85 = scmp.eq.s32.totalorder %s16, 1
    %p86 = por %p84, %p85
    %p88 = scmp.ne.s32.totalorder %s73, %s87
    %p89 = scmp.eq.s32.totalorder %s16, 0
    %p90 = por %p88, %p89
    %s92 = sadd.s32 %s91, 1
    %p95 = scmp.eq.s32.totalorder %s10, 1
    %p96 = scmp.ne.s32.totalorder %s91, %s93
    %p97 = scmp.eq.s32.totalorder %s10, 0
    %p98 = por %p96, %p97
    %p99 = scmp.ne.s32.totalorder %s91, %s93
    %p100 = scmp.eq.s32.totalorder %s15, 1
    %p101 = por %p99, %p100
    %p102 = scmp.ne.s32.totalorder %s93, %s94
    %p103 = scmp.eq.s32.totalorder %s15, 0
    %p104 = por %p102, %p103
    %p105 = scmp.ne.s32.totalorder %s93, %s94
    %p106 = scmp.eq.s32.totalorder %s16, 1
    %p107 = por %p105, %p106
    %p109 = scmp.ne.s32.totalorder %s94, %s108
    %p110 = scmp.eq.s32.totalorder %s16, 0
    %p111 = por %p109, %p110
    %s112 = ssub.s32 %s10, %s17
    %p113 = scmp.eq.s32.totalorder %s112, 0
    %s115 = sadd.s32 %s114, 1
    %s116 = scalar_select %p113, %s114, %s115
    %p119 = pneg %p113
    %p120 = scmp.eq.s32.totalorder %s10, 1
    %p121 = por %p119, %p120
    %p122 = scmp.ne.s32.totalorder %s114, %s117
    %p123 = scmp.eq.s32.totalorder %s10, 0
    %p124 = por %p122, %p123
    %p125 = scmp.ne.s32.totalorder %s114, %s117
    %p126 = scmp.eq.s32.totalorder %s15, 1
    %p127 = por %p125, %p126
    %p128 = scmp.ne.s32.totalorder %s117, %s118
    %p129 = scmp.eq.s32.totalorder %s15, 0
    %p130 = por %p128, %p129
    %p131 = scmp.ne.s32.totalorder %s117, %s118
    %p132 = scmp.eq.s32.totalorder %s16, 1
    %p133 = por %p131, %p132
    %p135 = scmp.ne.s32.totalorder %s118, %s134
    %p136 = scmp.eq.s32.totalorder %s16, 0
    %p137 = por %p135, %p136
    %p138 = scmp.le.s32.totalorder 1, %s10
    %p139 = scmp.lt.s32.totalorder %s10, 3
    %p140 = pnand %p138, %p139
    %p141 = pneg %p140
    // Predicated region
    $region9: #{decoder_forward.9} parent=5 // pred_check
      _
    $region10: #{decoder_forward.9} parent=5 // pred_check_branch
      %143 = sbr.rel (%p140) target = $region12
    $region11: #{decoder_forward.9} parent=5 // pred_region
      %s144 = ssub.s32 %s10, 1
      // Predicated region
      $region13: #{decoder_forward.9} parent=11 // pred_check
        %p145 = pneg %p83
      $region14: #{decoder_forward.9} parent=11 // pred_check_branch
        %147 = sbr.rel (%p145) target = $region16
      $region15: #{decoder_forward.9} parent=11 // pred_region
        _
      $region16: #{decoder_forward.9} parent=11 // pred_fallthru
        _
      // Predicated region
      $region17: #{decoder_forward.9} parent=11 // pred_check
        %p148 = pneg %p104
      $region18: #{decoder_forward.9} parent=11 // pred_check_branch
        %150 = sbr.rel (%p148) target = $region20
      $region19: #{decoder_forward.9} parent=11 // pred_region
        _
      $region20: #{decoder_forward.9} parent=11 // pred_fallthru
        _
    $region12: #{decoder_forward.9} parent=5 // pred_fallthru
      _
    %p151 = scmp.lt.s32.totalorder %s10, 2
    // Predicated region
    $region21: #{decoder_forward.9} parent=5 // pred_check
      %p152 = pneg %p151
    $region22: #{decoder_forward.9} parent=5 // pred_check_branch
      %154 = sbr.rel (%p152) target = $region24
    $region23: #{decoder_forward.9} parent=5 // pred_region
      // Predicated region
      $region25: #{decoder_forward.9} parent=23 // pred_check
        %p155 = pneg %p30
      $region26: #{decoder_forward.9} parent=23 // pred_check_branch
        %157 = sbr.rel (%p155) target = $region28
      $region27: #{decoder_forward.9} parent=23 // pred_region
        %p158 = scmp.lt.s32.totalorder %s10, 1
        %s159 = scalar_select %p158, %s10, 1
        %s160 = smul.addr %s159, 4
        %s161 = scalar_lea.vmem %s0, %s160
      $region28: #{decoder_forward.9} parent=23 // pred_fallthru
        _
      // Predicated region
      $region29: #{decoder_forward.9} parent=23 // pred_check
        %p162 = pneg %p56
      $region30: #{decoder_forward.9} parent=23 // pred_check_branch
        %164 = sbr.rel (%p162) target = $region32
      $region31: #{decoder_forward.9} parent=23 // pred_region
        %p165 = scmp.lt.s32.totalorder %s10, 1
        %s166 = scalar_select %p165, %s10, 1
        %s167 = smul.addr %s166, 8
        %s168 = scalar_lea.vmem %s1, %s167
      $region32: #{decoder_forward.9} parent=23 // pred_fallthru
        _
    $region24: #{decoder_forward.9} parent=5 // pred_fallthru
      _
    %p169 = scmp.le.s32.totalorder 1, %s10
    %p170 = scmp.lt.s32.totalorder %s10, 3
    %p171 = pnand %p169, %p170
    %p172 = pneg %p171
    // Predicated region
    $region33: #{decoder_forward.9} parent=5 // pred_check
      _
    $region34: #{decoder_forward.9} parent=5 // pred_check_branch
      %174 = sbr.rel (%p171) target = $region36
    $region35: #{decoder_forward.9} parent=5 // pred_region
      %s175 = ssub.s32 %s10, 1
      %p176 = scmp.lt.s32.totalorder %s15, 1
      %s177 = scalar_select %p176, %s15, 1
      %s178 = smul.addr %s177, 4
      %s179 = scalar_lea.vmem %s0, %s178
      %p180 = pneg %p36
      %p181 = pneg %p33
      %p182 = scmp.lt.s32.totalorder %s15, 1
      %s183 = scalar_select %p182, %s15, 1
      %s184 = smul.addr %s183, 8
      %s185 = scalar_lea.vmem %s1, %s184
      %p186 = pneg %p62
      %p187 = pneg %p59
      %p188 = pneg %p83
      %p189 = pneg %p80
      %p190 = pneg %p104
      %p191 = pneg %p101
      %p192 = pneg %p130
      %p193 = pneg %p127
      %p194 = scmp.lt.s32.totalorder %s15, 1
      %s195 = scalar_select %p194, %s15, 1
      %s196 = smul.addr %s195, 8
      %s197 = scalar_lea.vmem %s4, %s196
      %p198 = scmp.lt.s32.totalorder %s15, 1
      %s199 = scalar_select %p198, %s15, 1
      %s200 = smul.addr %s199, 4
      %s201 = scalar_lea.vmem %s0, %s200
      %p202 = scmp.lt.s32.totalorder %s15, 1
      %s203 = scalar_select %p202, %s15, 1
      %s204 = smul.addr %s203, 8
      %s205 = scalar_lea.vmem %s1, %s204
      %p206 = scmp.lt.s32.totalorder %s15, 1
      %s207 = scalar_select %p206, %s15, 1
      %s208 = smul.addr %s207, 8
      %s209 = scalar_lea.vmem %s4, %s208
      %v210 = vld [vmem:[%s2] sm:$0xff]
      %v211 = vld [vmem:[%s201] sm:$0xf]
      %vm212 = vcmask 31744
      %v214 = vsel %vm212, %v210, 0
      %vm216 = vcmask 1043456
      %v218 = vsel %vm216, %v211, 0
      %220 = vmatprep.subr.mxu0 0.0
      %221 = vmatpush1.msra.mxu0 %v218
      %222 = vmatprep.subr.mxu0 0.0
      %223 = vmatpush1.msra.mxu0 0.0
      %224 = vmatprep.subr.mxu0 0.0
      %225 = vmatpush1.msra.mxu0 0.0
      %226 = vmatprep.subr.mxu0 0.0
      %227 = vmatpush1.msra.mxu0 0.0
      %228 = vmatprep.subr.mxu0 0.0
      %229 = vmatpush1.msra.mxu0 0.0
      %230 = vmatprep.subr.mxu0 0.0
      %231 = vmatpush1.msra.mxu0 0.0
      %232 = vmatprep.subr.mxu0 0.0
      %233 = vmatpush1.msra.mxu0 0.0
      %234 = vmatprep.subr.mxu0 0.0
      %235 = vmatpush1.msra.mxu0 0.0
      %236 = vmatprep.subr.mxu0 0.0
      %237 = vmatpush1.msra.mxu0 0.0
      %238 = vmatprep.subr.mxu0 0.0
      %239 = vmatpush1.msra.mxu0 0.0
      %240 = vmatprep.subr.mxu0 0.0
      %241 = vmatpush1.msra.mxu0 0.0
      %242 = vmatprep.subr.mxu0 0.0
      %243 = vmatpush1.msra.mxu0 0.0
      %244 = vmatprep.subr.mxu0 0.0
      %245 = vmatpush1.msra.mxu0 0.0
      %246 = vmatprep.subr.mxu0 0.0
      %247 = vmatpush1.msra.mxu0 0.0
      %248 = vmatprep.subr.mxu0 0.0
      %249 = vmatpush1.msra.mxu0 0.0
      %250 = vmatprep.subr.mxu0 0.0
      %251 = vmatpush1.msra.mxu0 0.0
      %252 = vmatprep.subr.mxu0 0.0
      %253 = vmatpush1.msra.mxu0 0.0
      %254 = vmatprep.subr.mxu0 0.0
      %255 = vmatpush1.msra.mxu0 0.0
      %256 = vmatprep.subr.mxu0 0.0
      %257 = vmatpush1.msra.mxu0 0.0
      %258 = vmatprep.subr.mxu0 0.0
      %259 = vmatpush1.msra.mxu0 0.0
      %260 = vmatprep.subr.mxu0 0.0
      %261 = vmatpush1.msra.mxu0 0.0
      %262 = vmatprep.subr.mxu0 0.0
      %263 = vmatpush1.msra.mxu0 0.0
      %264 = vmatprep.subr.mxu0 0.0
      %265 = vmatpush1.msra.mxu0 0.0
      %266 = vmatprep.subr.mxu0 0.0
      %267 = vmatpush1.msra.mxu0 0.0
      %268 = vmatprep.subr.mxu0 0.0
      %269 = vmatpush1.msra.mxu0 0.0
      %270 = vmatprep.subr.mxu0 0.0
      %271 = vmatpush1.msra.mxu0 0.0
      %272 = vmatprep.subr.mxu0 0.0
      %273 = vmatpush1.msra.mxu0 0.0
      %274 = vmatprep.subr.mxu0 0.0
      %275 = vmatpush1.msra.mxu0 0.0
      %276 = vmatprep.subr.mxu0 0.0
      %277 = vmatpush1.msra.mxu0 0.0
      %278 = vmatprep.subr.mxu0 0.0
      %279 = vmatpush1.msra.mxu0 0.0
      %280 = vmatprep.subr.mxu0 0.0
      %281 = vmatpush1.msra.mxu0 0.0
      %282 = vmatprep.subr.mxu0 0.0
      %283 = vmatpush1.msra.mxu0 0.0
      %284 = vmatprep.mubr.f32.mxu0 0.0
      %285 = vmatmul.mubr.f32.gmra.mrb[0].mxu0 %v214
      %v286 = vpop.f32.mrb[0].mxu0
      %v287 = vadd.f32 0.0, %v286
      %v288 = vpop.f32.mrb[0].mxu0
      %289 = vdwg.mxu0
      %v290 = vld [vmem:[%s3] sm:$0xff]
      %v291 = vld [vmem:[%s3 + $0x8] sm:$0xff]
      %v292 = vld [vmem:[%s3 + $0x10] sm:$0xff]
      %v293 = vld [vmem:[%s3 + $0x18] sm:$0xff]
      %v294 = vld [vmem:[%s3 + $0x20] sm:$0xff]
      %v295 = vld [vmem:[%s3 + $0x28] sm:$0xff]
      %v296 = vld [vmem:[%s3 + $0x30] sm:$0xff]
      %v297 = vld [vmem:[%s3 + $0x38] sm:$0xff]
      %v298 = vld [vmem:[%s205] sm:$0xff]
      %vm299 = vcmask 523264
      %v301 = vsel %vm299, %v287, 0
      %303 = vmatprep.subr.mxu0 0.0
      %304 = vmatpush1.msra.mxu0 %v290
      %305 = vmatprep.subr.mxu0 0.0
      %306 = vmatpush1.msra.mxu0 %v291
      %307 = vmatprep.subr.mxu0 0.0
      %308 = vmatpush1.msra.mxu0 %v292
      %309 = vmatprep.subr.mxu0 0.0
      %310 = vmatpush1.msra.mxu0 %v293
      %311 = vmatprep.subr.mxu0 0.0
      %312 = vmatpush1.msra.mxu0 %v294
      %313 = vmatprep.subr.mxu0 0.0
      %314 = vmatpush1.msra.mxu0 %v295
      %315 = vmatprep.subr.mxu0 0.0
      %316 = vmatpush1.msra.mxu0 %v296
      %317 = vmatprep.subr.mxu0 0.0
      %318 = vmatpush1.msra.mxu0 %v297
      %319 = vmatprep.subr.mxu0 0.0
      %320 = vmatpush1.msra.mxu0 0.0
      %321 = vmatprep.subr.mxu0 0.0
      %322 = vmatpush1.msra.mxu0 0.0
      %323 = vmatprep.subr.mxu0 0.0
      %324 = vmatpush1.msra.mxu0 0.0
      %325 = vmatprep.subr.mxu0 0.0
      %326 = vmatpush1.msra.mxu0 0.0
      %327 = vmatprep.subr.mxu0 0.0
      %328 = vmatpush1.msra.mxu0 0.0
      %329 = vmatprep.subr.mxu0 0.0
      %330 = vmatpush1.msra.mxu0 0.0
      %331 = vmatprep.subr.mxu0 0.0
      %332 = vmatpush1.msra.mxu0 0.0
      %333 = vmatprep.subr.mxu0 0.0
      %334 = vmatpush1.msra.mxu0 0.0
      %335 = vmatprep.subr.mxu0 0.0
      %336 = vmatpush1.msra.mxu0 0.0
      %337 = vmatprep.subr.mxu0 0.0
      %338 = vmatpush1.msra.mxu0 0.0
      %339 = vmatprep.subr.mxu0 0.0
      %340 = vmatpush1.msra.mxu0 0.0
      %341 = vmatprep.subr.mxu0 0.0
      %342 = vmatpush1.msra.mxu0 0.0
      %343 = vmatprep.subr.mxu0 0.0
      %344 = vmatpush1.msra.mxu0 0.0
      %345 = vmatprep.subr.mxu0 0.0
      %346 = vmatpush1.msra.mxu0 0.0
      %347 = vmatprep.subr.mxu0 0.0
      %348 = vmatpush1.msra.mxu0 0.0
      %349 = vmatprep.subr.mxu0 0.0
      %350 = vmatpush1.msra.mxu0 0.0
      %351 = vmatprep.subr.mxu0 0.0
      %352 = vmatpush1.msra.mxu0 0.0
      %353 = vmatprep.subr.mxu0 0.0
      %354 = vmatpush1.msra.mxu0 0.0
      %355 = vmatprep.subr.mxu0 0.0
      %356 = vmatpush1.msra.mxu0 0.0
      %357 = vmatprep.subr.mxu0 0.0
      %358 = vmatpush1.msra.mxu0 0.0
      %359 = vmatprep.subr.mxu0 0.0
      %360 = vmatpush1.msra.mxu0 0.0
      %361 = vmatprep.subr.mxu0 0.0
      %362 = vmatpush1.msra.mxu0 0.0
      %363 = vmatprep.subr.mxu0 0.0
      %364 = vmatpush1.msra.mxu0 0.0
      %365 = vmatprep.subr.mxu0 0.0
      %366 = vmatpush1.msra.mxu0 0.0
      %367 = vmatprep.mubr.f32.mxu0 0.0
      %368 = vmatmul.mubr.f32.gmra.mrb[0].mxu0 %v301
      %v369 = vpop.f32.mrb[0].mxu0
      %v370 = vadd.f32 %v298, %v369
      %v371 = vpop.f32.mrb[0].mxu0
      %372 = vdwg.mxu0
      %vm373 = vcmask 785408
      %374 = vst.msk [vmem:[%s209] sm:$0xff] %vm373, %v370
      %p375 = scmp.lt.s32.totalorder %s15, 1
      %s376 = scalar_select %p375, %s15, 1
      %s377 = smul.addr %s376, 8
      %s378 = scalar_lea.vmem %s4, %s377
      // Predicated region
      $region37: #{decoder_forward.9} parent=35 // pred_check
        %p379 = pneg %p127
      $region38: #{decoder_forward.9} parent=35 // pred_check_branch
        %381 = sbr.rel (%p379) target = $region40
      $region39: #{decoder_forward.9} parent=35 // pred_region
        _
      $region40: #{decoder_forward.9} parent=35 // pred_fallthru
        _
    $region36: #{decoder_forward.9} parent=5 // pred_fallthru
      _
    %p382 = scmp.le.s32.totalorder 2, %s10
    // Predicated region
    $region41: #{decoder_forward.9} parent=5 // pred_check
      %p383 = pneg %p382
    $region42: #{decoder_forward.9} parent=5 // pred_check_branch
      %385 = sbr.rel (%p383) target = $region44
    $region43: #{decoder_forward.9} parent=5 // pred_region
      %s386 = ssub.s32 %s10, 2
      // Predicated region
      $region45: #{decoder_forward.9} parent=43 // pred_check
        %p387 = pneg %p133
      $region46: #{decoder_forward.9} parent=43 // pred_check_branch
        %389 = sbr.rel (%p387) target = $region48
      $region47: #{decoder_forward.9} parent=43 // pred_region
        %p390 = scmp.lt.s32.totalorder %s16, 1
        %s391 = scalar_select %p390, %s16, 1
        %s392 = smul.addr %s391, 8
        %s393 = scalar_lea.vmem %s4, %s392
      $region48: #{decoder_forward.9} parent=43 // pred_fallthru
        _
    $region44: #{decoder_forward.9} parent=5 // pred_fallthru
      _
  $region6: #{decoder_forward.9} parent=0 // loop_footer
    %s14 = sadd.s32 1, %s10
  $region7: #{decoder_forward.9} parent=0 // loop_footer_branch
    %9 = sbr.rel target = $region3
  $region8: #{decoder_forward.9} parent=0 // loop_exit
    _

// kernel: decoder_forward.8
$region0: #{decoder_forward.8}
  #allocation0 [shape = 'u32[]', space=smem, size = 0x4, offset = 0x4, fixed_abs, tag = 'smem constant byte address 0x4 - core index']
  #allocation1 [shape = 'u32[144,128]{1,0:T(1,128)}', space=vmem, size = 0x12000, scoped, tag = 'internal scratch']
  #allocation2 [shape = 'f32[10,96]{1,0:T(8,128)}', space=vmem, size = 0x2000, scoped, tag = 'scratch operand']
  %s0 = inlined_call_operand.vmem [shape: f32[2,8,96], index: 0, kind: input, shape index: {}]
  %s1 = inlined_call_operand.vmem [shape: f32[1,3,96,96], index: 1, kind: input, shape index: {}]
  %s2 = inlined_call_operand.vmem [shape: f32[1,3,96,96], index: 2, kind: input, shape index: {}]
  %s3 = inlined_call_operand.vmem [shape: f32[1,96,3], index: 3, kind: input, shape index: {}]
  %s4 = inlined_call_operand.vmem [shape: f32[1,3,96], index: 4, kind: input, shape index: {}]
  %s5 = inlined_call_operand.vmem [shape: f32[2,8,96], index: 5, kind: output, shape index: {}]
  %s6 = sld [smem:[#allocation0]]
  $region53: #{decoder_forward.8} parent=0
    _
  %s8 = ssub.s32 1, %s6
  %s9 = scalar_select 0, %s8, %s6
  loop: start=0, step=1, limit=4
  $region2: #{decoder_forward.8} parent=0 // loop_pre_header
    _
  $region3: #{decoder_forward.8} parent=0 // loop_header
    %s11 = sphi 0, %s15
    %p12 = scmp.ge.s32.totalorder %s11, 4
    %s21 = sphi 0, %s23
    %s24 = sphi 0, %s21
    %s25 = sphi 0, %s24
    %s41 = sphi 0, %s25
    %s45 = sphi 0, %s45
    %s47 = sphi 0, %s45
    %s48 = sphi 0, %s47
    %s62 = sphi 0, %s48
    %s66 = sphi 0, %s66
    %s68 = sphi 0, %s66
    %s69 = sphi 0, %s68
    %s83 = sphi 0, %s69
    %s87 = sphi 0, %s87
    %s89 = sphi 0, %s87
    %s90 = sphi 0, %s89
    %s104 = sphi 0, %s90
    %s108 = sphi 0, %s108
    %s110 = sphi 0, %s108
    %s111 = sphi 0, %s110
    %s125 = sphi 0, %s111
    %s131 = sphi 0, %s133
    %s134 = sphi 0, %s131
    %s135 = sphi 0, %s134
    %s151 = sphi 0, %s135
  $region4: #{decoder_forward.8} parent=0 // loop_header_branch
    %14 = sbr.rel (%p12) target = $region8
  $region5: #{decoder_forward.8} parent=0 // loop_body
    %s16 = ssub.s32 %s11, 1
    %s17 = ssub.s32 %s11, 2
    %s18 = sadd.s32 %s11, 1
    %s19 = ssub.s32 %s11, %s18
    %p20 = scmp.eq.s32.totalorder %s19, 0
    %s22 = sadd.s32 %s21, 1
    %s23 = scalar_select %p20, %s21, %s22
    %p26 = pneg %p20
    %p27 = scmp.eq.s32.totalorder %s11, 1
    %p28 = por %p26, %p27
    %p29 = scmp.ne.s32.totalorder %s21, %s24
    %p30 = scmp.eq.s32.totalorder %s11, 0
    %p31 = por %p29, %p30
    %p32 = scmp.ne.s32.totalorder %s21, %s24
    %p33 = scmp.eq.s32.totalorder %s16, 1
    %p34 = por %p32, %p33
    %p35 = scmp.ne.s32.totalorder %s24, %s25
    %p36 = scmp.eq.s32.totalorder %s16, 0
    %p37 = por %p35, %p36
    %p38 = scmp.ne.s32.totalorder %s24, %s25
    %p39 = scmp.eq.s32.totalorder %s17, 1
    %p40 = por %p38, %p39
    %p42 = scmp.ne.s32.totalorder %s25, %s41
    %p43 = scmp.eq.s32.totalorder %s17, 0
    %p44 = por %p42, %p43
    %s46 = sadd.s32 %s45, 1
    %p49 = scmp.eq.s32.totalorder %s11, 1
    %p50 = scmp.ne.s32.totalorder %s45, %s47
    %p51 = scmp.eq.s32.totalorder %s11, 0
    %p52 = por %p50, %p51
    %p53 = scmp.ne.s32.totalorder %s45, %s47
    %p54 = scmp.eq.s32.totalorder %s16, 1
    %p55 = por %p53, %p54
    %p56 = scmp.ne.s32.totalorder %s47, %s48
    %p57 = scmp.eq.s32.totalorder %s16, 0
    %p58 = por %p56, %p57
    %p59 = scmp.ne.s32.totalorder %s47, %s48
    %p60 = scmp.eq.s32.totalorder %s17, 1
    %p61 = por %p59, %p60
    %p63 = scmp.ne.s32.totalorder %s48, %s62
    %p64 = scmp.eq.s32.totalorder %s17, 0
    %p65 = por %p63, %p64
    %s67 = sadd.s32 %s66, 1
    %p70 = scmp.eq.s32.totalorder %s11, 1
    %p71 = scmp.ne.s32.totalorder %s66, %s68
    %p72 = scmp.eq.s32.totalorder %s11, 0
    %p73 = por %p71, %p72
    %p74 = scmp.ne.s32.totalorder %s66, %s68
    %p75 = scmp.eq.s32.totalorder %s16, 1
    %p76 = por %p74, %p75
    %p77 = scmp.ne.s32.totalorder %s68, %s69
    %p78 = scmp.eq.s32.totalorder %s16, 0
    %p79 = por %p77, %p78
    %p80 = scmp.ne.s32.totalorder %s68, %s69
    %p81 = scmp.eq.s32.totalorder %s17, 1
    %p82 = por %p80, %p81
    %p84 = scmp.ne.s32.totalorder %s69, %s83
    %p85 = scmp.eq.s32.totalorder %s17, 0
    %p86 = por %p84, %p85
    %s88 = sadd.s32 %s87, 1
    %p91 = scmp.eq.s32.totalorder %s11, 1
    %p92 = scmp.ne.s32.totalorder %s87, %s89
    %p93 = scmp.eq.s32.totalorder %s11, 0
    %p94 = por %p92, %p93
    %p95 = scmp.ne.s32.totalorder %s87, %s89
    %p96 = scmp.eq.s32.totalorder %s16, 1
    %p97 = por %p95, %p96
    %p98 = scmp.ne.s32.totalorder %s89, %s90
    %p99 = scmp.eq.s32.totalorder %s16, 0
    %p100 = por %p98, %p99
    %p101 = scmp.ne.s32.totalorder %s89, %s90
    %p102 = scmp.eq.s32.totalorder %s17, 1
    %p103 = por %p101, %p102
    %p105 = scmp.ne.s32.totalorder %s90, %s104
    %p106 = scmp.eq.s32.totalorder %s17, 0
    %p107 = por %p105, %p106
    %s109 = sadd.s32 %s108, 1
    %p112 = scmp.eq.s32.totalorder %s11, 1
    %p113 = scmp.ne.s32.totalorder %s108, %s110
    %p114 = scmp.eq.s32.totalorder %s11, 0
    %p115 = por %p113, %p114
    %p116 = scmp.ne.s32.totalorder %s108, %s110
    %p117 = scmp.eq.s32.totalorder %s16, 1
    %p118 = por %p116, %p117
    %p119 = scmp.ne.s32.totalorder %s110, %s111
    %p120 = scmp.eq.s32.totalorder %s16, 0
    %p121 = por %p119, %p120
    %p122 = scmp.ne.s32.totalorder %s110, %s111
    %p123 = scmp.eq.s32.totalorder %s17, 1
    %p124 = por %p122, %p123
    %p126 = scmp.ne.s32.totalorder %s111, %s125
    %p127 = scmp.eq.s32.totalorder %s17, 0
    %p128 = por %p126, %p127
    %s129 = ssub.s32 %s11, %s18
    %p130 = scmp.eq.s32.totalorder %s129, 0
    %s132 = sadd.s32 %s131, 1
    %s133 = scalar_select %p130, %s131, %s132
    %p136 = pneg %p130
    %p137 = scmp.eq.s32.totalorder %s11, 1
    %p138 = por %p136, %p137
    %p139 = scmp.ne.s32.totalorder %s131, %s134
    %p140 = scmp.eq.s32.totalorder %s11, 0
    %p141 = por %p139, %p140
    %p142 = scmp.ne.s32.totalorder %s131, %s134
    %p143 = scmp.eq.s32.totalorder %s16, 1
    %p144 = por %p142, %p143
    %p145 = scmp.ne.s32.totalorder %s134, %s135
    %p146 = scmp.eq.s32.totalorder %s16, 0
    %p147 = por %p145, %p146
    %p148 = scmp.ne.s32.totalorder %s134, %s135
    %p149 = scmp.eq.s32.totalorder %s17, 1
    %p150 = por %p148, %p149
    %p152 = scmp.ne.s32.totalorder %s135, %s151
    %p153 = scmp.eq.s32.totalorder %s17, 0
    %p154 = por %p152, %p153
    %p155 = scmp.le.s32.totalorder 1, %s11
    %p156 = scmp.lt.s32.totalorder %s11, 3
    %p157 = pnand %p155, %p156
    %p158 = pneg %p157
    // Predicated region
    $region9: #{decoder_forward.8} parent=5 // pred_check
      _
    $region10: #{decoder_forward.8} parent=5 // pred_check_branch
      %160 = sbr.rel (%p157) target = $region12
    $region11: #{decoder_forward.8} parent=5 // pred_region
      %s161 = ssub.s32 %s11, 1
      // Predicated region
      $region13: #{decoder_forward.8} parent=11 // pred_check
        %p162 = pneg %p58
      $region14: #{decoder_forward.8} parent=11 // pred_check_branch
        %164 = sbr.rel (%p162) target = $region16
      $region15: #{decoder_forward.8} parent=11 // pred_region
        _
      $region16: #{decoder_forward.8} parent=11 // pred_fallthru
        _
      // Predicated region
      $region17: #{decoder_forward.8} parent=11 // pred_check
        %p165 = pneg %p79
      $region18: #{decoder_forward.8} parent=11 // pred_check_branch
        %167 = sbr.rel (%p165) target = $region20
      $region19: #{decoder_forward.8} parent=11 // pred_region
        _
      $region20: #{decoder_forward.8} parent=11 // pred_fallthru
        _
      // Predicated region
      $region21: #{decoder_forward.8} parent=11 // pred_check
        %p168 = pneg %p100
      $region22: #{decoder_forward.8} parent=11 // pred_check_branch
        %170 = sbr.rel (%p168) target = $region24
      $region23: #{decoder_forward.8} parent=11 // pred_region
        _
      $region24: #{decoder_forward.8} parent=11 // pred_fallthru
        _
      // Predicated region
      $region25: #{decoder_forward.8} parent=11 // pred_check
        %p171 = pneg %p121
      $region26: #{decoder_forward.8} parent=11 // pred_check_branch
        %173 = sbr.rel (%p171) target = $region28
      $region27: #{decoder_forward.8} parent=11 // pred_region
        _
      $region28: #{decoder_forward.8} parent=11 // pred_fallthru
        _
    $region12: #{decoder_forward.8} parent=5 // pred_fallthru
      _
    %p174 = scmp.lt.s32.totalorder %s11, 2
    // Predicated region
    $region29: #{decoder_forward.8} parent=5 // pred_check
      %p175 = pneg %p174
    $region30: #{decoder_forward.8} parent=5 // pred_check_branch
      %177 = sbr.rel (%p175) target = $region32
    $region31: #{decoder_forward.8} parent=5 // pred_region
      // Predicated region
      $region33: #{decoder_forward.8} parent=31 // pred_check
        %p178 = pneg %p31
      $region34: #{decoder_forward.8} parent=31 // pred_check_branch
        %180 = sbr.rel (%p178) target = $region36
      $region35: #{decoder_forward.8} parent=31 // pred_region
        %p181 = scmp.lt.s32.totalorder %s11, 1
        %s182 = scalar_select %p181, %s11, 1
        %s183 = smul.addr %s182, 8
        %s184 = scalar_lea.vmem %s0, %s183
      $region36: #{decoder_forward.8} parent=31 // pred_fallthru
        _
    $region32: #{decoder_forward.8} parent=5 // pred_fallthru
      _
    %p185 = scmp.le.s32.totalorder 1, %s11
    %p186 = scmp.lt.s32.totalorder %s11, 3
    %p187 = pnand %p185, %p186
    %p188 = pneg %p187
    // Predicated region
    $region37: #{decoder_forward.8} parent=5 // pred_check
      _
    $region38: #{decoder_forward.8} parent=5 // pred_check_branch
      %190 = sbr.rel (%p187) target = $region40
    $region39: #{decoder_forward.8} parent=5 // pred_region
      %s191 = ssub.s32 %s11, 1
      %p192 = scmp.lt.s32.totalorder %s16, 1
      %s193 = scalar_select %p192, %s16, 1
      %s194 = smul.addr %s193, 8
      %s195 = scalar_lea.vmem %s0, %s194
      %p196 = pneg %p37
      %p197 = pneg %p34
      %p198 = pneg %p58
      %p199 = pneg %p55
      %p200 = pneg %p79
      %p201 = pneg %p76
      %p202 = pneg %p100
      %p203 = pneg %p97
      %p204 = pneg %p121
      %p205 = pneg %p118
      %p206 = pneg %p147
      %p207 = pneg %p144
      %p208 = scmp.lt.s32.totalorder %s16, 1
      %s209 = scalar_select %p208, %s16, 1
      %s210 = smul.addr %s209, 8
      %s211 = scalar_lea.vmem %s5, %s210
      %p212 = scmp.lt.s32.totalorder %s16, 1
      %s213 = scalar_select %p212, %s16, 1
      %s214 = smul.addr %s213, 8
      %s215 = scalar_lea.vmem %s0, %s214
      %p216 = scmp.lt.s32.totalorder %s16, 1
      %s217 = scalar_select %p216, %s16, 1
      %s218 = smul.addr %s217, 8
      %s219 = scalar_lea.vmem %s5, %s218
      %vm220 = vcmask 778240
      %221 = vst.msk [vmem:[#allocation2] sm:$0x1] %vm220, 0.0
      %222 = vst.msk [vmem:[#allocation2 + $0x9] sm:$0x1] %vm220, 0.0
      %v223 = vld [vmem:[%s215] sm:$0xff]
      %vm224 = vcmask 785408
      %225 = vst.msk [vmem:[#allocation2 + $0x1] sm:$0xff] %vm224, %v223
      %v226 = vld [vmem:[#allocation2] sm:$0xff]
      %v227 = vld [vmem:[%s1] sm:$0xff]
      %v228 = vld [vmem:[%s1 + $0x8] sm:$0xff]
      %v229 = vld [vmem:[%s1 + $0x10] sm:$0xff]
      %v230 = vld [vmem:[%s1 + $0x18] sm:$0xff]
      %v231 = vld [vmem:[%s1 + $0x20] sm:$0xff]
      %v232 = vld [vmem:[%s1 + $0x28] sm:$0xff]
      %v233 = vld [vmem:[%s1 + $0x30] sm:$0xff]
      %v234 = vld [vmem:[%s1 + $0x38] sm:$0xff]
      %v235 = vld [vmem:[%s1 + $0x40] sm:$0xff]
      %v236 = vld [vmem:[%s1 + $0x48] sm:$0xff]
      %v237 = vld [vmem:[%s1 + $0x50] sm:$0xff]
      %v238 = vld [vmem:[%s1 + $0x58] sm:$0xff]
      %v239 = vld [vmem:[#allocation2 + $0x1] sm:$0xff]
      %s240 = scalar_lea.vmem %s1, 96
      %v241 = vld [vmem:[%s240] sm:$0xff]
      %v242 = vld [vmem:[%s240 + $0x8] sm:$0xff]
      %v243 = vld [vmem:[%s240 + $0x10] sm:$0xff]
      %v244 = vld [vmem:[%s240 + $0x18] sm:$0xff]
      %v245 = vld [vmem:[%s240 + $0x20] sm:$0xff]
      %v246 = vld [vmem:[%s240 + $0x28] sm:$0xff]
      %v247 = vld [vmem:[%s240 + $0x30] sm:$0xff]
      %v248 = vld [vmem:[%s240 + $0x38] sm:$0xff]
      %v249 = vld [vmem:[%s240 + $0x40] sm:$0xff]
      %v250 = vld [vmem:[%s240 + $0x48] sm:$0xff]
      %v251 = vld [vmem:[%s240 + $0x50] sm:$0xff]
      %v252 = vld [vmem:[%s240 + $0x58] sm:$0xff]
      %v254 = vsel %vm224, %v239, 0
      %256 = vmatprep.subr.mxu0 0.0
      %257 = vmatpush1.msra.mxu0 %v241
      %258 = vmatprep.subr.mxu0 0.0
      %259 = vmatpush1.msra.mxu0 %v242
      %260 = vmatprep.subr.mxu0 0.0
      %261 = vmatpush1.msra.mxu0 %v243
      %262 = vmatprep.subr.mxu0 0.0
      %263 = vmatpush1.msra.mxu0 %v244
      %264 = vmatprep.subr.mxu0 0.0
      %265 = vmatpush1.msra.mxu0 %v245
      %266 = vmatprep.subr.mxu0 0.0
      %267 = vmatpush1.msra.mxu0 %v246
      %268 = vmatprep.subr.mxu0 0.0
      %269 = vmatpush1.msra.mxu0 %v247
      %270 = vmatprep.subr.mxu0 0.0
      %271 = vmatpush1.msra.mxu0 %v248
      %272 = vmatprep.subr.mxu0 0.0
      %273 = vmatpush1.msra.mxu0 %v249
      %274 = vmatprep.subr.mxu0 0.0
      %275 = vmatpush1.msra.mxu0 %v250
      %276 = vmatprep.subr.mxu0 0.0
      %277 = vmatpush1.msra.mxu0 %v251
      %278 = vmatprep.subr.mxu0 0.0
      %279 = vmatpush1.msra.mxu0 %v252
      %280 = vmatprep.subr.mxu0 0.0
      %281 = vmatpush1.msra.mxu0 0.0
      %282 = vmatprep.subr.mxu0 0.0
      %283 = vmatpush1.msra.mxu0 0.0
      %284 = vmatprep.subr.mxu0 0.0
      %285 = vmatpush1.msra.mxu0 0.0
      %286 = vmatprep.subr.mxu0 0.0
      %287 = vmatpush1.msra.mxu0 0.0
      %288 = vmatprep.subr.mxu0 0.0
      %289 = vmatpush1.msra.mxu0 0.0
      %290 = vmatprep.subr.mxu0 0.0
      %291 = vmatpush1.msra.mxu0 0.0
      %292 = vmatprep.subr.mxu0 0.0
      %293 = vmatpush1.msra.mxu0 0.0
      %294 = vmatprep.subr.mxu0 0.0
      %295 = vmatpush1.msra.mxu0 0.0
      %296 = vmatprep.subr.mxu0 0.0
      %297 = vmatpush1.msra.mxu0 0.0
      %298 = vmatprep.subr.mxu0 0.0
      %299 = vmatpush1.msra.mxu0 0.0
      %300 = vmatprep.subr.mxu0 0.0
      %301 = vmatpush1.msra.mxu0 0.0
      %302 = vmatprep.subr.mxu0 0.0
      %303 = vmatpush1.msra.mxu0 0.0
      %304 = vmatprep.subr.mxu0 0.0
      %305 = vmatpush1.msra.mxu0 0.0
      %306 = vmatprep.subr.mxu0 0.0
      %307 = vmatpush1.msra.mxu0 0.0
      %308 = vmatprep.subr.mxu0 0.0
      %309 = vmatpush1.msra.mxu0 0.0
      %310 = vmatprep.subr.mxu0 0.0
      %311 = vmatpush1.msra.mxu0 0.0
      %312 = vmatprep.subr.mxu0 0.0
      %313 = vmatpush1.msra.mxu0 0.0
      %314 = vmatprep.subr.mxu0 0.0
      %315 = vmatpush1.msra.mxu0 0.0
      %316 = vmatprep.subr.mxu0 0.0
      %317 = vmatpush1.msra.mxu0 0.0
      %318 = vmatprep.subr.mxu0 0.0
      %319 = vmatpush1.msra.mxu0 0.0
      %320 = vmatprep.mubr.f32.mxu0 0.0
      %321 = vmatmul.mubr.f32.gmra.mrb[0].mxu0 %v254
      %v322 = vpop.f32.mrb[0].mxu0
      %v323 = vadd.f32 0.0, %v322
      %v324 = vpop.f32.mrb[0].mxu0
      %325 = vdwg.mxu0
      %v327 = vsel %vm224, %v226, 0
      %329 = vmatprep.subr.mxu0 0.0
      %330 = vmatpush1.msra.mxu0 %v227
      %331 = vmatprep.subr.mxu0 0.0
      %332 = vmatpush1.msra.mxu0 %v228
      %333 = vmatprep.subr.mxu0 0.0
      %334 = vmatpush1.msra.mxu0 %v229
      %335 = vmatprep.subr.mxu0 0.0
      %336 = vmatpush1.msra.mxu0 %v230
      %337 = vmatprep.subr.mxu0 0.0
      %338 = vmatpush1.msra.mxu0 %v231
      %339 = vmatprep.subr.mxu0 0.0
      %340 = vmatpush1.msra.mxu0 %v232
      %341 = vmatprep.subr.mxu0 0.0
      %342 = vmatpush1.msra.mxu0 %v233
      %343 = vmatprep.subr.mxu0 0.0
      %344 = vmatpush1.msra.mxu0 %v234
      %345 = vmatprep.subr.mxu0 0.0
      %346 = vmatpush1.msra.mxu0 %v235
      %347 = vmatprep.subr.mxu0 0.0
      %348 = vmatpush1.msra.mxu0 %v236
      %349 = vmatprep.subr.mxu0 0.0
      %350 = vmatpush1.msra.mxu0 %v237
      %351 = vmatprep.subr.mxu0 0.0
      %352 = vmatpush1.msra.mxu0 %v238
      %353 = vmatprep.subr.mxu0 0.0
      %354 = vmatpush1.msra.mxu0 0.0
      %355 = vmatprep.subr.mxu0 0.0
      %356 = vmatpush1.msra.mxu0 0.0
      %357 = vmatprep.subr.mxu0 0.0
      %358 = vmatpush1.msra.mxu0 0.0
      %359 = vmatprep.subr.mxu0 0.0
      %360 = vmatpush1.msra.mxu0 0.0
      %361 = vmatprep.subr.mxu0 0.0
      %362 = vmatpush1.msra.mxu0 0.0
      %363 = vmatprep.subr.mxu0 0.0
      %364 = vmatpush1.msra.mxu0 0.0
      %365 = vmatprep.subr.mxu0 0.0
      %366 = vmatpush1.msra.mxu0 0.0
      %367 = vmatprep.subr.mxu0 0.0
      %368 = vmatpush1.msra.mxu0 0.0
      %369 = vmatprep.subr.mxu0 0.0
      %370 = vmatpush1.msra.mxu0 0.0
      %371 = vmatprep.subr.mxu0 0.0
      %372 = vmatpush1.msra.mxu0 0.0
      %373 = vmatprep.subr.mxu0 0.0
      %374 = vmatpush1.msra.mxu0 0.0
      %375 = vmatprep.subr.mxu0 0.0
      %376 = vmatpush1.msra.mxu0 0.0
      %377 = vmatprep.subr.mxu0 0.0
      %378 = vmatpush1.msra.mxu0 0.0
      %379 = vmatprep.subr.mxu0 0.0
      %380 = vmatpush1.msra.mxu0 0.0
      %381 = vmatprep.subr.mxu0 0.0
      %382 = vmatpush1.msra.mxu0 0.0
      %383 = vmatprep.subr.mxu0 0.0
      %384 = vmatpush1.msra.mxu0 0.0
      %385 = vmatprep.subr.mxu0 0.0
      %386 = vmatpush1.msra.mxu0 0.0
      %387 = vmatprep.subr.mxu0 0.0
      %388 = vmatpush1.msra.mxu0 0.0
      %389 = vmatprep.subr.mxu0 0.0
      %390 = vmatpush1.msra.mxu0 0.0
      %391 = vmatprep.subr.mxu0 0.0
      %392 = vmatpush1.msra.mxu0 0.0
      %393 = vmatprep.mubr.f32.mxu0 0.0
      %394 = vmatmul.mubr.f32.gmra.mrb[0].mxu0 %v327
      %v395 = vpop.f32.mrb[0].mxu0
      %v396 = vadd.f32 %v323, %v395
      %v397 = vpop.f32.mrb[0].mxu0
      %398 = vdwg.mxu0
      %v399 = vld [vmem:[#allocation2 + $0x2] sm:$0xff]
      %s400 = scalar_lea.vmem %s1, 192
      %v401 = vld [vmem:[%s400] sm:$0xff]
      %v402 = vld [vmem:[%s400 + $0x8] sm:$0xff]
      %v403 = vld [vmem:[%s400 + $0x10] sm:$0xff]
      %v404 = vld [vmem:[%s400 + $0x18] sm:$0xff]
      %v405 = vld [vmem:[%s400 + $0x20] sm:$0xff]
      %v406 = vld [vmem:[%s400 + $0x28] sm:$0xff]
      %v407 = vld [vmem:[%s400 + $0x30] sm:$0xff]
      %v408 = vld [vmem:[%s400 + $0x38] sm:$0xff]
      %v409 = vld [vmem:[%s400 + $0x40] sm:$0xff]
      %v410 = vld [vmem:[%s400 + $0x48] sm:$0xff]
      %v411 = vld [vmem:[%s400 + $0x50] sm:$0xff]
      %v412 = vld [vmem:[%s400 + $0x58] sm:$0xff]
      %v414 = vsel %vm224, %v399, 0
      %416 = vmatprep.subr.mxu0 0.0
      %417 = vmatpush1.msra.mxu0 %v401
      %418 = vmatprep.subr.mxu0 0.0
      %419 = vmatpush1.msra.mxu0 %v402
      %420 = vmatprep.subr.mxu0 0.0
      %421 = vmatpush1.msra.mxu0 %v403
      %422 = vmatprep.subr.mxu0 0.0
      %423 = vmatpush1.msra.mxu0 %v404
      %424 = vmatprep.subr.mxu0 0.0
      %425 = vmatpush1.msra.mxu0 %v405
      %426 = vmatprep.subr.mxu0 0.0
      %427 = vmatpush1.msra.mxu0 %v406
      %428 = vmatprep.subr.mxu0 0.0
      %429 = vmatpush1.msra.mxu0 %v407
      %430 = vmatprep.subr.mxu0 0.0
      %431 = vmatpush1.msra.mxu0 %v408
      %432 = vmatprep.subr.mxu0 0.0
      %433 = vmatpush1.msra.mxu0 %v409
      %434 = vmatprep.subr.mxu0 0.0
      %435 = vmatpush1.msra.mxu0 %v410
      %436 = vmatprep.subr.mxu0 0.0
      %437 = vmatpush1.msra.mxu0 %v411
      %438 = vmatprep.subr.mxu0 0.0
      %439 = vmatpush1.msra.mxu0 %v412
      %440 = vmatprep.subr.mxu0 0.0
      %441 = vmatpush1.msra.mxu0 0.0
      %442 = vmatprep.subr.mxu0 0.0
      %443 = vmatpush1.msra.mxu0 0.0
      %444 = vmatprep.subr.mxu0 0.0
      %445 = vmatpush1.msra.mxu0 0.0
      %446 = vmatprep.subr.mxu0 0.0
      %447 = vmatpush1.msra.mxu0 0.0
      %448 = vmatprep.subr.mxu0 0.0
      %449 = vmatpush1.msra.mxu0 0.0
      %450 = vmatprep.subr.mxu0 0.0
      %451 = vmatpush1.msra.mxu0 0.0
      %452 = vmatprep.subr.mxu0 0.0
      %453 = vmatpush1.msra.mxu0 0.0
      %454 = vmatprep.subr.mxu0 0.0
      %455 = vmatpush1.msra.mxu0 0.0
      %456 = vmatprep.subr.mxu0 0.0
      %457 = vmatpush1.msra.mxu0 0.0
      %458 = vmatprep.subr.mxu0 0.0
      %459 = vmatpush1.msra.mxu0 0.0
      %460 = vmatprep.subr.mxu0 0.0
      %461 = vmatpush1.msra.mxu0 0.0
      %462 = vmatprep.subr.mxu0 0.0
      %463 = vmatpush1.msra.mxu0 0.0
      %464 = vmatprep.subr.mxu0 0.0
      %465 = vmatpush1.msra.mxu0 0.0
      %466 = vmatprep.subr.mxu0 0.0
      %467 = vmatpush1.msra.mxu0 0.0
      %468 = vmatprep.subr.mxu0 0.0
      %469 = vmatpush1.msra.mxu0 0.0
      %470 = vmatprep.subr.mxu0 0.0
      %471 = vmatpush1.msra.mxu0 0.0
      %472 = vmatprep.subr.mxu0 0.0
      %473 = vmatpush1.msra.mxu0 0.0
      %474 = vmatprep.subr.mxu0 0.0
      %475 = vmatpush1.msra.mxu0 0.0
      %476 = vmatprep.subr.mxu0 0.0
      %477 = vmatpush1.msra.mxu0 0.0
      %478 = vmatprep.subr.mxu0 0.0
      %479 = vmatpush1.msra.mxu0 0.0
      %480 = vmatprep.mubr.f32.mxu0 0.0
      %481 = vmatmul.mubr.f32.gmra.mrb[0].mxu0 %v414
      %v482 = vpop.f32.mrb[0].mxu0
      %v483 = vadd.f32 0.0, %v482
      %v484 = vpop.f32.mrb[0].mxu0
      %485 = vdwg.mxu0
      %v486 = vadd.f32 %v396, %v483
      %vm487 = vcmp.gt.f32.partialorder %v486, 0.0
      %v488 = vmul.f32 %v486, 0.25
      %v489 = vsel %vm487, %v486, %v488
      %490 = vst.msk [vmem:[#allocation2 + $0x1] sm:$0xff] %vm224, %v489
      %v491 = vld [vmem:[#allocation2] sm:$0xff]
      %v492 = vld [vmem:[%s2] sm:$0xff]
      %v493 = vld [vmem:[%s2 + $0x8] sm:$0xff]
      %v494 = vld [vmem:[%s2 + $0x10] sm:$0xff]
      %v495 = vld [vmem:[%s2 + $0x18] sm:$0xff]
      %v496 = vld [vmem:[%s2 + $0x20] sm:$0xff]
      %v497 = vld [vmem:[%s2 + $0x28] sm:$0xff]
      %v498 = vld [vmem:[%s2 + $0x30] sm:$0xff]
      %v499 = vld [vmem:[%s2 + $0x38] sm:$0xff]
      %v500 = vld [vmem:[%s2 + $0x40] sm:$0xff]
      %v501 = vld [vmem:[%s2 + $0x48] sm:$0xff]
      %v502 = vld [vmem:[%s2 + $0x50] sm:$0xff]
      %v503 = vld [vmem:[%s2 + $0x58] sm:$0xff]
      %v504 = vld [vmem:[#allocation2 + $0x1] sm:$0xff]
      %s505 = scalar_lea.vmem %s2, 96
      %v506 = vld [vmem:[%s505] sm:$0xff]
      %v507 = vld [vmem:[%s505 + $0x8] sm:$0xff]
      %v508 = vld [vmem:[%s505 + $0x10] sm:$0xff]
      %v509 = vld [vmem:[%s505 + $0x18] sm:$0xff]
      %v510 = vld [vmem:[%s505 + $0x20] sm:$0xff]
      %v511 = vld [vmem:[%s505 + $0x28] sm:$0xff]
      %v512 = vld [vmem:[%s505 + $0x30] sm:$0xff]
      %v513 = vld [vmem:[%s505 + $0x38] sm:$0xff]
      %v514 = vld [vmem:[%s505 + $0x40] sm:$0xff]
      %v515 = vld [vmem:[%s505 + $0x48] sm:$0xff]
      %v516 = vld [vmem:[%s505 + $0x50] sm:$0xff]
      %v517 = vld [vmem:[%s505 + $0x58] sm:$0xff]
      %v519 = vsel %vm224, %v504, 0
      %521 = vmatprep.subr.mxu0 0.0
      %522 = vmatpush1.msra.mxu0 %v506
      %523 = vmatprep.subr.mxu0 0.0
      %524 = vmatpush1.msra.mxu0 %v507
      %525 = vmatprep.subr.mxu0 0.0
      %526 = vmatpush1.msra.mxu0 %v508
      %527 = vmatprep.subr.mxu0 0.0
      %528 = vmatpush1.msra.mxu0 %v509
      %529 = vmatprep.subr.mxu0 0.0
      %530 = vmatpush1.msra.mxu0 %v510
      %531 = vmatprep.subr.mxu0 0.0
      %532 = vmatpush1.msra.mxu0 %v511
      %533 = vmatprep.subr.mxu0 0.0
      %534 = vmatpush1.msra.mxu0 %v512
      %535 = vmatprep.subr.mxu0 0.0
      %536 = vmatpush1.msra.mxu0 %v513
      %537 = vmatprep.subr.mxu0 0.0
      %538 = vmatpush1.msra.mxu0 %v514
      %539 = vmatprep.subr.mxu0 0.0
      %540 = vmatpush1.msra.mxu0 %v515
      %541 = vmatprep.subr.mxu0 0.0
      %542 = vmatpush1.msra.mxu0 %v516
      %543 = vmatprep.subr.mxu0 0.0
      %544 = vmatpush1.msra.mxu0 %v517
      %545 = vmatprep.subr.mxu0 0.0
      %546 = vmatpush1.msra.mxu0 0.0
      %547 = vmatprep.subr.mxu0 0.0
      %548 = vmatpush1.msra.mxu0 0.0
      %549 = vmatprep.subr.mxu0 0.0
      %550 = vmatpush1.msra.mxu0 0.0
      %551 = vmatprep.subr.mxu0 0.0
      %552 = vmatpush1.msra.mxu0 0.0
      %553 = vmatprep.subr.mxu0 0.0
      %554 = vmatpush1.msra.mxu0 0.0
      %555 = vmatprep.subr.mxu0 0.0
      %556 = vmatpush1.msra.mxu0 0.0
      %557 = vmatprep.subr.mxu0 0.0
      %558 = vmatpush1.msra.mxu0 0.0
      %559 = vmatprep.subr.mxu0 0.0
      %560 = vmatpush1.msra.mxu0 0.0
      %561 = vmatprep.subr.mxu0 0.0
      %562 = vmatpush1.msra.mxu0 0.0
      %563 = vmatprep.subr.mxu0 0.0
      %564 = vmatpush1.msra.mxu0 0.0
      %565 = vmatprep.subr.mxu0 0.0
      %566 = vmatpush1.msra.mxu0 0.0
      %567 = vmatprep.subr.mxu0 0.0
      %568 = vmatpush1.msra.mxu0 0.0
      %569 = vmatprep.subr.mxu0 0.0
      %570 = vmatpush1.msra.mxu0 0.0
      %571 = vmatprep.subr.mxu0 0.0
      %572 = vmatpush1.msra.mxu0 0.0
      %573 = vmatprep.subr.mxu0 0.0
      %574 = vmatpush1.msra.mxu0 0.0
      %575 = vmatprep.subr.mxu0 0.0
      %576 = vmatpush1.msra.mxu0 0.0
      %577 = vmatprep.subr.mxu0 0.0
      %578 = vmatpush1.msra.mxu0 0.0
      %579 = vmatprep.subr.mxu0 0.0
      %580 = vmatpush1.msra.mxu0 0.0
      %581 = vmatprep.subr.mxu0 0.0
      %582 = vmatpush1.msra.mxu0 0.0
      %583 = vmatprep.subr.mxu0 0.0
      %584 = vmatpush1.msra.mxu0 0.0
      %585 = vmatprep.mubr.f32.mxu0 0.0
      %586 = vmatmul.mubr.f32.gmra.mrb[0].mxu0 %v519
      %v587 = vpop.f32.mrb[0].mxu0
      %v588 = vadd.f32 0.0, %v587
      %v589 = vpop.f32.mrb[0].mxu0
      %590 = vdwg.mxu0
      %v592 = vsel %vm224, %v491, 0
      %594 = vmatprep.subr.mxu0 0.0
      %595 = vmatpush1.msra.mxu0 %v492
      %596 = vmatprep.subr.mxu0 0.0
      %597 = vmatpush1.msra.mxu0 %v493
      %598 = vmatprep.subr.mxu0 0.0
      %599 = vmatpush1.msra.mxu0 %v494
      %600 = vmatprep.subr.mxu0 0.0
      %601 = vmatpush1.msra.mxu0 %v495
      %602 = vmatprep.subr.mxu0 0.0
      %603 = vmatpush1.msra.mxu0 %v496
      %604 = vmatprep.subr.mxu0 0.0
      %605 = vmatpush1.msra.mxu0 %v497
      %606 = vmatprep.subr.mxu0 0.0
      %607 = vmatpush1.msra.mxu0 %v498
      %608 = vmatprep.subr.mxu0 0.0
      %609 = vmatpush1.msra.mxu0 %v499
      %610 = vmatprep.subr.mxu0 0.0
      %611 = vmatpush1.msra.mxu0 %v500
      %612 = vmatprep.subr.mxu0 0.0
      %613 = vmatpush1.msra.mxu0 %v501
      %614 = vmatprep.subr.mxu0 0.0
      %615 = vmatpush1.msra.mxu0 %v502
      %616 = vmatprep.subr.mxu0 0.0
      %617 = vmatpush1.msra.mxu0 %v503
      %618 = vmatprep.subr.mxu0 0.0
      %619 = vmatpush1.msra.mxu0 0.0
      %620 = vmatprep.subr.mxu0 0.0
      %621 = vmatpush1.msra.mxu0 0.0
      %622 = vmatprep.subr.mxu0 0.0
      %623 = vmatpush1.msra.mxu0 0.0
      %624 = vmatprep.subr.mxu0 0.0
      %625 = vmatpush1.msra.mxu0 0.0
      %626 = vmatprep.subr.mxu0 0.0
      %627 = vmatpush1.msra.mxu0 0.0
      %628 = vmatprep.subr.mxu0 0.0
      %629 = vmatpush1.msra.mxu0 0.0
      %630 = vmatprep.subr.mxu0 0.0
      %631 = vmatpush1.msra.mxu0 0.0
      %632 = vmatprep.subr.mxu0 0.0
      %633 = vmatpush1.msra.mxu0 0.0
      %634 = vmatprep.subr.mxu0 0.0
      %635 = vmatpush1.msra.mxu0 0.0
      %636 = vmatprep.subr.mxu0 0.0
      %637 = vmatpush1.msra.mxu0 0.0
      %638 = vmatprep.subr.mxu0 0.0
      %639 = vmatpush1.msra.mxu0 0.0
      %640 = vmatprep.subr.mxu0 0.0
      %641 = vmatpush1.msra.mxu0 0.0
      %642 = vmatprep.subr.mxu0 0.0
      %643 = vmatpush1.msra.mxu0 0.0
      %644 = vmatprep.subr.mxu0 0.0
      %645 = vmatpush1.msra.mxu0 0.0
      %646 = vmatprep.subr.mxu0 0.0
      %647 = vmatpush1.msra.mxu0 0.0
      %648 = vmatprep.subr.mxu0 0.0
      %649 = vmatpush1.msra.mxu0 0.0
      %650 = vmatprep.subr.mxu0 0.0
      %651 = vmatpush1.msra.mxu0 0.0
      %652 = vmatprep.subr.mxu0 0.0
      %653 = vmatpush1.msra.mxu0 0.0
      %654 = vmatprep.subr.mxu0 0.0
      %655 = vmatpush1.msra.mxu0 0.0
      %656 = vmatprep.subr.mxu0 0.0
      %657 = vmatpush1.msra.mxu0 0.0
      %658 = vmatprep.mubr.f32.mxu0 0.0
      %659 = vmatmul.mubr.f32.gmra.mrb[0].mxu0 %v592
      %v660 = vpop.f32.mrb[0].mxu0
      %v661 = vadd.f32 %v588, %v660
      %v662 = vpop.f32.mrb[0].mxu0
      %663 = vdwg.mxu0
      %v664 = vld [vmem:[#allocation2 + $0x2] sm:$0xff]
      %s665 = scalar_lea.vmem %s2, 192
      %v666 = vld [vmem:[%s665] sm:$0xff]
      %v667 = vld [vmem:[%s665 + $0x8] sm:$0xff]
      %v668 = vld [vmem:[%s665 + $0x10] sm:$0xff]
      %v669 = vld [vmem:[%s665 + $0x18] sm:$0xff]
      %v670 = vld [vmem:[%s665 + $0x20] sm:$0xff]
      %v671 = vld [vmem:[%s665 + $0x28] sm:$0xff]
      %v672 = vld [vmem:[%s665 + $0x30] sm:$0xff]
      %v673 = vld [vmem:[%s665 + $0x38] sm:$0xff]
      %v674 = vld [vmem:[%s665 + $0x40] sm:$0xff]
      %v675 = vld [vmem:[%s665 + $0x48] sm:$0xff]
      %v676 = vld [vmem:[%s665 + $0x50] sm:$0xff]
      %v677 = vld [vmem:[%s665 + $0x58] sm:$0xff]
      %v679 = vsel %vm224, %v664, 0
      %681 = vmatprep.subr.mxu0 0.0
      %682 = vmatpush1.msra.mxu0 %v666
      %683 = vmatprep.subr.mxu0 0.0
      %684 = vmatpush1.msra.mxu0 %v667
      %685 = vmatprep.subr.mxu0 0.0
      %686 = vmatpush1.msra.mxu0 %v668
      %687 = vmatprep.subr.mxu0 0.0
      %688 = vmatpush1.msra.mxu0 %v669
      %689 = vmatprep.subr.mxu0 0.0
      %690 = vmatpush1.msra.mxu0 %v670
      %691 = vmatprep.subr.mxu0 0.0
      %692 = vmatpush1.msra.mxu0 %v671
      %693 = vmatprep.subr.mxu0 0.0
      %694 = vmatpush1.msra.mxu0 %v672
      %695 = vmatprep.subr.mxu0 0.0
      %696 = vmatpush1.msra.mxu0 %v673
      %697 = vmatprep.subr.mxu0 0.0
      %698 = vmatpush1.msra.mxu0 %v674
      %699 = vmatprep.subr.mxu0 0.0
      %700 = vmatpush1.msra.mxu0 %v675
      %701 = vmatprep.subr.mxu0 0.0
      %702 = vmatpush1.msra.mxu0 %v676
      %703 = vmatprep.subr.mxu0 0.0
      %704 = vmatpush1.msra.mxu0 %v677
      %705 = vmatprep.subr.mxu0 0.0
      %706 = vmatpush1.msra.mxu0 0.0
      %707 = vmatprep.subr.mxu0 0.0
      %708 = vmatpush1.msra.mxu0 0.0
      %709 = vmatprep.subr.mxu0 0.0
      %710 = vmatpush1.msra.mxu0 0.0
      %711 = vmatprep.subr.mxu0 0.0
      %712 = vmatpush1.msra.mxu0 0.0
      %713 = vmatprep.subr.mxu0 0.0
      %714 = vmatpush1.msra.mxu0 0.0
      %715 = vmatprep.subr.mxu0 0.0
      %716 = vmatpush1.msra.mxu0 0.0
      %717 = vmatprep.subr.mxu0 0.0
      %718 = vmatpush1.msra.mxu0 0.0
      %719 = vmatprep.subr.mxu0 0.0
      %720 = vmatpush1.msra.mxu0 0.0
      %721 = vmatprep.subr.mxu0 0.0
      %722 = vmatpush1.msra.mxu0 0.0
      %723 = vmatprep.subr.mxu0 0.0
      %724 = vmatpush1.msra.mxu0 0.0
      %725 = vmatprep.subr.mxu0 0.0
      %726 = vmatpush1.msra.mxu0 0.0
      %727 = vmatprep.subr.mxu0 0.0
      %728 = vmatpush1.msra.mxu0 0.0
      %729 = vmatprep.subr.mxu0 0.0
      %730 = vmatpush1.msra.mxu0 0.0
      %731 = vmatprep.subr.mxu0 0.0
      %732 = vmatpush1.msra.mxu0 0.0
      %733 = vmatprep.subr.mxu0 0.0
      %734 = vmatpush1.msra.mxu0 0.0
      %735 = vmatprep.subr.mxu0 0.0
      %736 = vmatpush1.msra.mxu0 0.0
      %737 = vmatprep.subr.mxu0 0.0
      %738 = vmatpush1.msra.mxu0 0.0
      %739 = vmatprep.subr.mxu0 0.0
      %740 = vmatpush1.msra.mxu0 0.0
      %741 = vmatprep.subr.mxu0 0.0
      %742 = vmatpush1.msra.mxu0 0.0
      %743 = vmatprep.subr.mxu0 0.0
      %744 = vmatpush1.msra.mxu0 0.0
      %745 = vmatprep.mubr.f32.mxu0 0.0
      %746 = vmatmul.mubr.f32.gmra.mrb[0].mxu0 %v679
      %v747 = vpop.f32.mrb[0].mxu0
      %v748 = vadd.f32 0.0, %v747
      %v749 = vpop.f32.mrb[0].mxu0
      %750 = vdwg.mxu0
      %v751 = vadd.f32 %v661, %v748
      %v752 = vsel %vm224, %v751, 0.0
      %v753 = vrot.slane %v752, 4
      %v754 = vadd.f32 %v752, %v753
      %v755 = vrot.slane %v754, 2
      %v756 = vadd.f32 %v754, %v755
      %v757 = vrot.slane %v756, 1
      %v758 = vadd.f32 %v756, %v757
      %v759 = vld [vmem:[%s3] sm:$0xff]
      %v760 = vld [vmem:[%s3 + $0x8] sm:$0xff]
      %v761 = vld [vmem:[%s3 + $0x10] sm:$0xff]
      %v762 = vld [vmem:[%s3 + $0x18] sm:$0xff]
      %v763 = vld [vmem:[%s3 + $0x20] sm:$0xff]
      %v764 = vld [vmem:[%s3 + $0x28] sm:$0xff]
      %v765 = vld [vmem:[%s3 + $0x30] sm:$0xff]
      %v766 = vld [vmem:[%s3 + $0x38] sm:$0xff]
      %v767 = vld [vmem:[%s3 + $0x40] sm:$0xff]
      %v768 = vld [vmem:[%s3 + $0x48] sm:$0xff]
      %v769 = vld [vmem:[%s3 + $0x50] sm:$0xff]
      %v770 = vld [vmem:[%s3 + $0x58] sm:$0xff]
      %v772 = vsel %vm224, %v758, 0
      %774 = vmatprep.subr.mxu0 0.0
      %775 = vmatpush1.msra.mxu0 %v759
      %776 = vmatprep.subr.mxu0 0.0
      %777 = vmatpush1.msra.mxu0 %v760
      %778 = vmatprep.subr.mxu0 0.0
      %779 = vmatpush1.msra.mxu0 %v761
      %780 = vmatprep.subr.mxu0 0.0
      %781 = vmatpush1.msra.mxu0 %v762
      %782 = vmatprep.subr.mxu0 0.0
      %783 = vmatpush1.msra.mxu0 %v763
      %784 = vmatprep.subr.mxu0 0.0
      %785 = vmatpush1.msra.mxu0 %v764
      %786 = vmatprep.subr.mxu0 0.0
      %787 = vmatpush1.msra.mxu0 %v765
      %788 = vmatprep.subr.mxu0 0.0
      %789 = vmatpush1.msra.mxu0 %v766
      %790 = vmatprep.subr.mxu0 0.0
      %791 = vmatpush1.msra.mxu0 %v767
      %792 = vmatprep.subr.mxu0 0.0
      %793 = vmatpush1.msra.mxu0 %v768
      %794 = vmatprep.subr.mxu0 0.0
      %795 = vmatpush1.msra.mxu0 %v769
      %796 = vmatprep.subr.mxu0 0.0
      %797 = vmatpush1.msra.mxu0 %v770
      %798 = vmatprep.subr.mxu0 0.0
      %799 = vmatpush1.msra.mxu0 0.0
      %800 = vmatprep.subr.mxu0 0.0
      %801 = vmatpush1.msra.mxu0 0.0
      %802 = vmatprep.subr.mxu0 0.0
      %803 = vmatpush1.msra.mxu0 0.0
      %804 = vmatprep.subr.mxu0 0.0
      %805 = vmatpush1.msra.mxu0 0.0
      %806 = vmatprep.subr.mxu0 0.0
      %807 = vmatpush1.msra.mxu0 0.0
      %808 = vmatprep.subr.mxu0 0.0
      %809 = vmatpush1.msra.mxu0 0.0
      %810 = vmatprep.subr.mxu0 0.0
      %811 = vmatpush1.msra.mxu0 0.0
      %812 = vmatprep.subr.mxu0 0.0
      %813 = vmatpush1.msra.mxu0 0.0
      %814 = vmatprep.subr.mxu0 0.0
      %815 = vmatpush1.msra.mxu0 0.0
      %816 = vmatprep.subr.mxu0 0.0
      %817 = vmatpush1.msra.mxu0 0.0
      %818 = vmatprep.subr.mxu0 0.0
      %819 = vmatpush1.msra.mxu0 0.0
      %820 = vmatprep.subr.mxu0 0.0
      %821 = vmatpush1.msra.mxu0 0.0
      %822 = vmatprep.subr.mxu0 0.0
      %823 = vmatpush1.msra.mxu0 0.0
      %824 = vmatprep.subr.mxu0 0.0
      %825 = vmatpush1.msra.mxu0 0.0
      %826 = vmatprep.subr.mxu0 0.0
      %827 = vmatpush1.msra.mxu0 0.0
      %828 = vmatprep.subr.mxu0 0.0
      %829 = vmatpush1.msra.mxu0 0.0
      %830 = vmatprep.subr.mxu0 0.0
      %831 = vmatpush1.msra.mxu0 0.0
      %832 = vmatprep.subr.mxu0 0.0
      %833 = vmatpush1.msra.mxu0 0.0
      %834 = vmatprep.subr.mxu0 0.0
      %835 = vmatpush1.msra.mxu0 0.0
      %836 = vmatprep.subr.mxu0 0.0
      %837 = vmatpush1.msra.mxu0 0.0
      %838 = vmatprep.mubr.f32.mxu0 0.0
      %839 = vmatmul.mubr.f32.gmra.mrb[0].mxu0 %v772
      %v840 = vpop.f32.mrb[0].mxu0
      %v841 = vadd.f32 0.0, %v840
      %v842 = vpop.f32.mrb[0].mxu0
      %843 = vdwg.mxu0
      %v844 = vmax.f32 %v841, 0.0
      %v845 = vld [vmem:[%s4] sm:$0x7]
      %vm846 = vcmask 23552
      %v848 = vsel %vm846, %v844, 0
      %vm850 = vcmask 1042432
      %v852 = vsel %vm850, %v845, 0
      %854 = vmatprep.subr.mxu0 0.0
      %855 = vmatpush1.msra.mxu0 %v852
      %856 = vmatprep.subr.mxu0 0.0
      %857 = vmatpush1.msra.mxu0 0.0
      %858 = vmatprep.subr.mxu0 0.0
      %859 = vmatpush1.msra.mxu0 0.0
      %860 = vmatprep.subr.mxu0 0.0
      %861 = vmatpush1.msra.mxu0 0.0
      %862 = vmatprep.subr.mxu0 0.0
      %863 = vmatpush1.msra.mxu0 0.0
      %864 = vmatprep.subr.mxu0 0.0
      %865 = vmatpush1.msra.mxu0 0.0
      %866 = vmatprep.subr.mxu0 0.0
      %867 = vmatpush1.msra.mxu0 0.0
      %868 = vmatprep.subr.mxu0 0.0
      %869 = vmatpush1.msra.mxu0 0.0
      %870 = vmatprep.subr.mxu0 0.0
      %871 = vmatpush1.msra.mxu0 0.0
      %872 = vmatprep.subr.mxu0 0.0
      %873 = vmatpush1.msra.mxu0 0.0
      %874 = vmatprep.subr.mxu0 0.0
      %875 = vmatpush1.msra.mxu0 0.0
      %876 = vmatprep.subr.mxu0 0.0
      %877 = vmatpush1.msra.mxu0 0.0
      %878 = vmatprep.subr.mxu0 0.0
      %879 = vmatpush1.msra.mxu0 0.0
      %880 = vmatprep.subr.mxu0 0.0
      %881 = vmatpush1.msra.mxu0 0.0
      %882 = vmatprep.subr.mxu0 0.0
      %883 = vmatpush1.msra.mxu0 0.0
      %884 = vmatprep.subr.mxu0 0.0
      %885 = vmatpush1.msra.mxu0 0.0
      %886 = vmatprep.subr.mxu0 0.0
      %887 = vmatpush1.msra.mxu0 0.0
      %888 = vmatprep.subr.mxu0 0.0
      %889 = vmatpush1.msra.mxu0 0.0
      %890 = vmatprep.subr.mxu0 0.0
      %891 = vmatpush1.msra.mxu0 0.0
      %892 = vmatprep.subr.mxu0 0.0
      %893 = vmatpush1.msra.mxu0 0.0
      %894 = vmatprep.subr.mxu0 0.0
      %895 = vmatpush1.msra.mxu0 0.0
      %896 = vmatprep.subr.mxu0 0.0
      %897 = vmatpush1.msra.mxu0 0.0
      %898 = vmatprep.subr.mxu0 0.0
      %899 = vmatpush1.msra.mxu0 0.0
      %900 = vmatprep.subr.mxu0 0.0
      %901 = vmatpush1.msra.mxu0 0.0
      %902 = vmatprep.subr.mxu0 0.0
      %903 = vmatpush1.msra.mxu0 0.0
      %904 = vmatprep.subr.mxu0 0.0
      %905 = vmatpush1.msra.mxu0 0.0
      %906 = vmatprep.subr.mxu0 0.0
      %907 = vmatpush1.msra.mxu0 0.0
      %908 = vmatprep.subr.mxu0 0.0
      %909 = vmatpush1.msra.mxu0 0.0
      %910 = vmatprep.subr.mxu0 0.0
      %911 = vmatpush1.msra.mxu0 0.0
      %912 = vmatprep.subr.mxu0 0.0
      %913 = vmatpush1.msra.mxu0 0.0
      %914 = vmatprep.subr.mxu0 0.0
      %915 = vmatpush1.msra.mxu0 0.0
      %916 = vmatprep.subr.mxu0 0.0
      %917 = vmatpush1.msra.mxu0 0.0
      %918 = vmatprep.mubr.f32.mxu0 0.0
      %919 = vmatmul.mubr.f32.gmra.mrb[0].mxu0 %v848
      %v920 = vpop.f32.mrb[0].mxu0
      %v921 = vadd.f32 0.0, %v920
      %v922 = vpop.f32.mrb[0].mxu0
      %923 = vdwg.mxu0
      %v924 = vxor.u32 %v921, 2147483648
      %v925 = vmul.f32 %v924, 1.442695
      %v926 = vpow.pop %v925
      %v927 = vadd.f32 %v926, 1.0
      %v928 = vrcp.pop %v927
      %v929 = vmul.f32 1.0, %v928
      %v930 = vlaneseq
      %v931 = vshrl.u32 %v930, 7
      %v932 = vsub.s32 0, %v931
      %v933 = vrot.slane %v929, %v932
      %v934 = vmul.f32 %v751, %v933
      %v935 = vadd.f32 %v934, %v223
      %936 = vst.msk [vmem:[%s219] sm:$0xff] %vm224, %v935
      %p937 = scmp.lt.s32.totalorder %s16, 1
      %s938 = scalar_select %p937, %s16, 1
      %s939 = smul.addr %s938, 8
      %s940 = scalar_lea.vmem %s5, %s939
      // Predicated region
      $region41: #{decoder_forward.8} parent=39 // pred_check
        %p941 = pneg %p144
      $region42: #{decoder_forward.8} parent=39 // pred_check_branch
        %943 = sbr.rel (%p941) target = $region44
      $region43: #{decoder_forward.8} parent=39 // pred_region
        _
      $region44: #{decoder_forward.8} parent=39 // pred_fallthru
        _
    $region40: #{decoder_forward.8} parent=5 // pred_fallthru
      _
    %p944 = scmp.le.s32.totalorder 2, %s11
    // Predicated region
    $region45: #{decoder_forward.8} parent=5 // pred_check
      %p945 = pneg %p944
    $region46: #{decoder_forward.8} parent=5 // pred_check_branch
      %947 = sbr.rel (%p945) target = $region48
    $region47: #{decoder_forward.8} parent=5 // pred_region
      %s948 = ssub.s32 %s11, 2
      // Predicated region
      $region49: #{decoder_forward.8} parent=47 // pred_check
        %p949 = pneg %p150
      $region50: #{decoder_forward.8} parent=47 // pred_check_branch
        %951 = sbr.rel (%p949) target = $region52
      $region51: #{decoder_forward.8} parent=47 // pred_region
        %p952 = scmp.lt.s32.totalorder %s17, 1
        %s953 = scalar_select %p952, %s17, 1
        %s954 = smul.addr %s953, 8
        %s955 = scalar_lea.vmem %s5, %s954
      $region52: #{decoder_forward.8} parent=47 // pred_fallthru
        _
    $region48: #{decoder_forward.8} parent=5 // pred_fallthru
      _
  $region6: #{decoder_forward.8} parent=0 // loop_footer
    %s15 = sadd.s32 1, %s11
  $region7: #{decoder_forward.8} parent=0 // loop_footer_branch
    %10 = sbr.rel target = $region3
  $region8: #{decoder_forward.8} parent=0 // loop_exit
    _

// kernel: decoder_forward.10
$region0: #{decoder_forward.10}
  #allocation0 [shape = 'u32[]', space=smem, size = 0x4, offset = 0x4, fixed_abs, tag = 'smem constant byte address 0x4 - core index']
  #allocation1 [shape = 'u32[144,128]{1,0:T(1,128)}', space=vmem, size = 0x12000, scoped, tag = 'internal scratch']
  #allocation2 [shape = 'f32[10,96]{1,0:T(8,128)}', space=vmem, size = 0x2000, scoped, tag = 'scratch operand']
  %s0 = inlined_call_operand.vmem [shape: f32[2,8,96], index: 0, kind: input, shape index: {}]
  %s1 = inlined_call_operand.vmem [shape: f32[2,3,96,96], index: 1, kind: input, shape index: {}]
  %s2 = inlined_call_operand.vmem [shape: f32[2,3,96,96], index: 2, kind: input, shape index: {}]
  %s3 = inlined_call_operand.vmem [shape: f32[2,96,3], index: 3, kind: input, shape index: {}]
  %s4 = inlined_call_operand.vmem [shape: f32[2,3,96], index: 4, kind: input, shape index: {}]
  %s5 = inlined_call_operand.vmem [shape: f32[2,8,96], index: 5, kind: output, shape index: {}]
  %s6 = sld [smem:[#allocation0]]
  $region53: #{decoder_forward.10} parent=0
    _
  %s8 = ssub.s32 1, %s6
  %s9 = scalar_select 0, %s8, %s6
  loop: start=0, step=1, limit=4
  $region2: #{decoder_forward.10} parent=0 // loop_pre_header
    _
  $region3: #{decoder_forward.10} parent=0 // loop_header
    %s11 = sphi 0, %s15
    %p12 = scmp.ge.s32.totalorder %s11, 4
    %s21 = sphi 0, %s23
    %s24 = sphi 0, %s21
    %s25 = sphi 0, %s24
    %s41 = sphi 0, %s25
    %s45 = sphi 0, %s45
    %s47 = sphi 0, %s45
    %s48 = sphi 0, %s47
    %s62 = sphi 0, %s48
    %s66 = sphi 0, %s66
    %s68 = sphi 0, %s66
    %s69 = sphi 0, %s68
    %s83 = sphi 0, %s69
    %s87 = sphi 0, %s87
    %s89 = sphi 0, %s87
    %s90 = sphi 0, %s89
    %s104 = sphi 0, %s90
    %s108 = sphi 0, %s108
    %s110 = sphi 0, %s108
    %s111 = sphi 0, %s110
    %s125 = sphi 0, %s111
    %s131 = sphi 0, %s133
    %s134 = sphi 0, %s131
    %s135 = sphi 0, %s134
    %s151 = sphi 0, %s135
  $region4: #{decoder_forward.10} parent=0 // loop_header_branch
    %14 = sbr.rel (%p12) target = $region8
  $region5: #{decoder_forward.10} parent=0 // loop_body
    %s16 = ssub.s32 %s11, 1
    %s17 = ssub.s32 %s11, 2
    %s18 = sadd.s32 %s11, 1
    %s19 = ssub.s32 %s11, %s18
    %p20 = scmp.eq.s32.totalorder %s19, 0
    %s22 = sadd.s32 %s21, 1
    %s23 = scalar_select %p20, %s21, %s22
    %p26 = pneg %p20
    %p27 = scmp.eq.s32.totalorder %s11, 1
    %p28 = por %p26, %p27
    %p29 = scmp.ne.s32.totalorder %s21, %s24
    %p30 = scmp.eq.s32.totalorder %s11, 0
    %p31 = por %p29, %p30
    %p32 = scmp.ne.s32.totalorder %s21, %s24
    %p33 = scmp.eq.s32.totalorder %s16, 1
    %p34 = por %p32, %p33
    %p35 = scmp.ne.s32.totalorder %s24, %s25
    %p36 = scmp.eq.s32.totalorder %s16, 0
    %p37 = por %p35, %p36
    %p38 = scmp.ne.s32.totalorder %s24, %s25
    %p39 = scmp.eq.s32.totalorder %s17, 1
    %p40 = por %p38, %p39
    %p42 = scmp.ne.s32.totalorder %s25, %s41
    %p43 = scmp.eq.s32.totalorder %s17, 0
    %p44 = por %p42, %p43
    %s46 = sadd.s32 %s45, 1
    %p49 = scmp.eq.s32.totalorder %s11, 1
    %p50 = scmp.ne.s32.totalorder %s45, %s47
    %p51 = scmp.eq.s32.totalorder %s11, 0
    %p52 = por %p50, %p51
    %p53 = scmp.ne.s32.totalorder %s45, %s47
    %p54 = scmp.eq.s32.totalorder %s16, 1
    %p55 = por %p53, %p54
    %p56 = scmp.ne.s32.totalorder %s47, %s48
    %p57 = scmp.eq.s32.totalorder %s16, 0
    %p58 = por %p56, %p57
    %p59 = scmp.ne.s32.totalorder %s47, %s48
    %p60 = scmp.eq.s32.totalorder %s17, 1
    %p61 = por %p59, %p60
    %p63 = scmp.ne.s32.totalorder %s48, %s62
    %p64 = scmp.eq.s32.totalorder %s17, 0
    %p65 = por %p63, %p64
    %s67 = sadd.s32 %s66, 1
    %p70 = scmp.eq.s32.totalorder %s11, 1
    %p71 = scmp.ne.s32.totalorder %s66, %s68
    %p72 = scmp.eq.s32.totalorder %s11, 0
    %p73 = por %p71, %p72
    %p74 = scmp.ne.s32.totalorder %s66, %s68
    %p75 = scmp.eq.s32.totalorder %s16, 1
    %p76 = por %p74, %p75
    %p77 = scmp.ne.s32.totalorder %s68, %s69
    %p78 = scmp.eq.s32.totalorder %s16, 0
    %p79 = por %p77, %p78
    %p80 = scmp.ne.s32.totalorder %s68, %s69
    %p81 = scmp.eq.s32.totalorder %s17, 1
    %p82 = por %p80, %p81
    %p84 = scmp.ne.s32.totalorder %s69, %s83
    %p85 = scmp.eq.s32.totalorder %s17, 0
    %p86 = por %p84, %p85
    %s88 = sadd.s32 %s87, 1
    %p91 = scmp.eq.s32.totalorder %s11, 1
    %p92 = scmp.ne.s32.totalorder %s87, %s89
    %p93 = scmp.eq.s32.totalorder %s11, 0
    %p94 = por %p92, %p93
    %p95 = scmp.ne.s32.totalorder %s87, %s89
    %p96 = scmp.eq.s32.totalorder %s16, 1
    %p97 = por %p95, %p96
    %p98 = scmp.ne.s32.totalorder %s89, %s90
    %p99 = scmp.eq.s32.totalorder %s16, 0
    %p100 = por %p98, %p99
    %p101 = scmp.ne.s32.totalorder %s89, %s90
    %p102 = scmp.eq.s32.totalorder %s17, 1
    %p103 = por %p101, %p102
    %p105 = scmp.ne.s32.totalorder %s90, %s104
    %p106 = scmp.eq.s32.totalorder %s17, 0
    %p107 = por %p105, %p106
    %s109 = sadd.s32 %s108, 1
    %p112 = scmp.eq.s32.totalorder %s11, 1
    %p113 = scmp.ne.s32.totalorder %s108, %s110
    %p114 = scmp.eq.s32.totalorder %s11, 0
    %p115 = por %p113, %p114
    %p116 = scmp.ne.s32.totalorder %s108, %s110
    %p117 = scmp.eq.s32.totalorder %s16, 1
    %p118 = por %p116, %p117
    %p119 = scmp.ne.s32.totalorder %s110, %s111
    %p120 = scmp.eq.s32.totalorder %s16, 0
    %p121 = por %p119, %p120
    %p122 = scmp.ne.s32.totalorder %s110, %s111
    %p123 = scmp.eq.s32.totalorder %s17, 1
    %p124 = por %p122, %p123
    %p126 = scmp.ne.s32.totalorder %s111, %s125
    %p127 = scmp.eq.s32.totalorder %s17, 0
    %p128 = por %p126, %p127
    %s129 = ssub.s32 %s11, %s18
    %p130 = scmp.eq.s32.totalorder %s129, 0
    %s132 = sadd.s32 %s131, 1
    %s133 = scalar_select %p130, %s131, %s132
    %p136 = pneg %p130
    %p137 = scmp.eq.s32.totalorder %s11, 1
    %p138 = por %p136, %p137
    %p139 = scmp.ne.s32.totalorder %s131, %s134
    %p140 = scmp.eq.s32.totalorder %s11, 0
    %p141 = por %p139, %p140
    %p142 = scmp.ne.s32.totalorder %s131, %s134
    %p143 = scmp.eq.s32.totalorder %s16, 1
    %p144 = por %p142, %p143
    %p145 = scmp.ne.s32.totalorder %s134, %s135
    %p146 = scmp.eq.s32.totalorder %s16, 0
    %p147 = por %p145, %p146
    %p148 = scmp.ne.s32.totalorder %s134, %s135
    %p149 = scmp.eq.s32.totalorder %s17, 1
    %p150 = por %p148, %p149
    %p152 = scmp.ne.s32.totalorder %s135, %s151
    %p153 = scmp.eq.s32.totalorder %s17, 0
    %p154 = por %p152, %p153
    %p155 = scmp.le.s32.totalorder 1, %s11
    %p156 = scmp.lt.s32.totalorder %s11, 3
    %p157 = pnand %p155, %p156
    %p158 = pneg %p157
    // Predicated region
    $region9: #{decoder_forward.10} parent=5 // pred_check
      _
    $region10: #{decoder_forward.10} parent=5 // pred_check_branch
      %160 = sbr.rel (%p157) target = $region12
    $region11: #{decoder_forward.10} parent=5 // pred_region
      %s161 = ssub.s32 %s11, 1
      // Predicated region
      $region13: #{decoder_forward.10} parent=11 // pred_check
        %p162 = pneg %p58
      $region14: #{decoder_forward.10} parent=11 // pred_check_branch
        %164 = sbr.rel (%p162) target = $region16
      $region15: #{decoder_forward.10} parent=11 // pred_region
        _
      $region16: #{decoder_forward.10} parent=11 // pred_fallthru
        _
      // Predicated region
      $region17: #{decoder_forward.10} parent=11 // pred_check
        %p165 = pneg %p79
      $region18: #{decoder_forward.10} parent=11 // pred_check_branch
        %167 = sbr.rel (%p165) target = $region20
      $region19: #{decoder_forward.10} parent=11 // pred_region
        _
      $region20: #{decoder_forward.10} parent=11 // pred_fallthru
        _
      // Predicated region
      $region21: #{decoder_forward.10} parent=11 // pred_check
        %p168 = pneg %p100
      $region22: #{decoder_forward.10} parent=11 // pred_check_branch
        %170 = sbr.rel (%p168) target = $region24
      $region23: #{decoder_forward.10} parent=11 // pred_region
        _
      $region24: #{decoder_forward.10} parent=11 // pred_fallthru
        _
      // Predicated region
      $region25: #{decoder_forward.10} parent=11 // pred_check
        %p171 = pneg %p121
      $region26: #{decoder_forward.10} parent=11 // pred_check_branch
        %173 = sbr.rel (%p171) target = $region28
      $region27: #{decoder_forward.10} parent=11 // pred_region
        _
      $region28: #{decoder_forward.10} parent=11 // pred_fallthru
        _
    $region12: #{decoder_forward.10} parent=5 // pred_fallthru
      _
    %p174 = scmp.lt.s32.totalorder %s11, 2
    // Predicated region
    $region29: #{decoder_forward.10} parent=5 // pred_check
      %p175 = pneg %p174
    $region30: #{decoder_forward.10} parent=5 // pred_check_branch
      %177 = sbr.rel (%p175) target = $region32
    $region31: #{decoder_forward.10} parent=5 // pred_region
      // Predicated region
      $region33: #{decoder_forward.10} parent=31 // pred_check
        %p178 = pneg %p31
      $region34: #{decoder_forward.10} parent=31 // pred_check_branch
        %180 = sbr.rel (%p178) target = $region36
      $region35: #{decoder_forward.10} parent=31 // pred_region
        %p181 = scmp.lt.s32.totalorder %s11, 1
        %s182 = scalar_select %p181, %s11, 1
        %s183 = smul.addr %s182, 8
        %s184 = scalar_lea.vmem %s0, %s183
      $region36: #{decoder_forward.10} parent=31 // pred_fallthru
        _
    $region32: #{decoder_forward.10} parent=5 // pred_fallthru
      _
    %p185 = scmp.le.s32.totalorder 1, %s11
    %p186 = scmp.lt.s32.totalorder %s11, 3
    %p187 = pnand %p185, %p186
    %p188 = pneg %p187
    // Predicated region
    $region37: #{decoder_forward.10} parent=5 // pred_check
      _
    $region38: #{decoder_forward.10} parent=5 // pred_check_branch
      %190 = sbr.rel (%p187) target = $region40
    $region39: #{decoder_forward.10} parent=5 // pred_region
      %s191 = ssub.s32 %s11, 1
      %p192 = scmp.lt.s32.totalorder %s16, 1
      %s193 = scalar_select %p192, %s16, 1
      %s194 = smul.addr %s193, 8
      %s195 = scalar_lea.vmem %s0, %s194
      %p196 = pneg %p37
      %p197 = pneg %p34
      %p198 = pneg %p58
      %p199 = pneg %p55
      %p200 = pneg %p79
      %p201 = pneg %p76
      %p202 = pneg %p100
      %p203 = pneg %p97
      %p204 = pneg %p121
      %p205 = pneg %p118
      %p206 = pneg %p147
      %p207 = pneg %p144
      %p208 = scmp.lt.s32.totalorder %s16, 1
      %s209 = scalar_select %p208, %s16, 1
      %s210 = smul.addr %s209, 8
      %s211 = scalar_lea.vmem %s5, %s210
      %p212 = scmp.lt.s32.totalorder %s16, 1
      %s213 = scalar_select %p212, %s16, 1
      %s214 = smul.addr %s213, 8
      %s215 = scalar_lea.vmem %s0, %s214
      %p216 = scmp.lt.s32.totalorder %s16, 1
      %s217 = scalar_select %p216, %s16, 1
      %s218 = smul.addr %s217, 8
      %s219 = scalar_lea.vmem %s5, %s218
      %vm220 = vcmask 778240
      %221 = vst.msk [vmem:[#allocation2] sm:$0x1] %vm220, 0.0
      %222 = vst.msk [vmem:[#allocation2 + $0x9] sm:$0x1] %vm220, 0.0
      %v223 = vld [vmem:[%s215] sm:$0xff]
      %vm224 = vcmask 785408
      %225 = vst.msk [vmem:[#allocation2 + $0x1] sm:$0xff] %vm224, %v223
      %v226 = vld [vmem:[#allocation2] sm:$0xff]
      %v227 = vld [vmem:[%s1] sm:$0xff]
      %v228 = vld [vmem:[%s1 + $0x8] sm:$0xff]
      %v229 = vld [vmem:[%s1 + $0x10] sm:$0xff]
      %v230 = vld [vmem:[%s1 + $0x18] sm:$0xff]
      %v231 = vld [vmem:[%s1 + $0x20] sm:$0xff]
      %v232 = vld [vmem:[%s1 + $0x28] sm:$0xff]
      %v233 = vld [vmem:[%s1 + $0x30] sm:$0xff]
      %v234 = vld [vmem:[%s1 + $0x38] sm:$0xff]
      %v235 = vld [vmem:[%s1 + $0x40] sm:$0xff]
      %v236 = vld [vmem:[%s1 + $0x48] sm:$0xff]
      %v237 = vld [vmem:[%s1 + $0x50] sm:$0xff]
      %v238 = vld [vmem:[%s1 + $0x58] sm:$0xff]
      %v239 = vld [vmem:[#allocation2 + $0x1] sm:$0xff]
      %s240 = scalar_lea.vmem %s1, 96
      %v241 = vld [vmem:[%s240] sm:$0xff]
      %v242 = vld [vmem:[%s240 + $0x8] sm:$0xff]
      %v243 = vld [vmem:[%s240 + $0x10] sm:$0xff]
      %v244 = vld [vmem:[%s240 + $0x18] sm:$0xff]
      %v245 = vld [vmem:[%s240 + $0x20] sm:$0xff]
      %v246 = vld [vmem:[%s240 + $0x28] sm:$0xff]
      %v247 = vld [vmem:[%s240 + $0x30] sm:$0xff]
      %v248 = vld [vmem:[%s240 + $0x38] sm:$0xff]
      %v249 = vld [vmem:[%s240 + $0x40] sm:$0xff]
      %v250 = vld [vmem:[%s240 + $0x48] sm:$0xff]
      %v251 = vld [vmem:[%s240 + $0x50] sm:$0xff]
      %v252 = vld [vmem:[%s240 + $0x58] sm:$0xff]
      %v254 = vsel %vm224, %v239, 0
      %256 = vmatprep.subr.mxu0 0.0
      %257 = vmatpush1.msra.mxu0 %v241
      %258 = vmatprep.subr.mxu0 0.0
      %259 = vmatpush1.msra.mxu0 %v242
      %260 = vmatprep.subr.mxu0 0.0
      %261 = vmatpush1.msra.mxu0 %v243
      %262 = vmatprep.subr.mxu0 0.0
      %263 = vmatpush1.msra.mxu0 %v244
      %264 = vmatprep.subr.mxu0 0.0
      %265 = vmatpush1.msra.mxu0 %v245
      %266 = vmatprep.subr.mxu0 0.0
      %267 = vmatpush1.msra.mxu0 %v246
      %268 = vmatprep.subr.mxu0 0.0
      %269 = vmatpush1.msra.mxu0 %v247
      %270 = vmatprep.subr.mxu0 0.0
      %271 = vmatpush1.msra.mxu0 %v248
      %272 = vmatprep.subr.mxu0 0.0
      %273 = vmatpush1.msra.mxu0 %v249
      %274 = vmatprep.subr.mxu0 0.0
      %275 = vmatpush1.msra.mxu0 %v250
      %276 = vmatprep.subr.mxu0 0.0
      %277 = vmatpush1.msra.mxu0 %v251
      %278 = vmatprep.subr.mxu0 0.0
      %279 = vmatpush1.msra.mxu0 %v252
      %280 = vmatprep.subr.mxu0 0.0
      %281 = vmatpush1.msra.mxu0 0.0
      %282 = vmatprep.subr.mxu0 0.0
      %283 = vmatpush1.msra.mxu0 0.0
      %284 = vmatprep.subr.mxu0 0.0
      %285 = vmatpush1.msra.mxu0 0.0
      %286 = vmatprep.subr.mxu0 0.0
      %287 = vmatpush1.msra.mxu0 0.0
      %288 = vmatprep.subr.mxu0 0.0
      %289 = vmatpush1.msra.mxu0 0.0
      %290 = vmatprep.subr.mxu0 0.0
      %291 = vmatpush1.msra.mxu0 0.0
      %292 = vmatprep.subr.mxu0 0.0
      %293 = vmatpush1.msra.mxu0 0.0
      %294 = vmatprep.subr.mxu0 0.0
      %295 = vmatpush1.msra.mxu0 0.0
      %296 = vmatprep.subr.mxu0 0.0
      %297 = vmatpush1.msra.mxu0 0.0
      %298 = vmatprep.subr.mxu0 0.0
      %299 = vmatpush1.msra.mxu0 0.0
      %300 = vmatprep.subr.mxu0 0.0
      %301 = vmatpush1.msra.mxu0 0.0
      %302 = vmatprep.subr.mxu0 0.0
      %303 = vmatpush1.msra.mxu0 0.0
      %304 = vmatprep.subr.mxu0 0.0
      %305 = vmatpush1.msra.mxu0 0.0
      %306 = vmatprep.subr.mxu0 0.0
      %307 = vmatpush1.msra.mxu0 0.0
      %308 = vmatprep.subr.mxu0 0.0
      %309 = vmatpush1.msra.mxu0 0.0
      %310 = vmatprep.subr.mxu0 0.0
      %311 = vmatpush1.msra.mxu0 0.0
      %312 = vmatprep.subr.mxu0 0.0
      %313 = vmatpush1.msra.mxu0 0.0
      %314 = vmatprep.subr.mxu0 0.0
      %315 = vmatpush1.msra.mxu0 0.0
      %316 = vmatprep.subr.mxu0 0.0
      %317 = vmatpush1.msra.mxu0 0.0
      %318 = vmatprep.subr.mxu0 0.0
      %319 = vmatpush1.msra.mxu0 0.0
      %320 = vmatprep.mubr.f32.mxu0 0.0
      %321 = vmatmul.mubr.f32.gmra.mrb[0].mxu0 %v254
      %v322 = vpop.f32.mrb[0].mxu0
      %v323 = vadd.f32 0.0, %v322
      %v324 = vpop.f32.mrb[0].mxu0
      %325 = vdwg.mxu0
      %v327 = vsel %vm224, %v226, 0
      %329 = vmatprep.subr.mxu0 0.0
      %330 = vmatpush1.msra.mxu0 %v227
      %331 = vmatprep.subr.mxu0 0.0
      %332 = vmatpush1.msra.mxu0 %v228
      %333 = vmatprep.subr.mxu0 0.0
      %334 = vmatpush1.msra.mxu0 %v229
      %335 = vmatprep.subr.mxu0 0.0
      %336 = vmatpush1.msra.mxu0 %v230
      %337 = vmatprep.subr.mxu0 0.0
      %338 = vmatpush1.msra.mxu0 %v231
      %339 = vmatprep.subr.mxu0 0.0
      %340 = vmatpush1.msra.mxu0 %v232
      %341 = vmatprep.subr.mxu0 0.0
      %342 = vmatpush1.msra.mxu0 %v233
      %343 = vmatprep.subr.mxu0 0.0
      %344 = vmatpush1.msra.mxu0 %v234
      %345 = vmatprep.subr.mxu0 0.0
      %346 = vmatpush1.msra.mxu0 %v235
      %347 = vmatprep.subr.mxu0 0.0
      %348 = vmatpush1.msra.mxu0 %v236
      %349 = vmatprep.subr.mxu0 0.0
      %350 = vmatpush1.msra.mxu0 %v237
      %351 = vmatprep.subr.mxu0 0.0
      %352 = vmatpush1.msra.mxu0 %v238
      %353 = vmatprep.subr.mxu0 0.0
      %354 = vmatpush1.msra.mxu0 0.0
      %355 = vmatprep.subr.mxu0 0.0
      %356 = vmatpush1.msra.mxu0 0.0
      %357 = vmatprep.subr.mxu0 0.0
      %358 = vmatpush1.msra.mxu0 0.0
      %359 = vmatprep.subr.mxu0 0.0
      %360 = vmatpush1.msra.mxu0 0.0
      %361 = vmatprep.subr.mxu0 0.0
      %362 = vmatpush1.msra.mxu0 0.0
      %363 = vmatprep.subr.mxu0 0.0
      %364 = vmatpush1.msra.mxu0 0.0
      %365 = vmatprep.subr.mxu0 0.0
      %366 = vmatpush1.msra.mxu0 0.0
      %367 = vmatprep.subr.mxu0 0.0
      %368 = vmatpush1.msra.mxu0 0.0
      %369 = vmatprep.subr.mxu0 0.0
      %370 = vmatpush1.msra.mxu0 0.0
      %371 = vmatprep.subr.mxu0 0.0
      %372 = vmatpush1.msra.mxu0 0.0
      %373 = vmatprep.subr.mxu0 0.0
      %374 = vmatpush1.msra.mxu0 0.0
      %375 = vmatprep.subr.mxu0 0.0
      %376 = vmatpush1.msra.mxu0 0.0
      %377 = vmatprep.subr.mxu0 0.0
      %378 = vmatpush1.msra.mxu0 0.0
      %379 = vmatprep.subr.mxu0 0.0
      %380 = vmatpush1.msra.mxu0 0.0
      %381 = vmatprep.subr.mxu0 0.0
      %382 = vmatpush1.msra.mxu0 0.0
      %383 = vmatprep.subr.mxu0 0.0
      %384 = vmatpush1.msra.mxu0 0.0
      %385 = vmatprep.subr.mxu0 0.0
      %386 = vmatpush1.msra.mxu0 0.0
      %387 = vmatprep.subr.mxu0 0.0
      %388 = vmatpush1.msra.mxu0 0.0
      %389 = vmatprep.subr.mxu0 0.0
      %390 = vmatpush1.msra.mxu0 0.0
      %391 = vmatprep.subr.mxu0 0.0
      %392 = vmatpush1.msra.mxu0 0.0
      %393 = vmatprep.mubr.f32.mxu0 0.0
      %394 = vmatmul.mubr.f32.gmra.mrb[0].mxu0 %v327
      %v395 = vpop.f32.mrb[0].mxu0
      %v396 = vadd.f32 %v323, %v395
      %v397 = vpop.f32.mrb[0].mxu0
      %398 = vdwg.mxu0
      %v399 = vld [vmem:[#allocation2 + $0x2] sm:$0xff]
      %s400 = scalar_lea.vmem %s1, 192
      %v401 = vld [vmem:[%s400] sm:$0xff]
      %v402 = vld [vmem:[%s400 + $0x8] sm:$0xff]
      %v403 = vld [vmem:[%s400 + $0x10] sm:$0xff]
      %v404 = vld [vmem:[%s400 + $0x18] sm:$0xff]
      %v405 = vld [vmem:[%s400 + $0x20] sm:$0xff]
      %v406 = vld [vmem:[%s400 + $0x28] sm:$0xff]
      %v407 = vld [vmem:[%s400 + $0x30] sm:$0xff]
      %v408 = vld [vmem:[%s400 + $0x38] sm:$0xff]
      %v409 = vld [vmem:[%s400 + $0x40] sm:$0xff]
      %v410 = vld [vmem:[%s400 + $0x48] sm:$0xff]
      %v411 = vld [vmem:[%s400 + $0x50] sm:$0xff]
      %v412 = vld [vmem:[%s400 + $0x58] sm:$0xff]
      %v414 = vsel %vm224, %v399, 0
      %416 = vmatprep.subr.mxu0 0.0
      %417 = vmatpush1.msra.mxu0 %v401
      %418 = vmatprep.subr.mxu0 0.0
      %419 = vmatpush1.msra.mxu0 %v402
      %420 = vmatprep.subr.mxu0 0.0
      %421 = vmatpush1.msra.mxu0 %v403
      %422 = vmatprep.subr.mxu0 0.0
      %423 = vmatpush1.msra.mxu0 %v404
      %424 = vmatprep.subr.mxu0 0.0
      %425 = vmatpush1.msra.mxu0 %v405
      %426 = vmatprep.subr.mxu0 0.0
      %427 = vmatpush1.msra.mxu0 %v406
      %428 = vmatprep.subr.mxu0 0.0
      %429 = vmatpush1.msra.mxu0 %v407
      %430 = vmatprep.subr.mxu0 0.0
      %431 = vmatpush1.msra.mxu0 %v408
      %432 = vmatprep.subr.mxu0 0.0
      %433 = vmatpush1.msra.mxu0 %v409
      %434 = vmatprep.subr.mxu0 0.0
      %435 = vmatpush1.msra.mxu0 %v410
      %436 = vmatprep.subr.mxu0 0.0
      %437 = vmatpush1.msra.mxu0 %v411
      %438 = vmatprep.subr.mxu0 0.0
      %439 = vmatpush1.msra.mxu0 %v412
      %440 = vmatprep.subr.mxu0 0.0
      %441 = vmatpush1.msra.mxu0 0.0
      %442 = vmatprep.subr.mxu0 0.0
      %443 = vmatpush1.msra.mxu0 0.0
      %444 = vmatprep.subr.mxu0 0.0
      %445 = vmatpush1.msra.mxu0 0.0
      %446 = vmatprep.subr.mxu0 0.0
      %447 = vmatpush1.msra.mxu0 0.0
      %448 = vmatprep.subr.mxu0 0.0
      %449 = vmatpush1.msra.mxu0 0.0
      %450 = vmatprep.subr.mxu0 0.0
      %451 = vmatpush1.msra.mxu0 0.0
      %452 = vmatprep.subr.mxu0 0.0
      %453 = vmatpush1.msra.mxu0 0.0
      %454 = vmatprep.subr.mxu0 0.0
      %455 = vmatpush1.msra.mxu0 0.0
      %456 = vmatprep.subr.mxu0 0.0
      %457 = vmatpush1.msra.mxu0 0.0
      %458 = vmatprep.subr.mxu0 0.0
      %459 = vmatpush1.msra.mxu0 0.0
      %460 = vmatprep.subr.mxu0 0.0
      %461 = vmatpush1.msra.mxu0 0.0
      %462 = vmatprep.subr.mxu0 0.0
      %463 = vmatpush1.msra.mxu0 0.0
      %464 = vmatprep.subr.mxu0 0.0
      %465 = vmatpush1.msra.mxu0 0.0
      %466 = vmatprep.subr.mxu0 0.0
      %467 = vmatpush1.msra.mxu0 0.0
      %468 = vmatprep.subr.mxu0 0.0
      %469 = vmatpush1.msra.mxu0 0.0
      %470 = vmatprep.subr.mxu0 0.0
      %471 = vmatpush1.msra.mxu0 0.0
      %472 = vmatprep.subr.mxu0 0.0
      %473 = vmatpush1.msra.mxu0 0.0
      %474 = vmatprep.subr.mxu0 0.0
      %475 = vmatpush1.msra.mxu0 0.0
      %476 = vmatprep.subr.mxu0 0.0
      %477 = vmatpush1.msra.mxu0 0.0
      %478 = vmatprep.subr.mxu0 0.0
      %479 = vmatpush1.msra.mxu0 0.0
      %480 = vmatprep.mubr.f32.mxu0 0.0
      %481 = vmatmul.mubr.f32.gmra.mrb[0].mxu0 %v414
      %v482 = vpop.f32.mrb[0].mxu0
      %v483 = vadd.f32 0.0, %v482
      %v484 = vpop.f32.mrb[0].mxu0
      %485 = vdwg.mxu0
      %v486 = vadd.f32 %v396, %v483
      %vm487 = vcmp.gt.f32.partialorder %v486, 0.0
      %v488 = vmul.f32 %v486, 0.25
      %v489 = vsel %vm487, %v486, %v488
      %490 = vst.msk [vmem:[#allocation2 + $0x1] sm:$0xff] %vm224, %v489
      %v491 = vld [vmem:[#allocation2] sm:$0xff]
      %v492 = vld [vmem:[%s2] sm:$0xff]
      %v493 = vld [vmem:[%s2 + $0x8] sm:$0xff]
      %v494 = vld [vmem:[%s2 + $0x10] sm:$0xff]
      %v495 = vld [vmem:[%s2 + $0x18] sm:$0xff]
      %v496 = vld [vmem:[%s2 + $0x20] sm:$0xff]
      %v497 = vld [vmem:[%s2 + $0x28] sm:$0xff]
      %v498 = vld [vmem:[%s2 + $0x30] sm:$0xff]
      %v499 = vld [vmem:[%s2 + $0x38] sm:$0xff]
      %v500 = vld [vmem:[%s2 + $0x40] sm:$0xff]
      %v501 = vld [vmem:[%s2 + $0x48] sm:$0xff]
      %v502 = vld [vmem:[%s2 + $0x50] sm:$0xff]
      %v503 = vld [vmem:[%s2 + $0x58] sm:$0xff]
      %v504 = vld [vmem:[#allocation2 + $0x1] sm:$0xff]
      %s505 = scalar_lea.vmem %s2, 96
      %v506 = vld [vmem:[%s505] sm:$0xff]
      %v507 = vld [vmem:[%s505 + $0x8] sm:$0xff]
      %v508 = vld [vmem:[%s505 + $0x10] sm:$0xff]
      %v509 = vld [vmem:[%s505 + $0x18] sm:$0xff]
      %v510 = vld [vmem:[%s505 + $0x20] sm:$0xff]
      %v511 = vld [vmem:[%s505 + $0x28] sm:$0xff]
      %v512 = vld [vmem:[%s505 + $0x30] sm:$0xff]
      %v513 = vld [vmem:[%s505 + $0x38] sm:$0xff]
      %v514 = vld [vmem:[%s505 + $0x40] sm:$0xff]
      %v515 = vld [vmem:[%s505 + $0x48] sm:$0xff]
      %v516 = vld [vmem:[%s505 + $0x50] sm:$0xff]
      %v517 = vld [vmem:[%s505 + $0x58] sm:$0xff]
      %v519 = vsel %vm224, %v504, 0
      %521 = vmatprep.subr.mxu0 0.0
      %522 = vmatpush1.msra.mxu0 %v506
      %523 = vmatprep.subr.mxu0 0.0
      %524 = vmatpush1.msra.mxu0 %v507
      %525 = vmatprep.subr.mxu0 0.0
      %526 = vmatpush1.msra.mxu0 %v508
      %527 = vmatprep.subr.mxu0 0.0
      %528 = vmatpush1.msra.mxu0 %v509
      %529 = vmatprep.subr.mxu0 0.0
      %530 = vmatpush1.msra.mxu0 %v510
      %531 = vmatprep.subr.mxu0 0.0
      %532 = vmatpush1.msra.mxu0 %v511
      %533 = vmatprep.subr.mxu0 0.0
      %534 = vmatpush1.msra.mxu0 %v512
      %535 = vmatprep.subr.mxu0 0.0
      %536 = vmatpush1.msra.mxu0 %v513
      %537 = vmatprep.subr.mxu0 0.0
      %538 = vmatpush1.msra.mxu0 %v514
      %539 = vmatprep.subr.mxu0 0.0
      %540 = vmatpush1.msra.mxu0 %v515
      %541 = vmatprep.subr.mxu0 0.0
      %542 = vmatpush1.msra.mxu0 %v516
      %543 = vmatprep.subr.mxu0 0.0
      %544 = vmatpush1.msra.mxu0 %v517
      %545 = vmatprep.subr.mxu0 0.0
      %546 = vmatpush1.msra.mxu0 0.0
      %547 = vmatprep.subr.mxu0 0.0
      %548 = vmatpush1.msra.mxu0 0.0
      %549 = vmatprep.subr.mxu0 0.0
      %550 = vmatpush1.msra.mxu0 0.0
      %551 = vmatprep.subr.mxu0 0.0
      %552 = vmatpush1.msra.mxu0 0.0
      %553 = vmatprep.subr.mxu0 0.0
      %554 = vmatpush1.msra.mxu0 0.0
      %555 = vmatprep.subr.mxu0 0.0
      %556 = vmatpush1.msra.mxu0 0.0
      %557 = vmatprep.subr.mxu0 0.0
      %558 = vmatpush1.msra.mxu0 0.0
      %559 = vmatprep.subr.mxu0 0.0
      %560 = vmatpush1.msra.mxu0 0.0
      %561 = vmatprep.subr.mxu0 0.0
      %562 = vmatpush1.msra.mxu0 0.0
      %563 = vmatprep.subr.mxu0 0.0
      %564 = vmatpush1.msra.mxu0 0.0
      %565 = vmatprep.subr.mxu0 0.0
      %566 = vmatpush1.msra.mxu0 0.0
      %567 = vmatprep.subr.mxu0 0.0
      %568 = vmatpush1.msra.mxu0 0.0
      %569 = vmatprep.subr.mxu0 0.0
      %570 = vmatpush1.msra.mxu0 0.0
      %571 = vmatprep.subr.mxu0 0.0
      %572 = vmatpush1.msra.mxu0 0.0
      %573 = vmatprep.subr.mxu0 0.0
      %574 = vmatpush1.msra.mxu0 0.0
      %575 = vmatprep.subr.mxu0 0.0
      %576 = vmatpush1.msra.mxu0 0.0
      %577 = vmatprep.subr.mxu0 0.0
      %578 = vmatpush1.msra.mxu0 0.0
      %579 = vmatprep.subr.mxu0 0.0
      %580 = vmatpush1.msra.mxu0 0.0
      %581 = vmatprep.subr.mxu0 0.0
      %582 = vmatpush1.msra.mxu0 0.0
      %583 = vmatprep.subr.mxu0 0.0
      %584 = vmatpush1.msra.mxu0 0.0
      %585 = vmatprep.mubr.f32.mxu0 0.0
      %586 = vmatmul.mubr.f32.gmra.mrb[0].mxu0 %v519
      %v587 = vpop.f32.mrb[0].mxu0
      %v588 = vadd.f32 0.0, %v587
      %v589 = vpop.f32.mrb[0].mxu0
      %590 = vdwg.mxu0
      %v592 = vsel %vm224, %v491, 0
      %594 = vmatprep.subr.mxu0 0.0
      %595 = vmatpush1.msra.mxu0 %v492
      %596 = vmatprep.subr.mxu0 0.0
      %597 = vmatpush1.msra.mxu0 %v493
      %598 = vmatprep.subr.mxu0 0.0
      %599 = vmatpush1.msra.mxu0 %v494
      %600 = vmatprep.subr.mxu0 0.0
      %601 = vmatpush1.msra.mxu0 %v495
      %602 = vmatprep.subr.mxu0 0.0
      %603 = vmatpush1.msra.mxu0 %v496
      %604 = vmatprep.subr.mxu0 0.0
      %605 = vmatpush1.msra.mxu0 %v497
      %606 = vmatprep.subr.mxu0 0.0
      %607 = vmatpush1.msra.mxu0 %v498
      %608 = vmatprep.subr.mxu0 0.0
      %609 = vmatpush1.msra.mxu0 %v499
      %610 = vmatprep.subr.mxu0 0.0
      %611 = vmatpush1.msra.mxu0 %v500
      %612 = vmatprep.subr.mxu0 0.0
      %613 = vmatpush1.msra.mxu0 %v501
      %614 = vmatprep.subr.mxu0 0.0
      %615 = vmatpush1.msra.mxu0 %v502
      %616 = vmatprep.subr.mxu0 0.0
      %617 = vmatpush1.msra.mxu0 %v503
      %618 = vmatprep.subr.mxu0 0.0
      %619 = vmatpush1.msra.mxu0 0.0
      %620 = vmatprep.subr.mxu0 0.0
      %621 = vmatpush1.msra.mxu0 0.0
      %622 = vmatprep.subr.mxu0 0.0
      %623 = vmatpush1.msra.mxu0 0.0
      %624 = vmatprep.subr.mxu0 0.0
      %625 = vmatpush1.msra.mxu0 0.0
      %626 = vmatprep.subr.mxu0 0.0
      %627 = vmatpush1.msra.mxu0 0.0
      %628 = vmatprep.subr.mxu0 0.0
      %629 = vmatpush1.msra.mxu0 0.0
      %630 = vmatprep.subr.mxu0 0.0
      %631 = vmatpush1.msra.mxu0 0.0
      %632 = vmatprep.subr.mxu0 0.0
      %633 = vmatpush1.msra.mxu0 0.0
      %634 = vmatprep.subr.mxu0 0.0
      %635 = vmatpush1.msra.mxu0 0.0
      %636 = vmatprep.subr.mxu0 0.0
      %637 = vmatpush1.msra.mxu0 0.0
      %638 = vmatprep.subr.mxu0 0.0
      %639 = vmatpush1.msra.mxu0 0.0
      %640 = vmatprep.subr.mxu0 0.0
      %641 = vmatpush1.msra.mxu0 0.0
      %642 = vmatprep.subr.mxu0 0.0
      %643 = vmatpush1.msra.mxu0 0.0
      %644 = vmatprep.subr.mxu0 0.0
      %645 = vmatpush1.msra.mxu0 0.0
      %646 = vmatprep.subr.mxu0 0.0
      %647 = vmatpush1.msra.mxu0 0.0
      %648 = vmatprep.subr.mxu0 0.0
      %649 = vmatpush1.msra.mxu0 0.0
      %650 = vmatprep.subr.mxu0 0.0
      %651 = vmatpush1.msra.mxu0 0.0
      %652 = vmatprep.subr.mxu0 0.0
      %653 = vmatpush1.msra.mxu0 0.0
      %654 = vmatprep.subr.mxu0 0.0
      %655 = vmatpush1.msra.mxu0 0.0
      %656 = vmatprep.subr.mxu0 0.0
      %657 = vmatpush1.msra.mxu0 0.0
      %658 = vmatprep.mubr.f32.mxu0 0.0
      %659 = vmatmul.mubr.f32.gmra.mrb[0].mxu0 %v592
      %v660 = vpop.f32.mrb[0].mxu0
      %v661 = vadd.f32 %v588, %v660
      %v662 = vpop.f32.mrb[0].mxu0
      %663 = vdwg.mxu0
      %v664 = vld [vmem:[#allocation2 + $0x2] sm:$0xff]
      %s665 = scalar_lea.vmem %s2, 192
      %v666 = vld [vmem:[%s665] sm:$0xff]
      %v667 = vld [vmem:[%s665 + $0x8] sm:$0xff]
      %v668 = vld [vmem:[%s665 + $0x10] sm:$0xff]
      %v669 = vld [vmem:[%s665 + $0x18] sm:$0xff]
      %v670 = vld [vmem:[%s665 + $0x20] sm:$0xff]
      %v671 = vld [vmem:[%s665 + $0x28] sm:$0xff]
      %v672 = vld [vmem:[%s665 + $0x30] sm:$0xff]
      %v673 = vld [vmem:[%s665 + $0x38] sm:$0xff]
      %v674 = vld [vmem:[%s665 + $0x40] sm:$0xff]
      %v675 = vld [vmem:[%s665 + $0x48] sm:$0xff]
      %v676 = vld [vmem:[%s665 + $0x50] sm:$0xff]
      %v677 = vld [vmem:[%s665 + $0x58] sm:$0xff]
      %v679 = vsel %vm224, %v664, 0
      %681 = vmatprep.subr.mxu0 0.0
      %682 = vmatpush1.msra.mxu0 %v666
      %683 = vmatprep.subr.mxu0 0.0
      %684 = vmatpush1.msra.mxu0 %v667
      %685 = vmatprep.subr.mxu0 0.0
      %686 = vmatpush1.msra.mxu0 %v668
      %687 = vmatprep.subr.mxu0 0.0
      %688 = vmatpush1.msra.mxu0 %v669
      %689 = vmatprep.subr.mxu0 0.0
      %690 = vmatpush1.msra.mxu0 %v670
      %691 = vmatprep.subr.mxu0 0.0
      %692 = vmatpush1.msra.mxu0 %v671
      %693 = vmatprep.subr.mxu0 0.0
      %694 = vmatpush1.msra.mxu0 %v672
      %695 = vmatprep.subr.mxu0 0.0
      %696 = vmatpush1.msra.mxu0 %v673
      %697 = vmatprep.subr.mxu0 0.0
      %698 = vmatpush1.msra.mxu0 %v674
      %699 = vmatprep.subr.mxu0 0.0
      %700 = vmatpush1.msra.mxu0 %v675
      %701 = vmatprep.subr.mxu0 0.0
      %702 = vmatpush1.msra.mxu0 %v676
      %703 = vmatprep.subr.mxu0 0.0
      %704 = vmatpush1.msra.mxu0 %v677
      %705 = vmatprep.subr.mxu0 0.0
      %706 = vmatpush1.msra.mxu0 0.0
      %707 = vmatprep.subr.mxu0 0.0
      %708 = vmatpush1.msra.mxu0 0.0
      %709 = vmatprep.subr.mxu0 0.0
      %710 = vmatpush1.msra.mxu0 0.0
      %711 = vmatprep.subr.mxu0 0.0
      %712 = vmatpush1.msra.mxu0 0.0
      %713 = vmatprep.subr.mxu0 0.0
      %714 = vmatpush1.msra.mxu0 0.0
      %715 = vmatprep.subr.mxu0 0.0
      %716 = vmatpush1.msra.mxu0 0.0
      %717 = vmatprep.subr.mxu0 0.0
      %718 = vmatpush1.msra.mxu0 0.0
      %719 = vmatprep.subr.mxu0 0.0
      %720 = vmatpush1.msra.mxu0 0.0
      %721 = vmatprep.subr.mxu0 0.0
      %722 = vmatpush1.msra.mxu0 0.0
      %723 = vmatprep.subr.mxu0 0.0
      %724 = vmatpush1.msra.mxu0 0.0
      %725 = vmatprep.subr.mxu0 0.0
      %726 = vmatpush1.msra.mxu0 0.0
      %727 = vmatprep.subr.mxu0 0.0
      %728 = vmatpush1.msra.mxu0 0.0
      %729 = vmatprep.subr.mxu0 0.0
      %730 = vmatpush1.msra.mxu0 0.0
      %731 = vmatprep.subr.mxu0 0.0
      %732 = vmatpush1.msra.mxu0 0.0
      %733 = vmatprep.subr.mxu0 0.0
      %734 = vmatpush1.msra.mxu0 0.0
      %735 = vmatprep.subr.mxu0 0.0
      %736 = vmatpush1.msra.mxu0 0.0
      %737 = vmatprep.subr.mxu0 0.0
      %738 = vmatpush1.msra.mxu0 0.0
      %739 = vmatprep.subr.mxu0 0.0
      %740 = vmatpush1.msra.mxu0 0.0
      %741 = vmatprep.subr.mxu0 0.0
      %742 = vmatpush1.msra.mxu0 0.0
      %743 = vmatprep.subr.mxu0 0.0
      %744 = vmatpush1.msra.mxu0 0.0
      %745 = vmatprep.mubr.f32.mxu0 0.0
      %746 = vmatmul.mubr.f32.gmra.mrb[0].mxu0 %v679
      %v747 = vpop.f32.mrb[0].mxu0
      %v748 = vadd.f32 0.0, %v747
      %v749 = vpop.f32.mrb[0].mxu0
      %750 = vdwg.mxu0
      %v751 = vadd.f32 %v661, %v748
      %v752 = vsel %vm224, %v751, 0.0
      %v753 = vrot.slane %v752, 4
      %v754 = vadd.f32 %v752, %v753
      %v755 = vrot.slane %v754, 2
      %v756 = vadd.f32 %v754, %v755
      %v757 = vrot.slane %v756, 1
      %v758 = vadd.f32 %v756, %v757
      %v759 = vld [vmem:[%s3] sm:$0xff]
      %v760 = vld [vmem:[%s3 + $0x8] sm:$0xff]
      %v761 = vld [vmem:[%s3 + $0x10] sm:$0xff]
      %v762 = vld [vmem:[%s3 + $0x18] sm:$0xff]
      %v763 = vld [vmem:[%s3 + $0x20] sm:$0xff]
      %v764 = vld [vmem:[%s3 + $0x28] sm:$0xff]
      %v765 = vld [vmem:[%s3 + $0x30] sm:$0xff]
      %v766 = vld [vmem:[%s3 + $0x38] sm:$0xff]
      %v767 = vld [vmem:[%s3 + $0x40] sm:$0xff]
      %v768 = vld [vmem:[%s3 + $0x48] sm:$0xff]
      %v769 = vld [vmem:[%s3 + $0x50] sm:$0xff]
      %v770 = vld [vmem:[%s3 + $0x58] sm:$0xff]
      %v772 = vsel %vm224, %v758, 0
      %774 = vmatprep.subr.mxu0 0.0
      %775 = vmatpush1.msra.mxu0 %v759
      %776 = vmatprep.subr.mxu0 0.0
      %777 = vmatpush1.msra.mxu0 %v760
      %778 = vmatprep.subr.mxu0 0.0
      %779 = vmatpush1.msra.mxu0 %v761
      %780 = vmatprep.subr.mxu0 0.0
      %781 = vmatpush1.msra.mxu0 %v762
      %782 = vmatprep.subr.mxu0 0.0
      %783 = vmatpush1.msra.mxu0 %v763
      %784 = vmatprep.subr.mxu0 0.0
      %785 = vmatpush1.msra.mxu0 %v764
      %786 = vmatprep.subr.mxu0 0.0
      %787 = vmatpush1.msra.mxu0 %v765
      %788 = vmatprep.subr.mxu0 0.0
      %789 = vmatpush1.msra.mxu0 %v766
      %790 = vmatprep.subr.mxu0 0.0
      %791 = vmatpush1.msra.mxu0 %v767
      %792 = vmatprep.subr.mxu0 0.0
      %793 = vmatpush1.msra.mxu0 %v768
      %794 = vmatprep.subr.mxu0 0.0
      %795 = vmatpush1.msra.mxu0 %v769
      %796 = vmatprep.subr.mxu0 0.0
      %797 = vmatpush1.msra.mxu0 %v770
      %798 = vmatprep.subr.mxu0 0.0
      %799 = vmatpush1.msra.mxu0 0.0
      %800 = vmatprep.subr.mxu0 0.0
      %801 = vmatpush1.msra.mxu0 0.0
      %802 = vmatprep.subr.mxu0 0.0
      %803 = vmatpush1.msra.mxu0 0.0
      %804 = vmatprep.subr.mxu0 0.0
      %805 = vmatpush1.msra.mxu0 0.0
      %806 = vmatprep.subr.mxu0 0.0
      %807 = vmatpush1.msra.mxu0 0.0
      %808 = vmatprep.subr.mxu0 0.0
      %809 = vmatpush1.msra.mxu0 0.0
      %810 = vmatprep.subr.mxu0 0.0
      %811 = vmatpush1.msra.mxu0 0.0
      %812 = vmatprep.subr.mxu0 0.0
      %813 = vmatpush1.msra.mxu0 0.0
      %814 = vmatprep.subr.mxu0 0.0
      %815 = vmatpush1.msra.mxu0 0.0
      %816 = vmatprep.subr.mxu0 0.0
      %817 = vmatpush1.msra.mxu0 0.0
      %818 = vmatprep.subr.mxu0 0.0
      %819 = vmatpush1.msra.mxu0 0.0
      %820 = vmatprep.subr.mxu0 0.0
      %821 = vmatpush1.msra.mxu0 0.0
      %822 = vmatprep.subr.mxu0 0.0
      %823 = vmatpush1.msra.mxu0 0.0
      %824 = vmatprep.subr.mxu0 0.0
      %825 = vmatpush1.msra.mxu0 0.0
      %826 = vmatprep.subr.mxu0 0.0
      %827 = vmatpush1.msra.mxu0 0.0
      %828 = vmatprep.subr.mxu0 0.0
      %829 = vmatpush1.msra.mxu0 0.0
      %830 = vmatprep.subr.mxu0 0.0
      %831 = vmatpush1.msra.mxu0 0.0
      %832 = vmatprep.subr.mxu0 0.0
      %833 = vmatpush1.msra.mxu0 0.0
      %834 = vmatprep.subr.mxu0 0.0
      %835 = vmatpush1.msra.mxu0 0.0
      %836 = vmatprep.subr.mxu0 0.0
      %837 = vmatpush1.msra.mxu0 0.0
      %838 = vmatprep.mubr.f32.mxu0 0.0
      %839 = vmatmul.mubr.f32.gmra.mrb[0].mxu0 %v772
      %v840 = vpop.f32.mrb[0].mxu0
      %v841 = vadd.f32 0.0, %v840
      %v842 = vpop.f32.mrb[0].mxu0
      %843 = vdwg.mxu0
      %v844 = vmax.f32 %v841, 0.0
      %v845 = vld [vmem:[%s4] sm:$0x7]
      %vm846 = vcmask 23552
      %v848 = vsel %vm846, %v844, 0
      %vm850 = vcmask 1042432
      %v852 = vsel %vm850, %v845, 0
      %854 = vmatprep.subr.mxu0 0.0
      %855 = vmatpush1.msra.mxu0 %v852
      %856 = vmatprep.subr.mxu0 0.0
      %857 = vmatpush1.msra.mxu0 0.0
      %858 = vmatprep.subr.mxu0 0.0
      %859 = vmatpush1.msra.mxu0 0.0
      %860 = vmatprep.subr.mxu0 0.0
      %861 = vmatpush1.msra.mxu0 0.0
      %862 = vmatprep.subr.mxu0 0.0
      %863 = vmatpush1.msra.mxu0 0.0
      %864 = vmatprep.subr.mxu0 0.0
      %865 = vmatpush1.msra.mxu0 0.0
      %866 = vmatprep.subr.mxu0 0.0
      %867 = vmatpush1.msra.mxu0 0.0
      %868 = vmatprep.subr.mxu0 0.0
      %869 = vmatpush1.msra.mxu0 0.0
      %870 = vmatprep.subr.mxu0 0.0
      %871 = vmatpush1.msra.mxu0 0.0
      %872 = vmatprep.subr.mxu0 0.0
      %873 = vmatpush1.msra.mxu0 0.0
      %874 = vmatprep.subr.mxu0 0.0
      %875 = vmatpush1.msra.mxu0 0.0
      %876 = vmatprep.subr.mxu0 0.0
      %877 = vmatpush1.msra.mxu0 0.0
      %878 = vmatprep.subr.mxu0 0.0
      %879 = vmatpush1.msra.mxu0 0.0
      %880 = vmatprep.subr.mxu0 0.0
      %881 = vmatpush1.msra.mxu0 0.0
      %882 = vmatprep.subr.mxu0 0.0
      %883 = vmatpush1.msra.mxu0 0.0
      %884 = vmatprep.subr.mxu0 0.0
      %885 = vmatpush1.msra.mxu0 0.0
      %886 = vmatprep.subr.mxu0 0.0
      %887 = vmatpush1.msra.mxu0 0.0
      %888 = vmatprep.subr.mxu0 0.0
      %889 = vmatpush1.msra.mxu0 0.0
      %890 = vmatprep.subr.mxu0 0.0
      %891 = vmatpush1.msra.mxu0 0.0
      %892 = vmatprep.subr.mxu0 0.0
      %893 = vmatpush1.msra.mxu0 0.0
      %894 = vmatprep.subr.mxu0 0.0
      %895 = vmatpush1.msra.mxu0 0.0
      %896 = vmatprep.subr.mxu0 0.0
      %897 = vmatpush1.msra.mxu0 0.0
      %898 = vmatprep.subr.mxu0 0.0
      %899 = vmatpush1.msra.mxu0 0.0
      %900 = vmatprep.subr.mxu0 0.0
      %901 = vmatpush1.msra.mxu0 0.0
      %902 = vmatprep.subr.mxu0 0.0
      %903 = vmatpush1.msra.mxu0 0.0
      %904 = vmatprep.subr.mxu0 0.0
      %905 = vmatpush1.msra.mxu0 0.0
      %906 = vmatprep.subr.mxu0 0.0
      %907 = vmatpush1.msra.mxu0 0.0
      %908 = vmatprep.subr.mxu0 0.0
      %909 = vmatpush1.msra.mxu0 0.0
      %910 = vmatprep.subr.mxu0 0.0
      %911 = vmatpush1.msra.mxu0 0.0
      %912 = vmatprep.subr.mxu0 0.0
      %913 = vmatpush1.msra.mxu0 0.0
      %914 = vmatprep.subr.mxu0 0.0
      %915 = vmatpush1.msra.mxu0 0.0
      %916 = vmatprep.subr.mxu0 0.0
      %917 = vmatpush1.msra.mxu0 0.0
      %918 = vmatprep.mubr.f32.mxu0 0.0
      %919 = vmatmul.mubr.f32.gmra.mrb[0].mxu0 %v848
      %v920 = vpop.f32.mrb[0].mxu0
      %v921 = vadd.f32 0.0, %v920
      %v922 = vpop.f32.mrb[0].mxu0
      %923 = vdwg.mxu0
      %v924 = vxor.u32 %v921, 2147483648
      %v925 = vmul.f32 %v924, 1.442695
      %v926 = vpow.pop %v925
      %v927 = vadd.f32 %v926, 1.0
      %v928 = vrcp.pop %v927
      %v929 = vmul.f32 1.0, %v928
      %v930 = vlaneseq
      %v931 = vshrl.u32 %v930, 7
      %v932 = vsub.s32 0, %v931
      %v933 = vrot.slane %v929, %v932
      %v934 = vmul.f32 %v751, %v933
      %v935 = vadd.f32 %v934, %v223
      %936 = vst.msk [vmem:[#allocation2 + $0x1] sm:$0xff] %vm224, %v935
      %v937 = vld [vmem:[#allocation2] sm:$0xff]
      %s938 = scalar_lea.vmem %s1, 288
      %v939 = vld [vmem:[%s938] sm:$0xff]
      %v940 = vld [vmem:[%s938 + $0x8] sm:$0xff]
      %v941 = vld [vmem:[%s938 + $0x10] sm:$0xff]
      %v942 = vld [vmem:[%s938 + $0x18] sm:$0xff]
      %v943 = vld [vmem:[%s938 + $0x20] sm:$0xff]
      %v944 = vld [vmem:[%s938 + $0x28] sm:$0xff]
      %v945 = vld [vmem:[%s938 + $0x30] sm:$0xff]
      %v946 = vld [vmem:[%s938 + $0x38] sm:$0xff]
      %v947 = vld [vmem:[%s938 + $0x40] sm:$0xff]
      %v948 = vld [vmem:[%s938 + $0x48] sm:$0xff]
      %v949 = vld [vmem:[%s938 + $0x50] sm:$0xff]
      %v950 = vld [vmem:[%s938 + $0x58] sm:$0xff]
      %v951 = vld [vmem:[#allocation2 + $0x1] sm:$0xff]
      %s952 = scalar_lea.vmem %s1, 384
      %v953 = vld [vmem:[%s952] sm:$0xff]
      %v954 = vld [vmem:[%s952 + $0x8] sm:$0xff]
      %v955 = vld [vmem:[%s952 + $0x10] sm:$0xff]
      %v956 = vld [vmem:[%s952 + $0x18] sm:$0xff]
      %v957 = vld [vmem:[%s952 + $0x20] sm:$0xff]
      %v958 = vld [vmem:[%s952 + $0x28] sm:$0xff]
      %v959 = vld [vmem:[%s952 + $0x30] sm:$0xff]
      %v960 = vld [vmem:[%s952 + $0x38] sm:$0xff]
      %v961 = vld [vmem:[%s952 + $0x40] sm:$0xff]
      %v962 = vld [vmem:[%s952 + $0x48] sm:$0xff]
      %v963 = vld [vmem:[%s952 + $0x50] sm:$0xff]
      %v964 = vld [vmem:[%s952 + $0x58] sm:$0xff]
      %v966 = vsel %vm224, %v951, 0
      %968 = vmatprep.subr.mxu0 0.0
      %969 = vmatpush1.msra.mxu0 %v953
      %970 = vmatprep.subr.mxu0 0.0
      %971 = vmatpush1.msra.mxu0 %v954
      %972 = vmatprep.subr.mxu0 0.0
      %973 = vmatpush1.msra.mxu0 %v955
      %974 = vmatprep.subr.mxu0 0.0
      %975 = vmatpush1.msra.mxu0 %v956
      %976 = vmatprep.subr.mxu0 0.0
      %977 = vmatpush1.msra.mxu0 %v957
      %978 = vmatprep.subr.mxu0 0.0
      %979 = vmatpush1.msra.mxu0 %v958
      %980 = vmatprep.subr.mxu0 0.0
      %981 = vmatpush1.msra.mxu0 %v959
      %982 = vmatprep.subr.mxu0 0.0
      %983 = vmatpush1.msra.mxu0 %v960
      %984 = vmatprep.subr.mxu0 0.0
      %985 = vmatpush1.msra.mxu0 %v961
      %986 = vmatprep.subr.mxu0 0.0
      %987 = vmatpush1.msra.mxu0 %v962
      %988 = vmatprep.subr.mxu0 0.0
      %989 = vmatpush1.msra.mxu0 %v963
      %990 = vmatprep.subr.mxu0 0.0
      %991 = vmatpush1.msra.mxu0 %v964
      %992 = vmatprep.subr.mxu0 0.0
      %993 = vmatpush1.msra.mxu0 0.0
      %994 = vmatprep.subr.mxu0 0.0
      %995 = vmatpush1.msra.mxu0 0.0
      %996 = vmatprep.subr.mxu0 0.0
      %997 = vmatpush1.msra.mxu0 0.0
      %998 = vmatprep.subr.mxu0 0.0
      %999 = vmatpush1.msra.mxu0 0.0
      %1000 = vmatprep.subr.mxu0 0.0
      %1001 = vmatpush1.msra.mxu0 0.0
      %1002 = vmatprep.subr.mxu0 0.0
      %1003 = vmatpush1.msra.mxu0 0.0
      %1004 = vmatprep.subr.mxu0 0.0
      %1005 = vmatpush1.msra.mxu0 0.0
      %1006 = vmatprep.subr.mxu0 0.0
      %1007 = vmatpush1.msra.mxu0 0.0
      %1008 = vmatprep.subr.mxu0 0.0
      %1009 = vmatpush1.msra.mxu0 0.0
      %1010 = vmatprep.subr.mxu0 0.0
      %1011 = vmatpush1.msra.mxu0 0.0
      %1012 = vmatprep.subr.mxu0 0.0
      %1013 = vmatpush1.msra.mxu0 0.0
      %1014 = vmatprep.subr.mxu0 0.0
      %1015 = vmatpush1.msra.mxu0 0.0
      %1016 = vmatprep.subr.mxu0 0.0
      %1017 = vmatpush1.msra.mxu0 0.0
      %1018 = vmatprep.subr.mxu0 0.0
      %1019 = vmatpush1.msra.mxu0 0.0
      %1020 = vmatprep.subr.mxu0 0.0
      %1021 = vmatpush1.msra.mxu0 0.0
      %1022 = vmatprep.subr.mxu0 0.0
      %1023 = vmatpush1.msra.mxu0 0.0
      %1024 = vmatprep.subr.mxu0 0.0
      %1025 = vmatpush1.msra.mxu0 0.0
      %1026 = vmatprep.subr.mxu0 0.0
      %1027 = vmatpush1.msra.mxu0 0.0
      %1028 = vmatprep.subr.mxu0 0.0
      %1029 = vmatpush1.msra.mxu0 0.0
      %1030 = vmatprep.subr.mxu0 0.0
      %1031 = vmatpush1.msra.mxu0 0.0
      %1032 = vmatprep.mubr.f32.mxu0 0.0
      %1033 = vmatmul.mubr.f32.gmra.mrb[0].mxu0 %v966
      %v1034 = vpop.f32.mrb[0].mxu0
      %v1035 = vadd.f32 0.0, %v1034
      %v1036 = vpop.f32.mrb[0].mxu0
      %1037 = vdwg.mxu0
      %v1039 = vsel %vm224, %v937, 0
      %1041 = vmatprep.subr.mxu0 0.0
      %1042 = vmatpush1.msra.mxu0 %v939
      %1043 = vmatprep.subr.mxu0 0.0
      %1044 = vmatpush1.msra.mxu0 %v940
      %1045 = vmatprep.subr.mxu0 0.0
      %1046 = vmatpush1.msra.mxu0 %v941
      %1047 = vmatprep.subr.mxu0 0.0
      %1048 = vmatpush1.msra.mxu0 %v942
      %1049 = vmatprep.subr.mxu0 0.0
      %1050 = vmatpush1.msra.mxu0 %v943
      %1051 = vmatprep.subr.mxu0 0.0
      %1052 = vmatpush1.msra.mxu0 %v944
      %1053 = vmatprep.subr.mxu0 0.0
      %1054 = vmatpush1.msra.mxu0 %v945
      %1055 = vmatprep.subr.mxu0 0.0
      %1056 = vmatpush1.msra.mxu0 %v946
      %1057 = vmatprep.subr.mxu0 0.0
      %1058 = vmatpush1.msra.mxu0 %v947
      %1059 = vmatprep.subr.mxu0 0.0
      %1060 = vmatpush1.msra.mxu0 %v948
      %1061 = vmatprep.subr.mxu0 0.0
      %1062 = vmatpush1.msra.mxu0 %v949
      %1063 = vmatprep.subr.mxu0 0.0
      %1064 = vmatpush1.msra.mxu0 %v950
      %1065 = vmatprep.subr.mxu0 0.0
      %1066 = vmatpush1.msra.mxu0 0.0
      %1067 = vmatprep.subr.mxu0 0.0
      %1068 = vmatpush1.msra.mxu0 0.0
      %1069 = vmatprep.subr.mxu0 0.0
      %1070 = vmatpush1.msra.mxu0 0.0
      %1071 = vmatprep.subr.mxu0 0.0
      %1072 = vmatpush1.msra.mxu0 0.0
      %1073 = vmatprep.subr.mxu0 0.0
      %1074 = vmatpush1.msra.mxu0 0.0
      %1075 = vmatprep.subr.mxu0 0.0
      %1076 = vmatpush1.msra.mxu0 0.0
      %1077 = vmatprep.subr.mxu0 0.0
      %1078 = vmatpush1.msra.mxu0 0.0
      %1079 = vmatprep.subr.mxu0 0.0
      %1080 = vmatpush1.msra.mxu0 0.0
      %1081 = vmatprep.subr.mxu0 0.0
      %1082 = vmatpush1.msra.mxu0 0.0
      %1083 = vmatprep.subr.mxu0 0.0
      %1084 = vmatpush1.msra.mxu0 0.0
      %1085 = vmatprep.subr.mxu0 0.0
      %1086 = vmatpush1.msra.mxu0 0.0
      %1087 = vmatprep.subr.mxu0 0.0
      %1088 = vmatpush1.msra.mxu0 0.0
      %1089 = vmatprep.subr.mxu0 0.0
      %1090 = vmatpush1.msra.mxu0 0.0
      %1091 = vmatprep.subr.mxu0 0.0
      %1092 = vmatpush1.msra.mxu0 0.0
      %1093 = vmatprep.subr.mxu0 0.0
      %1094 = vmatpush1.msra.mxu0 0.0
      %1095 = vmatprep.subr.mxu0 0.0
      %1096 = vmatpush1.msra.mxu0 0.0
      %1097 = vmatprep.subr.mxu0 0.0
      %1098 = vmatpush1.msra.mxu0 0.0
      %1099 = vmatprep.subr.mxu0 0.0
      %1100 = vmatpush1.msra.mxu0 0.0
      %1101 = vmatprep.subr.mxu0 0.0
      %1102 = vmatpush1.msra.mxu0 0.0
      %1103 = vmatprep.subr.mxu0 0.0
      %1104 = vmatpush1.msra.mxu0 0.0
      %1105 = vmatprep.mubr.f32.mxu0 0.0
      %1106 = vmatmul.mubr.f32.gmra.mrb[0].mxu0 %v1039
      %v1107 = vpop.f32.mrb[0].mxu0
      %v1108 = vadd.f32 %v1035, %v1107
      %v1109 = vpop.f32.mrb[0].mxu0
      %1110 = vdwg.mxu0
      %v1111 = vld [vmem:[#allocation2 + $0x2] sm:$0xff]
      %s1112 = scalar_lea.vmem %s1, 480
      %v1113 = vld [vmem:[%s1112] sm:$0xff]
      %v1114 = vld [vmem:[%s1112 + $0x8] sm:$0xff]
      %v1115 = vld [vmem:[%s1112 + $0x10] sm:$0xff]
      %v1116 = vld [vmem:[%s1112 + $0x18] sm:$0xff]
      %v1117 = vld [vmem:[%s1112 + $0x20] sm:$0xff]
      %v1118 = vld [vmem:[%s1112 + $0x28] sm:$0xff]
      %v1119 = vld [vmem:[%s1112 + $0x30] sm:$0xff]
      %v1120 = vld [vmem:[%s1112 + $0x38] sm:$0xff]
      %v1121 = vld [vmem:[%s1112 + $0x40] sm:$0xff]
      %v1122 = vld [vmem:[%s1112 + $0x48] sm:$0xff]
      %v1123 = vld [vmem:[%s1112 + $0x50] sm:$0xff]
      %v1124 = vld [vmem:[%s1112 + $0x58] sm:$0xff]
      %v1126 = vsel %vm224, %v1111, 0
      %1128 = vmatprep.subr.mxu0 0.0
      %1129 = vmatpush1.msra.mxu0 %v1113
      %1130 = vmatprep.subr.mxu0 0.0
      %1131 = vmatpush1.msra.mxu0 %v1114
      %1132 = vmatprep.subr.mxu0 0.0
      %1133 = vmatpush1.msra.mxu0 %v1115
      %1134 = vmatprep.subr.mxu0 0.0
      %1135 = vmatpush1.msra.mxu0 %v1116
      %1136 = vmatprep.subr.mxu0 0.0
      %1137 = vmatpush1.msra.mxu0 %v1117
      %1138 = vmatprep.subr.mxu0 0.0
      %1139 = vmatpush1.msra.mxu0 %v1118
      %1140 = vmatprep.subr.mxu0 0.0
      %1141 = vmatpush1.msra.mxu0 %v1119
      %1142 = vmatprep.subr.mxu0 0.0
      %1143 = vmatpush1.msra.mxu0 %v1120
      %1144 = vmatprep.subr.mxu0 0.0
      %1145 = vmatpush1.msra.mxu0 %v1121
      %1146 = vmatprep.subr.mxu0 0.0
      %1147 = vmatpush1.msra.mxu0 %v1122
      %1148 = vmatprep.subr.mxu0 0.0
      %1149 = vmatpush1.msra.mxu0 %v1123
      %1150 = vmatprep.subr.mxu0 0.0
      %1151 = vmatpush1.msra.mxu0 %v1124
      %1152 = vmatprep.subr.mxu0 0.0
      %1153 = vmatpush1.msra.mxu0 0.0
      %1154 = vmatprep.subr.mxu0 0.0
      %1155 = vmatpush1.msra.mxu0 0.0
      %1156 = vmatprep.subr.mxu0 0.0
      %1157 = vmatpush1.msra.mxu0 0.0
      %1158 = vmatprep.subr.mxu0 0.0
      %1159 = vmatpush1.msra.mxu0 0.0
      %1160 = vmatprep.subr.mxu0 0.0
      %1161 = vmatpush1.msra.mxu0 0.0
      %1162 = vmatprep.subr.mxu0 0.0
      %1163 = vmatpush1.msra.mxu0 0.0
      %1164 = vmatprep.subr.mxu0 0.0
      %1165 = vmatpush1.msra.mxu0 0.0
      %1166 = vmatprep.subr.mxu0 0.0
      %1167 = vmatpush1.msra.mxu0 0.0
      %1168 = vmatprep.subr.mxu0 0.0
      %1169 = vmatpush1.msra.mxu0 0.0
      %1170 = vmatprep.subr.mxu0 0.0
      %1171 = vmatpush1.msra.mxu0 0.0
      %1172 = vmatprep.subr.mxu0 0.0
      %1173 = vmatpush1.msra.mxu0 0.0
      %1174 = vmatprep.subr.mxu0 0.0
      %1175 = vmatpush1.msra.mxu0 0.0
      %1176 = vmatprep.subr.mxu0 0.0
      %1177 = vmatpush1.msra.mxu0 0.0
      %1178 = vmatprep.subr.mxu0 0.0
      %1179 = vmatpush1.msra.mxu0 0.0
      %1180 = vmatprep.subr.mxu0 0.0
      %1181 = vmatpush1.msra.mxu0 0.0
      %1182 = vmatprep.subr.mxu0 0.0
      %1183 = vmatpush1.msra.mxu0 0.0
      %1184 = vmatprep.subr.mxu0 0.0
      %1185 = vmatpush1.msra.mxu0 0.0
      %1186 = vmatprep.subr.mxu0 0.0
      %1187 = vmatpush1.msra.mxu0 0.0
      %1188 = vmatprep.subr.mxu0 0.0
      %1189 = vmatpush1.msra.mxu0 0.0
      %1190 = vmatprep.subr.mxu0 0.0
      %1191 = vmatpush1.msra.mxu0 0.0
      %1192 = vmatprep.mubr.f32.mxu0 0.0
      %1193 = vmatmul.mubr.f32.gmra.mrb[0].mxu0 %v1126
      %v1194 = vpop.f32.mrb[0].mxu0
      %v1195 = vadd.f32 0.0, %v1194
      %v1196 = vpop.f32.mrb[0].mxu0
      %1197 = vdwg.mxu0
      %v1198 = vadd.f32 %v1108, %v1195
      %vm1199 = vcmp.gt.f32.partialorder %v1198, 0.0
      %v1200 = vmul.f32 %v1198, 0.25
      %v1201 = vsel %vm1199, %v1198, %v1200
      %1202 = vst.msk [vmem:[#allocation2 + $0x1] sm:$0xff] %vm224, %v1201
      %v1203 = vld [vmem:[#allocation2] sm:$0xff]
      %s1204 = scalar_lea.vmem %s2, 288
      %v1205 = vld [vmem:[%s1204] sm:$0xff]
      %v1206 = vld [vmem:[%s1204 + $0x8] sm:$0xff]
      %v1207 = vld [vmem:[%s1204 + $0x10] sm:$0xff]
      %v1208 = vld [vmem:[%s1204 + $0x18] sm:$0xff]
      %v1209 = vld [vmem:[%s1204 + $0x20] sm:$0xff]
      %v1210 = vld [vmem:[%s1204 + $0x28] sm:$0xff]
      %v1211 = vld [vmem:[%s1204 + $0x30] sm:$0xff]
      %v1212 = vld [vmem:[%s1204 + $0x38] sm:$0xff]
      %v1213 = vld [vmem:[%s1204 + $0x40] sm:$0xff]
      %v1214 = vld [vmem:[%s1204 + $0x48] sm:$0xff]
      %v1215 = vld [vmem:[%s1204 + $0x50] sm:$0xff]
      %v1216 = vld [vmem:[%s1204 + $0x58] sm:$0xff]
      %v1217 = vld [vmem:[#allocation2 + $0x1] sm:$0xff]
      %s1218 = scalar_lea.vmem %s2, 384
      %v1219 = vld [vmem:[%s1218] sm:$0xff]
      %v1220 = vld [vmem:[%s1218 + $0x8] sm:$0xff]
      %v1221 = vld [vmem:[%s1218 + $0x10] sm:$0xff]
      %v1222 = vld [vmem:[%s1218 + $0x18] sm:$0xff]
      %v1223 = vld [vmem:[%s1218 + $0x20] sm:$0xff]
      %v1224 = vld [vmem:[%s1218 + $0x28] sm:$0xff]
      %v1225 = vld [vmem:[%s1218 + $0x30] sm:$0xff]
      %v1226 = vld [vmem:[%s1218 + $0x38] sm:$0xff]
      %v1227 = vld [vmem:[%s1218 + $0x40] sm:$0xff]
      %v1228 = vld [vmem:[%s1218 + $0x48] sm:$0xff]
      %v1229 = vld [vmem:[%s1218 + $0x50] sm:$0xff]
      %v1230 = vld [vmem:[%s1218 + $0x58] sm:$0xff]
      %v1232 = vsel %vm224, %v1217, 0
      %1234 = vmatprep.subr.mxu0 0.0
      %1235 = vmatpush1.msra.mxu0 %v1219
      %1236 = vmatprep.subr.mxu0 0.0
      %1237 = vmatpush1.msra.mxu0 %v1220
      %1238 = vmatprep.subr.mxu0 0.0
      %1239 = vmatpush1.msra.mxu0 %v1221
      %1240 = vmatprep.subr.mxu0 0.0
      %1241 = vmatpush1.msra.mxu0 %v1222
      %1242 = vmatprep.subr.mxu0 0.0
      %1243 = vmatpush1.msra.mxu0 %v1223
      %1244 = vmatprep.subr.mxu0 0.0
      %1245 = vmatpush1.msra.mxu0 %v1224
      %1246 = vmatprep.subr.mxu0 0.0
      %1247 = vmatpush1.msra.mxu0 %v1225
      %1248 = vmatprep.subr.mxu0 0.0
      %1249 = vmatpush1.msra.mxu0 %v1226
      %1250 = vmatprep.subr.mxu0 0.0
      %1251 = vmatpush1.msra.mxu0 %v1227
      %1252 = vmatprep.subr.mxu0 0.0
      %1253 = vmatpush1.msra.mxu0 %v1228
      %1254 = vmatprep.subr.mxu0 0.0
      %1255 = vmatpush1.msra.mxu0 %v1229
      %1256 = vmatprep.subr.mxu0 0.0
      %1257 = vmatpush1.msra.mxu0 %v1230
      %1258 = vmatprep.subr.mxu0 0.0
      %1259 = vmatpush1.msra.mxu0 0.0
      %1260 = vmatprep.subr.mxu0 0.0
      %1261 = vmatpush1.msra.mxu0 0.0
      %1262 = vmatprep.subr.mxu0 0.0
      %1263 = vmatpush1.msra.mxu0 0.0
      %1264 = vmatprep.subr.mxu0 0.0
      %1265 = vmatpush1.msra.mxu0 0.0
      %1266 = vmatprep.subr.mxu0 0.0
      %1267 = vmatpush1.msra.mxu0 0.0
      %1268 = vmatprep.subr.mxu0 0.0
      %1269 = vmatpush1.msra.mxu0 0.0
      %1270 = vmatprep.subr.mxu0 0.0
      %1271 = vmatpush1.msra.mxu0 0.0
      %1272 = vmatprep.subr.mxu0 0.0
      %1273 = vmatpush1.msra.mxu0 0.0
      %1274 = vmatprep.subr.mxu0 0.0
      %1275 = vmatpush1.msra.mxu0 0.0
      %1276 = vmatprep.subr.mxu0 0.0
      %1277 = vmatpush1.msra.mxu0 0.0
      %1278 = vmatprep.subr.mxu0 0.0
      %1279 = vmatpush1.msra.mxu0 0.0
      %1280 = vmatprep.subr.mxu0 0.0
      %1281 = vmatpush1.msra.mxu0 0.0
      %1282 = vmatprep.subr.mxu0 0.0
      %1283 = vmatpush1.msra.mxu0 0.0
      %1284 = vmatprep.subr.mxu0 0.0
      %1285 = vmatpush1.msra.mxu0 0.0
      %1286 = vmatprep.subr.mxu0 0.0
      %1287 = vmatpush1.msra.mxu0 0.0
      %1288 = vmatprep.subr.mxu0 0.0
      %1289 = vmatpush1.msra.mxu0 0.0
      %1290 = vmatprep.subr.mxu0 0.0
      %1291 = vmatpush1.msra.mxu0 0.0
      %1292 = vmatprep.subr.mxu0 0.0
      %1293 = vmatpush1.msra.mxu0 0.0
      %1294 = vmatprep.subr.mxu0 0.0
      %1295 = vmatpush1.msra.mxu0 0.0
      %1296 = vmatprep.subr.mxu0 0.0
      %1297 = vmatpush1.msra.mxu0 0.0
      %1298 = vmatprep.mubr.f32.mxu0 0.0
      %1299 = vmatmul.mubr.f32.gmra.mrb[0].mxu0 %v1232
      %v1300 = vpop.f32.mrb[0].mxu0
      %v1301 = vadd.f32 0.0, %v1300
      %v1302 = vpop.f32.mrb[0].mxu0
      %1303 = vdwg.mxu0
      %v1305 = vsel %vm224, %v1203, 0
      %1307 = vmatprep.subr.mxu0 0.0
      %1308 = vmatpush1.msra.mxu0 %v1205
      %1309 = vmatprep.subr.mxu0 0.0
      %1310 = vmatpush1.msra.mxu0 %v1206
      %1311 = vmatprep.subr.mxu0 0.0
      %1312 = vmatpush1.msra.mxu0 %v1207
      %1313 = vmatprep.subr.mxu0 0.0
      %1314 = vmatpush1.msra.mxu0 %v1208
      %1315 = vmatprep.subr.mxu0 0.0
      %1316 = vmatpush1.msra.mxu0 %v1209
      %1317 = vmatprep.subr.mxu0 0.0
      %1318 = vmatpush1.msra.mxu0 %v1210
      %1319 = vmatprep.subr.mxu0 0.0
      %1320 = vmatpush1.msra.mxu0 %v1211
      %1321 = vmatprep.subr.mxu0 0.0
      %1322 = vmatpush1.msra.mxu0 %v1212
      %1323 = vmatprep.subr.mxu0 0.0
      %1324 = vmatpush1.msra.mxu0 %v1213
      %1325 = vmatprep.subr.mxu0 0.0
      %1326 = vmatpush1.msra.mxu0 %v1214
      %1327 = vmatprep.subr.mxu0 0.0
      %1328 = vmatpush1.msra.mxu0 %v1215
      %1329 = vmatprep.subr.mxu0 0.0
      %1330 = vmatpush1.msra.mxu0 %v1216
      %1331 = vmatprep.subr.mxu0 0.0
      %1332 = vmatpush1.msra.mxu0 0.0
      %1333 = vmatprep.subr.mxu0 0.0
      %1334 = vmatpush1.msra.mxu0 0.0
      %1335 = vmatprep.subr.mxu0 0.0
      %1336 = vmatpush1.msra.mxu0 0.0
      %1337 = vmatprep.subr.mxu0 0.0
      %1338 = vmatpush1.msra.mxu0 0.0
      %1339 = vmatprep.subr.mxu0 0.0
      %1340 = vmatpush1.msra.mxu0 0.0
      %1341 = vmatprep.subr.mxu0 0.0
      %1342 = vmatpush1.msra.mxu0 0.0
      %1343 = vmatprep.subr.mxu0 0.0
      %1344 = vmatpush1.msra.mxu0 0.0
      %1345 = vmatprep.subr.mxu0 0.0
      %1346 = vmatpush1.msra.mxu0 0.0
      %1347 = vmatprep.subr.mxu0 0.0
      %1348 = vmatpush1.msra.mxu0 0.0
      %1349 = vmatprep.subr.mxu0 0.0
      %1350 = vmatpush1.msra.mxu0 0.0
      %1351 = vmatprep.subr.mxu0 0.0
      %1352 = vmatpush1.msra.mxu0 0.0
      %1353 = vmatprep.subr.mxu0 0.0
      %1354 = vmatpush1.msra.mxu0 0.0
      %1355 = vmatprep.subr.mxu0 0.0
      %1356 = vmatpush1.msra.mxu0 0.0
      %1357 = vmatprep.subr.mxu0 0.0
      %1358 = vmatpush1.msra.mxu0 0.0
      %1359 = vmatprep.subr.mxu0 0.0
      %1360 = vmatpush1.msra.mxu0 0.0
      %1361 = vmatprep.subr.mxu0 0.0
      %1362 = vmatpush1.msra.mxu0 0.0
      %1363 = vmatprep.subr.mxu0 0.0
      %1364 = vmatpush1.msra.mxu0 0.0
      %1365 = vmatprep.subr.mxu0 0.0
      %1366 = vmatpush1.msra.mxu0 0.0
      %1367 = vmatprep.subr.mxu0 0.0
      %1368 = vmatpush1.msra.mxu0 0.0
      %1369 = vmatprep.subr.mxu0 0.0
      %1370 = vmatpush1.msra.mxu0 0.0
      %1371 = vmatprep.mubr.f32.mxu0 0.0
      %1372 = vmatmul.mubr.f32.gmra.mrb[0].mxu0 %v1305
      %v1373 = vpop.f32.mrb[0].mxu0
      %v1374 = vadd.f32 %v1301, %v1373
      %v1375 = vpop.f32.mrb[0].mxu0
      %1376 = vdwg.mxu0
      %v1377 = vld [vmem:[#allocation2 + $0x2] sm:$0xff]
      %s1378 = scalar_lea.vmem %s2, 480
      %v1379 = vld [vmem:[%s1378] sm:$0xff]
      %v1380 = vld [vmem:[%s1378 + $0x8] sm:$0xff]
      %v1381 = vld [vmem:[%s1378 + $0x10] sm:$0xff]
      %v1382 = vld [vmem:[%s1378 + $0x18] sm:$0xff]
      %v1383 = vld [vmem:[%s1378 + $0x20] sm:$0xff]
      %v1384 = vld [vmem:[%s1378 + $0x28] sm:$0xff]
      %v1385 = vld [vmem:[%s1378 + $0x30] sm:$0xff]
      %v1386 = vld [vmem:[%s1378 + $0x38] sm:$0xff]
      %v1387 = vld [vmem:[%s1378 + $0x40] sm:$0xff]
      %v1388 = vld [vmem:[%s1378 + $0x48] sm:$0xff]
      %v1389 = vld [vmem:[%s1378 + $0x50] sm:$0xff]
      %v1390 = vld [vmem:[%s1378 + $0x58] sm:$0xff]
      %v1392 = vsel %vm224, %v1377, 0
      %1394 = vmatprep.subr.mxu0 0.0
      %1395 = vmatpush1.msra.mxu0 %v1379
      %1396 = vmatprep.subr.mxu0 0.0
      %1397 = vmatpush1.msra.mxu0 %v1380
      %1398 = vmatprep.subr.mxu0 0.0
      %1399 = vmatpush1.msra.mxu0 %v1381
      %1400 = vmatprep.subr.mxu0 0.0
      %1401 = vmatpush1.msra.mxu0 %v1382
      %1402 = vmatprep.subr.mxu0 0.0
      %1403 = vmatpush1.msra.mxu0 %v1383
      %1404 = vmatprep.subr.mxu0 0.0
      %1405 = vmatpush1.msra.mxu0 %v1384
      %1406 = vmatprep.subr.mxu0 0.0
      %1407 = vmatpush1.msra.mxu0 %v1385
      %1408 = vmatprep.subr.mxu0 0.0
      %1409 = vmatpush1.msra.mxu0 %v1386
      %1410 = vmatprep.subr.mxu0 0.0
      %1411 = vmatpush1.msra.mxu0 %v1387
      %1412 = vmatprep.subr.mxu0 0.0
      %1413 = vmatpush1.msra.mxu0 %v1388
      %1414 = vmatprep.subr.mxu0 0.0
      %1415 = vmatpush1.msra.mxu0 %v1389
      %1416 = vmatprep.subr.mxu0 0.0
      %1417 = vmatpush1.msra.mxu0 %v1390
      %1418 = vmatprep.subr.mxu0 0.0
      %1419 = vmatpush1.msra.mxu0 0.0
      %1420 = vmatprep.subr.mxu0 0.0
      %1421 = vmatpush1.msra.mxu0 0.0
      %1422 = vmatprep.subr.mxu0 0.0
      %1423 = vmatpush1.msra.mxu0 0.0
      %1424 = vmatprep.subr.mxu0 0.0
      %1425 = vmatpush1.msra.mxu0 0.0
      %1426 = vmatprep.subr.mxu0 0.0
      %1427 = vmatpush1.msra.mxu0 0.0
      %1428 = vmatprep.subr.mxu0 0.0
      %1429 = vmatpush1.msra.mxu0 0.0
      %1430 = vmatprep.subr.mxu0 0.0
      %1431 = vmatpush1.msra.mxu0 0.0
      %1432 = vmatprep.subr.mxu0 0.0
      %1433 = vmatpush1.msra.mxu0 0.0
      %1434 = vmatprep.subr.mxu0 0.0
      %1435 = vmatpush1.msra.mxu0 0.0
      %1436 = vmatprep.subr.mxu0 0.0
      %1437 = vmatpush1.msra.mxu0 0.0
      %1438 = vmatprep.subr.mxu0 0.0
      %1439 = vmatpush1.msra.mxu0 0.0
      %1440 = vmatprep.subr.mxu0 0.0
      %1441 = vmatpush1.msra.mxu0 0.0
      %1442 = vmatprep.subr.mxu0 0.0
      %1443 = vmatpush1.msra.mxu0 0.0
      %1444 = vmatprep.subr.mxu0 0.0
      %1445 = vmatpush1.msra.mxu0 0.0
      %1446 = vmatprep.subr.mxu0 0.0
      %1447 = vmatpush1.msra.mxu0 0.0
      %1448 = vmatprep.subr.mxu0 0.0
      %1449 = vmatpush1.msra.mxu0 0.0
      %1450 = vmatprep.subr.mxu0 0.0
      %1451 = vmatpush1.msra.mxu0 0.0
      %1452 = vmatprep.subr.mxu0 0.0
      %1453 = vmatpush1.msra.mxu0 0.0
      %1454 = vmatprep.subr.mxu0 0.0
      %1455 = vmatpush1.msra.mxu0 0.0
      %1456 = vmatprep.subr.mxu0 0.0
      %1457 = vmatpush1.msra.mxu0 0.0
      %1458 = vmatprep.mubr.f32.mxu0 0.0
      %1459 = vmatmul.mubr.f32.gmra.mrb[0].mxu0 %v1392
      %v1460 = vpop.f32.mrb[0].mxu0
      %v1461 = vadd.f32 0.0, %v1460
      %v1462 = vpop.f32.mrb[0].mxu0
      %1463 = vdwg.mxu0
      %v1464 = vadd.f32 %v1374, %v1461
      %v1465 = vsel %vm224, %v1464, 0.0
      %v1466 = vrot.slane %v1465, 4
      %v1467 = vadd.f32 %v1465, %v1466
      %v1468 = vrot.slane %v1467, 2
      %v1469 = vadd.f32 %v1467, %v1468
      %v1470 = vrot.slane %v1469, 1
      %v1471 = vadd.f32 %v1469, %v1470
      %s1472 = scalar_lea.vmem %s3, 96
      %v1473 = vld [vmem:[%s1472] sm:$0xff]
      %v1474 = vld [vmem:[%s1472 + $0x8] sm:$0xff]
      %v1475 = vld [vmem:[%s1472 + $0x10] sm:$0xff]
      %v1476 = vld [vmem:[%s1472 + $0x18] sm:$0xff]
      %v1477 = vld [vmem:[%s1472 + $0x20] sm:$0xff]
      %v1478 = vld [vmem:[%s1472 + $0x28] sm:$0xff]
      %v1479 = vld [vmem:[%s1472 + $0x30] sm:$0xff]
      %v1480 = vld [vmem:[%s1472 + $0x38] sm:$0xff]
      %v1481 = vld [vmem:[%s1472 + $0x40] sm:$0xff]
      %v1482 = vld [vmem:[%s1472 + $0x48] sm:$0xff]
      %v1483 = vld [vmem:[%s1472 + $0x50] sm:$0xff]
      %v1484 = vld [vmem:[%s1472 + $0x58] sm:$0xff]
      %v1486 = vsel %vm224, %v1471, 0
      %1488 = vmatprep.subr.mxu0 0.0
      %1489 = vmatpush1.msra.mxu0 %v1473
      %1490 = vmatprep.subr.mxu0 0.0
      %1491 = vmatpush1.msra.mxu0 %v1474
      %1492 = vmatprep.subr.mxu0 0.0
      %1493 = vmatpush1.msra.mxu0 %v1475
      %1494 = vmatprep.subr.mxu0 0.0
      %1495 = vmatpush1.msra.mxu0 %v1476
      %1496 = vmatprep.subr.mxu0 0.0
      %1497 = vmatpush1.msra.mxu0 %v1477
      %1498 = vmatprep.subr.mxu0 0.0
      %1499 = vmatpush1.msra.mxu0 %v1478
      %1500 = vmatprep.subr.mxu0 0.0
      %1501 = vmatpush1.msra.mxu0 %v1479
      %1502 = vmatprep.subr.mxu0 0.0
      %1503 = vmatpush1.msra.mxu0 %v1480
      %1504 = vmatprep.subr.mxu0 0.0
      %1505 = vmatpush1.msra.mxu0 %v1481
      %1506 = vmatprep.subr.mxu0 0.0
      %1507 = vmatpush1.msra.mxu0 %v1482
      %1508 = vmatprep.subr.mxu0 0.0
      %1509 = vmatpush1.msra.mxu0 %v1483
      %1510 = vmatprep.subr.mxu0 0.0
      %1511 = vmatpush1.msra.mxu0 %v1484
      %1512 = vmatprep.subr.mxu0 0.0
      %1513 = vmatpush1.msra.mxu0 0.0
      %1514 = vmatprep.subr.mxu0 0.0
      %1515 = vmatpush1.msra.mxu0 0.0
      %1516 = vmatprep.subr.mxu0 0.0
      %1517 = vmatpush1.msra.mxu0 0.0
      %1518 = vmatprep.subr.mxu0 0.0
      %1519 = vmatpush1.msra.mxu0 0.0
      %1520 = vmatprep.subr.mxu0 0.0
      %1521 = vmatpush1.msra.mxu0 0.0
      %1522 = vmatprep.subr.mxu0 0.0
      %1523 = vmatpush1.msra.mxu0 0.0
      %1524 = vmatprep.subr.mxu0 0.0
      %1525 = vmatpush1.msra.mxu0 0.0
      %1526 = vmatprep.subr.mxu0 0.0
      %1527 = vmatpush1.msra.mxu0 0.0
      %1528 = vmatprep.subr.mxu0 0.0
      %1529 = vmatpush1.msra.mxu0 0.0
      %1530 = vmatprep.subr.mxu0 0.0
      %1531 = vmatpush1.msra.mxu0 0.0
      %1532 = vmatprep.subr.mxu0 0.0
      %1533 = vmatpush1.msra.mxu0 0.0
      %1534 = vmatprep.subr.mxu0 0.0
      %1535 = vmatpush1.msra.mxu0 0.0
      %1536 = vmatprep.subr.mxu0 0.0
      %1537 = vmatpush1.msra.mxu0 0.0
      %1538 = vmatprep.subr.mxu0 0.0
      %1539 = vmatpush1.msra.mxu0 0.0
      %1540 = vmatprep.subr.mxu0 0.0
      %1541 = vmatpush1.msra.mxu0 0.0
      %1542 = vmatprep.subr.mxu0 0.0
      %1543 = vmatpush1.msra.mxu0 0.0
      %1544 = vmatprep.subr.mxu0 0.0
      %1545 = vmatpush1.msra.mxu0 0.0
      %1546 = vmatprep.subr.mxu0 0.0
      %1547 = vmatpush1.msra.mxu0 0.0
      %1548 = vmatprep.subr.mxu0 0.0
      %1549 = vmatpush1.msra.mxu0 0.0
      %1550 = vmatprep.subr.mxu0 0.0
      %1551 = vmatpush1.msra.mxu0 0.0
      %1552 = vmatprep.mubr.f32.mxu0 0.0
      %1553 = vmatmul.mubr.f32.gmra.mrb[0].mxu0 %v1486
      %v1554 = vpop.f32.mrb[0].mxu0
      %v1555 = vadd.f32 0.0, %v1554
      %v1556 = vpop.f32.mrb[0].mxu0
      %1557 = vdwg.mxu0
      %v1558 = vmax.f32 %v1555, 0.0
      %s1559 = scalar_lea.vmem %s4, 4
      %v1560 = vld [vmem:[%s1559] sm:$0x7]
      %v1562 = vsel %vm846, %v1558, 0
      %v1565 = vsel %vm850, %v1560, 0
      %1567 = vmatprep.subr.mxu0 0.0
      %1568 = vmatpush1.msra.mxu0 %v1565
      %1569 = vmatprep.subr.mxu0 0.0
      %1570 = vmatpush1.msra.mxu0 0.0
      %1571 = vmatprep.subr.mxu0 0.0
      %1572 = vmatpush1.msra.mxu0 0.0
      %1573 = vmatprep.subr.mxu0 0.0
      %1574 = vmatpush1.msra.mxu0 0.0
      %1575 = vmatprep.subr.mxu0 0.0
      %1576 = vmatpush1.msra.mxu0 0.0
      %1577 = vmatprep.subr.mxu0 0.0
      %1578 = vmatpush1.msra.mxu0 0.0
      %1579 = vmatprep.subr.mxu0 0.0
      %1580 = vmatpush1.msra.mxu0 0.0
      %1581 = vmatprep.subr.mxu0 0.0
      %1582 = vmatpush1.msra.mxu0 0.0
      %1583 = vmatprep.subr.mxu0 0.0
      %1584 = vmatpush1.msra.mxu0 0.0
      %1585 = vmatprep.subr.mxu0 0.0
      %1586 = vmatpush1.msra.mxu0 0.0
      %1587 = vmatprep.subr.mxu0 0.0
      %1588 = vmatpush1.msra.mxu0 0.0
      %1589 = vmatprep.subr.mxu0 0.0
      %1590 = vmatpush1.msra.mxu0 0.0
      %1591 = vmatprep.subr.mxu0 0.0
      %1592 = vmatpush1.msra.mxu0 0.0
      %1593 = vmatprep.subr.mxu0 0.0
      %1594 = vmatpush1.msra.mxu0 0.0
      %1595 = vmatprep.subr.mxu0 0.0
      %1596 = vmatpush1.msra.mxu0 0.0
      %1597 = vmatprep.subr.mxu0 0.0
      %1598 = vmatpush1.msra.mxu0 0.0
      %1599 = vmatprep.subr.mxu0 0.0
      %1600 = vmatpush1.msra.mxu0 0.0
      %1601 = vmatprep.subr.mxu0 0.0
      %1602 = vmatpush1.msra.mxu0 0.0
      %1603 = vmatprep.subr.mxu0 0.0
      %1604 = vmatpush1.msra.mxu0 0.0
      %1605 = vmatprep.subr.mxu0 0.0
      %1606 = vmatpush1.msra.mxu0 0.0
      %1607 = vmatprep.subr.mxu0 0.0
      %1608 = vmatpush1.msra.mxu0 0.0
      %1609 = vmatprep.subr.mxu0 0.0
      %1610 = vmatpush1.msra.mxu0 0.0
      %1611 = vmatprep.subr.mxu0 0.0
      %1612 = vmatpush1.msra.mxu0 0.0
      %1613 = vmatprep.subr.mxu0 0.0
      %1614 = vmatpush1.msra.mxu0 0.0
      %1615 = vmatprep.subr.mxu0 0.0
      %1616 = vmatpush1.msra.mxu0 0.0
      %1617 = vmatprep.subr.mxu0 0.0
      %1618 = vmatpush1.msra.mxu0 0.0
      %1619 = vmatprep.subr.mxu0 0.0
      %1620 = vmatpush1.msra.mxu0 0.0
      %1621 = vmatprep.subr.mxu0 0.0
      %1622 = vmatpush1.msra.mxu0 0.0
      %1623 = vmatprep.subr.mxu0 0.0
      %1624 = vmatpush1.msra.mxu0 0.0
      %1625 = vmatprep.subr.mxu0 0.0
      %1626 = vmatpush1.msra.mxu0 0.0
      %1627 = vmatprep.subr.mxu0 0.0
      %1628 = vmatpush1.msra.mxu0 0.0
      %1629 = vmatprep.subr.mxu0 0.0
      %1630 = vmatpush1.msra.mxu0 0.0
      %1631 = vmatprep.mubr.f32.mxu0 0.0
      %1632 = vmatmul.mubr.f32.gmra.mrb[0].mxu0 %v1562
      %v1633 = vpop.f32.mrb[0].mxu0
      %v1634 = vadd.f32 0.0, %v1633
      %v1635 = vpop.f32.mrb[0].mxu0
      %1636 = vdwg.mxu0
      %v1637 = vxor.u32 %v1634, 2147483648
      %v1638 = vmul.f32 %v1637, 1.442695
      %v1639 = vpow.pop %v1638
      %v1640 = vadd.f32 %v1639, 1.0
      %v1641 = vrcp.pop %v1640
      %v1642 = vmul.f32 1.0, %v1641
      %v1643 = vlaneseq
      %v1644 = vshrl.u32 %v1643, 7
      %v1645 = vsub.s32 0, %v1644
      %v1646 = vrot.slane %v1642, %v1645
      %v1647 = vmul.f32 %v1464, %v1646
      %v1648 = vadd.f32 %v1647, %v935
      %1649 = vst.msk [vmem:[%s219] sm:$0xff] %vm224, %v1648
      %p1650 = scmp.lt.s32.totalorder %s16, 1
      %s1651 = scalar_select %p1650, %s16, 1
      %s1652 = smul.addr %s1651, 8
      %s1653 = scalar_lea.vmem %s5, %s1652
      // Predicated region
      $region41: #{decoder_forward.10} parent=39 // pred_check
        %p1654 = pneg %p144
      $region42: #{decoder_forward.10} parent=39 // pred_check_branch
        %1656 = sbr.rel (%p1654) target = $region44
      $region43: #{decoder_forward.10} parent=39 // pred_region
        _
      $region44: #{decoder_forward.10} parent=39 // pred_fallthru
        _
    $region40: #{decoder_forward.10} parent=5 // pred_fallthru
      _
    %p1657 = scmp.le.s32.totalorder 2, %s11
    // Predicated region
    $region45: #{decoder_forward.10} parent=5 // pred_check
      %p1658 = pneg %p1657
    $region46: #{decoder_forward.10} parent=5 // pred_check_branch
      %1660 = sbr.rel (%p1658) target = $region48
    $region47: #{decoder_forward.10} parent=5 // pred_region
      %s1661 = ssub.s32 %s11, 2
      // Predicated region
      $region49: #{decoder_forward.10} parent=47 // pred_check
        %p1662 = pneg %p150
      $region50: #{decoder_forward.10} parent=47 // pred_check_branch
        %1664 = sbr.rel (%p1662) target = $region52
      $region51: #{decoder_forward.10} parent=47 // pred_region
        %p1665 = scmp.lt.s32.totalorder %s17, 1
        %s1666 = scalar_select %p1665, %s17, 1
        %s1667 = smul.addr %s1666, 8
        %s1668 = scalar_lea.vmem %s5, %s1667
      $region52: #{decoder_forward.10} parent=47 // pred_fallthru
        _
    $region48: #{decoder_forward.10} parent=5 // pred_fallthru
      _
  $region6: #{decoder_forward.10} parent=0 // loop_footer
    %s15 = sadd.s32 1, %s11
  $region7: #{decoder_forward.10} parent=0 // loop_footer_branch
    %10 = sbr.rel target = $region3
  $region8: #{decoder_forward.10} parent=0 // loop_exit
    _

// kernel: decoder_forward.11
$region0: #{decoder_forward.11}
  #allocation0 [shape = 'u32[]', space=smem, size = 0x4, offset = 0x4, fixed_abs, tag = 'smem constant byte address 0x4 - core index']
  #allocation1 [shape = 'u32[144,128]{1,0:T(1,128)}', space=vmem, size = 0x12000, scoped, tag = 'internal scratch']
  #allocation2 [shape = 'f32[18,128]{1,0:T(8,128)}', space=vmem, size = 0x3000, scoped, tag = 'scratch operand']
  %s0 = inlined_call_operand.vmem [shape: f32[2,16,128], index: 0, kind: input, shape index: {}]
  %s1 = inlined_call_operand.vmem [shape: f32[1,3,128,128], index: 1, kind: input, shape index: {}]
  %s2 = inlined_call_operand.vmem [shape: f32[1,3,128,128], index: 2, kind: input, shape index: {}]
  %s3 = inlined_call_operand.vmem [shape: f32[1,128,2], index: 3, kind: input, shape index: {}]
  %s4 = inlined_call_operand.vmem [shape: f32[1,2,128], index: 4, kind: input, shape index: {}]
  %s5 = inlined_call_operand.vmem [shape: f32[2,16,128], index: 5, kind: output, shape index: {}]
  %s6 = sld [smem:[#allocation0]]
  $region53: #{decoder_forward.11} parent=0
    _
  %s8 = ssub.s32 1, %s6
  %s9 = scalar_select 0, %s8, %s6
  loop: start=0, step=1, limit=4
  $region2: #{decoder_forward.11} parent=0 // loop_pre_header
    _
  $region3: #{decoder_forward.11} parent=0 // loop_header
    %s11 = sphi 0, %s15
    %p12 = scmp.ge.s32.totalorder %s11, 4
    %s21 = sphi 0, %s23
    %s24 = sphi 0, %s21
    %s25 = sphi 0, %s24
    %s41 = sphi 0, %s25
    %s45 = sphi 0, %s45
    %s47 = sphi 0, %s45
    %s48 = sphi 0, %s47
    %s62 = sphi 0, %s48
    %s66 = sphi 0, %s66
    %s68 = sphi 0, %s66
    %s69 = sphi 0, %s68
    %s83 = sphi 0, %s69
    %s87 = sphi 0, %s87
    %s89 = sphi 0, %s87
    %s90 = sphi 0, %s89
    %s104 = sphi 0, %s90
    %s108 = sphi 0, %s108
    %s110 = sphi 0, %s108
    %s111 = sphi 0, %s110
    %s125 = sphi 0, %s111
    %s131 = sphi 0, %s133
    %s134 = sphi 0, %s131
    %s135 = sphi 0, %s134
    %s151 = sphi 0, %s135
  $region4: #{decoder_forward.11} parent=0 // loop_header_branch
    %14 = sbr.rel (%p12) target = $region8
  $region5: #{decoder_forward.11} parent=0 // loop_body
    %s16 = ssub.s32 %s11, 1
    %s17 = ssub.s32 %s11, 2
    %s18 = sadd.s32 %s11, 1
    %s19 = ssub.s32 %s11, %s18
    %p20 = scmp.eq.s32.totalorder %s19, 0
    %s22 = sadd.s32 %s21, 1
    %s23 = scalar_select %p20, %s21, %s22
    %p26 = pneg %p20
    %p27 = scmp.eq.s32.totalorder %s11, 1
    %p28 = por %p26, %p27
    %p29 = scmp.ne.s32.totalorder %s21, %s24
    %p30 = scmp.eq.s32.totalorder %s11, 0
    %p31 = por %p29, %p30
    %p32 = scmp.ne.s32.totalorder %s21, %s24
    %p33 = scmp.eq.s32.totalorder %s16, 1
    %p34 = por %p32, %p33
    %p35 = scmp.ne.s32.totalorder %s24, %s25
    %p36 = scmp.eq.s32.totalorder %s16, 0
    %p37 = por %p35, %p36
    %p38 = scmp.ne.s32.totalorder %s24, %s25
    %p39 = scmp.eq.s32.totalorder %s17, 1
    %p40 = por %p38, %p39
    %p42 = scmp.ne.s32.totalorder %s25, %s41
    %p43 = scmp.eq.s32.totalorder %s17, 0
    %p44 = por %p42, %p43
    %s46 = sadd.s32 %s45, 1
    %p49 = scmp.eq.s32.totalorder %s11, 1
    %p50 = scmp.ne.s32.totalorder %s45, %s47
    %p51 = scmp.eq.s32.totalorder %s11, 0
    %p52 = por %p50, %p51
    %p53 = scmp.ne.s32.totalorder %s45, %s47
    %p54 = scmp.eq.s32.totalorder %s16, 1
    %p55 = por %p53, %p54
    %p56 = scmp.ne.s32.totalorder %s47, %s48
    %p57 = scmp.eq.s32.totalorder %s16, 0
    %p58 = por %p56, %p57
    %p59 = scmp.ne.s32.totalorder %s47, %s48
    %p60 = scmp.eq.s32.totalorder %s17, 1
    %p61 = por %p59, %p60
    %p63 = scmp.ne.s32.totalorder %s48, %s62
    %p64 = scmp.eq.s32.totalorder %s17, 0
    %p65 = por %p63, %p64
    %s67 = sadd.s32 %s66, 1
    %p70 = scmp.eq.s32.totalorder %s11, 1
    %p71 = scmp.ne.s32.totalorder %s66, %s68
    %p72 = scmp.eq.s32.totalorder %s11, 0
    %p73 = por %p71, %p72
    %p74 = scmp.ne.s32.totalorder %s66, %s68
    %p75 = scmp.eq.s32.totalorder %s16, 1
    %p76 = por %p74, %p75
    %p77 = scmp.ne.s32.totalorder %s68, %s69
    %p78 = scmp.eq.s32.totalorder %s16, 0
    %p79 = por %p77, %p78
    %p80 = scmp.ne.s32.totalorder %s68, %s69
    %p81 = scmp.eq.s32.totalorder %s17, 1
    %p82 = por %p80, %p81
    %p84 = scmp.ne.s32.totalorder %s69, %s83
    %p85 = scmp.eq.s32.totalorder %s17, 0
    %p86 = por %p84, %p85
    %s88 = sadd.s32 %s87, 1
    %p91 = scmp.eq.s32.totalorder %s11, 1
    %p92 = scmp.ne.s32.totalorder %s87, %s89
    %p93 = scmp.eq.s32.totalorder %s11, 0
    %p94 = por %p92, %p93
    %p95 = scmp.ne.s32.totalorder %s87, %s89
    %p96 = scmp.eq.s32.totalorder %s16, 1
    %p97 = por %p95, %p96
    %p98 = scmp.ne.s32.totalorder %s89, %s90
    %p99 = scmp.eq.s32.totalorder %s16, 0
    %p100 = por %p98, %p99
    %p101 = scmp.ne.s32.totalorder %s89, %s90
    %p102 = scmp.eq.s32.totalorder %s17, 1
    %p103 = por %p101, %p102
    %p105 = scmp.ne.s32.totalorder %s90, %s104
    %p106 = scmp.eq.s32.totalorder %s17, 0
    %p107 = por %p105, %p106
    %s109 = sadd.s32 %s108, 1
    %p112 = scmp.eq.s32.totalorder %s11, 1
    %p113 = scmp.ne.s32.totalorder %s108, %s110
    %p114 = scmp.eq.s32.totalorder %s11, 0
    %p115 = por %p113, %p114
    %p116 = scmp.ne.s32.totalorder %s108, %s110
    %p117 = scmp.eq.s32.totalorder %s16, 1
    %p118 = por %p116, %p117
    %p119 = scmp.ne.s32.totalorder %s110, %s111
    %p120 = scmp.eq.s32.totalorder %s16, 0
    %p121 = por %p119, %p120
    %p122 = scmp.ne.s32.totalorder %s110, %s111
    %p123 = scmp.eq.s32.totalorder %s17, 1
    %p124 = por %p122, %p123
    %p126 = scmp.ne.s32.totalorder %s111, %s125
    %p127 = scmp.eq.s32.totalorder %s17, 0
    %p128 = por %p126, %p127
    %s129 = ssub.s32 %s11, %s18
    %p130 = scmp.eq.s32.totalorder %s129, 0
    %s132 = sadd.s32 %s131, 1
    %s133 = scalar_select %p130, %s131, %s132
    %p136 = pneg %p130
    %p137 = scmp.eq.s32.totalorder %s11, 1
    %p138 = por %p136, %p137
    %p139 = scmp.ne.s32.totalorder %s131, %s134
    %p140 = scmp.eq.s32.totalorder %s11, 0
    %p141 = por %p139, %p140
    %p142 = scmp.ne.s32.totalorder %s131, %s134
    %p143 = scmp.eq.s32.totalorder %s16, 1
    %p144 = por %p142, %p143
    %p145 = scmp.ne.s32.totalorder %s134, %s135
    %p146 = scmp.eq.s32.totalorder %s16, 0
    %p147 = por %p145, %p146
    %p148 = scmp.ne.s32.totalorder %s134, %s135
    %p149 = scmp.eq.s32.totalorder %s17, 1
    %p150 = por %p148, %p149
    %p152 = scmp.ne.s32.totalorder %s135, %s151
    %p153 = scmp.eq.s32.totalorder %s17, 0
    %p154 = por %p152, %p153
    %p155 = scmp.le.s32.totalorder 1, %s11
    %p156 = scmp.lt.s32.totalorder %s11, 3
    %p157 = pnand %p155, %p156
    %p158 = pneg %p157
    // Predicated region
    $region9: #{decoder_forward.11} parent=5 // pred_check
      _
    $region10: #{decoder_forward.11} parent=5 // pred_check_branch
      %160 = sbr.rel (%p157) target = $region12
    $region11: #{decoder_forward.11} parent=5 // pred_region
      %s161 = ssub.s32 %s11, 1
      // Predicated region
      $region13: #{decoder_forward.11} parent=11 // pred_check
        %p162 = pneg %p58
      $region14: #{decoder_forward.11} parent=11 // pred_check_branch
        %164 = sbr.rel (%p162) target = $region16
      $region15: #{decoder_forward.11} parent=11 // pred_region
        _
      $region16: #{decoder_forward.11} parent=11 // pred_fallthru
        _
      // Predicated region
      $region17: #{decoder_forward.11} parent=11 // pred_check
        %p165 = pneg %p79
      $region18: #{decoder_forward.11} parent=11 // pred_check_branch
        %167 = sbr.rel (%p165) target = $region20
      $region19: #{decoder_forward.11} parent=11 // pred_region
        _
      $region20: #{decoder_forward.11} parent=11 // pred_fallthru
        _
      // Predicated region
      $region21: #{decoder_forward.11} parent=11 // pred_check
        %p168 = pneg %p100
      $region22: #{decoder_forward.11} parent=11 // pred_check_branch
        %170 = sbr.rel (%p168) target = $region24
      $region23: #{decoder_forward.11} parent=11 // pred_region
        _
      $region24: #{decoder_forward.11} parent=11 // pred_fallthru
        _
      // Predicated region
      $region25: #{decoder_forward.11} parent=11 // pred_check
        %p171 = pneg %p121
      $region26: #{decoder_forward.11} parent=11 // pred_check_branch
        %173 = sbr.rel (%p171) target = $region28
      $region27: #{decoder_forward.11} parent=11 // pred_region
        _
      $region28: #{decoder_forward.11} parent=11 // pred_fallthru
        _
    $region12: #{decoder_forward.11} parent=5 // pred_fallthru
      _
    %p174 = scmp.lt.s32.totalorder %s11, 2
    // Predicated region
    $region29: #{decoder_forward.11} parent=5 // pred_check
      %p175 = pneg %p174
    $region30: #{decoder_forward.11} parent=5 // pred_check_branch
      %177 = sbr.rel (%p175) target = $region32
    $region31: #{decoder_forward.11} parent=5 // pred_region
      // Predicated region
      $region33: #{decoder_forward.11} parent=31 // pred_check
        %p178 = pneg %p31
      $region34: #{decoder_forward.11} parent=31 // pred_check_branch
        %180 = sbr.rel (%p178) target = $region36
      $region35: #{decoder_forward.11} parent=31 // pred_region
        %p181 = scmp.lt.s32.totalorder %s11, 1
        %s182 = scalar_select %p181, %s11, 1
        %s183 = smul.addr %s182, 2
        %s184 = smul.addr %s183, 8
        %s185 = scalar_lea.vmem %s0, %s184
      $region36: #{decoder_forward.11} parent=31 // pred_fallthru
        _
    $region32: #{decoder_forward.11} parent=5 // pred_fallthru
      _
    %p186 = scmp.le.s32.totalorder 1, %s11
    %p187 = scmp.lt.s32.totalorder %s11, 3
    %p188 = pnand %p186, %p187
    %p189 = pneg %p188
    // Predicated region
    $region37: #{decoder_forward.11} parent=5 // pred_check
      _
    $region38: #{decoder_forward.11} parent=5 // pred_check_branch
      %191 = sbr.rel (%p188) target = $region40
    $region39: #{decoder_forward.11} parent=5 // pred_region
      %s192 = ssub.s32 %s11, 1
      %p193 = scmp.lt.s32.totalorder %s16, 1
      %s194 = scalar_select %p193, %s16, 1
      %s195 = smul.addr %s194, 2
      %s196 = smul.addr %s195, 8
      %s197 = scalar_lea.vmem %s0, %s196
      %p198 = pneg %p37
      %p199 = pneg %p34
      %p200 = pneg %p58
      %p201 = pneg %p55
      %p202 = pneg %p79
      %p203 = pneg %p76
      %p204 = pneg %p100
      %p205 = pneg %p97
      %p206 = pneg %p121
      %p207 = pneg %p118
      %p208 = pneg %p147
      %p209 = pneg %p144
      %p210 = scmp.lt.s32.totalorder %s16, 1
      %s211 = scalar_select %p210, %s16, 1
      %s212 = smul.addr %s211, 2
      %s213 = smul.addr %s212, 8
      %s214 = scalar_lea.vmem %s5, %s213
      %p215 = scmp.lt.s32.totalorder %s16, 1
      %s216 = scalar_select %p215, %s16, 1
      %s217 = smul.addr %s216, 2
      %s218 = smul.addr %s217, 8
      %s219 = scalar_lea.vmem %s0, %s218
      %p220 = scmp.lt.s32.totalorder %s16, 1
      %s221 = scalar_select %p220, %s16, 1
      %s222 = smul.addr %s221, 2
      %s223 = smul.addr %s222, 8
      %s224 = scalar_lea.vmem %s5, %s223
      %225 = vst [vmem:[#allocation2] sm:$0x1] 0.0
      %226 = vst [vmem:[#allocation2 + $0x11] sm:$0x1] 0.0
      %v227 = vld [vmem:[%s219] sm:$0xff]
      %v228 = vld [vmem:[%s219 + $0x8] sm:$0xff]
      %229 = vst [vmem:[#allocation2 + $0x1] sm:$0xff] %v227
      %230 = vst [vmem:[#allocation2 + $0x9] sm:$0xff] %v228
      %v231 = vld [vmem:[#allocation2] sm:$0xff]
      %v232 = vld [vmem:[#allocation2 + $0x8] sm:$0xff]
      %v233 = vld [vmem:[%s1] sm:$0xff]
      %v234 = vld [vmem:[%s1 + $0x8] sm:$0xff]
      %v235 = vld [vmem:[%s1 + $0x10] sm:$0xff]
      %v236 = vld [vmem:[%s1 + $0x18] sm:$0xff]
      %v237 = vld [vmem:[%s1 + $0x20] sm:$0xff]
      %v238 = vld [vmem:[%s1 + $0x28] sm:$0xff]
      %v239 = vld [vmem:[%s1 + $0x30] sm:$0xff]
      %v240 = vld [vmem:[%s1 + $0x38] sm:$0xff]
      %v241 = vld [vmem:[%s1 + $0x40] sm:$0xff]
      %v242 = vld [vmem:[%s1 + $0x48] sm:$0xff]
      %v243 = vld [vmem:[%s1 + $0x50] sm:$0xff]
      %v244 = vld [vmem:[%s1 + $0x58] sm:$0xff]
      %v245 = vld [vmem:[%s1 + $0x60] sm:$0xff]
      %v246 = vld [vmem:[%s1 + $0x68] sm:$0xff]
      %v247 = vld [vmem:[%s1 + $0x70] sm:$0xff]
      %v248 = vld [vmem:[%s1 + $0x78] sm:$0xff]
      %v249 = vld [vmem:[#allocation2 + $0x1] sm:$0xff]
      %v250 = vld [vmem:[#allocation2 + $0x9] sm:$0xff]
      %s251 = scalar_lea.vmem %s1, 128
      %v252 = vld [vmem:[%s251] sm:$0xff]
      %v253 = vld [vmem:[%s251 + $0x8] sm:$0xff]
      %v254 = vld [vmem:[%s251 + $0x10] sm:$0xff]
      %v255 = vld [vmem:[%s251 + $0x18] sm:$0xff]
      %v256 = vld [vmem:[%s251 + $0x20] sm:$0xff]
      %v257 = vld [vmem:[%s251 + $0x28] sm:$0xff]
      %v258 = vld [vmem:[%s251 + $0x30] sm:$0xff]
      %v259 = vld [vmem:[%s251 + $0x38] sm:$0xff]
      %v260 = vld [vmem:[%s251 + $0x40] sm:$0xff]
      %v261 = vld [vmem:[%s251 + $0x48] sm:$0xff]
      %v262 = vld [vmem:[%s251 + $0x50] sm:$0xff]
      %v263 = vld [vmem:[%s251 + $0x58] sm:$0xff]
      %v264 = vld [vmem:[%s251 + $0x60] sm:$0xff]
      %v265 = vld [vmem:[%s251 + $0x68] sm:$0xff]
      %v266 = vld [vmem:[%s251 + $0x70] sm:$0xff]
      %v267 = vld [vmem:[%s251 + $0x78] sm:$0xff]
      %268 = vmatprep.subr.mxu0 0.0
      %269 = vmatpush1.msra.mxu0 %v252
      %270 = vmatprep.subr.mxu0 0.0
      %271 = vmatpush1.msra.mxu0 %v253
      %272 = vmatprep.subr.mxu0 0.0
      %273 = vmatpush1.msra.mxu0 %v254
      %274 = vmatprep.subr.mxu0 0.0
      %275 = vmatpush1.msra.mxu0 %v255
      %276 = vmatprep.subr.mxu0 0.0
      %277 = vmatpush1.msra.mxu0 %v256
      %278 = vmatprep.subr.mxu0 0.0
      %279 = vmatpush1.msra.mxu0 %v257
      %280 = vmatprep.subr.mxu0 0.0
      %281 = vmatpush1.msra.mxu0 %v258
      %282 = vmatprep.subr.mxu0 0.0
      %283 = vmatpush1.msra.mxu0 %v259
      %284 = vmatprep.subr.mxu0 0.0
      %285 = vmatpush1.msra.mxu0 %v260
      %286 = vmatprep.subr.mxu0 0.0
      %287 = vmatpush1.msra.mxu0 %v261
      %288 = vmatprep.subr.mxu0 0.0
      %289 = vmatpush1.msra.mxu0 %v262
      %290 = vmatprep.subr.mxu0 0.0
      %291 = vmatpush1.msra.mxu0 %v263
      %292 = vmatprep.subr.mxu0 0.0
      %293 = vmatpush1.msra.mxu0 %v264
      %294 = vmatprep.subr.mxu0 0.0
      %295 = vmatpush1.msra.mxu0 %v265
      %296 = vmatprep.subr.mxu0 0.0
      %297 = vmatpush1.msra.mxu0 %v266
      %298 = vmatprep.subr.mxu0 0.0
      %299 = vmatpush1.msra.mxu0 %v267
      %300 = vmatprep.subr.mxu0 0.0
      %301 = vmatpush1.msra.mxu0 0.0
      %302 = vmatprep.subr.mxu0 0.0
      %303 = vmatpush1.msra.mxu0 0.0
      %304 = vmatprep.subr.mxu0 0.0
      %305 = vmatpush1.msra.mxu0 0.0
      %306 = vmatprep.subr.mxu0 0.0
      %307 = vmatpush1.msra.mxu0 0.0
      %308 = vmatprep.subr.mxu0 0.0
      %309 = vmatpush1.msra.mxu0 0.0
      %310 = vmatprep.subr.mxu0 0.0
      %311 = vmatpush1.msra.mxu0 0.0
      %312 = vmatprep.subr.mxu0 0.0
      %313 = vmatpush1.msra.mxu0 0.0
      %314 = vmatprep.subr.mxu0 0.0
      %315 = vmatpush1.msra.mxu0 0.0
      %316 = vmatprep.subr.mxu0 0.0
      %317 = vmatpush1.msra.mxu0 0.0
      %318 = vmatprep.subr.mxu0 0.0
      %319 = vmatpush1.msra.mxu0 0.0
      %320 = vmatprep.subr.mxu0 0.0
      %321 = vmatpush1.msra.mxu0 0.0
      %322 = vmatprep.subr.mxu0 0.0
      %323 = vmatpush1.msra.mxu0 0.0
      %324 = vmatprep.subr.mxu0 0.0
      %325 = vmatpush1.msra.mxu0 0.0
      %326 = vmatprep.subr.mxu0 0.0
      %327 = vmatpush1.msra.mxu0 0.0
      %328 = vmatprep.subr.mxu0 0.0
      %329 = vmatpush1.msra.mxu0 0.0
      %330 = vmatprep.subr.mxu0 0.0
      %331 = vmatpush1.msra.mxu0 0.0
      %332 = vmatprep.mubr.f32.mxu0 0.0
      %333 = vmatmul.mubr.f32.gmra.mrb[0].mxu0 %v249
      %v334 = vpop.f32.mrb[0].mxu0
      %v335 = vadd.f32 0.0, %v334
      %v336 = vpop.f32.mrb[0].mxu0
      %337 = vmatprep.mubr.f32.mxu0 0.0
      %338 = vmatmul.mubr.f32.gmra.mrb[0].mxu0 %v250
      %v339 = vpop.f32.mrb[0].mxu0
      %v340 = vadd.f32 0.0, %v339
      %v341 = vpop.f32.mrb[0].mxu0
      %342 = vdwg.mxu0
      %343 = vmatprep.subr.mxu0 0.0
      %344 = vmatpush1.msra.mxu0 %v233
      %345 = vmatprep.subr.mxu0 0.0
      %346 = vmatpush1.msra.mxu0 %v234
      %347 = vmatprep.subr.mxu0 0.0
      %348 = vmatpush1.msra.mxu0 %v235
      %349 = vmatprep.subr.mxu0 0.0
      %350 = vmatpush1.msra.mxu0 %v236
      %351 = vmatprep.subr.mxu0 0.0
      %352 = vmatpush1.msra.mxu0 %v237
      %353 = vmatprep.subr.mxu0 0.0
      %354 = vmatpush1.msra.mxu0 %v238
      %355 = vmatprep.subr.mxu0 0.0
      %356 = vmatpush1.msra.mxu0 %v239
      %357 = vmatprep.subr.mxu0 0.0
      %358 = vmatpush1.msra.mxu0 %v240
      %359 = vmatprep.subr.mxu0 0.0
      %360 = vmatpush1.msra.mxu0 %v241
      %361 = vmatprep.subr.mxu0 0.0
      %362 = vmatpush1.msra.mxu0 %v242
      %363 = vmatprep.subr.mxu0 0.0
      %364 = vmatpush1.msra.mxu0 %v243
      %365 = vmatprep.subr.mxu0 0.0
      %366 = vmatpush1.msra.mxu0 %v244
      %367 = vmatprep.subr.mxu0 0.0
      %368 = vmatpush1.msra.mxu0 %v245
      %369 = vmatprep.subr.mxu0 0.0
      %370 = vmatpush1.msra.mxu0 %v246
      %371 = vmatprep.subr.mxu0 0.0
      %372 = vmatpush1.msra.mxu0 %v247
      %373 = vmatprep.subr.mxu0 0.0
      %374 = vmatpush1.msra.mxu0 %v248
      %375 = vmatprep.subr.mxu0 0.0
      %376 = vmatpush1.msra.mxu0 0.0
      %377 = vmatprep.subr.mxu0 0.0
      %378 = vmatpush1.msra.mxu0 0.0
      %379 = vmatprep.subr.mxu0 0.0
      %380 = vmatpush1.msra.mxu0 0.0
      %381 = vmatprep.subr.mxu0 0.0
      %382 = vmatpush1.msra.mxu0 0.0
      %383 = vmatprep.subr.mxu0 0.0
      %384 = vmatpush1.msra.mxu0 0.0
      %385 = vmatprep.subr.mxu0 0.0
      %386 = vmatpush1.msra.mxu0 0.0
      %387 = vmatprep.subr.mxu0 0.0
      %388 = vmatpush1.msra.mxu0 0.0
      %389 = vmatprep.subr.mxu0 0.0
      %390 = vmatpush1.msra.mxu0 0.0
      %391 = vmatprep.subr.mxu0 0.0
      %392 = vmatpush1.msra.mxu0 0.0
      %393 = vmatprep.subr.mxu0 0.0
      %394 = vmatpush1.msra.mxu0 0.0
      %395 = vmatprep.subr.mxu0 0.0
      %396 = vmatpush1.msra.mxu0 0.0
      %397 = vmatprep.subr.mxu0 0.0
      %398 = vmatpush1.msra.mxu0 0.0
      %399 = vmatprep.subr.mxu0 0.0
      %400 = vmatpush1.msra.mxu0 0.0
      %401 = vmatprep.subr.mxu0 0.0
      %402 = vmatpush1.msra.mxu0 0.0
      %403 = vmatprep.subr.mxu0 0.0
      %404 = vmatpush1.msra.mxu0 0.0
      %405 = vmatprep.subr.mxu0 0.0
      %406 = vmatpush1.msra.mxu0 0.0
      %407 = vmatprep.mubr.f32.mxu0 0.0
      %408 = vmatmul.mubr.f32.gmra.mrb[0].mxu0 %v231
      %v409 = vpop.f32.mrb[0].mxu0
      %v410 = vadd.f32 %v335, %v409
      %v411 = vpop.f32.mrb[0].mxu0
      %412 = vmatprep.mubr.f32.mxu0 0.0
      %413 = vmatmul.mubr.f32.gmra.mrb[0].mxu0 %v232
      %v414 = vpop.f32.mrb[0].mxu0
      %v415 = vadd.f32 %v340, %v414
      %v416 = vpop.f32.mrb[0].mxu0
      %417 = vdwg.mxu0
      %v418 = vld [vmem:[#allocation2 + $0x2] sm:$0xff]
      %v419 = vld [vmem:[#allocation2 + $0xa] sm:$0xff]
      %s420 = scalar_lea.vmem %s1, 256
      %v421 = vld [vmem:[%s420] sm:$0xff]
      %v422 = vld [vmem:[%s420 + $0x8] sm:$0xff]
      %v423 = vld [vmem:[%s420 + $0x10] sm:$0xff]
      %v424 = vld [vmem:[%s420 + $0x18] sm:$0xff]
      %v425 = vld [vmem:[%s420 + $0x20] sm:$0xff]
      %v426 = vld [vmem:[%s420 + $0x28] sm:$0xff]
      %v427 = vld [vmem:[%s420 + $0x30] sm:$0xff]
      %v428 = vld [vmem:[%s420 + $0x38] sm:$0xff]
      %v429 = vld [vmem:[%s420 + $0x40] sm:$0xff]
      %v430 = vld [vmem:[%s420 + $0x48] sm:$0xff]
      %v431 = vld [vmem:[%s420 + $0x50] sm:$0xff]
      %v432 = vld [vmem:[%s420 + $0x58] sm:$0xff]
      %v433 = vld [vmem:[%s420 + $0x60] sm:$0xff]
      %v434 = vld [vmem:[%s420 + $0x68] sm:$0xff]
      %v435 = vld [vmem:[%s420 + $0x70] sm:$0xff]
      %v436 = vld [vmem:[%s420 + $0x78] sm:$0xff]
      %437 = vmatprep.subr.mxu0 0.0
      %438 = vmatpush1.msra.mxu0 %v421
      %439 = vmatprep.subr.mxu0 0.0
      %440 = vmatpush1.msra.mxu0 %v422
      %441 = vmatprep.subr.mxu0 0.0
      %442 = vmatpush1.msra.mxu0 %v423
      %443 = vmatprep.subr.mxu0 0.0
      %444 = vmatpush1.msra.mxu0 %v424
      %445 = vmatprep.subr.mxu0 0.0
      %446 = vmatpush1.msra.mxu0 %v425
      %447 = vmatprep.subr.mxu0 0.0
      %448 = vmatpush1.msra.mxu0 %v426
      %449 = vmatprep.subr.mxu0 0.0
      %450 = vmatpush1.msra.mxu0 %v427
      %451 = vmatprep.subr.mxu0 0.0
      %452 = vmatpush1.msra.mxu0 %v428
      %453 = vmatprep.subr.mxu0 0.0
      %454 = vmatpush1.msra.mxu0 %v429
      %455 = vmatprep.subr.mxu0 0.0
      %456 = vmatpush1.msra.mxu0 %v430
      %457 = vmatprep.subr.mxu0 0.0
      %458 = vmatpush1.msra.mxu0 %v431
      %459 = vmatprep.subr.mxu0 0.0
      %460 = vmatpush1.msra.mxu0 %v432
      %461 = vmatprep.subr.mxu0 0.0
      %462 = vmatpush1.msra.mxu0 %v433
      %463 = vmatprep.subr.mxu0 0.0
      %464 = vmatpush1.msra.mxu0 %v434
      %465 = vmatprep.subr.mxu0 0.0
      %466 = vmatpush1.msra.mxu0 %v435
      %467 = vmatprep.subr.mxu0 0.0
      %468 = vmatpush1.msra.mxu0 %v436
      %469 = vmatprep.subr.mxu0 0.0
      %470 = vmatpush1.msra.mxu0 0.0
      %471 = vmatprep.subr.mxu0 0.0
      %472 = vmatpush1.msra.mxu0 0.0
      %473 = vmatprep.subr.mxu0 0.0
      %474 = vmatpush1.msra.mxu0 0.0
      %475 = vmatprep.subr.mxu0 0.0
      %476 = vmatpush1.msra.mxu0 0.0
      %477 = vmatprep.subr.mxu0 0.0
      %478 = vmatpush1.msra.mxu0 0.0
      %479 = vmatprep.subr.mxu0 0.0
      %480 = vmatpush1.msra.mxu0 0.0
      %481 = vmatprep.subr.mxu0 0.0
      %482 = vmatpush1.msra.mxu0 0.0
      %483 = vmatprep.subr.mxu0 0.0
      %484 = vmatpush1.msra.mxu0 0.0
      %485 = vmatprep.subr.mxu0 0.0
      %486 = vmatpush1.msra.mxu0 0.0
      %487 = vmatprep.subr.mxu0 0.0
      %488 = vmatpush1.msra.mxu0 0.0
      %489 = vmatprep.subr.mxu0 0.0
      %490 = vmatpush1.msra.mxu0 0.0
      %491 = vmatprep.subr.mxu0 0.0
      %492 = vmatpush1.msra.mxu0 0.0
      %493 = vmatprep.subr.mxu0 0.0
      %494 = vmatpush1.msra.mxu0 0.0
      %495 = vmatprep.subr.mxu0 0.0
      %496 = vmatpush1.msra.mxu0 0.0
      %497 = vmatprep.subr.mxu0 0.0
      %498 = vmatpush1.msra.mxu0 0.0
      %499 = vmatprep.subr.mxu0 0.0
      %500 = vmatpush1.msra.mxu0 0.0
      %501 = vmatprep.mubr.f32.mxu0 0.0
      %502 = vmatmul.mubr.f32.gmra.mrb[0].mxu0 %v418
      %v503 = vpop.f32.mrb[0].mxu0
      %v504 = vadd.f32 0.0, %v503
      %v505 = vpop.f32.mrb[0].mxu0
      %506 = vmatprep.mubr.f32.mxu0 0.0
      %507 = vmatmul.mubr.f32.gmra.mrb[0].mxu0 %v419
      %v508 = vpop.f32.mrb[0].mxu0
      %v509 = vadd.f32 0.0, %v508
      %v510 = vpop.f32.mrb[0].mxu0
      %511 = vdwg.mxu0
      %v512 = vadd.f32 %v410, %v504
      %v513 = vadd.f32 %v415, %v509
      %vm514 = vcmp.gt.f32.partialorder %v512, 0.0
      %vm515 = vcmp.gt.f32.partialorder %v513, 0.0
      %v516 = vmul.f32 %v512, 0.25
      %v517 = vmul.f32 %v513, 0.25
      %v518 = vsel %vm514, %v512, %v516
      %v519 = vsel %vm515, %v513, %v517
      %520 = vst [vmem:[#allocation2 + $0x1] sm:$0xff] %v518
      %521 = vst [vmem:[#allocation2 + $0x9] sm:$0xff] %v519
      %v522 = vld [vmem:[#allocation2] sm:$0xff]
      %v523 = vld [vmem:[#allocation2 + $0x8] sm:$0xff]
      %v524 = vld [vmem:[%s2] sm:$0xff]
      %v525 = vld [vmem:[%s2 + $0x8] sm:$0xff]
      %v526 = vld [vmem:[%s2 + $0x10] sm:$0xff]
      %v527 = vld [vmem:[%s2 + $0x18] sm:$0xff]
      %v528 = vld [vmem:[%s2 + $0x20] sm:$0xff]
      %v529 = vld [vmem:[%s2 + $0x28] sm:$0xff]
      %v530 = vld [vmem:[%s2 + $0x30] sm:$0xff]
      %v531 = vld [vmem:[%s2 + $0x38] sm:$0xff]
      %v532 = vld [vmem:[%s2 + $0x40] sm:$0xff]
      %v533 = vld [vmem:[%s2 + $0x48] sm:$0xff]
      %v534 = vld [vmem:[%s2 + $0x50] sm:$0xff]
      %v535 = vld [vmem:[%s2 + $0x58] sm:$0xff]
      %v536 = vld [vmem:[%s2 + $0x60] sm:$0xff]
      %v537 = vld [vmem:[%s2 + $0x68] sm:$0xff]
      %v538 = vld [vmem:[%s2 + $0x70] sm:$0xff]
      %v539 = vld [vmem:[%s2 + $0x78] sm:$0xff]
      %v540 = vld [vmem:[#allocation2 + $0x1] sm:$0xff]
      %v541 = vld [vmem:[#allocation2 + $0x9] sm:$0xff]
      %s542 = scalar_lea.vmem %s2, 128
      %v543 = vld [vmem:[%s542] sm:$0xff]
      %v544 = vld [vmem:[%s542 + $0x8] sm:$0xff]
      %v545 = vld [vmem:[%s542 + $0x10] sm:$0xff]
      %v546 = vld [vmem:[%s542 + $0x18] sm:$0xff]
      %v547 = vld [vmem:[%s542 + $0x20] sm:$0xff]
      %v548 = vld [vmem:[%s542 + $0x28] sm:$0xff]
      %v549 = vld [vmem:[%s542 + $0x30] sm:$0xff]
      %v550 = vld [vmem:[%s542 + $0x38] sm:$0xff]
      %v551 = vld [vmem:[%s542 + $0x40] sm:$0xff]
      %v552 = vld [vmem:[%s542 + $0x48] sm:$0xff]
      %v553 = vld [vmem:[%s542 + $0x50] sm:$0xff]
      %v554 = vld [vmem:[%s542 + $0x58] sm:$0xff]
      %v555 = vld [vmem:[%s542 + $0x60] sm:$0xff]
      %v556 = vld [vmem:[%s542 + $0x68] sm:$0xff]
      %v557 = vld [vmem:[%s542 + $0x70] sm:$0xff]
      %v558 = vld [vmem:[%s542 + $0x78] sm:$0xff]
      %559 = vmatprep.subr.mxu0 0.0
      %560 = vmatpush1.msra.mxu0 %v543
      %561 = vmatprep.subr.mxu0 0.0
      %562 = vmatpush1.msra.mxu0 %v544
      %563 = vmatprep.subr.mxu0 0.0
      %564 = vmatpush1.msra.mxu0 %v545
      %565 = vmatprep.subr.mxu0 0.0
      %566 = vmatpush1.msra.mxu0 %v546
      %567 = vmatprep.subr.mxu0 0.0
      %568 = vmatpush1.msra.mxu0 %v547
      %569 = vmatprep.subr.mxu0 0.0
      %570 = vmatpush1.msra.mxu0 %v548
      %571 = vmatprep.subr.mxu0 0.0
      %572 = vmatpush1.msra.mxu0 %v549
      %573 = vmatprep.subr.mxu0 0.0
      %574 = vmatpush1.msra.mxu0 %v550
      %575 = vmatprep.subr.mxu0 0.0
      %576 = vmatpush1.msra.mxu0 %v551
      %577 = vmatprep.subr.mxu0 0.0
      %578 = vmatpush1.msra.mxu0 %v552
      %579 = vmatprep.subr.mxu0 0.0
      %580 = vmatpush1.msra.mxu0 %v553
      %581 = vmatprep.subr.mxu0 0.0
      %582 = vmatpush1.msra.mxu0 %v554
      %583 = vmatprep.subr.mxu0 0.0
      %584 = vmatpush1.msra.mxu0 %v555
      %585 = vmatprep.subr.mxu0 0.0
      %586 = vmatpush1.msra.mxu0 %v556
      %587 = vmatprep.subr.mxu0 0.0
      %588 = vmatpush1.msra.mxu0 %v557
      %589 = vmatprep.subr.mxu0 0.0
      %590 = vmatpush1.msra.mxu0 %v558
      %591 = vmatprep.subr.mxu0 0.0
      %592 = vmatpush1.msra.mxu0 0.0
      %593 = vmatprep.subr.mxu0 0.0
      %594 = vmatpush1.msra.mxu0 0.0
      %595 = vmatprep.subr.mxu0 0.0
      %596 = vmatpush1.msra.mxu0 0.0
      %597 = vmatprep.subr.mxu0 0.0
      %598 = vmatpush1.msra.mxu0 0.0
      %599 = vmatprep.subr.mxu0 0.0
      %600 = vmatpush1.msra.mxu0 0.0
      %601 = vmatprep.subr.mxu0 0.0
      %602 = vmatpush1.msra.mxu0 0.0
      %603 = vmatprep.subr.mxu0 0.0
      %604 = vmatpush1.msra.mxu0 0.0
      %605 = vmatprep.subr.mxu0 0.0
      %606 = vmatpush1.msra.mxu0 0.0
      %607 = vmatprep.subr.mxu0 0.0
      %608 = vmatpush1.msra.mxu0 0.0
      %609 = vmatprep.subr.mxu0 0.0
      %610 = vmatpush1.msra.mxu0 0.0
      %611 = vmatprep.subr.mxu0 0.0
      %612 = vmatpush1.msra.mxu0 0.0
      %613 = vmatprep.subr.mxu0 0.0
      %614 = vmatpush1.msra.mxu0 0.0
      %615 = vmatprep.subr.mxu0 0.0
      %616 = vmatpush1.msra.mxu0 0.0
      %617 = vmatprep.subr.mxu0 0.0
      %618 = vmatpush1.msra.mxu0 0.0
      %619 = vmatprep.subr.mxu0 0.0
      %620 = vmatpush1.msra.mxu0 0.0
      %621 = vmatprep.subr.mxu0 0.0
      %622 = vmatpush1.msra.mxu0 0.0
      %623 = vmatprep.mubr.f32.mxu0 0.0
      %624 = vmatmul.mubr.f32.gmra.mrb[0].mxu0 %v540
      %v625 = vpop.f32.mrb[0].mxu0
      %v626 = vadd.f32 0.0, %v625
      %v627 = vpop.f32.mrb[0].mxu0
      %628 = vmatprep.mubr.f32.mxu0 0.0
      %629 = vmatmul.mubr.f32.gmra.mrb[0].mxu0 %v541
      %v630 = vpop.f32.mrb[0].mxu0
      %v631 = vadd.f32 0.0, %v630
      %v632 = vpop.f32.mrb[0].mxu0
      %633 = vdwg.mxu0
      %634 = vmatprep.subr.mxu0 0.0
      %635 = vmatpush1.msra.mxu0 %v524
      %636 = vmatprep.subr.mxu0 0.0
      %637 = vmatpush1.msra.mxu0 %v525
      %638 = vmatprep.subr.mxu0 0.0
      %639 = vmatpush1.msra.mxu0 %v526
      %640 = vmatprep.subr.mxu0 0.0
      %641 = vmatpush1.msra.mxu0 %v527
      %642 = vmatprep.subr.mxu0 0.0
      %643 = vmatpush1.msra.mxu0 %v528
      %644 = vmatprep.subr.mxu0 0.0
      %645 = vmatpush1.msra.mxu0 %v529
      %646 = vmatprep.subr.mxu0 0.0
      %647 = vmatpush1.msra.mxu0 %v530
      %648 = vmatprep.subr.mxu0 0.0
      %649 = vmatpush1.msra.mxu0 %v531
      %650 = vmatprep.subr.mxu0 0.0
      %651 = vmatpush1.msra.mxu0 %v532
      %652 = vmatprep.subr.mxu0 0.0
      %653 = vmatpush1.msra.mxu0 %v533
      %654 = vmatprep.subr.mxu0 0.0
      %655 = vmatpush1.msra.mxu0 %v534
      %656 = vmatprep.subr.mxu0 0.0
      %657 = vmatpush1.msra.mxu0 %v535
      %658 = vmatprep.subr.mxu0 0.0
      %659 = vmatpush1.msra.mxu0 %v536
      %660 = vmatprep.subr.mxu0 0.0
      %661 = vmatpush1.msra.mxu0 %v537
      %662 = vmatprep.subr.mxu0 0.0
      %663 = vmatpush1.msra.mxu0 %v538
      %664 = vmatprep.subr.mxu0 0.0
      %665 = vmatpush1.msra.mxu0 %v539
      %666 = vmatprep.subr.mxu0 0.0
      %667 = vmatpush1.msra.mxu0 0.0
      %668 = vmatprep.subr.mxu0 0.0
      %669 = vmatpush1.msra.mxu0 0.0
      %670 = vmatprep.subr.mxu0 0.0
      %671 = vmatpush1.msra.mxu0 0.0
      %672 = vmatprep.subr.mxu0 0.0
      %673 = vmatpush1.msra.mxu0 0.0
      %674 = vmatprep.subr.mxu0 0.0
      %675 = vmatpush1.msra.mxu0 0.0
      %676 = vmatprep.subr.mxu0 0.0
      %677 = vmatpush1.msra.mxu0 0.0
      %678 = vmatprep.subr.mxu0 0.0
      %679 = vmatpush1.msra.mxu0 0.0
      %680 = vmatprep.subr.mxu0 0.0
      %681 = vmatpush1.msra.mxu0 0.0
      %682 = vmatprep.subr.mxu0 0.0
      %683 = vmatpush1.msra.mxu0 0.0
      %684 = vmatprep.subr.mxu0 0.0
      %685 = vmatpush1.msra.mxu0 0.0
      %686 = vmatprep.subr.mxu0 0.0
      %687 = vmatpush1.msra.mxu0 0.0
      %688 = vmatprep.subr.mxu0 0.0
      %689 = vmatpush1.msra.mxu0 0.0
      %690 = vmatprep.subr.mxu0 0.0
      %691 = vmatpush1.msra.mxu0 0.0
      %692 = vmatprep.subr.mxu0 0.0
      %693 = vmatpush1.msra.mxu0 0.0
      %694 = vmatprep.subr.mxu0 0.0
      %695 = vmatpush1.msra.mxu0 0.0
      %696 = vmatprep.subr.mxu0 0.0
      %697 = vmatpush1.msra.mxu0 0.0
      %698 = vmatprep.mubr.f32.mxu0 0.0
      %699 = vmatmul.mubr.f32.gmra.mrb[0].mxu0 %v522
      %v700 = vpop.f32.mrb[0].mxu0
      %v701 = vadd.f32 %v626, %v700
      %v702 = vpop.f32.mrb[0].mxu0
      %703 = vmatprep.mubr.f32.mxu0 0.0
      %704 = vmatmul.mubr.f32.gmra.mrb[0].mxu0 %v523
      %v705 = vpop.f32.mrb[0].mxu0
      %v706 = vadd.f32 %v631, %v705
      %v707 = vpop.f32.mrb[0].mxu0
      %708 = vdwg.mxu0
      %v709 = vld [vmem:[#allocation2 + $0x2] sm:$0xff]
      %v710 = vld [vmem:[#allocation2 + $0xa] sm:$0xff]
      %s711 = scalar_lea.vmem %s2, 256
      %v712 = vld [vmem:[%s711] sm:$0xff]
      %v713 = vld [vmem:[%s711 + $0x8] sm:$0xff]
      %v714 = vld [vmem:[%s711 + $0x10] sm:$0xff]
      %v715 = vld [vmem:[%s711 + $0x18] sm:$0xff]
      %v716 = vld [vmem:[%s711 + $0x20] sm:$0xff]
      %v717 = vld [vmem:[%s711 + $0x28] sm:$0xff]
      %v718 = vld [vmem:[%s711 + $0x30] sm:$0xff]
      %v719 = vld [vmem:[%s711 + $0x38] sm:$0xff]
      %v720 = vld [vmem:[%s711 + $0x40] sm:$0xff]
      %v721 = vld [vmem:[%s711 + $0x48] sm:$0xff]
      %v722 = vld [vmem:[%s711 + $0x50] sm:$0xff]
      %v723 = vld [vmem:[%s711 + $0x58] sm:$0xff]
      %v724 = vld [vmem:[%s711 + $0x60] sm:$0xff]
      %v725 = vld [vmem:[%s711 + $0x68] sm:$0xff]
      %v726 = vld [vmem:[%s711 + $0x70] sm:$0xff]
      %v727 = vld [vmem:[%s711 + $0x78] sm:$0xff]
      %728 = vmatprep.subr.mxu0 0.0
      %729 = vmatpush1.msra.mxu0 %v712
      %730 = vmatprep.subr.mxu0 0.0
      %731 = vmatpush1.msra.mxu0 %v713
      %732 = vmatprep.subr.mxu0 0.0
      %733 = vmatpush1.msra.mxu0 %v714
      %734 = vmatprep.subr.mxu0 0.0
      %735 = vmatpush1.msra.mxu0 %v715
      %736 = vmatprep.subr.mxu0 0.0
      %737 = vmatpush1.msra.mxu0 %v716
      %738 = vmatprep.subr.mxu0 0.0
      %739 = vmatpush1.msra.mxu0 %v717
      %740 = vmatprep.subr.mxu0 0.0
      %741 = vmatpush1.msra.mxu0 %v718
      %742 = vmatprep.subr.mxu0 0.0
      %743 = vmatpush1.msra.mxu0 %v719
      %744 = vmatprep.subr.mxu0 0.0
      %745 = vmatpush1.msra.mxu0 %v720
      %746 = vmatprep.subr.mxu0 0.0
      %747 = vmatpush1.msra.mxu0 %v721
      %748 = vmatprep.subr.mxu0 0.0
      %749 = vmatpush1.msra.mxu0 %v722
      %750 = vmatprep.subr.mxu0 0.0
      %751 = vmatpush1.msra.mxu0 %v723
      %752 = vmatprep.subr.mxu0 0.0
      %753 = vmatpush1.msra.mxu0 %v724
      %754 = vmatprep.subr.mxu0 0.0
      %755 = vmatpush1.msra.mxu0 %v725
      %756 = vmatprep.subr.mxu0 0.0
      %757 = vmatpush1.msra.mxu0 %v726
      %758 = vmatprep.subr.mxu0 0.0
      %759 = vmatpush1.msra.mxu0 %v727
      %760 = vmatprep.subr.mxu0 0.0
      %761 = vmatpush1.msra.mxu0 0.0
      %762 = vmatprep.subr.mxu0 0.0
      %763 = vmatpush1.msra.mxu0 0.0
      %764 = vmatprep.subr.mxu0 0.0
      %765 = vmatpush1.msra.mxu0 0.0
      %766 = vmatprep.subr.mxu0 0.0
      %767 = vmatpush1.msra.mxu0 0.0
      %768 = vmatprep.subr.mxu0 0.0
      %769 = vmatpush1.msra.mxu0 0.0
      %770 = vmatprep.subr.mxu0 0.0
      %771 = vmatpush1.msra.mxu0 0.0
      %772 = vmatprep.subr.mxu0 0.0
      %773 = vmatpush1.msra.mxu0 0.0
      %774 = vmatprep.subr.mxu0 0.0
      %775 = vmatpush1.msra.mxu0 0.0
      %776 = vmatprep.subr.mxu0 0.0
      %777 = vmatpush1.msra.mxu0 0.0
      %778 = vmatprep.subr.mxu0 0.0
      %779 = vmatpush1.msra.mxu0 0.0
      %780 = vmatprep.subr.mxu0 0.0
      %781 = vmatpush1.msra.mxu0 0.0
      %782 = vmatprep.subr.mxu0 0.0
      %783 = vmatpush1.msra.mxu0 0.0
      %784 = vmatprep.subr.mxu0 0.0
      %785 = vmatpush1.msra.mxu0 0.0
      %786 = vmatprep.subr.mxu0 0.0
      %787 = vmatpush1.msra.mxu0 0.0
      %788 = vmatprep.subr.mxu0 0.0
      %789 = vmatpush1.msra.mxu0 0.0
      %790 = vmatprep.subr.mxu0 0.0
      %791 = vmatpush1.msra.mxu0 0.0
      %792 = vmatprep.mubr.f32.mxu0 0.0
      %793 = vmatmul.mubr.f32.gmra.mrb[0].mxu0 %v709
      %v794 = vpop.f32.mrb[0].mxu0
      %v795 = vadd.f32 0.0, %v794
      %v796 = vpop.f32.mrb[0].mxu0
      %797 = vmatprep.mubr.f32.mxu0 0.0
      %798 = vmatmul.mubr.f32.gmra.mrb[0].mxu0 %v710
      %v799 = vpop.f32.mrb[0].mxu0
      %v800 = vadd.f32 0.0, %v799
      %v801 = vpop.f32.mrb[0].mxu0
      %802 = vdwg.mxu0
      %v803 = vadd.f32 %v701, %v795
      %v804 = vadd.f32 %v706, %v800
      %v805 = vadd.f32 %v803, %v804
      %v806 = vrot.slane %v805, 4
      %v807 = vadd.f32 %v805, %v806
      %v808 = vrot.slane %v807, 2
      %v809 = vadd.f32 %v807, %v808
      %v810 = vrot.slane %v809, 1
      %v811 = vadd.f32 %v809, %v810
      %v812 = vld [vmem:[%s3] sm:$0xff]
      %v813 = vld [vmem:[%s3 + $0x8] sm:$0xff]
      %v814 = vld [vmem:[%s3 + $0x10] sm:$0xff]
      %v815 = vld [vmem:[%s3 + $0x18] sm:$0xff]
      %v816 = vld [vmem:[%s3 + $0x20] sm:$0xff]
      %v817 = vld [vmem:[%s3 + $0x28] sm:$0xff]
      %v818 = vld [vmem:[%s3 + $0x30] sm:$0xff]
      %v819 = vld [vmem:[%s3 + $0x38] sm:$0xff]
      %v820 = vld [vmem:[%s3 + $0x40] sm:$0xff]
      %v821 = vld [vmem:[%s3 + $0x48] sm:$0xff]
      %v822 = vld [vmem:[%s3 + $0x50] sm:$0xff]
      %v823 = vld [vmem:[%s3 + $0x58] sm:$0xff]
      %v824 = vld [vmem:[%s3 + $0x60] sm:$0xff]
      %v825 = vld [vmem:[%s3 + $0x68] sm:$0xff]
      %v826 = vld [vmem:[%s3 + $0x70] sm:$0xff]
      %v827 = vld [vmem:[%s3 + $0x78] sm:$0xff]
      %828 = vmatprep.subr.mxu0 0.0
      %829 = vmatpush1.msra.mxu0 %v812
      %830 = vmatprep.subr.mxu0 0.0
      %831 = vmatpush1.msra.mxu0 %v813
      %832 = vmatprep.subr.mxu0 0.0
      %833 = vmatpush1.msra.mxu0 %v814
      %834 = vmatprep.subr.mxu0 0.0
      %835 = vmatpush1.msra.mxu0 %v815
      %836 = vmatprep.subr.mxu0 0.0
      %837 = vmatpush1.msra.mxu0 %v816
      %838 = vmatprep.subr.mxu0 0.0
      %839 = vmatpush1.msra.mxu0 %v817
      %840 = vmatprep.subr.mxu0 0.0
      %841 = vmatpush1.msra.mxu0 %v818
      %842 = vmatprep.subr.mxu0 0.0
      %843 = vmatpush1.msra.mxu0 %v819
      %844 = vmatprep.subr.mxu0 0.0
      %845 = vmatpush1.msra.mxu0 %v820
      %846 = vmatprep.subr.mxu0 0.0
      %847 = vmatpush1.msra.mxu0 %v821
      %848 = vmatprep.subr.mxu0 0.0
      %849 = vmatpush1.msra.mxu0 %v822
      %850 = vmatprep.subr.mxu0 0.0
      %851 = vmatpush1.msra.mxu0 %v823
      %852 = vmatprep.subr.mxu0 0.0
      %853 = vmatpush1.msra.mxu0 %v824
      %854 = vmatprep.subr.mxu0 0.0
      %855 = vmatpush1.msra.mxu0 %v825
      %856 = vmatprep.subr.mxu0 0.0
      %857 = vmatpush1.msra.mxu0 %v826
      %858 = vmatprep.subr.mxu0 0.0
      %859 = vmatpush1.msra.mxu0 %v827
      %860 = vmatprep.subr.mxu0 0.0
      %861 = vmatpush1.msra.mxu0 0.0
      %862 = vmatprep.subr.mxu0 0.0
      %863 = vmatpush1.msra.mxu0 0.0
      %864 = vmatprep.subr.mxu0 0.0
      %865 = vmatpush1.msra.mxu0 0.0
      %866 = vmatprep.subr.mxu0 0.0
      %867 = vmatpush1.msra.mxu0 0.0
      %868 = vmatprep.subr.mxu0 0.0
      %869 = vmatpush1.msra.mxu0 0.0
      %870 = vmatprep.subr.mxu0 0.0
      %871 = vmatpush1.msra.mxu0 0.0
      %872 = vmatprep.subr.mxu0 0.0
      %873 = vmatpush1.msra.mxu0 0.0
      %874 = vmatprep.subr.mxu0 0.0
      %875 = vmatpush1.msra.mxu0 0.0
      %876 = vmatprep.subr.mxu0 0.0
      %877 = vmatpush1.msra.mxu0 0.0
      %878 = vmatprep.subr.mxu0 0.0
      %879 = vmatpush1.msra.mxu0 0.0
      %880 = vmatprep.subr.mxu0 0.0
      %881 = vmatpush1.msra.mxu0 0.0
      %882 = vmatprep.subr.mxu0 0.0
      %883 = vmatpush1.msra.mxu0 0.0
      %884 = vmatprep.subr.mxu0 0.0
      %885 = vmatpush1.msra.mxu0 0.0
      %886 = vmatprep.subr.mxu0 0.0
      %887 = vmatpush1.msra.mxu0 0.0
      %888 = vmatprep.subr.mxu0 0.0
      %889 = vmatpush1.msra.mxu0 0.0
      %890 = vmatprep.subr.mxu0 0.0
      %891 = vmatpush1.msra.mxu0 0.0
      %892 = vmatprep.mubr.f32.mxu0 0.0
      %893 = vmatmul.mubr.f32.gmra.mrb[0].mxu0 %v811
      %v894 = vpop.f32.mrb[0].mxu0
      %v895 = vadd.f32 0.0, %v894
      %v896 = vpop.f32.mrb[0].mxu0
      %897 = vdwg.mxu0
      %v898 = vmax.f32 %v895, 0.0
      %v899 = vld [vmem:[%s4] sm:$0x3]
      %vm900 = vcmask 15360
      %v902 = vsel %vm900, %v898, 0
      %vm904 = vcmask 1041408
      %v906 = vsel %vm904, %v899, 0
      %908 = vmatprep.subr.mxu0 0.0
      %909 = vmatpush1.msra.mxu0 %v906
      %910 = vmatprep.subr.mxu0 0.0
      %911 = vmatpush1.msra.mxu0 0.0
      %912 = vmatprep.subr.mxu0 0.0
      %913 = vmatpush1.msra.mxu0 0.0
      %914 = vmatprep.subr.mxu0 0.0
      %915 = vmatpush1.msra.mxu0 0.0
      %916 = vmatprep.subr.mxu0 0.0
      %917 = vmatpush1.msra.mxu0 0.0
      %918 = vmatprep.subr.mxu0 0.0
      %919 = vmatpush1.msra.mxu0 0.0
      %920 = vmatprep.subr.mxu0 0.0
      %921 = vmatpush1.msra.mxu0 0.0
      %922 = vmatprep.subr.mxu0 0.0
      %923 = vmatpush1.msra.mxu0 0.0
      %924 = vmatprep.subr.mxu0 0.0
      %925 = vmatpush1.msra.mxu0 0.0
      %926 = vmatprep.subr.mxu0 0.0
      %927 = vmatpush1.msra.mxu0 0.0
      %928 = vmatprep.subr.mxu0 0.0
      %929 = vmatpush1.msra.mxu0 0.0
      %930 = vmatprep.subr.mxu0 0.0
      %931 = vmatpush1.msra.mxu0 0.0
      %932 = vmatprep.subr.mxu0 0.0
      %933 = vmatpush1.msra.mxu0 0.0
      %934 = vmatprep.subr.mxu0 0.0
      %935 = vmatpush1.msra.mxu0 0.0
      %936 = vmatprep.subr.mxu0 0.0
      %937 = vmatpush1.msra.mxu0 0.0
      %938 = vmatprep.subr.mxu0 0.0
      %939 = vmatpush1.msra.mxu0 0.0
      %940 = vmatprep.subr.mxu0 0.0
      %941 = vmatpush1.msra.mxu0 0.0
      %942 = vmatprep.subr.mxu0 0.0
      %943 = vmatpush1.msra.mxu0 0.0
      %944 = vmatprep.subr.mxu0 0.0
      %945 = vmatpush1.msra.mxu0 0.0
      %946 = vmatprep.subr.mxu0 0.0
      %947 = vmatpush1.msra.mxu0 0.0
      %948 = vmatprep.subr.mxu0 0.0
      %949 = vmatpush1.msra.mxu0 0.0
      %950 = vmatprep.subr.mxu0 0.0
      %951 = vmatpush1.msra.mxu0 0.0
      %952 = vmatprep.subr.mxu0 0.0
      %953 = vmatpush1.msra.mxu0 0.0
      %954 = vmatprep.subr.mxu0 0.0
      %955 = vmatpush1.msra.mxu0 0.0
      %956 = vmatprep.subr.mxu0 0.0
      %957 = vmatpush1.msra.mxu0 0.0
      %958 = vmatprep.subr.mxu0 0.0
      %959 = vmatpush1.msra.mxu0 0.0
      %960 = vmatprep.subr.mxu0 0.0
      %961 = vmatpush1.msra.mxu0 0.0
      %962 = vmatprep.subr.mxu0 0.0
      %963 = vmatpush1.msra.mxu0 0.0
      %964 = vmatprep.subr.mxu0 0.0
      %965 = vmatpush1.msra.mxu0 0.0
      %966 = vmatprep.subr.mxu0 0.0
      %967 = vmatpush1.msra.mxu0 0.0
      %968 = vmatprep.subr.mxu0 0.0
      %969 = vmatpush1.msra.mxu0 0.0
      %970 = vmatprep.subr.mxu0 0.0
      %971 = vmatpush1.msra.mxu0 0.0
      %972 = vmatprep.mubr.f32.mxu0 0.0
      %973 = vmatmul.mubr.f32.gmra.mrb[0].mxu0 %v902
      %v974 = vpop.f32.mrb[0].mxu0
      %v975 = vadd.f32 0.0, %v974
      %v976 = vpop.f32.mrb[0].mxu0
      %977 = vdwg.mxu0
      %v978 = vxor.u32 %v975, 2147483648
      %v979 = vmul.f32 %v978, 1.442695
      %v980 = vpow.pop %v979
      %v981 = vadd.f32 %v980, 1.0
      %v982 = vrcp.pop %v981
      %v983 = vmul.f32 1.0, %v982
      %v984 = vlaneseq
      %v985 = vshrl.u32 %v984, 7
      %v986 = vsub.s32 0, %v985
      %v987 = vrot.slane %v983, %v986
      %v988 = vmul.f32 %v803, %v987
      %v989 = vmul.f32 %v804, %v987
      %v990 = vadd.f32 %v988, %v227
      %v991 = vadd.f32 %v989, %v228
      %992 = vst [vmem:[%s224] sm:$0xff] %v990
      %993 = vst [vmem:[%s224 + $0x8] sm:$0xff] %v991
      %p994 = scmp.lt.s32.totalorder %s16, 1
      %s995 = scalar_select %p994, %s16, 1
      %s996 = smul.addr %s995, 2
      %s997 = smul.addr %s996, 8
      %s998 = scalar_lea.vmem %s5, %s997
      // Predicated region
      $region41: #{decoder_forward.11} parent=39 // pred_check
        %p999 = pneg %p144
      $region42: #{decoder_forward.11} parent=39 // pred_check_branch
        %1001 = sbr.rel (%p999) target = $region44
      $region43: #{decoder_forward.11} parent=39 // pred_region
        _
      $region44: #{decoder_forward.11} parent=39 // pred_fallthru
        _
    $region40: #{decoder_forward.11} parent=5 // pred_fallthru
      _
    %p1002 = scmp.le.s32.totalorder 2, %s11
    // Predicated region
    $region45: #{decoder_forward.11} parent=5 // pred_check
      %p1003 = pneg %p1002
    $region46: #{decoder_forward.11} parent=5 // pred_check_branch
      %1005 = sbr.rel (%p1003) target = $region48
    $region47: #{decoder_forward.11} parent=5 // pred_region
      %s1006 = ssub.s32 %s11, 2
      // Predicated region
      $region49: #{decoder_forward.11} parent=47 // pred_check
        %p1007 = pneg %p150
      $region50: #{decoder_forward.11} parent=47 // pred_check_branch
        %1009 = sbr.rel (%p1007) target = $region52
      $region51: #{decoder_forward.11} parent=47 // pred_region
        %p1010 = scmp.lt.s32.totalorder %s17, 1
        %s1011 = scalar_select %p1010, %s17, 1
        %s1012 = smul.addr %s1011, 2
        %s1013 = smul.addr %s1012, 8
        %s1014 = scalar_lea.vmem %s5, %s1013
      $region52: #{decoder_forward.11} parent=47 // pred_fallthru
        _
    $region48: #{decoder_forward.11} parent=5 // pred_fallthru
      _
  $region6: #{decoder_forward.11} parent=0 // loop_footer
    %s15 = sadd.s32 1, %s11
  $region7: #{decoder_forward.11} parent=0 // loop_footer_branch
    %10 = sbr.rel target = $region3
  $region8: #{decoder_forward.11} parent=0 // loop_exit
    _

// kernel: decoder_forward.12
$region0: #{decoder_forward.12}
  #allocation0 [shape = 'u32[]', space=smem, size = 0x4, offset = 0x4, fixed_abs, tag = 'smem constant byte address 0x4 - core index']
  #allocation1 [shape = 'u32[144,128]{1,0:T(1,128)}', space=vmem, size = 0x12000, scoped, tag = 'internal scratch']
  %s0 = inlined_call_operand.vmem [shape: f32[2,8,96], index: 0, kind: input, shape index: {}]
  %s1 = inlined_call_operand.vmem [shape: f32[2,16,128], index: 1, kind: input, shape index: {}, may-alias: {1,4}]
  %s2 = inlined_call_operand.vmem [shape: f32[16,8], index: 2, kind: input, shape index: {}]
  %s3 = inlined_call_operand.vmem [shape: f32[96,128], index: 3, kind: input, shape index: {}]
  %s4 = inlined_call_operand.vmem [shape: f32[2,16,128], index: 4, kind: output, shape index: {}, may-alias: {1,4}]
  %s5 = sld [smem:[#allocation0]]
  $region49: #{decoder_forward.12} parent=0
    _
  %s7 = ssub.s32 1, %s5
  %s8 = scalar_select 0, %s7, %s5
  loop: start=0, step=1, limit=4
  $region2: #{decoder_forward.12} parent=0 // loop_pre_header
    _
  $region3: #{decoder_forward.12} parent=0 // loop_header
    %s10 = sphi 0, %s14
    %p11 = scmp.ge.s32.totalorder %s10, 4
    %s20 = sphi 0, %s22
    %s23 = sphi 0, %s20
    %s24 = sphi 0, %s23
    %s40 = sphi 0, %s24
    %s46 = sphi 0, %s48
    %s49 = sphi 0, %s46
    %s50 = sphi 0, %s49
    %s66 = sphi 0, %s50
    %s70 = sphi 0, %s70
    %s72 = sphi 0, %s70
    %s73 = sphi 0, %s72
    %s87 = sphi 0, %s73
    %s91 = sphi 0, %s91
    %s93 = sphi 0, %s91
    %s94 = sphi 0, %s93
    %s108 = sphi 0, %s94
    %s114 = sphi 0, %s116
    %s117 = sphi 0, %s114
    %s118 = sphi 0, %s117
    %s134 = sphi 0, %s118
  $region4: #{decoder_forward.12} parent=0 // loop_header_branch
    %13 = sbr.rel (%p11) target = $region8
  $region5: #{decoder_forward.12} parent=0 // loop_body
    %s15 = ssub.s32 %s10, 1
    %s16 = ssub.s32 %s10, 2
    %s17 = sadd.s32 %s10, 1
    %s18 = ssub.s32 %s10, %s17
    %p19 = scmp.eq.s32.totalorder %s18, 0
    %s21 = sadd.s32 %s20, 1
    %s22 = scalar_select %p19, %s20, %s21
    %p25 = pneg %p19
    %p26 = scmp.eq.s32.totalorder %s10, 1
    %p27 = por %p25, %p26
    %p28 = scmp.ne.s32.totalorder %s20, %s23
    %p29 = scmp.eq.s32.totalorder %s10, 0
    %p30 = por %p28, %p29
    %p31 = scmp.ne.s32.totalorder %s20, %s23
    %p32 = scmp.eq.s32.totalorder %s15, 1
    %p33 = por %p31, %p32
    %p34 = scmp.ne.s32.totalorder %s23, %s24
    %p35 = scmp.eq.s32.totalorder %s15, 0
    %p36 = por %p34, %p35
    %p37 = scmp.ne.s32.totalorder %s23, %s24
    %p38 = scmp.eq.s32.totalorder %s16, 1
    %p39 = por %p37, %p38
    %p41 = scmp.ne.s32.totalorder %s24, %s40
    %p42 = scmp.eq.s32.totalorder %s16, 0
    %p43 = por %p41, %p42
    %s44 = ssub.s32 %s10, %s17
    %p45 = scmp.eq.s32.totalorder %s44, 0
    %s47 = sadd.s32 %s46, 1
    %s48 = scalar_select %p45, %s46, %s47
    %p51 = pneg %p45
    %p52 = scmp.eq.s32.totalorder %s10, 1
    %p53 = por %p51, %p52
    %p54 = scmp.ne.s32.totalorder %s46, %s49
    %p55 = scmp.eq.s32.totalorder %s10, 0
    %p56 = por %p54, %p55
    %p57 = scmp.ne.s32.totalorder %s46, %s49
    %p58 = scmp.eq.s32.totalorder %s15, 1
    %p59 = por %p57, %p58
    %p60 = scmp.ne.s32.totalorder %s49, %s50
    %p61 = scmp.eq.s32.totalorder %s15, 0
    %p62 = por %p60, %p61
    %p63 = scmp.ne.s32.totalorder %s49, %s50
    %p64 = scmp.eq.s32.totalorder %s16, 1
    %p65 = por %p63, %p64
    %p67 = scmp.ne.s32.totalorder %s50, %s66
    %p68 = scmp.eq.s32.totalorder %s16, 0
    %p69 = por %p67, %p68
    %s71 = sadd.s32 %s70, 1
    %p74 = scmp.eq.s32.totalorder %s10, 1
    %p75 = scmp.ne.s32.totalorder %s70, %s72
    %p76 = scmp.eq.s32.totalorder %s10, 0
    %p77 = por %p75, %p76
    %p78 = scmp.ne.s32.totalorder %s70, %s72
    %p79 = scmp.eq.s32.totalorder %s15, 1
    %p80 = por %p78, %p79
    %p81 = scmp.ne.s32.totalorder %s72, %s73
    %p82 = scmp.eq.s32.totalorder %s15, 0
    %p83 = por %p81, %p82
    %p84 = scmp.ne.s32.totalorder %s72, %s73
    %p85 = scmp.eq.s32.totalorder %s16, 1
    %p86 = por %p84, %p85
    %p88 = scmp.ne.s32.totalorder %s73, %s87
    %p89 = scmp.eq.s32.totalorder %s16, 0
    %p90 = por %p88, %p89
    %s92 = sadd.s32 %s91, 1
    %p95 = scmp.eq.s32.totalorder %s10, 1
    %p96 = scmp.ne.s32.totalorder %s91, %s93
    %p97 = scmp.eq.s32.totalorder %s10, 0
    %p98 = por %p96, %p97
    %p99 = scmp.ne.s32.totalorder %s91, %s93
    %p100 = scmp.eq.s32.totalorder %s15, 1
    %p101 = por %p99, %p100
    %p102 = scmp.ne.s32.totalorder %s93, %s94
    %p103 = scmp.eq.s32.totalorder %s15, 0
    %p104 = por %p102, %p103
    %p105 = scmp.ne.s32.totalorder %s93, %s94
    %p106 = scmp.eq.s32.totalorder %s16, 1
    %p107 = por %p105, %p106
    %p109 = scmp.ne.s32.totalorder %s94, %s108
    %p110 = scmp.eq.s32.totalorder %s16, 0
    %p111 = por %p109, %p110
    %s112 = ssub.s32 %s10, %s17
    %p113 = scmp.eq.s32.totalorder %s112, 0
    %s115 = sadd.s32 %s114, 1
    %s116 = scalar_select %p113, %s114, %s115
    %p119 = pneg %p113
    %p120 = scmp.eq.s32.totalorder %s10, 1
    %p121 = por %p119, %p120
    %p122 = scmp.ne.s32.totalorder %s114, %s117
    %p123 = scmp.eq.s32.totalorder %s10, 0
    %p124 = por %p122, %p123
    %p125 = scmp.ne.s32.totalorder %s114, %s117
    %p126 = scmp.eq.s32.totalorder %s15, 1
    %p127 = por %p125, %p126
    %p128 = scmp.ne.s32.totalorder %s117, %s118
    %p129 = scmp.eq.s32.totalorder %s15, 0
    %p130 = por %p128, %p129
    %p131 = scmp.ne.s32.totalorder %s117, %s118
    %p132 = scmp.eq.s32.totalorder %s16, 1
    %p133 = por %p131, %p132
    %p135 = scmp.ne.s32.totalorder %s118, %s134
    %p136 = scmp.eq.s32.totalorder %s16, 0
    %p137 = por %p135, %p136
    %p138 = scmp.le.s32.totalorder 1, %s10
    %p139 = scmp.lt.s32.totalorder %s10, 3
    %p140 = pnand %p138, %p139
    %p141 = pneg %p140
    // Predicated region
    $region9: #{decoder_forward.12} parent=5 // pred_check
      _
    $region10: #{decoder_forward.12} parent=5 // pred_check_branch
      %143 = sbr.rel (%p140) target = $region12
    $region11: #{decoder_forward.12} parent=5 // pred_region
      %s144 = ssub.s32 %s10, 1
      // Predicated region
      $region13: #{decoder_forward.12} parent=11 // pred_check
        %p145 = pneg %p83
      $region14: #{decoder_forward.12} parent=11 // pred_check_branch
        %147 = sbr.rel (%p145) target = $region16
      $region15: #{decoder_forward.12} parent=11 // pred_region
        _
      $region16: #{decoder_forward.12} parent=11 // pred_fallthru
        _
      // Predicated region
      $region17: #{decoder_forward.12} parent=11 // pred_check
        %p148 = pneg %p104
      $region18: #{decoder_forward.12} parent=11 // pred_check_branch
        %150 = sbr.rel (%p148) target = $region20
      $region19: #{decoder_forward.12} parent=11 // pred_region
        _
      $region20: #{decoder_forward.12} parent=11 // pred_fallthru
        _
    $region12: #{decoder_forward.12} parent=5 // pred_fallthru
      _
    %p151 = scmp.lt.s32.totalorder %s10, 2
    // Predicated region
    $region21: #{decoder_forward.12} parent=5 // pred_check
      %p152 = pneg %p151
    $region22: #{decoder_forward.12} parent=5 // pred_check_branch
      %154 = sbr.rel (%p152) target = $region24
    $region23: #{decoder_forward.12} parent=5 // pred_region
      // Predicated region
      $region25: #{decoder_forward.12} parent=23 // pred_check
        %p155 = pneg %p30
      $region26: #{decoder_forward.12} parent=23 // pred_check_branch
        %157 = sbr.rel (%p155) target = $region28
      $region27: #{decoder_forward.12} parent=23 // pred_region
        %p158 = scmp.lt.s32.totalorder %s10, 1
        %s159 = scalar_select %p158, %s10, 1
        %s160 = smul.addr %s159, 8
        %s161 = scalar_lea.vmem %s0, %s160
      $region28: #{decoder_forward.12} parent=23 // pred_fallthru
        _
      // Predicated region
      $region29: #{decoder_forward.12} parent=23 // pred_check
        %p162 = pneg %p56
      $region30: #{decoder_forward.12} parent=23 // pred_check_branch
        %164 = sbr.rel (%p162) target = $region32
      $region31: #{decoder_forward.12} parent=23 // pred_region
        %p165 = scmp.lt.s32.totalorder %s10, 1
        %s166 = scalar_select %p165, %s10, 1
        %s167 = smul.addr %s166, 2
        %s168 = smul.addr %s167, 8
        %s169 = scalar_lea.vmem %s1, %s168
      $region32: #{decoder_forward.12} parent=23 // pred_fallthru
        _
    $region24: #{decoder_forward.12} parent=5 // pred_fallthru
      _
    %p170 = scmp.le.s32.totalorder 1, %s10
    %p171 = scmp.lt.s32.totalorder %s10, 3
    %p172 = pnand %p170, %p171
    %p173 = pneg %p172
    // Predicated region
    $region33: #{decoder_forward.12} parent=5 // pred_check
      _
    $region34: #{decoder_forward.12} parent=5 // pred_check_branch
      %175 = sbr.rel (%p172) target = $region36
    $region35: #{decoder_forward.12} parent=5 // pred_region
      %s176 = ssub.s32 %s10, 1
      %p177 = scmp.lt.s32.totalorder %s15, 1
      %s178 = scalar_select %p177, %s15, 1
      %s179 = smul.addr %s178, 8
      %s180 = scalar_lea.vmem %s0, %s179
      %p181 = pneg %p36
      %p182 = pneg %p33
      %p183 = scmp.lt.s32.totalorder %s15, 1
      %s184 = scalar_select %p183, %s15, 1
      %s185 = smul.addr %s184, 2
      %s186 = smul.addr %s185, 8
      %s187 = scalar_lea.vmem %s1, %s186
      %p188 = pneg %p62
      %p189 = pneg %p59
      %p190 = pneg %p83
      %p191 = pneg %p80
      %p192 = pneg %p104
      %p193 = pneg %p101
      %p194 = pneg %p130
      %p195 = pneg %p127
      %p196 = scmp.lt.s32.totalorder %s15, 1
      %s197 = scalar_select %p196, %s15, 1
      %s198 = smul.addr %s197, 2
      %s199 = smul.addr %s198, 8
      %s200 = scalar_lea.vmem %s4, %s199
      %p201 = scmp.lt.s32.totalorder %s15, 1
      %s202 = scalar_select %p201, %s15, 1
      %s203 = smul.addr %s202, 8
      %s204 = scalar_lea.vmem %s0, %s203
      %p205 = scmp.lt.s32.totalorder %s15, 1
      %s206 = scalar_select %p205, %s15, 1
      %s207 = smul.addr %s206, 2
      %s208 = smul.addr %s207, 8
      %s209 = scalar_lea.vmem %s1, %s208
      %p210 = scmp.lt.s32.totalorder %s15, 1
      %s211 = scalar_select %p210, %s15, 1
      %s212 = smul.addr %s211, 2
      %s213 = smul.addr %s212, 8
      %s214 = scalar_lea.vmem %s4, %s213
      %v215 = vld [vmem:[%s2] sm:$0xff]
      %v216 = vld [vmem:[%s2 + $0x8] sm:$0xff]
      %v217 = vld [vmem:[%s204] sm:$0xff]
      %vm218 = vcmask 64512
      %v220 = vsel %vm218, %v215, 0
      %v223 = vsel %vm218, %v216, 0
      %225 = vmatprep.subr.mxu0 0.0
      %226 = vmatpush1.msra.mxu0 %v217
      %227 = vmatprep.subr.mxu0 0.0
      %228 = vmatpush1.msra.mxu0 0.0
      %229 = vmatprep.subr.mxu0 0.0
      %230 = vmatpush1.msra.mxu0 0.0
      %231 = vmatprep.subr.mxu0 0.0
      %232 = vmatpush1.msra.mxu0 0.0
      %233 = vmatprep.subr.mxu0 0.0
      %234 = vmatpush1.msra.mxu0 0.0
      %235 = vmatprep.subr.mxu0 0.0
      %236 = vmatpush1.msra.mxu0 0.0
      %237 = vmatprep.subr.mxu0 0.0
      %238 = vmatpush1.msra.mxu0 0.0
      %239 = vmatprep.subr.mxu0 0.0
      %240 = vmatpush1.msra.mxu0 0.0
      %241 = vmatprep.subr.mxu0 0.0
      %242 = vmatpush1.msra.mxu0 0.0
      %243 = vmatprep.subr.mxu0 0.0
      %244 = vmatpush1.msra.mxu0 0.0
      %245 = vmatprep.subr.mxu0 0.0
      %246 = vmatpush1.msra.mxu0 0.0
      %247 = vmatprep.subr.mxu0 0.0
      %248 = vmatpush1.msra.mxu0 0.0
      %249 = vmatprep.subr.mxu0 0.0
      %250 = vmatpush1.msra.mxu0 0.0
      %251 = vmatprep.subr.mxu0 0.0
      %252 = vmatpush1.msra.mxu0 0.0
      %253 = vmatprep.subr.mxu0 0.0
      %254 = vmatpush1.msra.mxu0 0.0
      %255 = vmatprep.subr.mxu0 0.0
      %256 = vmatpush1.msra.mxu0 0.0
      %257 = vmatprep.subr.mxu0 0.0
      %258 = vmatpush1.msra.mxu0 0.0
      %259 = vmatprep.subr.mxu0 0.0
      %260 = vmatpush1.msra.mxu0 0.0
      %261 = vmatprep.subr.mxu0 0.0
      %262 = vmatpush1.msra.mxu0 0.0
      %263 = vmatprep.subr.mxu0 0.0
      %264 = vmatpush1.msra.mxu0 0.0
      %265 = vmatprep.subr.mxu0 0.0
      %266 = vmatpush1.msra.mxu0 0.0
      %267 = vmatprep.subr.mxu0 0.0
      %268 = vmatpush1.msra.mxu0 0.0
      %269 = vmatprep.subr.mxu0 0.0
      %270 = vmatpush1.msra.mxu0 0.0
      %271 = vmatprep.subr.mxu0 0.0
      %272 = vmatpush1.msra.mxu0 0.0
      %273 = vmatprep.subr.mxu0 0.0
      %274 = vmatpush1.msra.mxu0 0.0
      %275 = vmatprep.subr.mxu0 0.0
      %276 = vmatpush1.msra.mxu0 0.0
      %277 = vmatprep.subr.mxu0 0.0
      %278 = vmatpush1.msra.mxu0 0.0
      %279 = vmatprep.subr.mxu0 0.0
      %280 = vmatpush1.msra.mxu0 0.0
      %281 = vmatprep.subr.mxu0 0.0
      %282 = vmatpush1.msra.mxu0 0.0
      %283 = vmatprep.subr.mxu0 0.0
      %284 = vmatpush1.msra.mxu0 0.0
      %285 = vmatprep.subr.mxu0 0.0
      %286 = vmatpush1.msra.mxu0 0.0
      %287 = vmatprep.subr.mxu0 0.0
      %288 = vmatpush1.msra.mxu0 0.0
      %289 = vmatprep.mubr.f32.mxu0 0.0
      %290 = vmatmul.mubr.f32.gmra.mrb[0].mxu0 %v220
      %v291 = vpop.f32.mrb[0].mxu0
      %v292 = vadd.f32 0.0, %v291
      %v293 = vpop.f32.mrb[0].mxu0
      %294 = vmatprep.mubr.f32.mxu0 0.0
      %295 = vmatmul.mubr.f32.gmra.mrb[0].mxu0 %v223
      %v296 = vpop.f32.mrb[0].mxu0
      %v297 = vadd.f32 0.0, %v296
      %v298 = vpop.f32.mrb[0].mxu0
      %299 = vdwg.mxu0
      %v300 = vld [vmem:[%s3] sm:$0xff]
      %v301 = vld [vmem:[%s3 + $0x8] sm:$0xff]
      %v302 = vld [vmem:[%s3 + $0x10] sm:$0xff]
      %v303 = vld [vmem:[%s3 + $0x18] sm:$0xff]
      %v304 = vld [vmem:[%s3 + $0x20] sm:$0xff]
      %v305 = vld [vmem:[%s3 + $0x28] sm:$0xff]
      %v306 = vld [vmem:[%s3 + $0x30] sm:$0xff]
      %v307 = vld [vmem:[%s3 + $0x38] sm:$0xff]
      %v308 = vld [vmem:[%s3 + $0x40] sm:$0xff]
      %v309 = vld [vmem:[%s3 + $0x48] sm:$0xff]
      %v310 = vld [vmem:[%s3 + $0x50] sm:$0xff]
      %v311 = vld [vmem:[%s3 + $0x58] sm:$0xff]
      %v312 = vld [vmem:[%s209] sm:$0xff]
      %v313 = vld [vmem:[%s209 + $0x8] sm:$0xff]
      %vm314 = vcmask 785408
      %v316 = vsel %vm314, %v292, 0
      %v319 = vsel %vm314, %v297, 0
      %321 = vmatprep.subr.mxu0 0.0
      %322 = vmatpush1.msra.mxu0 %v300
      %323 = vmatprep.subr.mxu0 0.0
      %324 = vmatpush1.msra.mxu0 %v301
      %325 = vmatprep.subr.mxu0 0.0
      %326 = vmatpush1.msra.mxu0 %v302
      %327 = vmatprep.subr.mxu0 0.0
      %328 = vmatpush1.msra.mxu0 %v303
      %329 = vmatprep.subr.mxu0 0.0
      %330 = vmatpush1.msra.mxu0 %v304
      %331 = vmatprep.subr.mxu0 0.0
      %332 = vmatpush1.msra.mxu0 %v305
      %333 = vmatprep.subr.mxu0 0.0
      %334 = vmatpush1.msra.mxu0 %v306
      %335 = vmatprep.subr.mxu0 0.0
      %336 = vmatpush1.msra.mxu0 %v307
      %337 = vmatprep.subr.mxu0 0.0
      %338 = vmatpush1.msra.mxu0 %v308
      %339 = vmatprep.subr.mxu0 0.0
      %340 = vmatpush1.msra.mxu0 %v309
      %341 = vmatprep.subr.mxu0 0.0
      %342 = vmatpush1.msra.mxu0 %v310
      %343 = vmatprep.subr.mxu0 0.0
      %344 = vmatpush1.msra.mxu0 %v311
      %345 = vmatprep.subr.mxu0 0.0
      %346 = vmatpush1.msra.mxu0 0.0
      %347 = vmatprep.subr.mxu0 0.0
      %348 = vmatpush1.msra.mxu0 0.0
      %349 = vmatprep.subr.mxu0 0.0
      %350 = vmatpush1.msra.mxu0 0.0
      %351 = vmatprep.subr.mxu0 0.0
      %352 = vmatpush1.msra.mxu0 0.0
      %353 = vmatprep.subr.mxu0 0.0
      %354 = vmatpush1.msra.mxu0 0.0
      %355 = vmatprep.subr.mxu0 0.0
      %356 = vmatpush1.msra.mxu0 0.0
      %357 = vmatprep.subr.mxu0 0.0
      %358 = vmatpush1.msra.mxu0 0.0
      %359 = vmatprep.subr.mxu0 0.0
      %360 = vmatpush1.msra.mxu0 0.0
      %361 = vmatprep.subr.mxu0 0.0
      %362 = vmatpush1.msra.mxu0 0.0
      %363 = vmatprep.subr.mxu0 0.0
      %364 = vmatpush1.msra.mxu0 0.0
      %365 = vmatprep.subr.mxu0 0.0
      %366 = vmatpush1.msra.mxu0 0.0
      %367 = vmatprep.subr.mxu0 0.0
      %368 = vmatpush1.msra.mxu0 0.0
      %369 = vmatprep.subr.mxu0 0.0
      %370 = vmatpush1.msra.mxu0 0.0
      %371 = vmatprep.subr.mxu0 0.0
      %372 = vmatpush1.msra.mxu0 0.0
      %373 = vmatprep.subr.mxu0 0.0
      %374 = vmatpush1.msra.mxu0 0.0
      %375 = vmatprep.subr.mxu0 0.0
      %376 = vmatpush1.msra.mxu0 0.0
      %377 = vmatprep.subr.mxu0 0.0
      %378 = vmatpush1.msra.mxu0 0.0
      %379 = vmatprep.subr.mxu0 0.0
      %380 = vmatpush1.msra.mxu0 0.0
      %381 = vmatprep.subr.mxu0 0.0
      %382 = vmatpush1.msra.mxu0 0.0
      %383 = vmatprep.subr.mxu0 0.0
      %384 = vmatpush1.msra.mxu0 0.0
      %385 = vmatprep.mubr.f32.mxu0 0.0
      %386 = vmatmul.mubr.f32.gmra.mrb[0].mxu0 %v316
      %v387 = vpop.f32.mrb[0].mxu0
      %v388 = vadd.f32 %v312, %v387
      %v389 = vpop.f32.mrb[0].mxu0
      %390 = vmatprep.mubr.f32.mxu0 0.0
      %391 = vmatmul.mubr.f32.gmra.mrb[0].mxu0 %v319
      %v392 = vpop.f32.mrb[0].mxu0
      %v393 = vadd.f32 %v313, %v392
      %v394 = vpop.f32.mrb[0].mxu0
      %395 = vdwg.mxu0
      %396 = vst [vmem:[%s214] sm:$0xff] %v388
      %397 = vst [vmem:[%s214 + $0x8] sm:$0xff] %v393
      %p398 = scmp.lt.s32.totalorder %s15, 1
      %s399 = scalar_select %p398, %s15, 1
      %s400 = smul.addr %s399, 2
      %s401 = smul.addr %s400, 8
      %s402 = scalar_lea.vmem %s4, %s401
      // Predicated region
      $region37: #{decoder_forward.12} parent=35 // pred_check
        %p403 = pneg %p127
      $region38: #{decoder_forward.12} parent=35 // pred_check_branch
        %405 = sbr.rel (%p403) target = $region40
      $region39: #{decoder_forward.12} parent=35 // pred_region
        _
      $region40: #{decoder_forward.12} parent=35 // pred_fallthru
        _
    $region36: #{decoder_forward.12} parent=5 // pred_fallthru
      _
    %p406 = scmp.le.s32.totalorder 2, %s10
    // Predicated region
    $region41: #{decoder_forward.12} parent=5 // pred_check
      %p407 = pneg %p406
    $region42: #{decoder_forward.12} parent=5 // pred_check_branch
      %409 = sbr.rel (%p407) target = $region44
    $region43: #{decoder_forward.12} parent=5 // pred_region
      %s410 = ssub.s32 %s10, 2
      // Predicated region
      $region45: #{decoder_forward.12} parent=43 // pred_check
        %p411 = pneg %p133
      $region46: #{decoder_forward.12} parent=43 // pred_check_branch
        %413 = sbr.rel (%p411) target = $region48
      $region47: #{decoder_forward.12} parent=43 // pred_region
        %p414 = scmp.lt.s32.totalorder %s16, 1
        %s415 = scalar_select %p414, %s16, 1
        %s416 = smul.addr %s415, 2
        %s417 = smul.addr %s416, 8
        %s418 = scalar_lea.vmem %s4, %s417
      $region48: #{decoder_forward.12} parent=43 // pred_fallthru
        _
    $region44: #{decoder_forward.12} parent=5 // pred_fallthru
      _
  $region6: #{decoder_forward.12} parent=0 // loop_footer
    %s14 = sadd.s32 1, %s10
  $region7: #{decoder_forward.12} parent=0 // loop_footer_branch
    %9 = sbr.rel target = $region3
  $region8: #{decoder_forward.12} parent=0 // loop_exit
    _

// kernel: decoder_forward.13
$region0: #{decoder_forward.13}
  #allocation0 [shape = 'u32[]', space=smem, size = 0x4, offset = 0x4, fixed_abs, tag = 'smem constant byte address 0x4 - core index']
  #allocation1 [shape = 'u32[144,128]{1,0:T(1,128)}', space=vmem, size = 0x12000, scoped, tag = 'internal scratch']
  #allocation2 [shape = 'f32[18,128]{1,0:T(8,128)}', space=vmem, size = 0x3000, scoped, tag = 'scratch operand']
  %s0 = inlined_call_operand.vmem [shape: f32[2,16,128], index: 0, kind: input, shape index: {}]
  %s1 = inlined_call_operand.vmem [shape: f32[2,3,128,128], index: 1, kind: input, shape index: {}]
  %s2 = inlined_call_operand.vmem [shape: f32[2,3,128,128], index: 2, kind: input, shape index: {}]
  %s3 = inlined_call_operand.vmem [shape: f32[2,128,2], index: 3, kind: input, shape index: {}]
  %s4 = inlined_call_operand.vmem [shape: f32[2,2,128], index: 4, kind: input, shape index: {}]
  %s5 = inlined_call_operand.vmem [shape: f32[2,16,128], index: 5, kind: output, shape index: {}]
  %s6 = sld [smem:[#allocation0]]
  $region53: #{decoder_forward.13} parent=0
    _
  %s8 = ssub.s32 1, %s6
  %s9 = scalar_select 0, %s8, %s6
  loop: start=0, step=1, limit=4
  $region2: #{decoder_forward.13} parent=0 // loop_pre_header
    _
  $region3: #{decoder_forward.13} parent=0 // loop_header
    %s11 = sphi 0, %s15
    %p12 = scmp.ge.s32.totalorder %s11, 4
    %s21 = sphi 0, %s23
    %s24 = sphi 0, %s21
    %s25 = sphi 0, %s24
    %s41 = sphi 0, %s25
    %s45 = sphi 0, %s45
    %s47 = sphi 0, %s45
    %s48 = sphi 0, %s47
    %s62 = sphi 0, %s48
    %s66 = sphi 0, %s66
    %s68 = sphi 0, %s66
    %s69 = sphi 0, %s68
    %s83 = sphi 0, %s69
    %s87 = sphi 0, %s87
    %s89 = sphi 0, %s87
    %s90 = sphi 0, %s89
    %s104 = sphi 0, %s90
    %s108 = sphi 0, %s108
    %s110 = sphi 0, %s108
    %s111 = sphi 0, %s110
    %s125 = sphi 0, %s111
    %s131 = sphi 0, %s133
    %s134 = sphi 0, %s131
    %s135 = sphi 0, %s134
    %s151 = sphi 0, %s135
  $region4: #{decoder_forward.13} parent=0 // loop_header_branch
    %14 = sbr.rel (%p12) target = $region8
  $region5: #{decoder_forward.13} parent=0 // loop_body
    %s16 = ssub.s32 %s11, 1
    %s17 = ssub.s32 %s11, 2
    %s18 = sadd.s32 %s11, 1
    %s19 = ssub.s32 %s11, %s18
    %p20 = scmp.eq.s32.totalorder %s19, 0
    %s22 = sadd.s32 %s21, 1
    %s23 = scalar_select %p20, %s21, %s22
    %p26 = pneg %p20
    %p27 = scmp.eq.s32.totalorder %s11, 1
    %p28 = por %p26, %p27
    %p29 = scmp.ne.s32.totalorder %s21, %s24
    %p30 = scmp.eq.s32.totalorder %s11, 0
    %p31 = por %p29, %p30
    %p32 = scmp.ne.s32.totalorder %s21, %s24
    %p33 = scmp.eq.s32.totalorder %s16, 1
    %p34 = por %p32, %p33
    %p35 = scmp.ne.s32.totalorder %s24, %s25
    %p36 = scmp.eq.s32.totalorder %s16, 0
    %p37 = por %p35, %p36
    %p38 = scmp.ne.s32.totalorder %s24, %s25
    %p39 = scmp.eq.s32.totalorder %s17, 1
    %p40 = por %p38, %p39
    %p42 = scmp.ne.s32.totalorder %s25, %s41
    %p43 = scmp.eq.s32.totalorder %s17, 0
    %p44 = por %p42, %p43
    %s46 = sadd.s32 %s45, 1
    %p49 = scmp.eq.s32.totalorder %s11, 1
    %p50 = scmp.ne.s32.totalorder %s45, %s47
    %p51 = scmp.eq.s32.totalorder %s11, 0
    %p52 = por %p50, %p51
    %p53 = scmp.ne.s32.totalorder %s45, %s47
    %p54 = scmp.eq.s32.totalorder %s16, 1
    %p55 = por %p53, %p54
    %p56 = scmp.ne.s32.totalorder %s47, %s48
    %p57 = scmp.eq.s32.totalorder %s16, 0
    %p58 = por %p56, %p57
    %p59 = scmp.ne.s32.totalorder %s47, %s48
    %p60 = scmp.eq.s32.totalorder %s17, 1
    %p61 = por %p59, %p60
    %p63 = scmp.ne.s32.totalorder %s48, %s62
    %p64 = scmp.eq.s32.totalorder %s17, 0
    %p65 = por %p63, %p64
    %s67 = sadd.s32 %s66, 1
    %p70 = scmp.eq.s32.totalorder %s11, 1
    %p71 = scmp.ne.s32.totalorder %s66, %s68
    %p72 = scmp.eq.s32.totalorder %s11, 0
    %p73 = por %p71, %p72
    %p74 = scmp.ne.s32.totalorder %s66, %s68
    %p75 = scmp.eq.s32.totalorder %s16, 1
    %p76 = por %p74, %p75
    %p77 = scmp.ne.s32.totalorder %s68, %s69
    %p78 = scmp.eq.s32.totalorder %s16, 0
    %p79 = por %p77, %p78
    %p80 = scmp.ne.s32.totalorder %s68, %s69
    %p81 = scmp.eq.s32.totalorder %s17, 1
    %p82 = por %p80, %p81
    %p84 = scmp.ne.s32.totalorder %s69, %s83
    %p85 = scmp.eq.s32.totalorder %s17, 0
    %p86 = por %p84, %p85
    %s88 = sadd.s32 %s87, 1
    %p91 = scmp.eq.s32.totalorder %s11, 1
    %p92 = scmp.ne.s32.totalorder %s87, %s89
    %p93 = scmp.eq.s32.totalorder %s11, 0
    %p94 = por %p92, %p93
    %p95 = scmp.ne.s32.totalorder %s87, %s89
    %p96 = scmp.eq.s32.totalorder %s16, 1
    %p97 = por %p95, %p96
    %p98 = scmp.ne.s32.totalorder %s89, %s90
    %p99 = scmp.eq.s32.totalorder %s16, 0
    %p100 = por %p98, %p99
    %p101 = scmp.ne.s32.totalorder %s89, %s90
    %p102 = scmp.eq.s32.totalorder %s17, 1
    %p103 = por %p101, %p102
    %p105 = scmp.ne.s32.totalorder %s90, %s104
    %p106 = scmp.eq.s32.totalorder %s17, 0
    %p107 = por %p105, %p106
    %s109 = sadd.s32 %s108, 1
    %p112 = scmp.eq.s32.totalorder %s11, 1
    %p113 = scmp.ne.s32.totalorder %s108, %s110
    %p114 = scmp.eq.s32.totalorder %s11, 0
    %p115 = por %p113, %p114
    %p116 = scmp.ne.s32.totalorder %s108, %s110
    %p117 = scmp.eq.s32.totalorder %s16, 1
    %p118 = por %p116, %p117
    %p119 = scmp.ne.s32.totalorder %s110, %s111
    %p120 = scmp.eq.s32.totalorder %s16, 0
    %p121 = por %p119, %p120
    %p122 = scmp.ne.s32.totalorder %s110, %s111
    %p123 = scmp.eq.s32.totalorder %s17, 1
    %p124 = por %p122, %p123
    %p126 = scmp.ne.s32.totalorder %s111, %s125
    %p127 = scmp.eq.s32.totalorder %s17, 0
    %p128 = por %p126, %p127
    %s129 = ssub.s32 %s11, %s18
    %p130 = scmp.eq.s32.totalorder %s129, 0
    %s132 = sadd.s32 %s131, 1
    %s133 = scalar_select %p130, %s131, %s132
    %p136 = pneg %p130
    %p137 = scmp.eq.s32.totalorder %s11, 1
    %p138 = por %p136, %p137
    %p139 = scmp.ne.s32.totalorder %s131, %s134
    %p140 = scmp.eq.s32.totalorder %s11, 0
    %p141 = por %p139, %p140
    %p142 = scmp.ne.s32.totalorder %s131, %s134
    %p143 = scmp.eq.s32.totalorder %s16, 1
    %p144 = por %p142, %p143
    %p145 = scmp.ne.s32.totalorder %s134, %s135
    %p146 = scmp.eq.s32.totalorder %s16, 0
    %p147 = por %p145, %p146
    %p148 = scmp.ne.s32.totalorder %s134, %s135
    %p149 = scmp.eq.s32.totalorder %s17, 1
    %p150 = por %p148, %p149
    %p152 = scmp.ne.s32.totalorder %s135, %s151
    %p153 = scmp.eq.s32.totalorder %s17, 0
    %p154 = por %p152, %p153
    %p155 = scmp.le.s32.totalorder 1, %s11
    %p156 = scmp.lt.s32.totalorder %s11, 3
    %p157 = pnand %p155, %p156
    %p158 = pneg %p157
    // Predicated region
    $region9: #{decoder_forward.13} parent=5 // pred_check
      _
    $region10: #{decoder_forward.13} parent=5 // pred_check_branch
      %160 = sbr.rel (%p157) target = $region12
    $region11: #{decoder_forward.13} parent=5 // pred_region
      %s161 = ssub.s32 %s11, 1
      // Predicated region
      $region13: #{decoder_forward.13} parent=11 // pred_check
        %p162 = pneg %p58
      $region14: #{decoder_forward.13} parent=11 // pred_check_branch
        %164 = sbr.rel (%p162) target = $region16
      $region15: #{decoder_forward.13} parent=11 // pred_region
        _
      $region16: #{decoder_forward.13} parent=11 // pred_fallthru
        _
      // Predicated region
      $region17: #{decoder_forward.13} parent=11 // pred_check
        %p165 = pneg %p79
      $region18: #{decoder_forward.13} parent=11 // pred_check_branch
        %167 = sbr.rel (%p165) target = $region20
      $region19: #{decoder_forward.13} parent=11 // pred_region
        _
      $region20: #{decoder_forward.13} parent=11 // pred_fallthru
        _
      // Predicated region
      $region21: #{decoder_forward.13} parent=11 // pred_check
        %p168 = pneg %p100
      $region22: #{decoder_forward.13} parent=11 // pred_check_branch
        %170 = sbr.rel (%p168) target = $region24
      $region23: #{decoder_forward.13} parent=11 // pred_region
        _
      $region24: #{decoder_forward.13} parent=11 // pred_fallthru
        _
      // Predicated region
      $region25: #{decoder_forward.13} parent=11 // pred_check
        %p171 = pneg %p121
      $region26: #{decoder_forward.13} parent=11 // pred_check_branch
        %173 = sbr.rel (%p171) target = $region28
      $region27: #{decoder_forward.13} parent=11 // pred_region
        _
      $region28: #{decoder_forward.13} parent=11 // pred_fallthru
        _
    $region12: #{decoder_forward.13} parent=5 // pred_fallthru
      _
    %p174 = scmp.lt.s32.totalorder %s11, 2
    // Predicated region
    $region29: #{decoder_forward.13} parent=5 // pred_check
      %p175 = pneg %p174
    $region30: #{decoder_forward.13} parent=5 // pred_check_branch
      %177 = sbr.rel (%p175) target = $region32
    $region31: #{decoder_forward.13} parent=5 // pred_region
      // Predicated region
      $region33: #{decoder_forward.13} parent=31 // pred_check
        %p178 = pneg %p31
      $region34: #{decoder_forward.13} parent=31 // pred_check_branch
        %180 = sbr.rel (%p178) target = $region36
      $region35: #{decoder_forward.13} parent=31 // pred_region
        %p181 = scmp.lt.s32.totalorder %s11, 1
        %s182 = scalar_select %p181, %s11, 1
        %s183 = smul.addr %s182, 2
        %s184 = smul.addr %s183, 8
        %s185 = scalar_lea.vmem %s0, %s184
      $region36: #{decoder_forward.13} parent=31 // pred_fallthru
        _
    $region32: #{decoder_forward.13} parent=5 // pred_fallthru
      _
    %p186 = scmp.le.s32.totalorder 1, %s11
    %p187 = scmp.lt.s32.totalorder %s11, 3
    %p188 = pnand %p186, %p187
    %p189 = pneg %p188
    // Predicated region
    $region37: #{decoder_forward.13} parent=5 // pred_check
      _
    $region38: #{decoder_forward.13} parent=5 // pred_check_branch
      %191 = sbr.rel (%p188) target = $region40
    $region39: #{decoder_forward.13} parent=5 // pred_region
      %s192 = ssub.s32 %s11, 1
      %p193 = scmp.lt.s32.totalorder %s16, 1
      %s194 = scalar_select %p193, %s16, 1
      %s195 = smul.addr %s194, 2
      %s196 = smul.addr %s195, 8
      %s197 = scalar_lea.vmem %s0, %s196
      %p198 = pneg %p37
      %p199 = pneg %p34
      %p200 = pneg %p58
      %p201 = pneg %p55
      %p202 = pneg %p79
      %p203 = pneg %p76
      %p204 = pneg %p100
      %p205 = pneg %p97
      %p206 = pneg %p121
      %p207 = pneg %p118
      %p208 = pneg %p147
      %p209 = pneg %p144
      %p210 = scmp.lt.s32.totalorder %s16, 1
      %s211 = scalar_select %p210, %s16, 1
      %s212 = smul.addr %s211, 2
      %s213 = smul.addr %s212, 8
      %s214 = scalar_lea.vmem %s5, %s213
      %p215 = scmp.lt.s32.totalorder %s16, 1
      %s216 = scalar_select %p215, %s16, 1
      %s217 = smul.addr %s216, 2
      %s218 = smul.addr %s217, 8
      %s219 = scalar_lea.vmem %s0, %s218
      %p220 = scmp.lt.s32.totalorder %s16, 1
      %s221 = scalar_select %p220, %s16, 1
      %s222 = smul.addr %s221, 2
      %s223 = smul.addr %s222, 8
      %s224 = scalar_lea.vmem %s5, %s223
      %225 = vst [vmem:[#allocation2] sm:$0x1] 0.0
      %226 = vst [vmem:[#allocation2 + $0x11] sm:$0x1] 0.0
      %v227 = vld [vmem:[%s219] sm:$0xff]
      %v228 = vld [vmem:[%s219 + $0x8] sm:$0xff]
      %229 = vst [vmem:[#allocation2 + $0x1] sm:$0xff] %v227
      %230 = vst [vmem:[#allocation2 + $0x9] sm:$0xff] %v228
      %v231 = vld [vmem:[#allocation2] sm:$0xff]
      %v232 = vld [vmem:[#allocation2 + $0x8] sm:$0xff]
      %v233 = vld [vmem:[%s1] sm:$0xff]
      %v234 = vld [vmem:[%s1 + $0x8] sm:$0xff]
      %v235 = vld [vmem:[%s1 + $0x10] sm:$0xff]
      %v236 = vld [vmem:[%s1 + $0x18] sm:$0xff]
      %v237 = vld [vmem:[%s1 + $0x20] sm:$0xff]
      %v238 = vld [vmem:[%s1 + $0x28] sm:$0xff]
      %v239 = vld [vmem:[%s1 + $0x30] sm:$0xff]
      %v240 = vld [vmem:[%s1 + $0x38] sm:$0xff]
      %v241 = vld [vmem:[%s1 + $0x40] sm:$0xff]
      %v242 = vld [vmem:[%s1 + $0x48] sm:$0xff]
      %v243 = vld [vmem:[%s1 + $0x50] sm:$0xff]
      %v244 = vld [vmem:[%s1 + $0x58] sm:$0xff]
      %v245 = vld [vmem:[%s1 + $0x60] sm:$0xff]
      %v246 = vld [vmem:[%s1 + $0x68] sm:$0xff]
      %v247 = vld [vmem:[%s1 + $0x70] sm:$0xff]
      %v248 = vld [vmem:[%s1 + $0x78] sm:$0xff]
      %v249 = vld [vmem:[#allocation2 + $0x1] sm:$0xff]
      %v250 = vld [vmem:[#allocation2 + $0x9] sm:$0xff]
      %s251 = scalar_lea.vmem %s1, 128
      %v252 = vld [vmem:[%s251] sm:$0xff]
      %v253 = vld [vmem:[%s251 + $0x8] sm:$0xff]
      %v254 = vld [vmem:[%s251 + $0x10] sm:$0xff]
      %v255 = vld [vmem:[%s251 + $0x18] sm:$0xff]
      %v256 = vld [vmem:[%s251 + $0x20] sm:$0xff]
      %v257 = vld [vmem:[%s251 + $0x28] sm:$0xff]
      %v258 = vld [vmem:[%s251 + $0x30] sm:$0xff]
      %v259 = vld [vmem:[%s251 + $0x38] sm:$0xff]
      %v260 = vld [vmem:[%s251 + $0x40] sm:$0xff]
      %v261 = vld [vmem:[%s251 + $0x48] sm:$0xff]
      %v262 = vld [vmem:[%s251 + $0x50] sm:$0xff]
      %v263 = vld [vmem:[%s251 + $0x58] sm:$0xff]
      %v264 = vld [vmem:[%s251 + $0x60] sm:$0xff]
      %v265 = vld [vmem:[%s251 + $0x68] sm:$0xff]
      %v266 = vld [vmem:[%s251 + $0x70] sm:$0xff]
      %v267 = vld [vmem:[%s251 + $0x78] sm:$0xff]
      %268 = vmatprep.subr.mxu0 0.0
      %269 = vmatpush1.msra.mxu0 %v252
      %270 = vmatprep.subr.mxu0 0.0
      %271 = vmatpush1.msra.mxu0 %v253
      %272 = vmatprep.subr.mxu0 0.0
      %273 = vmatpush1.msra.mxu0 %v254
      %274 = vmatprep.subr.mxu0 0.0
      %275 = vmatpush1.msra.mxu0 %v255
      %276 = vmatprep.subr.mxu0 0.0
      %277 = vmatpush1.msra.mxu0 %v256
      %278 = vmatprep.subr.mxu0 0.0
      %279 = vmatpush1.msra.mxu0 %v257
      %280 = vmatprep.subr.mxu0 0.0
      %281 = vmatpush1.msra.mxu0 %v258
      %282 = vmatprep.subr.mxu0 0.0
      %283 = vmatpush1.msra.mxu0 %v259
      %284 = vmatprep.subr.mxu0 0.0
      %285 = vmatpush1.msra.mxu0 %v260
      %286 = vmatprep.subr.mxu0 0.0
      %287 = vmatpush1.msra.mxu0 %v261
      %288 = vmatprep.subr.mxu0 0.0
      %289 = vmatpush1.msra.mxu0 %v262
      %290 = vmatprep.subr.mxu0 0.0
      %291 = vmatpush1.msra.mxu0 %v263
      %292 = vmatprep.subr.mxu0 0.0
      %293 = vmatpush1.msra.mxu0 %v264
      %294 = vmatprep.subr.mxu0 0.0
      %295 = vmatpush1.msra.mxu0 %v265
      %296 = vmatprep.subr.mxu0 0.0
      %297 = vmatpush1.msra.mxu0 %v266
      %298 = vmatprep.subr.mxu0 0.0
      %299 = vmatpush1.msra.mxu0 %v267
      %300 = vmatprep.subr.mxu0 0.0
      %301 = vmatpush1.msra.mxu0 0.0
      %302 = vmatprep.subr.mxu0 0.0
      %303 = vmatpush1.msra.mxu0 0.0
      %304 = vmatprep.subr.mxu0 0.0
      %305 = vmatpush1.msra.mxu0 0.0
      %306 = vmatprep.subr.mxu0 0.0
      %307 = vmatpush1.msra.mxu0 0.0
      %308 = vmatprep.subr.mxu0 0.0
      %309 = vmatpush1.msra.mxu0 0.0
      %310 = vmatprep.subr.mxu0 0.0
      %311 = vmatpush1.msra.mxu0 0.0
      %312 = vmatprep.subr.mxu0 0.0
      %313 = vmatpush1.msra.mxu0 0.0
      %314 = vmatprep.subr.mxu0 0.0
      %315 = vmatpush1.msra.mxu0 0.0
      %316 = vmatprep.subr.mxu0 0.0
      %317 = vmatpush1.msra.mxu0 0.0
      %318 = vmatprep.subr.mxu0 0.0
      %319 = vmatpush1.msra.mxu0 0.0
      %320 = vmatprep.subr.mxu0 0.0
      %321 = vmatpush1.msra.mxu0 0.0
      %322 = vmatprep.subr.mxu0 0.0
      %323 = vmatpush1.msra.mxu0 0.0
      %324 = vmatprep.subr.mxu0 0.0
      %325 = vmatpush1.msra.mxu0 0.0
      %326 = vmatprep.subr.mxu0 0.0
      %327 = vmatpush1.msra.mxu0 0.0
      %328 = vmatprep.subr.mxu0 0.0
      %329 = vmatpush1.msra.mxu0 0.0
      %330 = vmatprep.subr.mxu0 0.0
      %331 = vmatpush1.msra.mxu0 0.0
      %332 = vmatprep.mubr.f32.mxu0 0.0
      %333 = vmatmul.mubr.f32.gmra.mrb[0].mxu0 %v249
      %v334 = vpop.f32.mrb[0].mxu0
      %v335 = vadd.f32 0.0, %v334
      %v336 = vpop.f32.mrb[0].mxu0
      %337 = vmatprep.mubr.f32.mxu0 0.0
      %338 = vmatmul.mubr.f32.gmra.mrb[0].mxu0 %v250
      %v339 = vpop.f32.mrb[0].mxu0
      %v340 = vadd.f32 0.0, %v339
      %v341 = vpop.f32.mrb[0].mxu0
      %342 = vdwg.mxu0
      %343 = vmatprep.subr.mxu0 0.0
      %344 = vmatpush1.msra.mxu0 %v233
      %345 = vmatprep.subr.mxu0 0.0
      %346 = vmatpush1.msra.mxu0 %v234
      %347 = vmatprep.subr.mxu0 0.0
      %348 = vmatpush1.msra.mxu0 %v235
      %349 = vmatprep.subr.mxu0 0.0
      %350 = vmatpush1.msra.mxu0 %v236
      %351 = vmatprep.subr.mxu0 0.0
      %352 = vmatpush1.msra.mxu0 %v237
      %353 = vmatprep.subr.mxu0 0.0
      %354 = vmatpush1.msra.mxu0 %v238
      %355 = vmatprep.subr.mxu0 0.0
      %356 = vmatpush1.msra.mxu0 %v239
      %357 = vmatprep.subr.mxu0 0.0
      %358 = vmatpush1.msra.mxu0 %v240
      %359 = vmatprep.subr.mxu0 0.0
      %360 = vmatpush1.msra.mxu0 %v241
      %361 = vmatprep.subr.mxu0 0.0
      %362 = vmatpush1.msra.mxu0 %v242
      %363 = vmatprep.subr.mxu0 0.0
      %364 = vmatpush1.msra.mxu0 %v243
      %365 = vmatprep.subr.mxu0 0.0
      %366 = vmatpush1.msra.mxu0 %v244
      %367 = vmatprep.subr.mxu0 0.0
      %368 = vmatpush1.msra.mxu0 %v245
      %369 = vmatprep.subr.mxu0 0.0
      %370 = vmatpush1.msra.mxu0 %v246
      %371 = vmatprep.subr.mxu0 0.0
      %372 = vmatpush1.msra.mxu0 %v247
      %373 = vmatprep.subr.mxu0 0.0
      %374 = vmatpush1.msra.mxu0 %v248
      %375 = vmatprep.subr.mxu0 0.0
      %376 = vmatpush1.msra.mxu0 0.0
      %377 = vmatprep.subr.mxu0 0.0
      %378 = vmatpush1.msra.mxu0 0.0
      %379 = vmatprep.subr.mxu0 0.0
      %380 = vmatpush1.msra.mxu0 0.0
      %381 = vmatprep.subr.mxu0 0.0
      %382 = vmatpush1.msra.mxu0 0.0
      %383 = vmatprep.subr.mxu0 0.0
      %384 = vmatpush1.msra.mxu0 0.0
      %385 = vmatprep.subr.mxu0 0.0
      %386 = vmatpush1.msra.mxu0 0.0
      %387 = vmatprep.subr.mxu0 0.0
      %388 = vmatpush1.msra.mxu0 0.0
      %389 = vmatprep.subr.mxu0 0.0
      %390 = vmatpush1.msra.mxu0 0.0
      %391 = vmatprep.subr.mxu0 0.0
      %392 = vmatpush1.msra.mxu0 0.0
      %393 = vmatprep.subr.mxu0 0.0
      %394 = vmatpush1.msra.mxu0 0.0
      %395 = vmatprep.subr.mxu0 0.0
      %396 = vmatpush1.msra.mxu0 0.0
      %397 = vmatprep.subr.mxu0 0.0
      %398 = vmatpush1.msra.mxu0 0.0
      %399 = vmatprep.subr.mxu0 0.0
      %400 = vmatpush1.msra.mxu0 0.0
      %401 = vmatprep.subr.mxu0 0.0
      %402 = vmatpush1.msra.mxu0 0.0
      %403 = vmatprep.subr.mxu0 0.0
      %404 = vmatpush1.msra.mxu0 0.0
      %405 = vmatprep.subr.mxu0 0.0
      %406 = vmatpush1.msra.mxu0 0.0
      %407 = vmatprep.mubr.f32.mxu0 0.0
      %408 = vmatmul.mubr.f32.gmra.mrb[0].mxu0 %v231
      %v409 = vpop.f32.mrb[0].mxu0
      %v410 = vadd.f32 %v335, %v409
      %v411 = vpop.f32.mrb[0].mxu0
      %412 = vmatprep.mubr.f32.mxu0 0.0
      %413 = vmatmul.mubr.f32.gmra.mrb[0].mxu0 %v232
      %v414 = vpop.f32.mrb[0].mxu0
      %v415 = vadd.f32 %v340, %v414
      %v416 = vpop.f32.mrb[0].mxu0
      %417 = vdwg.mxu0
      %v418 = vld [vmem:[#allocation2 + $0x2] sm:$0xff]
      %v419 = vld [vmem:[#allocation2 + $0xa] sm:$0xff]
      %s420 = scalar_lea.vmem %s1, 256
      %v421 = vld [vmem:[%s420] sm:$0xff]
      %v422 = vld [vmem:[%s420 + $0x8] sm:$0xff]
      %v423 = vld [vmem:[%s420 + $0x10] sm:$0xff]
      %v424 = vld [vmem:[%s420 + $0x18] sm:$0xff]
      %v425 = vld [vmem:[%s420 + $0x20] sm:$0xff]
      %v426 = vld [vmem:[%s420 + $0x28] sm:$0xff]
      %v427 = vld [vmem:[%s420 + $0x30] sm:$0xff]
      %v428 = vld [vmem:[%s420 + $0x38] sm:$0xff]
      %v429 = vld [vmem:[%s420 + $0x40] sm:$0xff]
      %v430 = vld [vmem:[%s420 + $0x48] sm:$0xff]
      %v431 = vld [vmem:[%s420 + $0x50] sm:$0xff]
      %v432 = vld [vmem:[%s420 + $0x58] sm:$0xff]
      %v433 = vld [vmem:[%s420 + $0x60] sm:$0xff]
      %v434 = vld [vmem:[%s420 + $0x68] sm:$0xff]
      %v435 = vld [vmem:[%s420 + $0x70] sm:$0xff]
      %v436 = vld [vmem:[%s420 + $0x78] sm:$0xff]
      %437 = vmatprep.subr.mxu0 0.0
      %438 = vmatpush1.msra.mxu0 %v421
      %439 = vmatprep.subr.mxu0 0.0
      %440 = vmatpush1.msra.mxu0 %v422
      %441 = vmatprep.subr.mxu0 0.0
      %442 = vmatpush1.msra.mxu0 %v423
      %443 = vmatprep.subr.mxu0 0.0
      %444 = vmatpush1.msra.mxu0 %v424
      %445 = vmatprep.subr.mxu0 0.0
      %446 = vmatpush1.msra.mxu0 %v425
      %447 = vmatprep.subr.mxu0 0.0
      %448 = vmatpush1.msra.mxu0 %v426
      %449 = vmatprep.subr.mxu0 0.0
      %450 = vmatpush1.msra.mxu0 %v427
      %451 = vmatprep.subr.mxu0 0.0
      %452 = vmatpush1.msra.mxu0 %v428
      %453 = vmatprep.subr.mxu0 0.0
      %454 = vmatpush1.msra.mxu0 %v429
      %455 = vmatprep.subr.mxu0 0.0
      %456 = vmatpush1.msra.mxu0 %v430
      %457 = vmatprep.subr.mxu0 0.0
      %458 = vmatpush1.msra.mxu0 %v431
      %459 = vmatprep.subr.mxu0 0.0
      %460 = vmatpush1.msra.mxu0 %v432
      %461 = vmatprep.subr.mxu0 0.0
      %462 = vmatpush1.msra.mxu0 %v433
      %463 = vmatprep.subr.mxu0 0.0
      %464 = vmatpush1.msra.mxu0 %v434
      %465 = vmatprep.subr.mxu0 0.0
      %466 = vmatpush1.msra.mxu0 %v435
      %467 = vmatprep.subr.mxu0 0.0
      %468 = vmatpush1.msra.mxu0 %v436
      %469 = vmatprep.subr.mxu0 0.0
      %470 = vmatpush1.msra.mxu0 0.0
      %471 = vmatprep.subr.mxu0 0.0
      %472 = vmatpush1.msra.mxu0 0.0
      %473 = vmatprep.subr.mxu0 0.0
      %474 = vmatpush1.msra.mxu0 0.0
      %475 = vmatprep.subr.mxu0 0.0
      %476 = vmatpush1.msra.mxu0 0.0
      %477 = vmatprep.subr.mxu0 0.0
      %478 = vmatpush1.msra.mxu0 0.0
      %479 = vmatprep.subr.mxu0 0.0
      %480 = vmatpush1.msra.mxu0 0.0
      %481 = vmatprep.subr.mxu0 0.0
      %482 = vmatpush1.msra.mxu0 0.0
      %483 = vmatprep.subr.mxu0 0.0
      %484 = vmatpush1.msra.mxu0 0.0
      %485 = vmatprep.subr.mxu0 0.0
      %486 = vmatpush1.msra.mxu0 0.0
      %487 = vmatprep.subr.mxu0 0.0
      %488 = vmatpush1.msra.mxu0 0.0
      %489 = vmatprep.subr.mxu0 0.0
      %490 = vmatpush1.msra.mxu0 0.0
      %491 = vmatprep.subr.mxu0 0.0
      %492 = vmatpush1.msra.mxu0 0.0
      %493 = vmatprep.subr.mxu0 0.0
      %494 = vmatpush1.msra.mxu0 0.0
      %495 = vmatprep.subr.mxu0 0.0
      %496 = vmatpush1.msra.mxu0 0.0
      %497 = vmatprep.subr.mxu0 0.0
      %498 = vmatpush1.msra.mxu0 0.0
      %499 = vmatprep.subr.mxu0 0.0
      %500 = vmatpush1.msra.mxu0 0.0
      %501 = vmatprep.mubr.f32.mxu0 0.0
      %502 = vmatmul.mubr.f32.gmra.mrb[0].mxu0 %v418
      %v503 = vpop.f32.mrb[0].mxu0
      %v504 = vadd.f32 0.0, %v503
      %v505 = vpop.f32.mrb[0].mxu0
      %506 = vmatprep.mubr.f32.mxu0 0.0
      %507 = vmatmul.mubr.f32.gmra.mrb[0].mxu0 %v419
      %v508 = vpop.f32.mrb[0].mxu0
      %v509 = vadd.f32 0.0, %v508
      %v510 = vpop.f32.mrb[0].mxu0
      %511 = vdwg.mxu0
      %v512 = vadd.f32 %v410, %v504
      %v513 = vadd.f32 %v415, %v509
      %vm514 = vcmp.gt.f32.partialorder %v512, 0.0
      %vm515 = vcmp.gt.f32.partialorder %v513, 0.0
      %v516 = vmul.f32 %v512, 0.25
      %v517 = vmul.f32 %v513, 0.25
      %v518 = vsel %vm514, %v512, %v516
      %v519 = vsel %vm515, %v513, %v517
      %520 = vst [vmem:[#allocation2 + $0x1] sm:$0xff] %v518
      %521 = vst [vmem:[#allocation2 + $0x9] sm:$0xff] %v519
      %v522 = vld [vmem:[#allocation2] sm:$0xff]
      %v523 = vld [vmem:[#allocation2 + $0x8] sm:$0xff]
      %v524 = vld [vmem:[%s2] sm:$0xff]
      %v525 = vld [vmem:[%s2 + $0x8] sm:$0xff]
      %v526 = vld [vmem:[%s2 + $0x10] sm:$0xff]
      %v527 = vld [vmem:[%s2 + $0x18] sm:$0xff]
      %v528 = vld [vmem:[%s2 + $0x20] sm:$0xff]
      %v529 = vld [vmem:[%s2 + $0x28] sm:$0xff]
      %v530 = vld [vmem:[%s2 + $0x30] sm:$0xff]
      %v531 = vld [vmem:[%s2 + $0x38] sm:$0xff]
      %v532 = vld [vmem:[%s2 + $0x40] sm:$0xff]
      %v533 = vld [vmem:[%s2 + $0x48] sm:$0xff]
      %v534 = vld [vmem:[%s2 + $0x50] sm:$0xff]
      %v535 = vld [vmem:[%s2 + $0x58] sm:$0xff]
      %v536 = vld [vmem:[%s2 + $0x60] sm:$0xff]
      %v537 = vld [vmem:[%s2 + $0x68] sm:$0xff]
      %v538 = vld [vmem:[%s2 + $0x70] sm:$0xff]
      %v539 = vld [vmem:[%s2 + $0x78] sm:$0xff]
      %v540 = vld [vmem:[#allocation2 + $0x1] sm:$0xff]
      %v541 = vld [vmem:[#allocation2 + $0x9] sm:$0xff]
      %s542 = scalar_lea.vmem %s2, 128
      %v543 = vld [vmem:[%s542] sm:$0xff]
      %v544 = vld [vmem:[%s542 + $0x8] sm:$0xff]
      %v545 = vld [vmem:[%s542 + $0x10] sm:$0xff]
      %v546 = vld [vmem:[%s542 + $0x18] sm:$0xff]
      %v547 = vld [vmem:[%s542 + $0x20] sm:$0xff]
      %v548 = vld [vmem:[%s542 + $0x28] sm:$0xff]
      %v549 = vld [vmem:[%s542 + $0x30] sm:$0xff]
      %v550 = vld [vmem:[%s542 + $0x38] sm:$0xff]
      %v551 = vld [vmem:[%s542 + $0x40] sm:$0xff]
      %v552 = vld [vmem:[%s542 + $0x48] sm:$0xff]
      %v553 = vld [vmem:[%s542 + $0x50] sm:$0xff]
      %v554 = vld [vmem:[%s542 + $0x58] sm:$0xff]
      %v555 = vld [vmem:[%s542 + $0x60] sm:$0xff]
      %v556 = vld [vmem:[%s542 + $0x68] sm:$0xff]
      %v557 = vld [vmem:[%s542 + $0x70] sm:$0xff]
      %v558 = vld [vmem:[%s542 + $0x78] sm:$0xff]
      %559 = vmatprep.subr.mxu0 0.0
      %560 = vmatpush1.msra.mxu0 %v543
      %561 = vmatprep.subr.mxu0 0.0
      %562 = vmatpush1.msra.mxu0 %v544
      %563 = vmatprep.subr.mxu0 0.0
      %564 = vmatpush1.msra.mxu0 %v545
      %565 = vmatprep.subr.mxu0 0.0
      %566 = vmatpush1.msra.mxu0 %v546
      %567 = vmatprep.subr.mxu0 0.0
      %568 = vmatpush1.msra.mxu0 %v547
      %569 = vmatprep.subr.mxu0 0.0
      %570 = vmatpush1.msra.mxu0 %v548
      %571 = vmatprep.subr.mxu0 0.0
      %572 = vmatpush1.msra.mxu0 %v549
      %573 = vmatprep.subr.mxu0 0.0
      %574 = vmatpush1.msra.mxu0 %v550
      %575 = vmatprep.subr.mxu0 0.0
      %576 = vmatpush1.msra.mxu0 %v551
      %577 = vmatprep.subr.mxu0 0.0
      %578 = vmatpush1.msra.mxu0 %v552
      %579 = vmatprep.subr.mxu0 0.0
      %580 = vmatpush1.msra.mxu0 %v553
      %581 = vmatprep.subr.mxu0 0.0
      %582 = vmatpush1.msra.mxu0 %v554
      %583 = vmatprep.subr.mxu0 0.0
      %584 = vmatpush1.msra.mxu0 %v555
      %585 = vmatprep.subr.mxu0 0.0
      %586 = vmatpush1.msra.mxu0 %v556
      %587 = vmatprep.subr.mxu0 0.0
      %588 = vmatpush1.msra.mxu0 %v557
      %589 = vmatprep.subr.mxu0 0.0
      %590 = vmatpush1.msra.mxu0 %v558
      %591 = vmatprep.subr.mxu0 0.0
      %592 = vmatpush1.msra.mxu0 0.0
      %593 = vmatprep.subr.mxu0 0.0
      %594 = vmatpush1.msra.mxu0 0.0
      %595 = vmatprep.subr.mxu0 0.0
      %596 = vmatpush1.msra.mxu0 0.0
      %597 = vmatprep.subr.mxu0 0.0
      %598 = vmatpush1.msra.mxu0 0.0
      %599 = vmatprep.subr.mxu0 0.0
      %600 = vmatpush1.msra.mxu0 0.0
      %601 = vmatprep.subr.mxu0 0.0
      %602 = vmatpush1.msra.mxu0 0.0
      %603 = vmatprep.subr.mxu0 0.0
      %604 = vmatpush1.msra.mxu0 0.0
      %605 = vmatprep.subr.mxu0 0.0
      %606 = vmatpush1.msra.mxu0 0.0
      %607 = vmatprep.subr.mxu0 0.0
      %608 = vmatpush1.msra.mxu0 0.0
      %609 = vmatprep.subr.mxu0 0.0
      %610 = vmatpush1.msra.mxu0 0.0
      %611 = vmatprep.subr.mxu0 0.0
      %612 = vmatpush1.msra.mxu0 0.0
      %613 = vmatprep.subr.mxu0 0.0
      %614 = vmatpush1.msra.mxu0 0.0
      %615 = vmatprep.subr.mxu0 0.0
      %616 = vmatpush1.msra.mxu0 0.0
      %617 = vmatprep.subr.mxu0 0.0
      %618 = vmatpush1.msra.mxu0 0.0
      %619 = vmatprep.subr.mxu0 0.0
      %620 = vmatpush1.msra.mxu0 0.0
      %621 = vmatprep.subr.mxu0 0.0
      %622 = vmatpush1.msra.mxu0 0.0
      %623 = vmatprep.mubr.f32.mxu0 0.0
      %624 = vmatmul.mubr.f32.gmra.mrb[0].mxu0 %v540
      %v625 = vpop.f32.mrb[0].mxu0
      %v626 = vadd.f32 0.0, %v625
      %v627 = vpop.f32.mrb[0].mxu0
      %628 = vmatprep.mubr.f32.mxu0 0.0
      %629 = vmatmul.mubr.f32.gmra.mrb[0].mxu0 %v541
      %v630 = vpop.f32.mrb[0].mxu0
      %v631 = vadd.f32 0.0, %v630
      %v632 = vpop.f32.mrb[0].mxu0
      %633 = vdwg.mxu0
      %634 = vmatprep.subr.mxu0 0.0
      %635 = vmatpush1.msra.mxu0 %v524
      %636 = vmatprep.subr.mxu0 0.0
      %637 = vmatpush1.msra.mxu0 %v525
      %638 = vmatprep.subr.mxu0 0.0
      %639 = vmatpush1.msra.mxu0 %v526
      %640 = vmatprep.subr.mxu0 0.0
      %641 = vmatpush1.msra.mxu0 %v527
      %642 = vmatprep.subr.mxu0 0.0
      %643 = vmatpush1.msra.mxu0 %v528
      %644 = vmatprep.subr.mxu0 0.0
      %645 = vmatpush1.msra.mxu0 %v529
      %646 = vmatprep.subr.mxu0 0.0
      %647 = vmatpush1.msra.mxu0 %v530
      %648 = vmatprep.subr.mxu0 0.0
      %649 = vmatpush1.msra.mxu0 %v531
      %650 = vmatprep.subr.mxu0 0.0
      %651 = vmatpush1.msra.mxu0 %v532
      %652 = vmatprep.subr.mxu0 0.0
      %653 = vmatpush1.msra.mxu0 %v533
      %654 = vmatprep.subr.mxu0 0.0
      %655 = vmatpush1.msra.mxu0 %v534
      %656 = vmatprep.subr.mxu0 0.0
      %657 = vmatpush1.msra.mxu0 %v535
      %658 = vmatprep.subr.mxu0 0.0
      %659 = vmatpush1.msra.mxu0 %v536
      %660 = vmatprep.subr.mxu0 0.0
      %661 = vmatpush1.msra.mxu0 %v537
      %662 = vmatprep.subr.mxu0 0.0
      %663 = vmatpush1.msra.mxu0 %v538
      %664 = vmatprep.subr.mxu0 0.0
      %665 = vmatpush1.msra.mxu0 %v539
      %666 = vmatprep.subr.mxu0 0.0
      %667 = vmatpush1.msra.mxu0 0.0
      %668 = vmatprep.subr.mxu0 0.0
      %669 = vmatpush1.msra.mxu0 0.0
      %670 = vmatprep.subr.mxu0 0.0
      %671 = vmatpush1.msra.mxu0 0.0
      %672 = vmatprep.subr.mxu0 0.0
      %673 = vmatpush1.msra.mxu0 0.0
      %674 = vmatprep.subr.mxu0 0.0
      %675 = vmatpush1.msra.mxu0 0.0
      %676 = vmatprep.subr.mxu0 0.0
      %677 = vmatpush1.msra.mxu0 0.0
      %678 = vmatprep.subr.mxu0 0.0
      %679 = vmatpush1.msra.mxu0 0.0
      %680 = vmatprep.subr.mxu0 0.0
      %681 = vmatpush1.msra.mxu0 0.0
      %682 = vmatprep.subr.mxu0 0.0
      %683 = vmatpush1.msra.mxu0 0.0
      %684 = vmatprep.subr.mxu0 0.0
      %685 = vmatpush1.msra.mxu0 0.0
      %686 = vmatprep.subr.mxu0 0.0
      %687 = vmatpush1.msra.mxu0 0.0
      %688 = vmatprep.subr.mxu0 0.0
      %689 = vmatpush1.msra.mxu0 0.0
      %690 = vmatprep.subr.mxu0 0.0
      %691 = vmatpush1.msra.mxu0 0.0
      %692 = vmatprep.subr.mxu0 0.0
      %693 = vmatpush1.msra.mxu0 0.0
      %694 = vmatprep.subr.mxu0 0.0
      %695 = vmatpush1.msra.mxu0 0.0
      %696 = vmatprep.subr.mxu0 0.0
      %697 = vmatpush1.msra.mxu0 0.0
      %698 = vmatprep.mubr.f32.mxu0 0.0
      %699 = vmatmul.mubr.f32.gmra.mrb[0].mxu0 %v522
      %v700 = vpop.f32.mrb[0].mxu0
      %v701 = vadd.f32 %v626, %v700
      %v702 = vpop.f32.mrb[0].mxu0
      %703 = vmatprep.mubr.f32.mxu0 0.0
      %704 = vmatmul.mubr.f32.gmra.mrb[0].mxu0 %v523
      %v705 = vpop.f32.mrb[0].mxu0
      %v706 = vadd.f32 %v631, %v705
      %v707 = vpop.f32.mrb[0].mxu0
      %708 = vdwg.mxu0
      %v709 = vld [vmem:[#allocation2 + $0x2] sm:$0xff]
      %v710 = vld [vmem:[#allocation2 + $0xa] sm:$0xff]
      %s711 = scalar_lea.vmem %s2, 256
      %v712 = vld [vmem:[%s711] sm:$0xff]
      %v713 = vld [vmem:[%s711 + $0x8] sm:$0xff]
      %v714 = vld [vmem:[%s711 + $0x10] sm:$0xff]
      %v715 = vld [vmem:[%s711 + $0x18] sm:$0xff]
      %v716 = vld [vmem:[%s711 + $0x20] sm:$0xff]
      %v717 = vld [vmem:[%s711 + $0x28] sm:$0xff]
      %v718 = vld [vmem:[%s711 + $0x30] sm:$0xff]
      %v719 = vld [vmem:[%s711 + $0x38] sm:$0xff]
      %v720 = vld [vmem:[%s711 + $0x40] sm:$0xff]
      %v721 = vld [vmem:[%s711 + $0x48] sm:$0xff]
      %v722 = vld [vmem:[%s711 + $0x50] sm:$0xff]
      %v723 = vld [vmem:[%s711 + $0x58] sm:$0xff]
      %v724 = vld [vmem:[%s711 + $0x60] sm:$0xff]
      %v725 = vld [vmem:[%s711 + $0x68] sm:$0xff]
      %v726 = vld [vmem:[%s711 + $0x70] sm:$0xff]
      %v727 = vld [vmem:[%s711 + $0x78] sm:$0xff]
      %728 = vmatprep.subr.mxu0 0.0
      %729 = vmatpush1.msra.mxu0 %v712
      %730 = vmatprep.subr.mxu0 0.0
      %731 = vmatpush1.msra.mxu0 %v713
      %732 = vmatprep.subr.mxu0 0.0
      %733 = vmatpush1.msra.mxu0 %v714
      %734 = vmatprep.subr.mxu0 0.0
      %735 = vmatpush1.msra.mxu0 %v715
      %736 = vmatprep.subr.mxu0 0.0
      %737 = vmatpush1.msra.mxu0 %v716
      %738 = vmatprep.subr.mxu0 0.0
      %739 = vmatpush1.msra.mxu0 %v717
      %740 = vmatprep.subr.mxu0 0.0
      %741 = vmatpush1.msra.mxu0 %v718
      %742 = vmatprep.subr.mxu0 0.0
      %743 = vmatpush1.msra.mxu0 %v719
      %744 = vmatprep.subr.mxu0 0.0
      %745 = vmatpush1.msra.mxu0 %v720
      %746 = vmatprep.subr.mxu0 0.0
      %747 = vmatpush1.msra.mxu0 %v721
      %748 = vmatprep.subr.mxu0 0.0
      %749 = vmatpush1.msra.mxu0 %v722
      %750 = vmatprep.subr.mxu0 0.0
      %751 = vmatpush1.msra.mxu0 %v723
      %752 = vmatprep.subr.mxu0 0.0
      %753 = vmatpush1.msra.mxu0 %v724
      %754 = vmatprep.subr.mxu0 0.0
      %755 = vmatpush1.msra.mxu0 %v725
      %756 = vmatprep.subr.mxu0 0.0
      %757 = vmatpush1.msra.mxu0 %v726
      %758 = vmatprep.subr.mxu0 0.0
      %759 = vmatpush1.msra.mxu0 %v727
      %760 = vmatprep.subr.mxu0 0.0
      %761 = vmatpush1.msra.mxu0 0.0
      %762 = vmatprep.subr.mxu0 0.0
      %763 = vmatpush1.msra.mxu0 0.0
      %764 = vmatprep.subr.mxu0 0.0
      %765 = vmatpush1.msra.mxu0 0.0
      %766 = vmatprep.subr.mxu0 0.0
      %767 = vmatpush1.msra.mxu0 0.0
      %768 = vmatprep.subr.mxu0 0.0
      %769 = vmatpush1.msra.mxu0 0.0
      %770 = vmatprep.subr.mxu0 0.0
      %771 = vmatpush1.msra.mxu0 0.0
      %772 = vmatprep.subr.mxu0 0.0
      %773 = vmatpush1.msra.mxu0 0.0
      %774 = vmatprep.subr.mxu0 0.0
      %775 = vmatpush1.msra.mxu0 0.0
      %776 = vmatprep.subr.mxu0 0.0
      %777 = vmatpush1.msra.mxu0 0.0
      %778 = vmatprep.subr.mxu0 0.0
      %779 = vmatpush1.msra.mxu0 0.0
      %780 = vmatprep.subr.mxu0 0.0
      %781 = vmatpush1.msra.mxu0 0.0
      %782 = vmatprep.subr.mxu0 0.0
      %783 = vmatpush1.msra.mxu0 0.0
      %784 = vmatprep.subr.mxu0 0.0
      %785 = vmatpush1.msra.mxu0 0.0
      %786 = vmatprep.subr.mxu0 0.0
      %787 = vmatpush1.msra.mxu0 0.0
      %788 = vmatprep.subr.mxu0 0.0
      %789 = vmatpush1.msra.mxu0 0.0
      %790 = vmatprep.subr.mxu0 0.0
      %791 = vmatpush1.msra.mxu0 0.0
      %792 = vmatprep.mubr.f32.mxu0 0.0
      %793 = vmatmul.mubr.f32.gmra.mrb[0].mxu0 %v709
      %v794 = vpop.f32.mrb[0].mxu0
      %v795 = vadd.f32 0.0, %v794
      %v796 = vpop.f32.mrb[0].mxu0
      %797 = vmatprep.mubr.f32.mxu0 0.0
      %798 = vmatmul.mubr.f32.gmra.mrb[0].mxu0 %v710
      %v799 = vpop.f32.mrb[0].mxu0
      %v800 = vadd.f32 0.0, %v799
      %v801 = vpop.f32.mrb[0].mxu0
      %802 = vdwg.mxu0
      %v803 = vadd.f32 %v701, %v795
      %v804 = vadd.f32 %v706, %v800
      %v805 = vadd.f32 %v803, %v804
      %v806 = vrot.slane %v805, 4
      %v807 = vadd.f32 %v805, %v806
      %v808 = vrot.slane %v807, 2
      %v809 = vadd.f32 %v807, %v808
      %v810 = vrot.slane %v809, 1
      %v811 = vadd.f32 %v809, %v810
      %v812 = vld [vmem:[%s3] sm:$0xff]
      %v813 = vld [vmem:[%s3 + $0x8] sm:$0xff]
      %v814 = vld [vmem:[%s3 + $0x10] sm:$0xff]
      %v815 = vld [vmem:[%s3 + $0x18] sm:$0xff]
      %v816 = vld [vmem:[%s3 + $0x20] sm:$0xff]
      %v817 = vld [vmem:[%s3 + $0x28] sm:$0xff]
      %v818 = vld [vmem:[%s3 + $0x30] sm:$0xff]
      %v819 = vld [vmem:[%s3 + $0x38] sm:$0xff]
      %v820 = vld [vmem:[%s3 + $0x40] sm:$0xff]
      %v821 = vld [vmem:[%s3 + $0x48] sm:$0xff]
      %v822 = vld [vmem:[%s3 + $0x50] sm:$0xff]
      %v823 = vld [vmem:[%s3 + $0x58] sm:$0xff]
      %v824 = vld [vmem:[%s3 + $0x60] sm:$0xff]
      %v825 = vld [vmem:[%s3 + $0x68] sm:$0xff]
      %v826 = vld [vmem:[%s3 + $0x70] sm:$0xff]
      %v827 = vld [vmem:[%s3 + $0x78] sm:$0xff]
      %828 = vmatprep.subr.mxu0 0.0
      %829 = vmatpush1.msra.mxu0 %v812
      %830 = vmatprep.subr.mxu0 0.0
      %831 = vmatpush1.msra.mxu0 %v813
      %832 = vmatprep.subr.mxu0 0.0
      %833 = vmatpush1.msra.mxu0 %v814
      %834 = vmatprep.subr.mxu0 0.0
      %835 = vmatpush1.msra.mxu0 %v815
      %836 = vmatprep.subr.mxu0 0.0
      %837 = vmatpush1.msra.mxu0 %v816
      %838 = vmatprep.subr.mxu0 0.0
      %839 = vmatpush1.msra.mxu0 %v817
      %840 = vmatprep.subr.mxu0 0.0
      %841 = vmatpush1.msra.mxu0 %v818
      %842 = vmatprep.subr.mxu0 0.0
      %843 = vmatpush1.msra.mxu0 %v819
      %844 = vmatprep.subr.mxu0 0.0
      %845 = vmatpush1.msra.mxu0 %v820
      %846 = vmatprep.subr.mxu0 0.0
      %847 = vmatpush1.msra.mxu0 %v821
      %848 = vmatprep.subr.mxu0 0.0
      %849 = vmatpush1.msra.mxu0 %v822
      %850 = vmatprep.subr.mxu0 0.0
      %851 = vmatpush1.msra.mxu0 %v823
      %852 = vmatprep.subr.mxu0 0.0
      %853 = vmatpush1.msra.mxu0 %v824
      %854 = vmatprep.subr.mxu0 0.0
      %855 = vmatpush1.msra.mxu0 %v825
      %856 = vmatprep.subr.mxu0 0.0
      %857 = vmatpush1.msra.mxu0 %v826
      %858 = vmatprep.subr.mxu0 0.0
      %859 = vmatpush1.msra.mxu0 %v827
      %860 = vmatprep.subr.mxu0 0.0
      %861 = vmatpush1.msra.mxu0 0.0
      %862 = vmatprep.subr.mxu0 0.0
      %863 = vmatpush1.msra.mxu0 0.0
      %864 = vmatprep.subr.mxu0 0.0
      %865 = vmatpush1.msra.mxu0 0.0
      %866 = vmatprep.subr.mxu0 0.0
      %867 = vmatpush1.msra.mxu0 0.0
      %868 = vmatprep.subr.mxu0 0.0
      %869 = vmatpush1.msra.mxu0 0.0
      %870 = vmatprep.subr.mxu0 0.0
      %871 = vmatpush1.msra.mxu0 0.0
      %872 = vmatprep.subr.mxu0 0.0
      %873 = vmatpush1.msra.mxu0 0.0
      %874 = vmatprep.subr.mxu0 0.0
      %875 = vmatpush1.msra.mxu0 0.0
      %876 = vmatprep.subr.mxu0 0.0
      %877 = vmatpush1.msra.mxu0 0.0
      %878 = vmatprep.subr.mxu0 0.0
      %879 = vmatpush1.msra.mxu0 0.0
      %880 = vmatprep.subr.mxu0 0.0
      %881 = vmatpush1.msra.mxu0 0.0
      %882 = vmatprep.subr.mxu0 0.0
      %883 = vmatpush1.msra.mxu0 0.0
      %884 = vmatprep.subr.mxu0 0.0
      %885 = vmatpush1.msra.mxu0 0.0
      %886 = vmatprep.subr.mxu0 0.0
      %887 = vmatpush1.msra.mxu0 0.0
      %888 = vmatprep.subr.mxu0 0.0
      %889 = vmatpush1.msra.mxu0 0.0
      %890 = vmatprep.subr.mxu0 0.0
      %891 = vmatpush1.msra.mxu0 0.0
      %892 = vmatprep.mubr.f32.mxu0 0.0
      %893 = vmatmul.mubr.f32.gmra.mrb[0].mxu0 %v811
      %v894 = vpop.f32.mrb[0].mxu0
      %v895 = vadd.f32 0.0, %v894
      %v896 = vpop.f32.mrb[0].mxu0
      %897 = vdwg.mxu0
      %v898 = vmax.f32 %v895, 0.0
      %v899 = vld [vmem:[%s4] sm:$0x3]
      %vm900 = vcmask 15360
      %v902 = vsel %vm900, %v898, 0
      %vm904 = vcmask 1041408
      %v906 = vsel %vm904, %v899, 0
      %908 = vmatprep.subr.mxu0 0.0
      %909 = vmatpush1.msra.mxu0 %v906
      %910 = vmatprep.subr.mxu0 0.0
      %911 = vmatpush1.msra.mxu0 0.0
      %912 = vmatprep.subr.mxu0 0.0
      %913 = vmatpush1.msra.mxu0 0.0
      %914 = vmatprep.subr.mxu0 0.0
      %915 = vmatpush1.msra.mxu0 0.0
      %916 = vmatprep.subr.mxu0 0.0
      %917 = vmatpush1.msra.mxu0 0.0
      %918 = vmatprep.subr.mxu0 0.0
      %919 = vmatpush1.msra.mxu0 0.0
      %920 = vmatprep.subr.mxu0 0.0
      %921 = vmatpush1.msra.mxu0 0.0
      %922 = vmatprep.subr.mxu0 0.0
      %923 = vmatpush1.msra.mxu0 0.0
      %924 = vmatprep.subr.mxu0 0.0
      %925 = vmatpush1.msra.mxu0 0.0
      %926 = vmatprep.subr.mxu0 0.0
      %927 = vmatpush1.msra.mxu0 0.0
      %928 = vmatprep.subr.mxu0 0.0
      %929 = vmatpush1.msra.mxu0 0.0
      %930 = vmatprep.subr.mxu0 0.0
      %931 = vmatpush1.msra.mxu0 0.0
      %932 = vmatprep.subr.mxu0 0.0
      %933 = vmatpush1.msra.mxu0 0.0
      %934 = vmatprep.subr.mxu0 0.0
      %935 = vmatpush1.msra.mxu0 0.0
      %936 = vmatprep.subr.mxu0 0.0
      %937 = vmatpush1.msra.mxu0 0.0
      %938 = vmatprep.subr.mxu0 0.0
      %939 = vmatpush1.msra.mxu0 0.0
      %940 = vmatprep.subr.mxu0 0.0
      %941 = vmatpush1.msra.mxu0 0.0
      %942 = vmatprep.subr.mxu0 0.0
      %943 = vmatpush1.msra.mxu0 0.0
      %944 = vmatprep.subr.mxu0 0.0
      %945 = vmatpush1.msra.mxu0 0.0
      %946 = vmatprep.subr.mxu0 0.0
      %947 = vmatpush1.msra.mxu0 0.0
      %948 = vmatprep.subr.mxu0 0.0
      %949 = vmatpush1.msra.mxu0 0.0
      %950 = vmatprep.subr.mxu0 0.0
      %951 = vmatpush1.msra.mxu0 0.0
      %952 = vmatprep.subr.mxu0 0.0
      %953 = vmatpush1.msra.mxu0 0.0
      %954 = vmatprep.subr.mxu0 0.0
      %955 = vmatpush1.msra.mxu0 0.0
      %956 = vmatprep.subr.mxu0 0.0
      %957 = vmatpush1.msra.mxu0 0.0
      %958 = vmatprep.subr.mxu0 0.0
      %959 = vmatpush1.msra.mxu0 0.0
      %960 = vmatprep.subr.mxu0 0.0
      %961 = vmatpush1.msra.mxu0 0.0
      %962 = vmatprep.subr.mxu0 0.0
      %963 = vmatpush1.msra.mxu0 0.0
      %964 = vmatprep.subr.mxu0 0.0
      %965 = vmatpush1.msra.mxu0 0.0
      %966 = vmatprep.subr.mxu0 0.0
      %967 = vmatpush1.msra.mxu0 0.0
      %968 = vmatprep.subr.mxu0 0.0
      %969 = vmatpush1.msra.mxu0 0.0
      %970 = vmatprep.subr.mxu0 0.0
      %971 = vmatpush1.msra.mxu0 0.0
      %972 = vmatprep.mubr.f32.mxu0 0.0
      %973 = vmatmul.mubr.f32.gmra.mrb[0].mxu0 %v902
      %v974 = vpop.f32.mrb[0].mxu0
      %v975 = vadd.f32 0.0, %v974
      %v976 = vpop.f32.mrb[0].mxu0
      %977 = vdwg.mxu0
      %v978 = vxor.u32 %v975, 2147483648
      %v979 = vmul.f32 %v978, 1.442695
      %v980 = vpow.pop %v979
      %v981 = vadd.f32 %v980, 1.0
      %v982 = vrcp.pop %v981
      %v983 = vmul.f32 1.0, %v982
      %v984 = vlaneseq
      %v985 = vshrl.u32 %v984, 7
      %v986 = vsub.s32 0, %v985
      %v987 = vrot.slane %v983, %v986
      %v988 = vmul.f32 %v803, %v987
      %v989 = vmul.f32 %v804, %v987
      %v990 = vadd.f32 %v988, %v227
      %v991 = vadd.f32 %v989, %v228
      %992 = vst [vmem:[#allocation2 + $0x1] sm:$0xff] %v990
      %993 = vst [vmem:[#allocation2 + $0x9] sm:$0xff] %v991
      %v994 = vld [vmem:[#allocation2] sm:$0xff]
      %v995 = vld [vmem:[#allocation2 + $0x8] sm:$0xff]
      %s996 = scalar_lea.vmem %s1, 384
      %v997 = vld [vmem:[%s996] sm:$0xff]
      %v998 = vld [vmem:[%s996 + $0x8] sm:$0xff]
      %v999 = vld [vmem:[%s996 + $0x10] sm:$0xff]
      %v1000 = vld [vmem:[%s996 + $0x18] sm:$0xff]
      %v1001 = vld [vmem:[%s996 + $0x20] sm:$0xff]
      %v1002 = vld [vmem:[%s996 + $0x28] sm:$0xff]
      %v1003 = vld [vmem:[%s996 + $0x30] sm:$0xff]
      %v1004 = vld [vmem:[%s996 + $0x38] sm:$0xff]
      %v1005 = vld [vmem:[%s996 + $0x40] sm:$0xff]
      %v1006 = vld [vmem:[%s996 + $0x48] sm:$0xff]
      %v1007 = vld [vmem:[%s996 + $0x50] sm:$0xff]
      %v1008 = vld [vmem:[%s996 + $0x58] sm:$0xff]
      %v1009 = vld [vmem:[%s996 + $0x60] sm:$0xff]
      %v1010 = vld [vmem:[%s996 + $0x68] sm:$0xff]
      %v1011 = vld [vmem:[%s996 + $0x70] sm:$0xff]
      %v1012 = vld [vmem:[%s996 + $0x78] sm:$0xff]
      %v1013 = vld [vmem:[#allocation2 + $0x1] sm:$0xff]
      %v1014 = vld [vmem:[#allocation2 + $0x9] sm:$0xff]
      %s1015 = scalar_lea.vmem %s1, 512
      %v1016 = vld [vmem:[%s1015] sm:$0xff]
      %v1017 = vld [vmem:[%s1015 + $0x8] sm:$0xff]
      %v1018 = vld [vmem:[%s1015 + $0x10] sm:$0xff]
      %v1019 = vld [vmem:[%s1015 + $0x18] sm:$0xff]
      %v1020 = vld [vmem:[%s1015 + $0x20] sm:$0xff]
      %v1021 = vld [vmem:[%s1015 + $0x28] sm:$0xff]
      %v1022 = vld [vmem:[%s1015 + $0x30] sm:$0xff]
      %v1023 = vld [vmem:[%s1015 + $0x38] sm:$0xff]
      %v1024 = vld [vmem:[%s1015 + $0x40] sm:$0xff]
      %v1025 = vld [vmem:[%s1015 + $0x48] sm:$0xff]
      %v1026 = vld [vmem:[%s1015 + $0x50] sm:$0xff]
      %v1027 = vld [vmem:[%s1015 + $0x58] sm:$0xff]
      %v1028 = vld [vmem:[%s1015 + $0x60] sm:$0xff]
      %v1029 = vld [vmem:[%s1015 + $0x68] sm:$0xff]
      %v1030 = vld [vmem:[%s1015 + $0x70] sm:$0xff]
      %v1031 = vld [vmem:[%s1015 + $0x78] sm:$0xff]
      %1032 = vmatprep.subr.mxu0 0.0
      %1033 = vmatpush1.msra.mxu0 %v1016
      %1034 = vmatprep.subr.mxu0 0.0
      %1035 = vmatpush1.msra.mxu0 %v1017
      %1036 = vmatprep.subr.mxu0 0.0
      %1037 = vmatpush1.msra.mxu0 %v1018
      %1038 = vmatprep.subr.mxu0 0.0
      %1039 = vmatpush1.msra.mxu0 %v1019
      %1040 = vmatprep.subr.mxu0 0.0
      %1041 = vmatpush1.msra.mxu0 %v1020
      %1042 = vmatprep.subr.mxu0 0.0
      %1043 = vmatpush1.msra.mxu0 %v1021
      %1044 = vmatprep.subr.mxu0 0.0
      %1045 = vmatpush1.msra.mxu0 %v1022
      %1046 = vmatprep.subr.mxu0 0.0
      %1047 = vmatpush1.msra.mxu0 %v1023
      %1048 = vmatprep.subr.mxu0 0.0
      %1049 = vmatpush1.msra.mxu0 %v1024
      %1050 = vmatprep.subr.mxu0 0.0
      %1051 = vmatpush1.msra.mxu0 %v1025
      %1052 = vmatprep.subr.mxu0 0.0
      %1053 = vmatpush1.msra.mxu0 %v1026
      %1054 = vmatprep.subr.mxu0 0.0
      %1055 = vmatpush1.msra.mxu0 %v1027
      %1056 = vmatprep.subr.mxu0 0.0
      %1057 = vmatpush1.msra.mxu0 %v1028
      %1058 = vmatprep.subr.mxu0 0.0
      %1059 = vmatpush1.msra.mxu0 %v1029
      %1060 = vmatprep.subr.mxu0 0.0
      %1061 = vmatpush1.msra.mxu0 %v1030
      %1062 = vmatprep.subr.mxu0 0.0
      %1063 = vmatpush1.msra.mxu0 %v1031
      %1064 = vmatprep.subr.mxu0 0.0
      %1065 = vmatpush1.msra.mxu0 0.0
      %1066 = vmatprep.subr.mxu0 0.0
      %1067 = vmatpush1.msra.mxu0 0.0
      %1068 = vmatprep.subr.mxu0 0.0
      %1069 = vmatpush1.msra.mxu0 0.0
      %1070 = vmatprep.subr.mxu0 0.0
      %1071 = vmatpush1.msra.mxu0 0.0
      %1072 = vmatprep.subr.mxu0 0.0
      %1073 = vmatpush1.msra.mxu0 0.0
      %1074 = vmatprep.subr.mxu0 0.0
      %1075 = vmatpush1.msra.mxu0 0.0
      %1076 = vmatprep.subr.mxu0 0.0
      %1077 = vmatpush1.msra.mxu0 0.0
      %1078 = vmatprep.subr.mxu0 0.0
      %1079 = vmatpush1.msra.mxu0 0.0
      %1080 = vmatprep.subr.mxu0 0.0
      %1081 = vmatpush1.msra.mxu0 0.0
      %1082 = vmatprep.subr.mxu0 0.0
      %1083 = vmatpush1.msra.mxu0 0.0
      %1084 = vmatprep.subr.mxu0 0.0
      %1085 = vmatpush1.msra.mxu0 0.0
      %1086 = vmatprep.subr.mxu0 0.0
      %1087 = vmatpush1.msra.mxu0 0.0
      %1088 = vmatprep.subr.mxu0 0.0
      %1089 = vmatpush1.msra.mxu0 0.0
      %1090 = vmatprep.subr.mxu0 0.0
      %1091 = vmatpush1.msra.mxu0 0.0
      %1092 = vmatprep.subr.mxu0 0.0
      %1093 = vmatpush1.msra.mxu0 0.0
      %1094 = vmatprep.subr.mxu0 0.0
      %1095 = vmatpush1.msra.mxu0 0.0
      %1096 = vmatprep.mubr.f32.mxu0 0.0
      %1097 = vmatmul.mubr.f32.gmra.mrb[0].mxu0 %v1013
      %v1098 = vpop.f32.mrb[0].mxu0
      %v1099 = vadd.f32 0.0, %v1098
      %v1100 = vpop.f32.mrb[0].mxu0
      %1101 = vmatprep.mubr.f32.mxu0 0.0
      %1102 = vmatmul.mubr.f32.gmra.mrb[0].mxu0 %v1014
      %v1103 = vpop.f32.mrb[0].mxu0
      %v1104 = vadd.f32 0.0, %v1103
      %v1105 = vpop.f32.mrb[0].mxu0
      %1106 = vdwg.mxu0
      %1107 = vmatprep.subr.mxu0 0.0
      %1108 = vmatpush1.msra.mxu0 %v997
      %1109 = vmatprep.subr.mxu0 0.0
      %1110 = vmatpush1.msra.mxu0 %v998
      %1111 = vmatprep.subr.mxu0 0.0
      %1112 = vmatpush1.msra.mxu0 %v999
      %1113 = vmatprep.subr.mxu0 0.0
      %1114 = vmatpush1.msra.mxu0 %v1000
      %1115 = vmatprep.subr.mxu0 0.0
      %1116 = vmatpush1.msra.mxu0 %v1001
      %1117 = vmatprep.subr.mxu0 0.0
      %1118 = vmatpush1.msra.mxu0 %v1002
      %1119 = vmatprep.subr.mxu0 0.0
      %1120 = vmatpush1.msra.mxu0 %v1003
      %1121 = vmatprep.subr.mxu0 0.0
      %1122 = vmatpush1.msra.mxu0 %v1004
      %1123 = vmatprep.subr.mxu0 0.0
      %1124 = vmatpush1.msra.mxu0 %v1005
      %1125 = vmatprep.subr.mxu0 0.0
      %1126 = vmatpush1.msra.mxu0 %v1006
      %1127 = vmatprep.subr.mxu0 0.0
      %1128 = vmatpush1.msra.mxu0 %v1007
      %1129 = vmatprep.subr.mxu0 0.0
      %1130 = vmatpush1.msra.mxu0 %v1008
      %1131 = vmatprep.subr.mxu0 0.0
      %1132 = vmatpush1.msra.mxu0 %v1009
      %1133 = vmatprep.subr.mxu0 0.0
      %1134 = vmatpush1.msra.mxu0 %v1010
      %1135 = vmatprep.subr.mxu0 0.0
      %1136 = vmatpush1.msra.mxu0 %v1011
      %1137 = vmatprep.subr.mxu0 0.0
      %1138 = vmatpush1.msra.mxu0 %v1012
      %1139 = vmatprep.subr.mxu0 0.0
      %1140 = vmatpush1.msra.mxu0 0.0
      %1141 = vmatprep.subr.mxu0 0.0
      %1142 = vmatpush1.msra.mxu0 0.0
      %1143 = vmatprep.subr.mxu0 0.0
      %1144 = vmatpush1.msra.mxu0 0.0
      %1145 = vmatprep.subr.mxu0 0.0
      %1146 = vmatpush1.msra.mxu0 0.0
      %1147 = vmatprep.subr.mxu0 0.0
      %1148 = vmatpush1.msra.mxu0 0.0
      %1149 = vmatprep.subr.mxu0 0.0
      %1150 = vmatpush1.msra.mxu0 0.0
      %1151 = vmatprep.subr.mxu0 0.0
      %1152 = vmatpush1.msra.mxu0 0.0
      %1153 = vmatprep.subr.mxu0 0.0
      %1154 = vmatpush1.msra.mxu0 0.0
      %1155 = vmatprep.subr.mxu0 0.0
      %1156 = vmatpush1.msra.mxu0 0.0
      %1157 = vmatprep.subr.mxu0 0.0
      %1158 = vmatpush1.msra.mxu0 0.0
      %1159 = vmatprep.subr.mxu0 0.0
      %1160 = vmatpush1.msra.mxu0 0.0
      %1161 = vmatprep.subr.mxu0 0.0
      %1162 = vmatpush1.msra.mxu0 0.0
      %1163 = vmatprep.subr.mxu0 0.0
      %1164 = vmatpush1.msra.mxu0 0.0
      %1165 = vmatprep.subr.mxu0 0.0
      %1166 = vmatpush1.msra.mxu0 0.0
      %1167 = vmatprep.subr.mxu0 0.0
      %1168 = vmatpush1.msra.mxu0 0.0
      %1169 = vmatprep.subr.mxu0 0.0
      %1170 = vmatpush1.msra.mxu0 0.0
      %1171 = vmatprep.mubr.f32.mxu0 0.0
      %1172 = vmatmul.mubr.f32.gmra.mrb[0].mxu0 %v994
      %v1173 = vpop.f32.mrb[0].mxu0
      %v1174 = vadd.f32 %v1099, %v1173
      %v1175 = vpop.f32.mrb[0].mxu0
      %1176 = vmatprep.mubr.f32.mxu0 0.0
      %1177 = vmatmul.mubr.f32.gmra.mrb[0].mxu0 %v995
      %v1178 = vpop.f32.mrb[0].mxu0
      %v1179 = vadd.f32 %v1104, %v1178
      %v1180 = vpop.f32.mrb[0].mxu0
      %1181 = vdwg.mxu0
      %v1182 = vld [vmem:[#allocation2 + $0x2] sm:$0xff]
      %v1183 = vld [vmem:[#allocation2 + $0xa] sm:$0xff]
      %s1184 = scalar_lea.vmem %s1, 640
      %v1185 = vld [vmem:[%s1184] sm:$0xff]
      %v1186 = vld [vmem:[%s1184 + $0x8] sm:$0xff]
      %v1187 = vld [vmem:[%s1184 + $0x10] sm:$0xff]
      %v1188 = vld [vmem:[%s1184 + $0x18] sm:$0xff]
      %v1189 = vld [vmem:[%s1184 + $0x20] sm:$0xff]
      %v1190 = vld [vmem:[%s1184 + $0x28] sm:$0xff]
      %v1191 = vld [vmem:[%s1184 + $0x30] sm:$0xff]
      %v1192 = vld [vmem:[%s1184 + $0x38] sm:$0xff]
      %v1193 = vld [vmem:[%s1184 + $0x40] sm:$0xff]
      %v1194 = vld [vmem:[%s1184 + $0x48] sm:$0xff]
      %v1195 = vld [vmem:[%s1184 + $0x50] sm:$0xff]
      %v1196 = vld [vmem:[%s1184 + $0x58] sm:$0xff]
      %v1197 = vld [vmem:[%s1184 + $0x60] sm:$0xff]
      %v1198 = vld [vmem:[%s1184 + $0x68] sm:$0xff]
      %v1199 = vld [vmem:[%s1184 + $0x70] sm:$0xff]
      %v1200 = vld [vmem:[%s1184 + $0x78] sm:$0xff]
      %1201 = vmatprep.subr.mxu0 0.0
      %1202 = vmatpush1.msra.mxu0 %v1185
      %1203 = vmatprep.subr.mxu0 0.0
      %1204 = vmatpush1.msra.mxu0 %v1186
      %1205 = vmatprep.subr.mxu0 0.0
      %1206 = vmatpush1.msra.mxu0 %v1187
      %1207 = vmatprep.subr.mxu0 0.0
      %1208 = vmatpush1.msra.mxu0 %v1188
      %1209 = vmatprep.subr.mxu0 0.0
      %1210 = vmatpush1.msra.mxu0 %v1189
      %1211 = vmatprep.subr.mxu0 0.0
      %1212 = vmatpush1.msra.mxu0 %v1190
      %1213 = vmatprep.subr.mxu0 0.0
      %1214 = vmatpush1.msra.mxu0 %v1191
      %1215 = vmatprep.subr.mxu0 0.0
      %1216 = vmatpush1.msra.mxu0 %v1192
      %1217 = vmatprep.subr.mxu0 0.0
      %1218 = vmatpush1.msra.mxu0 %v1193
      %1219 = vmatprep.subr.mxu0 0.0
      %1220 = vmatpush1.msra.mxu0 %v1194
      %1221 = vmatprep.subr.mxu0 0.0
      %1222 = vmatpush1.msra.mxu0 %v1195
      %1223 = vmatprep.subr.mxu0 0.0
      %1224 = vmatpush1.msra.mxu0 %v1196
      %1225 = vmatprep.subr.mxu0 0.0
      %1226 = vmatpush1.msra.mxu0 %v1197
      %1227 = vmatprep.subr.mxu0 0.0
      %1228 = vmatpush1.msra.mxu0 %v1198
      %1229 = vmatprep.subr.mxu0 0.0
      %1230 = vmatpush1.msra.mxu0 %v1199
      %1231 = vmatprep.subr.mxu0 0.0
      %1232 = vmatpush1.msra.mxu0 %v1200
      %1233 = vmatprep.subr.mxu0 0.0
      %1234 = vmatpush1.msra.mxu0 0.0
      %1235 = vmatprep.subr.mxu0 0.0
      %1236 = vmatpush1.msra.mxu0 0.0
      %1237 = vmatprep.subr.mxu0 0.0
      %1238 = vmatpush1.msra.mxu0 0.0
      %1239 = vmatprep.subr.mxu0 0.0
      %1240 = vmatpush1.msra.mxu0 0.0
      %1241 = vmatprep.subr.mxu0 0.0
      %1242 = vmatpush1.msra.mxu0 0.0
      %1243 = vmatprep.subr.mxu0 0.0
      %1244 = vmatpush1.msra.mxu0 0.0
      %1245 = vmatprep.subr.mxu0 0.0
      %1246 = vmatpush1.msra.mxu0 0.0
      %1247 = vmatprep.subr.mxu0 0.0
      %1248 = vmatpush1.msra.mxu0 0.0
      %1249 = vmatprep.subr.mxu0 0.0
      %1250 = vmatpush1.msra.mxu0 0.0
      %1251 = vmatprep.subr.mxu0 0.0
      %1252 = vmatpush1.msra.mxu0 0.0
      %1253 = vmatprep.subr.mxu0 0.0
      %1254 = vmatpush1.msra.mxu0 0.0
      %1255 = vmatprep.subr.mxu0 0.0
      %1256 = vmatpush1.msra.mxu0 0.0
      %1257 = vmatprep.subr.mxu0 0.0
      %1258 = vmatpush1.msra.mxu0 0.0
      %1259 = vmatprep.subr.mxu0 0.0
      %1260 = vmatpush1.msra.mxu0 0.0
      %1261 = vmatprep.subr.mxu0 0.0
      %1262 = vmatpush1.msra.mxu0 0.0
      %1263 = vmatprep.subr.mxu0 0.0
      %1264 = vmatpush1.msra.mxu0 0.0
      %1265 = vmatprep.mubr.f32.mxu0 0.0
      %1266 = vmatmul.mubr.f32.gmra.mrb[0].mxu0 %v1182
      %v1267 = vpop.f32.mrb[0].mxu0
      %v1268 = vadd.f32 0.0, %v1267
      %v1269 = vpop.f32.mrb[0].mxu0
      %1270 = vmatprep.mubr.f32.mxu0 0.0
      %1271 = vmatmul.mubr.f32.gmra.mrb[0].mxu0 %v1183
      %v1272 = vpop.f32.mrb[0].mxu0
      %v1273 = vadd.f32 0.0, %v1272
      %v1274 = vpop.f32.mrb[0].mxu0
      %1275 = vdwg.mxu0
      %v1276 = vadd.f32 %v1174, %v1268
      %v1277 = vadd.f32 %v1179, %v1273
      %vm1278 = vcmp.gt.f32.partialorder %v1276, 0.0
      %vm1279 = vcmp.gt.f32.partialorder %v1277, 0.0
      %v1280 = vmul.f32 %v1276, 0.25
      %v1281 = vmul.f32 %v1277, 0.25
      %v1282 = vsel %vm1278, %v1276, %v1280
      %v1283 = vsel %vm1279, %v1277, %v1281
      %1284 = vst [vmem:[#allocation2 + $0x1] sm:$0xff] %v1282
      %1285 = vst [vmem:[#allocation2 + $0x9] sm:$0xff] %v1283
      %v1286 = vld [vmem:[#allocation2] sm:$0xff]
      %v1287 = vld [vmem:[#allocation2 + $0x8] sm:$0xff]
      %s1288 = scalar_lea.vmem %s2, 384
      %v1289 = vld [vmem:[%s1288] sm:$0xff]
      %v1290 = vld [vmem:[%s1288 + $0x8] sm:$0xff]
      %v1291 = vld [vmem:[%s1288 + $0x10] sm:$0xff]
      %v1292 = vld [vmem:[%s1288 + $0x18] sm:$0xff]
      %v1293 = vld [vmem:[%s1288 + $0x20] sm:$0xff]
      %v1294 = vld [vmem:[%s1288 + $0x28] sm:$0xff]
      %v1295 = vld [vmem:[%s1288 + $0x30] sm:$0xff]
      %v1296 = vld [vmem:[%s1288 + $0x38] sm:$0xff]
      %v1297 = vld [vmem:[%s1288 + $0x40] sm:$0xff]
      %v1298 = vld [vmem:[%s1288 + $0x48] sm:$0xff]
      %v1299 = vld [vmem:[%s1288 + $0x50] sm:$0xff]
      %v1300 = vld [vmem:[%s1288 + $0x58] sm:$0xff]
      %v1301 = vld [vmem:[%s1288 + $0x60] sm:$0xff]
      %v1302 = vld [vmem:[%s1288 + $0x68] sm:$0xff]
      %v1303 = vld [vmem:[%s1288 + $0x70] sm:$0xff]
      %v1304 = vld [vmem:[%s1288 + $0x78] sm:$0xff]
      %v1305 = vld [vmem:[#allocation2 + $0x1] sm:$0xff]
      %v1306 = vld [vmem:[#allocation2 + $0x9] sm:$0xff]
      %s1307 = scalar_lea.vmem %s2, 512
      %v1308 = vld [vmem:[%s1307] sm:$0xff]
      %v1309 = vld [vmem:[%s1307 + $0x8] sm:$0xff]
      %v1310 = vld [vmem:[%s1307 + $0x10] sm:$0xff]
      %v1311 = vld [vmem:[%s1307 + $0x18] sm:$0xff]
      %v1312 = vld [vmem:[%s1307 + $0x20] sm:$0xff]
      %v1313 = vld [vmem:[%s1307 + $0x28] sm:$0xff]
      %v1314 = vld [vmem:[%s1307 + $0x30] sm:$0xff]
      %v1315 = vld [vmem:[%s1307 + $0x38] sm:$0xff]
      %v1316 = vld [vmem:[%s1307 + $0x40] sm:$0xff]
      %v1317 = vld [vmem:[%s1307 + $0x48] sm:$0xff]
      %v1318 = vld [vmem:[%s1307 + $0x50] sm:$0xff]
      %v1319 = vld [vmem:[%s1307 + $0x58] sm:$0xff]
      %v1320 = vld [vmem:[%s1307 + $0x60] sm:$0xff]
      %v1321 = vld [vmem:[%s1307 + $0x68] sm:$0xff]
      %v1322 = vld [vmem:[%s1307 + $0x70] sm:$0xff]
      %v1323 = vld [vmem:[%s1307 + $0x78] sm:$0xff]
      %1324 = vmatprep.subr.mxu0 0.0
      %1325 = vmatpush1.msra.mxu0 %v1308
      %1326 = vmatprep.subr.mxu0 0.0
      %1327 = vmatpush1.msra.mxu0 %v1309
      %1328 = vmatprep.subr.mxu0 0.0
      %1329 = vmatpush1.msra.mxu0 %v1310
      %1330 = vmatprep.subr.mxu0 0.0
      %1331 = vmatpush1.msra.mxu0 %v1311
      %1332 = vmatprep.subr.mxu0 0.0
      %1333 = vmatpush1.msra.mxu0 %v1312
      %1334 = vmatprep.subr.mxu0 0.0
      %1335 = vmatpush1.msra.mxu0 %v1313
      %1336 = vmatprep.subr.mxu0 0.0
      %1337 = vmatpush1.msra.mxu0 %v1314
      %1338 = vmatprep.subr.mxu0 0.0
      %1339 = vmatpush1.msra.mxu0 %v1315
      %1340 = vmatprep.subr.mxu0 0.0
      %1341 = vmatpush1.msra.mxu0 %v1316
      %1342 = vmatprep.subr.mxu0 0.0
      %1343 = vmatpush1.msra.mxu0 %v1317
      %1344 = vmatprep.subr.mxu0 0.0
      %1345 = vmatpush1.msra.mxu0 %v1318
      %1346 = vmatprep.subr.mxu0 0.0
      %1347 = vmatpush1.msra.mxu0 %v1319
      %1348 = vmatprep.subr.mxu0 0.0
      %1349 = vmatpush1.msra.mxu0 %v1320
      %1350 = vmatprep.subr.mxu0 0.0
      %1351 = vmatpush1.msra.mxu0 %v1321
      %1352 = vmatprep.subr.mxu0 0.0
      %1353 = vmatpush1.msra.mxu0 %v1322
      %1354 = vmatprep.subr.mxu0 0.0
      %1355 = vmatpush1.msra.mxu0 %v1323
      %1356 = vmatprep.subr.mxu0 0.0
      %1357 = vmatpush1.msra.mxu0 0.0
      %1358 = vmatprep.subr.mxu0 0.0
      %1359 = vmatpush1.msra.mxu0 0.0
      %1360 = vmatprep.subr.mxu0 0.0
      %1361 = vmatpush1.msra.mxu0 0.0
      %1362 = vmatprep.subr.mxu0 0.0
      %1363 = vmatpush1.msra.mxu0 0.0
      %1364 = vmatprep.subr.mxu0 0.0
      %1365 = vmatpush1.msra.mxu0 0.0
      %1366 = vmatprep.subr.mxu0 0.0
      %1367 = vmatpush1.msra.mxu0 0.0
      %1368 = vmatprep.subr.mxu0 0.0
      %1369 = vmatpush1.msra.mxu0 0.0
      %1370 = vmatprep.subr.mxu0 0.0
      %1371 = vmatpush1.msra.mxu0 0.0
      %1372 = vmatprep.subr.mxu0 0.0
      %1373 = vmatpush1.msra.mxu0 0.0
      %1374 = vmatprep.subr.mxu0 0.0
      %1375 = vmatpush1.msra.mxu0 0.0
      %1376 = vmatprep.subr.mxu0 0.0
      %1377 = vmatpush1.msra.mxu0 0.0
      %1378 = vmatprep.subr.mxu0 0.0
      %1379 = vmatpush1.msra.mxu0 0.0
      %1380 = vmatprep.subr.mxu0 0.0
      %1381 = vmatpush1.msra.mxu0 0.0
      %1382 = vmatprep.subr.mxu0 0.0
      %1383 = vmatpush1.msra.mxu0 0.0
      %1384 = vmatprep.subr.mxu0 0.0
      %1385 = vmatpush1.msra.mxu0 0.0
      %1386 = vmatprep.subr.mxu0 0.0
      %1387 = vmatpush1.msra.mxu0 0.0
      %1388 = vmatprep.mubr.f32.mxu0 0.0
      %1389 = vmatmul.mubr.f32.gmra.mrb[0].mxu0 %v1305
      %v1390 = vpop.f32.mrb[0].mxu0
      %v1391 = vadd.f32 0.0, %v1390
      %v1392 = vpop.f32.mrb[0].mxu0
      %1393 = vmatprep.mubr.f32.mxu0 0.0
      %1394 = vmatmul.mubr.f32.gmra.mrb[0].mxu0 %v1306
      %v1395 = vpop.f32.mrb[0].mxu0
      %v1396 = vadd.f32 0.0, %v1395
      %v1397 = vpop.f32.mrb[0].mxu0
      %1398 = vdwg.mxu0
      %1399 = vmatprep.subr.mxu0 0.0
      %1400 = vmatpush1.msra.mxu0 %v1289
      %1401 = vmatprep.subr.mxu0 0.0
      %1402 = vmatpush1.msra.mxu0 %v1290
      %1403 = vmatprep.subr.mxu0 0.0
      %1404 = vmatpush1.msra.mxu0 %v1291
      %1405 = vmatprep.subr.mxu0 0.0
      %1406 = vmatpush1.msra.mxu0 %v1292
      %1407 = vmatprep.subr.mxu0 0.0
      %1408 = vmatpush1.msra.mxu0 %v1293
      %1409 = vmatprep.subr.mxu0 0.0
      %1410 = vmatpush1.msra.mxu0 %v1294
      %1411 = vmatprep.subr.mxu0 0.0
      %1412 = vmatpush1.msra.mxu0 %v1295
      %1413 = vmatprep.subr.mxu0 0.0
      %1414 = vmatpush1.msra.mxu0 %v1296
      %1415 = vmatprep.subr.mxu0 0.0
      %1416 = vmatpush1.msra.mxu0 %v1297
      %1417 = vmatprep.subr.mxu0 0.0
      %1418 = vmatpush1.msra.mxu0 %v1298
      %1419 = vmatprep.subr.mxu0 0.0
      %1420 = vmatpush1.msra.mxu0 %v1299
      %1421 = vmatprep.subr.mxu0 0.0
      %1422 = vmatpush1.msra.mxu0 %v1300
      %1423 = vmatprep.subr.mxu0 0.0
      %1424 = vmatpush1.msra.mxu0 %v1301
      %1425 = vmatprep.subr.mxu0 0.0
      %1426 = vmatpush1.msra.mxu0 %v1302
      %1427 = vmatprep.subr.mxu0 0.0
      %1428 = vmatpush1.msra.mxu0 %v1303
      %1429 = vmatprep.subr.mxu0 0.0
      %1430 = vmatpush1.msra.mxu0 %v1304
      %1431 = vmatprep.subr.mxu0 0.0
      %1432 = vmatpush1.msra.mxu0 0.0
      %1433 = vmatprep.subr.mxu0 0.0
      %1434 = vmatpush1.msra.mxu0 0.0
      %1435 = vmatprep.subr.mxu0 0.0
      %1436 = vmatpush1.msra.mxu0 0.0
      %1437 = vmatprep.subr.mxu0 0.0
      %1438 = vmatpush1.msra.mxu0 0.0
      %1439 = vmatprep.subr.mxu0 0.0
      %1440 = vmatpush1.msra.mxu0 0.0
      %1441 = vmatprep.subr.mxu0 0.0
      %1442 = vmatpush1.msra.mxu0 0.0
      %1443 = vmatprep.subr.mxu0 0.0
      %1444 = vmatpush1.msra.mxu0 0.0
      %1445 = vmatprep.subr.mxu0 0.0
      %1446 = vmatpush1.msra.mxu0 0.0
      %1447 = vmatprep.subr.mxu0 0.0
      %1448 = vmatpush1.msra.mxu0 0.0
      %1449 = vmatprep.subr.mxu0 0.0
      %1450 = vmatpush1.msra.mxu0 0.0
      %1451 = vmatprep.subr.mxu0 0.0
      %1452 = vmatpush1.msra.mxu0 0.0
      %1453 = vmatprep.subr.mxu0 0.0
      %1454 = vmatpush1.msra.mxu0 0.0
      %1455 = vmatprep.subr.mxu0 0.0
      %1456 = vmatpush1.msra.mxu0 0.0
      %1457 = vmatprep.subr.mxu0 0.0
      %1458 = vmatpush1.msra.mxu0 0.0
      %1459 = vmatprep.subr.mxu0 0.0
      %1460 = vmatpush1.msra.mxu0 0.0
      %1461 = vmatprep.subr.mxu0 0.0
      %1462 = vmatpush1.msra.mxu0 0.0
      %1463 = vmatprep.mubr.f32.mxu0 0.0
      %1464 = vmatmul.mubr.f32.gmra.mrb[0].mxu0 %v1286
      %v1465 = vpop.f32.mrb[0].mxu0
      %v1466 = vadd.f32 %v1391, %v1465
      %v1467 = vpop.f32.mrb[0].mxu0
      %1468 = vmatprep.mubr.f32.mxu0 0.0
      %1469 = vmatmul.mubr.f32.gmra.mrb[0].mxu0 %v1287
      %v1470 = vpop.f32.mrb[0].mxu0
      %v1471 = vadd.f32 %v1396, %v1470
      %v1472 = vpop.f32.mrb[0].mxu0
      %1473 = vdwg.mxu0
      %v1474 = vld [vmem:[#allocation2 + $0x2] sm:$0xff]
      %v1475 = vld [vmem:[#allocation2 + $0xa] sm:$0xff]
      %s1476 = scalar_lea.vmem %s2, 640
      %v1477 = vld [vmem:[%s1476] sm:$0xff]
      %v1478 = vld [vmem:[%s1476 + $0x8] sm:$0xff]
      %v1479 = vld [vmem:[%s1476 + $0x10] sm:$0xff]
      %v1480 = vld [vmem:[%s1476 + $0x18] sm:$0xff]
      %v1481 = vld [vmem:[%s1476 + $0x20] sm:$0xff]
      %v1482 = vld [vmem:[%s1476 + $0x28] sm:$0xff]
      %v1483 = vld [vmem:[%s1476 + $0x30] sm:$0xff]
      %v1484 = vld [vmem:[%s1476 + $0x38] sm:$0xff]
      %v1485 = vld [vmem:[%s1476 + $0x40] sm:$0xff]
      %v1486 = vld [vmem:[%s1476 + $0x48] sm:$0xff]
      %v1487 = vld [vmem:[%s1476 + $0x50] sm:$0xff]
      %v1488 = vld [vmem:[%s1476 + $0x58] sm:$0xff]
      %v1489 = vld [vmem:[%s1476 + $0x60] sm:$0xff]
      %v1490 = vld [vmem:[%s1476 + $0x68] sm:$0xff]
      %v1491 = vld [vmem:[%s1476 + $0x70] sm:$0xff]
      %v1492 = vld [vmem:[%s1476 + $0x78] sm:$0xff]
      %1493 = vmatprep.subr.mxu0 0.0
      %1494 = vmatpush1.msra.mxu0 %v1477
      %1495 = vmatprep.subr.mxu0 0.0
      %1496 = vmatpush1.msra.mxu0 %v1478
      %1497 = vmatprep.subr.mxu0 0.0
      %1498 = vmatpush1.msra.mxu0 %v1479
      %1499 = vmatprep.subr.mxu0 0.0
      %1500 = vmatpush1.msra.mxu0 %v1480
      %1501 = vmatprep.subr.mxu0 0.0
      %1502 = vmatpush1.msra.mxu0 %v1481
      %1503 = vmatprep.subr.mxu0 0.0
      %1504 = vmatpush1.msra.mxu0 %v1482
      %1505 = vmatprep.subr.mxu0 0.0
      %1506 = vmatpush1.msra.mxu0 %v1483
      %1507 = vmatprep.subr.mxu0 0.0
      %1508 = vmatpush1.msra.mxu0 %v1484
      %1509 = vmatprep.subr.mxu0 0.0
      %1510 = vmatpush1.msra.mxu0 %v1485
      %1511 = vmatprep.subr.mxu0 0.0
      %1512 = vmatpush1.msra.mxu0 %v1486
      %1513 = vmatprep.subr.mxu0 0.0
      %1514 = vmatpush1.msra.mxu0 %v1487
      %1515 = vmatprep.subr.mxu0 0.0
      %1516 = vmatpush1.msra.mxu0 %v1488
      %1517 = vmatprep.subr.mxu0 0.0
      %1518 = vmatpush1.msra.mxu0 %v1489
      %1519 = vmatprep.subr.mxu0 0.0
      %1520 = vmatpush1.msra.mxu0 %v1490
      %1521 = vmatprep.subr.mxu0 0.0
      %1522 = vmatpush1.msra.mxu0 %v1491
      %1523 = vmatprep.subr.mxu0 0.0
      %1524 = vmatpush1.msra.mxu0 %v1492
      %1525 = vmatprep.subr.mxu0 0.0
      %1526 = vmatpush1.msra.mxu0 0.0
      %1527 = vmatprep.subr.mxu0 0.0
      %1528 = vmatpush1.msra.mxu0 0.0
      %1529 = vmatprep.subr.mxu0 0.0
      %1530 = vmatpush1.msra.mxu0 0.0
      %1531 = vmatprep.subr.mxu0 0.0
      %1532 = vmatpush1.msra.mxu0 0.0
      %1533 = vmatprep.subr.mxu0 0.0
      %1534 = vmatpush1.msra.mxu0 0.0
      %1535 = vmatprep.subr.mxu0 0.0
      %1536 = vmatpush1.msra.mxu0 0.0
      %1537 = vmatprep.subr.mxu0 0.0
      %1538 = vmatpush1.msra.mxu0 0.0
      %1539 = vmatprep.subr.mxu0 0.0
      %1540 = vmatpush1.msra.mxu0 0.0
      %1541 = vmatprep.subr.mxu0 0.0
      %1542 = vmatpush1.msra.mxu0 0.0
      %1543 = vmatprep.subr.mxu0 0.0
      %1544 = vmatpush1.msra.mxu0 0.0
      %1545 = vmatprep.subr.mxu0 0.0
      %1546 = vmatpush1.msra.mxu0 0.0
      %1547 = vmatprep.subr.mxu0 0.0
      %1548 = vmatpush1.msra.mxu0 0.0
      %1549 = vmatprep.subr.mxu0 0.0
      %1550 = vmatpush1.msra.mxu0 0.0
      %1551 = vmatprep.subr.mxu0 0.0
      %1552 = vmatpush1.msra.mxu0 0.0
      %1553 = vmatprep.subr.mxu0 0.0
      %1554 = vmatpush1.msra.mxu0 0.0
      %1555 = vmatprep.subr.mxu0 0.0
      %1556 = vmatpush1.msra.mxu0 0.0
      %1557 = vmatprep.mubr.f32.mxu0 0.0
      %1558 = vmatmul.mubr.f32.gmra.mrb[0].mxu0 %v1474
      %v1559 = vpop.f32.mrb[0].mxu0
      %v1560 = vadd.f32 0.0, %v1559
      %v1561 = vpop.f32.mrb[0].mxu0
      %1562 = vmatprep.mubr.f32.mxu0 0.0
      %1563 = vmatmul.mubr.f32.gmra.mrb[0].mxu0 %v1475
      %v1564 = vpop.f32.mrb[0].mxu0
      %v1565 = vadd.f32 0.0, %v1564
      %v1566 = vpop.f32.mrb[0].mxu0
      %1567 = vdwg.mxu0
      %v1568 = vadd.f32 %v1466, %v1560
      %v1569 = vadd.f32 %v1471, %v1565
      %v1570 = vadd.f32 %v1568, %v1569
      %v1571 = vrot.slane %v1570, 4
      %v1572 = vadd.f32 %v1570, %v1571
      %v1573 = vrot.slane %v1572, 2
      %v1574 = vadd.f32 %v1572, %v1573
      %v1575 = vrot.slane %v1574, 1
      %v1576 = vadd.f32 %v1574, %v1575
      %s1577 = scalar_lea.vmem %s3, 128
      %v1578 = vld [vmem:[%s1577] sm:$0xff]
      %v1579 = vld [vmem:[%s1577 + $0x8] sm:$0xff]
      %v1580 = vld [vmem:[%s1577 + $0x10] sm:$0xff]
      %v1581 = vld [vmem:[%s1577 + $0x18] sm:$0xff]
      %v1582 = vld [vmem:[%s1577 + $0x20] sm:$0xff]
      %v1583 = vld [vmem:[%s1577 + $0x28] sm:$0xff]
      %v1584 = vld [vmem:[%s1577 + $0x30] sm:$0xff]
      %v1585 = vld [vmem:[%s1577 + $0x38] sm:$0xff]
      %v1586 = vld [vmem:[%s1577 + $0x40] sm:$0xff]
      %v1587 = vld [vmem:[%s1577 + $0x48] sm:$0xff]
      %v1588 = vld [vmem:[%s1577 + $0x50] sm:$0xff]
      %v1589 = vld [vmem:[%s1577 + $0x58] sm:$0xff]
      %v1590 = vld [vmem:[%s1577 + $0x60] sm:$0xff]
      %v1591 = vld [vmem:[%s1577 + $0x68] sm:$0xff]
      %v1592 = vld [vmem:[%s1577 + $0x70] sm:$0xff]
      %v1593 = vld [vmem:[%s1577 + $0x78] sm:$0xff]
      %1594 = vmatprep.subr.mxu0 0.0
      %1595 = vmatpush1.msra.mxu0 %v1578
      %1596 = vmatprep.subr.mxu0 0.0
      %1597 = vmatpush1.msra.mxu0 %v1579
      %1598 = vmatprep.subr.mxu0 0.0
      %1599 = vmatpush1.msra.mxu0 %v1580
      %1600 = vmatprep.subr.mxu0 0.0
      %1601 = vmatpush1.msra.mxu0 %v1581
      %1602 = vmatprep.subr.mxu0 0.0
      %1603 = vmatpush1.msra.mxu0 %v1582
      %1604 = vmatprep.subr.mxu0 0.0
      %1605 = vmatpush1.msra.mxu0 %v1583
      %1606 = vmatprep.subr.mxu0 0.0
      %1607 = vmatpush1.msra.mxu0 %v1584
      %1608 = vmatprep.subr.mxu0 0.0
      %1609 = vmatpush1.msra.mxu0 %v1585
      %1610 = vmatprep.subr.mxu0 0.0
      %1611 = vmatpush1.msra.mxu0 %v1586
      %1612 = vmatprep.subr.mxu0 0.0
      %1613 = vmatpush1.msra.mxu0 %v1587
      %1614 = vmatprep.subr.mxu0 0.0
      %1615 = vmatpush1.msra.mxu0 %v1588
      %1616 = vmatprep.subr.mxu0 0.0
      %1617 = vmatpush1.msra.mxu0 %v1589
      %1618 = vmatprep.subr.mxu0 0.0
      %1619 = vmatpush1.msra.mxu0 %v1590
      %1620 = vmatprep.subr.mxu0 0.0
      %1621 = vmatpush1.msra.mxu0 %v1591
      %1622 = vmatprep.subr.mxu0 0.0
      %1623 = vmatpush1.msra.mxu0 %v1592
      %1624 = vmatprep.subr.mxu0 0.0
      %1625 = vmatpush1.msra.mxu0 %v1593
      %1626 = vmatprep.subr.mxu0 0.0
      %1627 = vmatpush1.msra.mxu0 0.0
      %1628 = vmatprep.subr.mxu0 0.0
      %1629 = vmatpush1.msra.mxu0 0.0
      %1630 = vmatprep.subr.mxu0 0.0
      %1631 = vmatpush1.msra.mxu0 0.0
      %1632 = vmatprep.subr.mxu0 0.0
      %1633 = vmatpush1.msra.mxu0 0.0
      %1634 = vmatprep.subr.mxu0 0.0
      %1635 = vmatpush1.msra.mxu0 0.0
      %1636 = vmatprep.subr.mxu0 0.0
      %1637 = vmatpush1.msra.mxu0 0.0
      %1638 = vmatprep.subr.mxu0 0.0
      %1639 = vmatpush1.msra.mxu0 0.0
      %1640 = vmatprep.subr.mxu0 0.0
      %1641 = vmatpush1.msra.mxu0 0.0
      %1642 = vmatprep.subr.mxu0 0.0
      %1643 = vmatpush1.msra.mxu0 0.0
      %1644 = vmatprep.subr.mxu0 0.0
      %1645 = vmatpush1.msra.mxu0 0.0
      %1646 = vmatprep.subr.mxu0 0.0
      %1647 = vmatpush1.msra.mxu0 0.0
      %1648 = vmatprep.subr.mxu0 0.0
      %1649 = vmatpush1.msra.mxu0 0.0
      %1650 = vmatprep.subr.mxu0 0.0
      %1651 = vmatpush1.msra.mxu0 0.0
      %1652 = vmatprep.subr.mxu0 0.0
      %1653 = vmatpush1.msra.mxu0 0.0
      %1654 = vmatprep.subr.mxu0 0.0
      %1655 = vmatpush1.msra.mxu0 0.0
      %1656 = vmatprep.subr.mxu0 0.0
      %1657 = vmatpush1.msra.mxu0 0.0
      %1658 = vmatprep.mubr.f32.mxu0 0.0
      %1659 = vmatmul.mubr.f32.gmra.mrb[0].mxu0 %v1576
      %v1660 = vpop.f32.mrb[0].mxu0
      %v1661 = vadd.f32 0.0, %v1660
      %v1662 = vpop.f32.mrb[0].mxu0
      %1663 = vdwg.mxu0
      %v1664 = vmax.f32 %v1661, 0.0
      %s1665 = scalar_lea.vmem %s4, 2
      %v1666 = vld [vmem:[%s1665] sm:$0x3]
      %v1668 = vsel %vm900, %v1664, 0
      %v1671 = vsel %vm904, %v1666, 0
      %1673 = vmatprep.subr.mxu0 0.0
      %1674 = vmatpush1.msra.mxu0 %v1671
      %1675 = vmatprep.subr.mxu0 0.0
      %1676 = vmatpush1.msra.mxu0 0.0
      %1677 = vmatprep.subr.mxu0 0.0
      %1678 = vmatpush1.msra.mxu0 0.0
      %1679 = vmatprep.subr.mxu0 0.0
      %1680 = vmatpush1.msra.mxu0 0.0
      %1681 = vmatprep.subr.mxu0 0.0
      %1682 = vmatpush1.msra.mxu0 0.0
      %1683 = vmatprep.subr.mxu0 0.0
      %1684 = vmatpush1.msra.mxu0 0.0
      %1685 = vmatprep.subr.mxu0 0.0
      %1686 = vmatpush1.msra.mxu0 0.0
      %1687 = vmatprep.subr.mxu0 0.0
      %1688 = vmatpush1.msra.mxu0 0.0
      %1689 = vmatprep.subr.mxu0 0.0
      %1690 = vmatpush1.msra.mxu0 0.0
      %1691 = vmatprep.subr.mxu0 0.0
      %1692 = vmatpush1.msra.mxu0 0.0
      %1693 = vmatprep.subr.mxu0 0.0
      %1694 = vmatpush1.msra.mxu0 0.0
      %1695 = vmatprep.subr.mxu0 0.0
      %1696 = vmatpush1.msra.mxu0 0.0
      %1697 = vmatprep.subr.mxu0 0.0
      %1698 = vmatpush1.msra.mxu0 0.0
      %1699 = vmatprep.subr.mxu0 0.0
      %1700 = vmatpush1.msra.mxu0 0.0
      %1701 = vmatprep.subr.mxu0 0.0
      %1702 = vmatpush1.msra.mxu0 0.0
      %1703 = vmatprep.subr.mxu0 0.0
      %1704 = vmatpush1.msra.mxu0 0.0
      %1705 = vmatprep.subr.mxu0 0.0
      %1706 = vmatpush1.msra.mxu0 0.0
      %1707 = vmatprep.subr.mxu0 0.0
      %1708 = vmatpush1.msra.mxu0 0.0
      %1709 = vmatprep.subr.mxu0 0.0
      %1710 = vmatpush1.msra.mxu0 0.0
      %1711 = vmatprep.subr.mxu0 0.0
      %1712 = vmatpush1.msra.mxu0 0.0
      %1713 = vmatprep.subr.mxu0 0.0
      %1714 = vmatpush1.msra.mxu0 0.0
      %1715 = vmatprep.subr.mxu0 0.0
      %1716 = vmatpush1.msra.mxu0 0.0
      %1717 = vmatprep.subr.mxu0 0.0
      %1718 = vmatpush1.msra.mxu0 0.0
      %1719 = vmatprep.subr.mxu0 0.0
      %1720 = vmatpush1.msra.mxu0 0.0
      %1721 = vmatprep.subr.mxu0 0.0
      %1722 = vmatpush1.msra.mxu0 0.0
      %1723 = vmatprep.subr.mxu0 0.0
      %1724 = vmatpush1.msra.mxu0 0.0
      %1725 = vmatprep.subr.mxu0 0.0
      %1726 = vmatpush1.msra.mxu0 0.0
      %1727 = vmatprep.subr.mxu0 0.0
      %1728 = vmatpush1.msra.mxu0 0.0
      %1729 = vmatprep.subr.mxu0 0.0
      %1730 = vmatpush1.msra.mxu0 0.0
      %1731 = vmatprep.subr.mxu0 0.0
      %1732 = vmatpush1.msra.mxu0 0.0
      %1733 = vmatprep.subr.mxu0 0.0
      %1734 = vmatpush1.msra.mxu0 0.0
      %1735 = vmatprep.subr.mxu0 0.0
      %1736 = vmatpush1.msra.mxu0 0.0
      %1737 = vmatprep.mubr.f32.mxu0 0.0
      %1738 = vmatmul.mubr.f32.gmra.mrb[0].mxu0 %v1668
      %v1739 = vpop.f32.mrb[0].mxu0
      %v1740 = vadd.f32 0.0, %v1739
      %v1741 = vpop.f32.mrb[0].mxu0
      %1742 = vdwg.mxu0
      %v1743 = vxor.u32 %v1740, 2147483648
      %v1744 = vmul.f32 %v1743, 1.442695
      %v1745 = vpow.pop %v1744
      %v1746 = vadd.f32 %v1745, 1.0
      %v1747 = vrcp.pop %v1746
      %v1748 = vmul.f32 1.0, %v1747
      %v1749 = vlaneseq
      %v1750 = vshrl.u32 %v1749, 7
      %v1751 = vsub.s32 0, %v1750
      %v1752 = vrot.slane %v1748, %v1751
      %v1753 = vmul.f32 %v1568, %v1752
      %v1754 = vmul.f32 %v1569, %v1752
      %v1755 = vadd.f32 %v1753, %v990
      %v1756 = vadd.f32 %v1754, %v991
      %1757 = vst [vmem:[%s224] sm:$0xff] %v1755
      %1758 = vst [vmem:[%s224 + $0x8] sm:$0xff] %v1756
      %p1759 = scmp.lt.s32.totalorder %s16, 1
      %s1760 = scalar_select %p1759, %s16, 1
      %s1761 = smul.addr %s1760, 2
      %s1762 = smul.addr %s1761, 8
      %s1763 = scalar_lea.vmem %s5, %s1762
      // Predicated region
      $region41: #{decoder_forward.13} parent=39 // pred_check
        %p1764 = pneg %p144
      $region42: #{decoder_forward.13} parent=39 // pred_check_branch
        %1766 = sbr.rel (%p1764) target = $region44
      $region43: #{decoder_forward.13} parent=39 // pred_region
        _
      $region44: #{decoder_forward.13} parent=39 // pred_fallthru
        _
    $region40: #{decoder_forward.13} parent=5 // pred_fallthru
      _
    %p1767 = scmp.le.s32.totalorder 2, %s11
    // Predicated region
    $region45: #{decoder_forward.13} parent=5 // pred_check
      %p1768 = pneg %p1767
    $region46: #{decoder_forward.13} parent=5 // pred_check_branch
      %1770 = sbr.rel (%p1768) target = $region48
    $region47: #{decoder_forward.13} parent=5 // pred_region
      %s1771 = ssub.s32 %s11, 2
      // Predicated region
      $region49: #{decoder_forward.13} parent=47 // pred_check
        %p1772 = pneg %p150
      $region50: #{decoder_forward.13} parent=47 // pred_check_branch
        %1774 = sbr.rel (%p1772) target = $region52
      $region51: #{decoder_forward.13} parent=47 // pred_region
        %p1775 = scmp.lt.s32.totalorder %s17, 1
        %s1776 = scalar_select %p1775, %s17, 1
        %s1777 = smul.addr %s1776, 2
        %s1778 = smul.addr %s1777, 8
        %s1779 = scalar_lea.vmem %s5, %s1778
      $region52: #{decoder_forward.13} parent=47 // pred_fallthru
        _
    $region48: #{decoder_forward.13} parent=5 // pred_fallthru
      _
  $region6: #{decoder_forward.13} parent=0 // loop_footer
    %s15 = sadd.s32 1, %s11
  $region7: #{decoder_forward.13} parent=0 // loop_footer_branch
    %10 = sbr.rel target = $region3
  $region8: #{decoder_forward.13} parent=0 // loop_exit
    _

</llo_original>
